<compile_context>
chip_gen: v7x
topology: tpu7x:2x2x1
jax: 0.10.0
libtpu: 0.0.40
codegen_flags: <defaults>
</compile_context>

<pallas_src>
import functools

import jax
import jax.numpy as jnp
from jax import lax
from jax.experimental import pallas as pl
from jax.experimental.pallas import tpu as pltpu


def _graphgen_kernel(iters, kernel_size, n, bt, hp,
                     x_ref, mask_ref,
                     w_init_ref, b_init_ref,
                     w1_ref, bn1_s_ref, bn1_b_ref,
                     w2s_ref, bn2_s_ref, bn2_b_ref,
                     ws_ref, bs_ref, nscale_ref,
                     a_ref,
                     p_ref, u_ref):
    """One grid step = `bt` batch elements.

    Rows are position-major: row r = i*bt + b (i = sequence position,
    b = batch index inside the group).
    """
    pad = (kernel_size - 1) // 2
    r = n * bt

    # Zero the conv boundary rows of the persistent padded-activation scratch.
    # Done every grid step (cheap: 2*pad whole tiles) so it stays correct no
    # matter how the parallel grid axis is sharded across TensorCores (each TC
    # owns its own scratch instance).
    if pad > 0:
        zrow = jnp.zeros((pad, bt, hp), jnp.float32)
        p_ref[0:pad, :, :] = zrow
        p_ref[n + pad:n + 2 * pad, :, :] = zrow

    # Initial embedding: (R, F) @ (F, Hp) + (1, Hp)
    h0 = (jnp.dot(x_ref[0], w_init_ref[...],
                  preferred_element_type=jnp.float32) + b_init_ref[...])

    def block(it, h):
        # conv1 (kernel_size=1, no bias) + folded BN1 + ReLU -> one matmul.
        # TODO(synk): for production-sized Hp, cast matmul operands to bf16
        # (keep f32 accumulation / epilogue) on v6e/v7x.
        y = jnp.dot(h, w1_ref[it], preferred_element_type=jnp.float32)
        y = jnp.maximum(y * bn1_s_ref[it] + bn1_b_ref[it], 0.0)

        # Write activations into the middle of the padded scratch.  Leading axis
        # is the (padded) sequence position, so each shifted read below moves
        # whole (bt, hp) tiles — no sublane-misaligned copies, no fresh zeros.
        p_ref[pad:pad + n, :, :] = y.reshape(n, bt, hp)

        # im2col unfold: U[:, k*Hp:(k+1)*Hp] = padded_act[k : k+n]
        # (lane offsets are multiples of 128 -> aligned, unmasked stores).
        for k in range(kernel_size):          # kernel_size is small & static
            u_ref[:, k * hp:(k + 1) * hp] = p_ref[k:k + n, :, :].reshape(r, hp)

        # conv2 (kernel_size=17, no bias) collapsed into a SINGLE matmul
        # (R, K*Hp) x (K*Hp, Hp) instead of K tiny shifted dots.
        acc = jnp.dot(u_ref[...], w2s_ref[it],
                      preferred_element_type=jnp.float32)

        # folded BN2 + residual + ReLU
        return jnp.maximum(acc * bn2_s_ref[it] + bn2_b_ref[it] + h, 0.0)

    h = lax.fori_loop(0, iters, block, h0, unroll=True)

    # Final spatial embedding + pairwise squared distances + masked adjacency.
    s = jnp.dot(h, ws_ref[...], preferred_element_type=jnp.float32) + bs_ref[...]
    sn = jnp.sum(s * s, axis=-1, keepdims=True)                       # (R, 1)
    gram = lax.dot_general(s, s, (((1,), (1,)), ((), ())),            # s @ s.T
                           preferred_element_type=jnp.float32)
    d = jnp.maximum(sn + sn.T - 2.0 * gram, 0.0)   # clamp cancellation noise
    # nscale_ref holds -exp(self.scale) (hoisted to the wrapper), read from SMEM.
    a_ref[0] = jnp.exp(d * nscale_ref[0]) * mask_ref[0]


def graphgen_forward(x, mask, params, *, iters, kernel_size=17, block_batch=None):
    B, N, F = x.shape
    H = params["w_init"].shape[1]
    K = kernel_size
    pad = (K - 1) // 2
    f32 = jnp.float32

    assert N % 8 == 0, "sequence length must be a multiple of 8 sublanes"
    # TODO(synk): ragged N (not a multiple of 8) would need per-row masking.

    # ---- batch tile: fold Bt batch elements into the sublane axis so matmul
    # LHS has ~128 rows, while keeping >= 2 grid steps (v7x has 2 TensorCores).
    if block_batch is None:
        cap = max(1, 128 // N)
        bt = 1
        for cand in range(1, min(B, cap) + 1):
            if B % cand == 0 and B // cand >= 2:
                bt = cand
    else:
        bt = block_batch
        assert B % bt == 0
    G = B // bt
    R = N * bt

    # ---- pad hidden (and the 3-wide spatial output) to full 128-lane width.
    # Zero padding is numerically inert here (all padded weights/scales/biases
    # are zero, so padded channels stay exactly zero through conv/BN/ReLU).
    Hp = max(128, ((H + 127) // 128) * 128)
    Sp = 128

    def padlast(a, size):
        a = a.astype(f32)
        return jnp.pad(a, [(0, 0)] * (a.ndim - 1) + [(0, size - a.shape[-1])])

    w_init = padlast(params["w_init"], Hp)                              # (F, Hp)
    b_init = padlast(params["b_init"], Hp)                              # (1, Hp)
    w1 = padlast(jnp.pad(params["w1"].astype(f32),
                         ((0, 0), (0, Hp - H), (0, 0))), Hp)            # (it, Hp, Hp)
    bn1_s = padlast(params["bn1_s"], Hp)                                # (it, 1, Hp)
    bn1_b = padlast(params["bn1_b"], Hp)
    bn2_s = padlast(params["bn2_s"], Hp)
    bn2_b = padlast(params["bn2_b"], Hp)
    # conv2 weights: pad channels, then stack the K taps along the contraction
    # axis for the single im2col matmul -> (iters, K*Hp, Hp).
    w2 = padlast(jnp.pad(params["w2"].astype(f32),
                         ((0, 0), (0, 0), (0, Hp - H), (0, 0))), Hp)    # (it,K,Hp,Hp)
    w2s = w2.reshape(iters, K * Hp, Hp)
    ws = padlast(jnp.pad(params["ws"].astype(f32), ((0, Hp - H), (0, 0))), Sp)
    bs = padlast(params["bs"], Sp)
    # -exp(self.scale): hoisted out of the kernel, passed as an SMEM scalar.
    nscale = (-jnp.exp(params["scale"].astype(f32))).reshape(1)

    # ---- position-major input layout: row r = i*bt + b within a group.
    x_perm = (x.astype(f32).reshape(G, bt, N, F)
              .transpose(0, 2, 1, 3).reshape(G, R, F))
    # Block-"diagonal" (interleaved) mask in the same layout; it also kills the
    # cross-batch entries of the lane-dense (R, R) adjacency slab.
    eye = jnp.eye(bt, dtype=f32)
    m = mask.astype(f32).reshape(G, bt, N, N)
    mask_perm = jnp.einsum("gbij,bc->gibjc", m, eye).reshape(G, R, R)

    def rep_spec(arr):
        nd = arr.ndim
        return pl.BlockSpec(arr.shape, lambda g, _nd=nd: (0,) * _nd)

    kern = functools.partial(_graphgen_kernel, iters, K, N, bt, Hp)

    in_specs = [
        pl.BlockSpec((1, R, F), lambda g: (g, 0, 0)),        # x (position-major)
        pl.BlockSpec((1, R, R), lambda g: (g, 0, 0)),        # block-diagonal mask
        rep_spec(w_init), rep_spec(b_init),
        rep_spec(w1), rep_spec(bn1_s), rep_spec(bn1_b),
        # TODO(synk): for production H (>=512) / large iters, stream w2s per
        # iteration (pl.ANY + make_async_copy) instead of replicating in VMEM
        # (matters for v7x's 64 MiB VMEM).
        rep_spec(w2s), rep_spec(bn2_s), rep_spec(bn2_b),
        rep_spec(ws), rep_spec(bs),
        pl.BlockSpec(memory_space=pltpu.MemorySpace.SMEM),   # -exp(scale) scalar
    ]

    out_full = pl.pallas_call(
        kern,
        out_shape=jax.ShapeDtypeStruct((G, R, R), f32),
        grid=(G,),
        in_specs=in_specs,
        out_specs=pl.BlockSpec((1, R, R), lambda g: (g, 0, 0)),
        scratch_shapes=[
            pltpu.VMEM((N + 2 * pad, bt, Hp), f32),   # persistent padded activations
            pltpu.VMEM((R, K * Hp), f32),             # im2col unfold buffer
        ],
        compiler_params=pltpu.CompilerParams(
            dimension_semantics=("parallel",),
            vmem_limit_bytes=32 * 1024 * 1024),
    )(x_perm, mask_perm,
      w_init, b_init, w1, bn1_s, bn1_b, w2s, bn2_s, bn2_b, ws, bs, nscale)

    # Extract the per-batch (N, N) adjacency blocks from the lane-dense output.
    of = out_full.reshape(G, N, bt, N, bt)
    return jnp.einsum("gibjc,bc->gbij", of, eye).reshape(B, N, N)


def graphgen_reference(x, mask, p, *, iters, kernel_size=17):
    """Plain-JAX reference (same parameter representation, unpadded)."""
    pad = (kernel_size - 1) // 2
    h = x @ p["w_init"] + p["b_init"]
    N = h.shape[1]
    for it in range(iters):
        y = h @ p["w1"][it]
        y = y * p["bn1_s"][it] + p["bn1_b"][it]
        y = jnp.maximum(y, 0.0)
        zp = jnp.pad(y, ((0, 0), (pad, pad), (0, 0)))
        acc = jnp.zeros_like(h)
        for k in range(kernel_size):
            acc = acc + zp[:, k:k + N, :] @ p["w2"][it, k]
        acc = acc * p["bn2_s"][it] + p["bn2_b"][it]
        h = jnp.maximum(acc + h, 0.0)
    s = h @ p["ws"] + p["bs"]
    diff = s[:, :, None, :] - s[:, None, :, :]
    d = jnp.sum(diff ** 2, axis=-1)
    return jnp.exp(-d * jnp.exp(p["scale"][0, 0])) * mask


def make_params(key, features, hidden, iters, kernel_size=17, eps=1e-5):
    ks = jax.random.split(key, 16)
    f32 = jnp.float32
    w_init = (jax.random.normal(ks[0], (features, hidden)) * 0.1).astype(f32)
    b_init = (jax.random.normal(ks[1], (1, hidden)) * 0.1).astype(f32)
    ws = (jax.random.normal(ks[2], (hidden, 3)) * 0.1).astype(f32)
    bs = (jax.random.normal(ks[3], (1, 3)) * 0.1).astype(f32)
    w1 = (jax.random.normal(ks[4], (iters, hidden, hidden)) * 0.1).astype(f32)
    w2 = (jax.random.normal(ks[5], (iters, kernel_size, hidden, hidden)) * 0.05).astype(f32)

    def bn_fold(kg, kb, km, kv):
        gamma = 1.0 + 0.1 * jax.random.normal(kg, (iters, 1, hidden))
        beta = 0.1 * jax.random.normal(kb, (iters, 1, hidden))
        rmean = 0.1 * jax.random.normal(km, (iters, 1, hidden))
        rvar = 1.0 + 0.1 * jnp.abs(jax.random.normal(kv, (iters, 1, hidden)))
        scale = gamma / jnp.sqrt(rvar + eps)
        bias = beta - rmean * scale
        return scale.astype(f32), bias.astype(f32)

    bn1_s, bn1_b = bn_fold(ks[6], ks[7], ks[8], ks[9])
    bn2_s, bn2_b = bn_fold(ks[10], ks[11], ks[12], ks[13])
    scale = jnp.zeros((1, 1), f32)     # self.scale = zeros(1)
    return dict(w_init=w_init, b_init=b_init, ws=ws, bs=bs,
                w1=w1, w2=w2, bn1_s=bn1_s, bn1_b=bn1_b,
                bn2_s=bn2_s, bn2_b=bn2_b, scale=scale)


if __name__ == "__main__":
    B, N, FEAT, HID, ITERS, KSIZE = 16, 16, 4, 32, 2, 17

    key = jax.random.PRNGKey(0)
    kx, km, kp = jax.random.split(key, 3)
    x = jax.random.normal(kx, (B, N, FEAT), dtype=jnp.float32)
    mask = (jax.random.uniform(km, (B, N, N)) > 0.3).astype(jnp.float32)
    params = make_params(kp, FEAT, HID, ITERS, KSIZE)

    out = graphgen_forward(x, mask, params, iters=ITERS, kernel_size=KSIZE)
    out = jax.block_until_ready(out)

    ref = graphgen_reference(x, mask, params, iters=ITERS, kernel_size=KSIZE)
    ref = jax.block_until_ready(ref)

    assert out.shape == (B, N, N)
    err = jnp.max(jnp.abs(out - ref))
    assert jnp.allclose(out, ref, atol=1e-4, rtol=1e-4), f"max abs err {err}"
    print("KERNEL_OK")
</pallas_src>

<mosaic_0001>
module attributes {stable_mosaic.version = 11 : i64} {
  func.func @_graphgen_kernel(%arg0: i32, %arg1: memref<1x128x4xf32, #tpu.memory_space<vmem>>, %arg2: memref<1x128x128xf32, #tpu.memory_space<vmem>>, %arg3: memref<4x128xf32, #tpu.memory_space<vmem>>, %arg4: memref<1x128xf32, #tpu.memory_space<vmem>>, %arg5: memref<2x128x128xf32, #tpu.memory_space<vmem>>, %arg6: memref<2x1x128xf32, #tpu.memory_space<vmem>>, %arg7: memref<2x1x128xf32, #tpu.memory_space<vmem>>, %arg8: memref<2x2176x128xf32, #tpu.memory_space<vmem>>, %arg9: memref<2x1x128xf32, #tpu.memory_space<vmem>>, %arg10: memref<2x1x128xf32, #tpu.memory_space<vmem>>, %arg11: memref<128x128xf32, #tpu.memory_space<vmem>>, %arg12: memref<1x128xf32, #tpu.memory_space<vmem>>, %arg13: memref<1xf32, #tpu.memory_space<smem>>, %arg14: memref<1x128x128xf32, #tpu.memory_space<vmem>>, %arg15: memref<32x8x128xf32, #tpu.memory_space<vmem>>, %arg16: memref<128x2176xf32, #tpu.memory_space<vmem>>) attributes {dimension_semantics = [#tpu.dimension_semantics<parallel>], iteration_bounds = array<i64: 2>, scalar_prefetch = 0 : i64, scratch_operands = 2 : i64, tpu.core_type = #tpu.core_type<tc>, window_params = [{transform_indices = @transform_0, window_bounds = array<i64: 1, 128, 4>}, {transform_indices = @transform_1, window_bounds = array<i64: 1, 128, 128>}, {pipeline_mode = #tpu.pipeline_mode<synchronous>, transform_indices = @transform_2, window_bounds = array<i64: 4, 128>}, {pipeline_mode = #tpu.pipeline_mode<synchronous>, transform_indices = @transform_3, window_bounds = array<i64: 1, 128>}, {pipeline_mode = #tpu.pipeline_mode<synchronous>, transform_indices = @transform_4, window_bounds = array<i64: 2, 128, 128>}, {pipeline_mode = #tpu.pipeline_mode<synchronous>, transform_indices = @transform_5, window_bounds = array<i64: 2, 1, 128>}, {pipeline_mode = #tpu.pipeline_mode<synchronous>, transform_indices = @transform_6, window_bounds = array<i64: 2, 1, 128>}, {pipeline_mode = #tpu.pipeline_mode<synchronous>, transform_indices = @transform_7, window_bounds = array<i64: 2, 2176, 128>}, {pipeline_mode = #tpu.pipeline_mode<synchronous>, transform_indices = @transform_8, window_bounds = array<i64: 2, 1, 128>}, {pipeline_mode = #tpu.pipeline_mode<synchronous>, transform_indices = @transform_9, window_bounds = array<i64: 2, 1, 128>}, {pipeline_mode = #tpu.pipeline_mode<synchronous>, transform_indices = @transform_10, window_bounds = array<i64: 128, 128>}, {pipeline_mode = #tpu.pipeline_mode<synchronous>, transform_indices = @transform_11, window_bounds = array<i64: 1, 128>}, {transform_indices = @transform_12, window_bounds = array<i64: 1>}, {transform_indices = @transform_13, window_bounds = array<i64: 1, 128, 128>}]} {
    %cst = arith.constant 0.000000e+00 : f32
    %0 = vector.broadcast %cst : f32 to vector<8x8x128xf32>
    %c0 = arith.constant 0 : index
    %c0_0 = arith.constant 0 : index
    %c0_1 = arith.constant 0 : index
    %1 = vector.load %arg15[%c0, %c0_0, %c0_1] : memref<32x8x128xf32, #tpu.memory_space<vmem>>, vector<8x8x128xf32>
    tpu.vector_store %arg15[%c0, %c0_0, %c0_1], %0 {strides = array<i32>} : memref<32x8x128xf32, #tpu.memory_space<vmem>>, vector<8x8x128xf32>,
    %c24 = arith.constant 24 : index
    %c0_2 = arith.constant 0 : index
    %c0_3 = arith.constant 0 : index
    %2 = vector.load %arg15[%c24, %c0_2, %c0_3] : memref<32x8x128xf32, #tpu.memory_space<vmem>>, vector<8x8x128xf32>
    tpu.vector_store %arg15[%c24, %c0_2, %c0_3], %0 {strides = array<i32>} : memref<32x8x128xf32, #tpu.memory_space<vmem>>, vector<8x8x128xf32>,
    %c0_4 = arith.constant 0 : index
    %c0_5 = arith.constant 0 : index
    %c0_6 = arith.constant 0 : index
    %3 = vector.load %arg1[%c0_4, %c0_5, %c0_6] : memref<1x128x4xf32, #tpu.memory_space<vmem>>, vector<1x128x4xf32>
    %4 = vector.shape_cast %3 : vector<1x128x4xf32> to vector<128x4xf32>
    %c0_7 = arith.constant 0 : index
    %c0_8 = arith.constant 0 : index
    %5 = vector.load %arg3[%c0_7, %c0_8] : memref<4x128xf32, #tpu.memory_space<vmem>>, vector<4x128xf32>
    %cst_9 = arith.constant dense<0.000000e+00> : vector<128x128xf32>
    %6 = tpu.matmul %4, %5, %cst_9 {dimension_numbers = #tpu.dot_dimension_numbers<[1], [0], [0], [1], [0, 0, 1, 1], [], []>} : vector<128x4xf32>, vector<4x128xf32>, vector<128x128xf32> -> vector<128x128xf32>
    %c0_10 = arith.constant 0 : index
    %c0_11 = arith.constant 0 : index
    %7 = vector.load %arg4[%c0_10, %c0_11] : memref<1x128xf32, #tpu.memory_space<vmem>>, vector<1x128xf32>
    %8 = vector.broadcast %7 : vector<1x128xf32> to vector<128x128xf32>
    %9 = arith.addf %6, %8 : vector<128x128xf32>
    %c0_i32 = arith.constant 0 : i32
    %10 = arith.index_cast %c0_i32 : i32 to index
    %c0_12 = arith.constant 0 : index
    %c0_13 = arith.constant 0 : index
    %11 = vector.load %arg5[%10, %c0_12, %c0_13] : memref<2x128x128xf32, #tpu.memory_space<vmem>>, vector<1x128x128xf32>
    %12 = vector.shape_cast %11 : vector<1x128x128xf32> to vector<128x128xf32>
    %cst_14 = arith.constant dense<0.000000e+00> : vector<128x128xf32>
    %13 = tpu.matmul %9, %12, %cst_14 {dimension_numbers = #tpu.dot_dimension_numbers<[1], [0], [0], [1], [0, 0, 1, 1], [], []>} : vector<128x128xf32>, vector<128x128xf32>, vector<128x128xf32> -> vector<128x128xf32>
    %14 = arith.index_cast %c0_i32 : i32 to index
    %c0_15 = arith.constant 0 : index
    %c0_16 = arith.constant 0 : index
    %15 = vector.load %arg6[%14, %c0_15, %c0_16] : memref<2x1x128xf32, #tpu.memory_space<vmem>>, vector<1x1x128xf32>
    %16 = vector.shape_cast %15 : vector<1x1x128xf32> to vector<1x128xf32>
    %17 = vector.broadcast %16 : vector<1x128xf32> to vector<128x128xf32>
    %18 = arith.mulf %13, %17 : vector<128x128xf32>
    %19 = arith.index_cast %c0_i32 : i32 to index
    %c0_17 = arith.constant 0 : index
    %c0_18 = arith.constant 0 : index
    %20 = vector.load %arg7[%19, %c0_17, %c0_18] : memref<2x1x128xf32, #tpu.memory_space<vmem>>, vector<1x1x128xf32>
    %21 = vector.shape_cast %20 : vector<1x1x128xf32> to vector<1x128xf32>
    %22 = vector.broadcast %21 : vector<1x128xf32> to vector<128x128xf32>
    %23 = arith.addf %18, %22 : vector<128x128xf32>
    %cst_19 = arith.constant 0.000000e+00 : f32
    %24 = vector.broadcast %cst_19 : f32 to vector<128x128xf32>
    %25 = arith.maximumf %23, %24 : vector<128x128xf32>
    %26 = vector.shape_cast %25 : vector<128x128xf32> to vector<16x8x128xf32>
    %c8 = arith.constant 8 : index
    %c0_20 = arith.constant 0 : index
    %c0_21 = arith.constant 0 : index
    %27 = vector.load %arg15[%c8, %c0_20, %c0_21] : memref<32x8x128xf32, #tpu.memory_space<vmem>>, vector<16x8x128xf32>
    tpu.vector_store %arg15[%c8, %c0_20, %c0_21], %26 {strides = array<i32>} : memref<32x8x128xf32, #tpu.memory_space<vmem>>, vector<16x8x128xf32>,
    %c0_22 = arith.constant 0 : index
    %c0_23 = arith.constant 0 : index
    %c0_24 = arith.constant 0 : index
    %28 = vector.load %arg15[%c0_22, %c0_23, %c0_24] : memref<32x8x128xf32, #tpu.memory_space<vmem>>, vector<16x8x128xf32>
    %29 = vector.shape_cast %28 : vector<16x8x128xf32> to vector<128x128xf32>
    %c0_25 = arith.constant 0 : index
    %c0_26 = arith.constant 0 : index
    %30 = vector.load %arg16[%c0_25, %c0_26] : memref<128x2176xf32, #tpu.memory_space<vmem>>, vector<128x128xf32>
    tpu.vector_store %arg16[%c0_25, %c0_26], %29 {strides = array<i32>} : memref<128x2176xf32, #tpu.memory_space<vmem>>, vector<128x128xf32>,
    %c1 = arith.constant 1 : index
    %c0_27 = arith.constant 0 : index
    %c0_28 = arith.constant 0 : index
    %31 = vector.load %arg15[%c1, %c0_27, %c0_28] : memref<32x8x128xf32, #tpu.memory_space<vmem>>, vector<16x8x128xf32>
    %32 = vector.shape_cast %31 : vector<16x8x128xf32> to vector<128x128xf32>
    %c0_29 = arith.constant 0 : index
    %c128 = arith.constant 128 : index
    %33 = vector.load %arg16[%c0_29, %c128] : memref<128x2176xf32, #tpu.memory_space<vmem>>, vector<128x128xf32>
    tpu.vector_store %arg16[%c0_29, %c128], %32 {strides = array<i32>} : memref<128x2176xf32, #tpu.memory_space<vmem>>, vector<128x128xf32>,
    %c2 = arith.constant 2 : index
    %c0_30 = arith.constant 0 : index
    %c0_31 = arith.constant 0 : index
    %34 = vector.load %arg15[%c2, %c0_30, %c0_31] : memref<32x8x128xf32, #tpu.memory_space<vmem>>, vector<16x8x128xf32>
    %35 = vector.shape_cast %34 : vector<16x8x128xf32> to vector<128x128xf32>
    %c0_32 = arith.constant 0 : index
    %c256 = arith.constant 256 : index
    %36 = vector.load %arg16[%c0_32, %c256] : memref<128x2176xf32, #tpu.memory_space<vmem>>, vector<128x128xf32>
    tpu.vector_store %arg16[%c0_32, %c256], %35 {strides = array<i32>} : memref<128x2176xf32, #tpu.memory_space<vmem>>, vector<128x128xf32>,
    %c3 = arith.constant 3 : index
    %c0_33 = arith.constant 0 : index
    %c0_34 = arith.constant 0 : index
    %37 = vector.load %arg15[%c3, %c0_33, %c0_34] : memref<32x8x128xf32, #tpu.memory_space<vmem>>, vector<16x8x128xf32>
    %38 = vector.shape_cast %37 : vector<16x8x128xf32> to vector<128x128xf32>
    %c0_35 = arith.constant 0 : index
    %c384 = arith.constant 384 : index
    %39 = vector.load %arg16[%c0_35, %c384] : memref<128x2176xf32, #tpu.memory_space<vmem>>, vector<128x128xf32>
    tpu.vector_store %arg16[%c0_35, %c384], %38 {strides = array<i32>} : memref<128x2176xf32, #tpu.memory_space<vmem>>, vector<128x128xf32>,
    %c4 = arith.constant 4 : index
    %c0_36 = arith.constant 0 : index
    %c0_37 = arith.constant 0 : index
    %40 = vector.load %arg15[%c4, %c0_36, %c0_37] : memref<32x8x128xf32, #tpu.memory_space<vmem>>, vector<16x8x128xf32>
    %41 = vector.shape_cast %40 : vector<16x8x128xf32> to vector<128x128xf32>
    %c0_38 = arith.constant 0 : index
    %c512 = arith.constant 512 : index
    %42 = vector.load %arg16[%c0_38, %c512] : memref<128x2176xf32, #tpu.memory_space<vmem>>, vector<128x128xf32>
    tpu.vector_store %arg16[%c0_38, %c512], %41 {strides = array<i32>} : memref<128x2176xf32, #tpu.memory_space<vmem>>, vector<128x128xf32>,
    %c5 = arith.constant 5 : index
    %c0_39 = arith.constant 0 : index
    %c0_40 = arith.constant 0 : index
    %43 = vector.load %arg15[%c5, %c0_39, %c0_40] : memref<32x8x128xf32, #tpu.memory_space<vmem>>, vector<16x8x128xf32>
    %44 = vector.shape_cast %43 : vector<16x8x128xf32> to vector<128x128xf32>
    %c0_41 = arith.constant 0 : index
    %c640 = arith.constant 640 : index
    %45 = vector.load %arg16[%c0_41, %c640] : memref<128x2176xf32, #tpu.memory_space<vmem>>, vector<128x128xf32>
    tpu.vector_store %arg16[%c0_41, %c640], %44 {strides = array<i32>} : memref<128x2176xf32, #tpu.memory_space<vmem>>, vector<128x128xf32>,
    %c6 = arith.constant 6 : index
    %c0_42 = arith.constant 0 : index
    %c0_43 = arith.constant 0 : index
    %46 = vector.load %arg15[%c6, %c0_42, %c0_43] : memref<32x8x128xf32, #tpu.memory_space<vmem>>, vector<16x8x128xf32>
    %47 = vector.shape_cast %46 : vector<16x8x128xf32> to vector<128x128xf32>
    %c0_44 = arith.constant 0 : index
    %c768 = arith.constant 768 : index
    %48 = vector.load %arg16[%c0_44, %c768] : memref<128x2176xf32, #tpu.memory_space<vmem>>, vector<128x128xf32>
    tpu.vector_store %arg16[%c0_44, %c768], %47 {strides = array<i32>} : memref<128x2176xf32, #tpu.memory_space<vmem>>, vector<128x128xf32>,
    %c7 = arith.constant 7 : index
    %c0_45 = arith.constant 0 : index
    %c0_46 = arith.constant 0 : index
    %49 = vector.load %arg15[%c7, %c0_45, %c0_46] : memref<32x8x128xf32, #tpu.memory_space<vmem>>, vector<16x8x128xf32>
    %50 = vector.shape_cast %49 : vector<16x8x128xf32> to vector<128x128xf32>
    %c0_47 = arith.constant 0 : index
    %c896 = arith.constant 896 : index
    %51 = vector.load %arg16[%c0_47, %c896] : memref<128x2176xf32, #tpu.memory_space<vmem>>, vector<128x128xf32>
    tpu.vector_store %arg16[%c0_47, %c896], %50 {strides = array<i32>} : memref<128x2176xf32, #tpu.memory_space<vmem>>, vector<128x128xf32>,
    %c8_48 = arith.constant 8 : index
    %c0_49 = arith.constant 0 : index
    %c0_50 = arith.constant 0 : index
    %52 = vector.load %arg15[%c8_48, %c0_49, %c0_50] : memref<32x8x128xf32, #tpu.memory_space<vmem>>, vector<16x8x128xf32>
    %53 = vector.shape_cast %52 : vector<16x8x128xf32> to vector<128x128xf32>
    %c0_51 = arith.constant 0 : index
    %c1024 = arith.constant 1024 : index
    %54 = vector.load %arg16[%c0_51, %c1024] : memref<128x2176xf32, #tpu.memory_space<vmem>>, vector<128x128xf32>
    tpu.vector_store %arg16[%c0_51, %c1024], %53 {strides = array<i32>} : memref<128x2176xf32, #tpu.memory_space<vmem>>, vector<128x128xf32>,
    %c9 = arith.constant 9 : index
    %c0_52 = arith.constant 0 : index
    %c0_53 = arith.constant 0 : index
    %55 = vector.load %arg15[%c9, %c0_52, %c0_53] : memref<32x8x128xf32, #tpu.memory_space<vmem>>, vector<16x8x128xf32>
    %56 = vector.shape_cast %55 : vector<16x8x128xf32> to vector<128x128xf32>
    %c0_54 = arith.constant 0 : index
    %c1152 = arith.constant 1152 : index
    %57 = vector.load %arg16[%c0_54, %c1152] : memref<128x2176xf32, #tpu.memory_space<vmem>>, vector<128x128xf32>
    tpu.vector_store %arg16[%c0_54, %c1152], %56 {strides = array<i32>} : memref<128x2176xf32, #tpu.memory_space<vmem>>, vector<128x128xf32>,
    %c10 = arith.constant 10 : index
    %c0_55 = arith.constant 0 : index
    %c0_56 = arith.constant 0 : index
    %58 = vector.load %arg15[%c10, %c0_55, %c0_56] : memref<32x8x128xf32, #tpu.memory_space<vmem>>, vector<16x8x128xf32>
    %59 = vector.shape_cast %58 : vector<16x8x128xf32> to vector<128x128xf32>
    %c0_57 = arith.constant 0 : index
    %c1280 = arith.constant 1280 : index
    %60 = vector.load %arg16[%c0_57, %c1280] : memref<128x2176xf32, #tpu.memory_space<vmem>>, vector<128x128xf32>
    tpu.vector_store %arg16[%c0_57, %c1280], %59 {strides = array<i32>} : memref<128x2176xf32, #tpu.memory_space<vmem>>, vector<128x128xf32>,
    %c11 = arith.constant 11 : index
    %c0_58 = arith.constant 0 : index
    %c0_59 = arith.constant 0 : index
    %61 = vector.load %arg15[%c11, %c0_58, %c0_59] : memref<32x8x128xf32, #tpu.memory_space<vmem>>, vector<16x8x128xf32>
    %62 = vector.shape_cast %61 : vector<16x8x128xf32> to vector<128x128xf32>
    %c0_60 = arith.constant 0 : index
    %c1408 = arith.constant 1408 : index
    %63 = vector.load %arg16[%c0_60, %c1408] : memref<128x2176xf32, #tpu.memory_space<vmem>>, vector<128x128xf32>
    tpu.vector_store %arg16[%c0_60, %c1408], %62 {strides = array<i32>} : memref<128x2176xf32, #tpu.memory_space<vmem>>, vector<128x128xf32>,
    %c12 = arith.constant 12 : index
    %c0_61 = arith.constant 0 : index
    %c0_62 = arith.constant 0 : index
    %64 = vector.load %arg15[%c12, %c0_61, %c0_62] : memref<32x8x128xf32, #tpu.memory_space<vmem>>, vector<16x8x128xf32>
    %65 = vector.shape_cast %64 : vector<16x8x128xf32> to vector<128x128xf32>
    %c0_63 = arith.constant 0 : index
    %c1536 = arith.constant 1536 : index
    %66 = vector.load %arg16[%c0_63, %c1536] : memref<128x2176xf32, #tpu.memory_space<vmem>>, vector<128x128xf32>
    tpu.vector_store %arg16[%c0_63, %c1536], %65 {strides = array<i32>} : memref<128x2176xf32, #tpu.memory_space<vmem>>, vector<128x128xf32>,
    %c13 = arith.constant 13 : index
    %c0_64 = arith.constant 0 : index
    %c0_65 = arith.constant 0 : index
    %67 = vector.load %arg15[%c13, %c0_64, %c0_65] : memref<32x8x128xf32, #tpu.memory_space<vmem>>, vector<16x8x128xf32>
    %68 = vector.shape_cast %67 : vector<16x8x128xf32> to vector<128x128xf32>
    %c0_66 = arith.constant 0 : index
    %c1664 = arith.constant 1664 : index
    %69 = vector.load %arg16[%c0_66, %c1664] : memref<128x2176xf32, #tpu.memory_space<vmem>>, vector<128x128xf32>
    tpu.vector_store %arg16[%c0_66, %c1664], %68 {strides = array<i32>} : memref<128x2176xf32, #tpu.memory_space<vmem>>, vector<128x128xf32>,
    %c14 = arith.constant 14 : index
    %c0_67 = arith.constant 0 : index
    %c0_68 = arith.constant 0 : index
    %70 = vector.load %arg15[%c14, %c0_67, %c0_68] : memref<32x8x128xf32, #tpu.memory_space<vmem>>, vector<16x8x128xf32>
    %71 = vector.shape_cast %70 : vector<16x8x128xf32> to vector<128x128xf32>
    %c0_69 = arith.constant 0 : index
    %c1792 = arith.constant 1792 : index
    %72 = vector.load %arg16[%c0_69, %c1792] : memref<128x2176xf32, #tpu.memory_space<vmem>>, vector<128x128xf32>
    tpu.vector_store %arg16[%c0_69, %c1792], %71 {strides = array<i32>} : memref<128x2176xf32, #tpu.memory_space<vmem>>, vector<128x128xf32>,
    %c15 = arith.constant 15 : index
    %c0_70 = arith.constant 0 : index
    %c0_71 = arith.constant 0 : index
    %73 = vector.load %arg15[%c15, %c0_70, %c0_71] : memref<32x8x128xf32, #tpu.memory_space<vmem>>, vector<16x8x128xf32>
    %74 = vector.shape_cast %73 : vector<16x8x128xf32> to vector<128x128xf32>
    %c0_72 = arith.constant 0 : index
    %c1920 = arith.constant 1920 : index
    %75 = vector.load %arg16[%c0_72, %c1920] : memref<128x2176xf32, #tpu.memory_space<vmem>>, vector<128x128xf32>
    tpu.vector_store %arg16[%c0_72, %c1920], %74 {strides = array<i32>} : memref<128x2176xf32, #tpu.memory_space<vmem>>, vector<128x128xf32>,
    %c16 = arith.constant 16 : index
    %c0_73 = arith.constant 0 : index
    %c0_74 = arith.constant 0 : index
    %76 = vector.load %arg15[%c16, %c0_73, %c0_74] : memref<32x8x128xf32, #tpu.memory_space<vmem>>, vector<16x8x128xf32>
    %77 = vector.shape_cast %76 : vector<16x8x128xf32> to vector<128x128xf32>
    %c0_75 = arith.constant 0 : index
    %c2048 = arith.constant 2048 : index
    %78 = vector.load %arg16[%c0_75, %c2048] : memref<128x2176xf32, #tpu.memory_space<vmem>>, vector<128x128xf32>
    tpu.vector_store %arg16[%c0_75, %c2048], %77 {strides = array<i32>} : memref<128x2176xf32, #tpu.memory_space<vmem>>, vector<128x128xf32>,
    %c0_76 = arith.constant 0 : index
    %c0_77 = arith.constant 0 : index
    %79 = vector.load %arg16[%c0_76, %c0_77] : memref<128x2176xf32, #tpu.memory_space<vmem>>, vector<128x2176xf32>
    %80 = arith.index_cast %c0_i32 : i32 to index
    %c0_78 = arith.constant 0 : index
    %c0_79 = arith.constant 0 : index
    %81 = vector.load %arg8[%80, %c0_78, %c0_79] : memref<2x2176x128xf32, #tpu.memory_space<vmem>>, vector<1x2176x128xf32>
    %82 = vector.shape_cast %81 : vector<1x2176x128xf32> to vector<2176x128xf32>
    %cst_80 = arith.constant dense<0.000000e+00> : vector<128x128xf32>
    %83 = tpu.matmul %79, %82, %cst_80 {dimension_numbers = #tpu.dot_dimension_numbers<[1], [0], [0], [1], [0, 0, 1, 1], [], []>} : vector<128x2176xf32>, vector<2176x128xf32>, vector<128x128xf32> -> vector<128x128xf32>
    %84 = arith.index_cast %c0_i32 : i32 to index
    %c0_81 = arith.constant 0 : index
    %c0_82 = arith.constant 0 : index
    %85 = vector.load %arg9[%84, %c0_81, %c0_82] : memref<2x1x128xf32, #tpu.memory_space<vmem>>, vector<1x1x128xf32>
    %86 = vector.shape_cast %85 : vector<1x1x128xf32> to vector<1x128xf32>
    %87 = vector.broadcast %86 : vector<1x128xf32> to vector<128x128xf32>
    %88 = arith.mulf %83, %87 : vector<128x128xf32>
    %89 = arith.index_cast %c0_i32 : i32 to index
    %c0_83 = arith.constant 0 : index
    %c0_84 = arith.constant 0 : index
    %90 = vector.load %arg10[%89, %c0_83, %c0_84] : memref<2x1x128xf32, #tpu.memory_space<vmem>>, vector<1x1x128xf32>
    %91 = vector.shape_cast %90 : vector<1x1x128xf32> to vector<1x128xf32>
    %92 = vector.broadcast %91 : vector<1x128xf32> to vector<128x128xf32>
    %93 = arith.addf %88, %92 : vector<128x128xf32>
    %94 = arith.addf %93, %9 : vector<128x128xf32>
    %cst_85 = arith.constant 0.000000e+00 : f32
    %95 = vector.broadcast %cst_85 : f32 to vector<128x128xf32>
    %96 = arith.maximumf %94, %95 : vector<128x128xf32>
    %c1_i32 = arith.constant 1 : i32
    %97 = arith.index_cast %c1_i32 : i32 to index
    %c0_86 = arith.constant 0 : index
    %c0_87 = arith.constant 0 : index
    %98 = vector.load %arg5[%97, %c0_86, %c0_87] : memref<2x128x128xf32, #tpu.memory_space<vmem>>, vector<1x128x128xf32>
    %99 = vector.shape_cast %98 : vector<1x128x128xf32> to vector<128x128xf32>
    %cst_88 = arith.constant dense<0.000000e+00> : vector<128x128xf32>
    %100 = tpu.matmul %96, %99, %cst_88 {dimension_numbers = #tpu.dot_dimension_numbers<[1], [0], [0], [1], [0, 0, 1, 1], [], []>} : vector<128x128xf32>, vector<128x128xf32>, vector<128x128xf32> -> vector<128x128xf32>
    %101 = arith.index_cast %c1_i32 : i32 to index
    %c0_89 = arith.constant 0 : index
    %c0_90 = arith.constant 0 : index
    %102 = vector.load %arg6[%101, %c0_89, %c0_90] : memref<2x1x128xf32, #tpu.memory_space<vmem>>, vector<1x1x128xf32>
    %103 = vector.shape_cast %102 : vector<1x1x128xf32> to vector<1x128xf32>
    %104 = vector.broadcast %103 : vector<1x128xf32> to vector<128x128xf32>
    %105 = arith.mulf %100, %104 : vector<128x128xf32>
    %106 = arith.index_cast %c1_i32 : i32 to index
    %c0_91 = arith.constant 0 : index
    %c0_92 = arith.constant 0 : index
    %107 = vector.load %arg7[%106, %c0_91, %c0_92] : memref<2x1x128xf32, #tpu.memory_space<vmem>>, vector<1x1x128xf32>
    %108 = vector.shape_cast %107 : vector<1x1x128xf32> to vector<1x128xf32>
    %109 = vector.broadcast %108 : vector<1x128xf32> to vector<128x128xf32>
    %110 = arith.addf %105, %109 : vector<128x128xf32>
    %cst_93 = arith.constant 0.000000e+00 : f32
    %111 = vector.broadcast %cst_93 : f32 to vector<128x128xf32>
    %112 = arith.maximumf %110, %111 : vector<128x128xf32>
    %113 = vector.shape_cast %112 : vector<128x128xf32> to vector<16x8x128xf32>
    %c8_94 = arith.constant 8 : index
    %c0_95 = arith.constant 0 : index
    %c0_96 = arith.constant 0 : index
    %114 = vector.load %arg15[%c8_94, %c0_95, %c0_96] : memref<32x8x128xf32, #tpu.memory_space<vmem>>, vector<16x8x128xf32>
    tpu.vector_store %arg15[%c8_94, %c0_95, %c0_96], %113 {strides = array<i32>} : memref<32x8x128xf32, #tpu.memory_space<vmem>>, vector<16x8x128xf32>,
    %c0_97 = arith.constant 0 : index
    %c0_98 = arith.constant 0 : index
    %c0_99 = arith.constant 0 : index
    %115 = vector.load %arg15[%c0_97, %c0_98, %c0_99] : memref<32x8x128xf32, #tpu.memory_space<vmem>>, vector<16x8x128xf32>
    %116 = vector.shape_cast %115 : vector<16x8x128xf32> to vector<128x128xf32>
    %c0_100 = arith.constant 0 : index
    %c0_101 = arith.constant 0 : index
    %117 = vector.load %arg16[%c0_100, %c0_101] : memref<128x2176xf32, #tpu.memory_space<vmem>>, vector<128x128xf32>
    tpu.vector_store %arg16[%c0_100, %c0_101], %116 {strides = array<i32>} : memref<128x2176xf32, #tpu.memory_space<vmem>>, vector<128x128xf32>,
    %c1_102 = arith.constant 1 : index
    %c0_103 = arith.constant 0 : index
    %c0_104 = arith.constant 0 : index
    %118 = vector.load %arg15[%c1_102, %c0_103, %c0_104] : memref<32x8x128xf32, #tpu.memory_space<vmem>>, vector<16x8x128xf32>
    %119 = vector.shape_cast %118 : vector<16x8x128xf32> to vector<128x128xf32>
    %c0_105 = arith.constant 0 : index
    %c128_106 = arith.constant 128 : index
    %120 = vector.load %arg16[%c0_105, %c128_106] : memref<128x2176xf32, #tpu.memory_space<vmem>>, vector<128x128xf32>
    tpu.vector_store %arg16[%c0_105, %c128_106], %119 {strides = array<i32>} : memref<128x2176xf32, #tpu.memory_space<vmem>>, vector<128x128xf32>,
    %c2_107 = arith.constant 2 : index
    %c0_108 = arith.constant 0 : index
    %c0_109 = arith.constant 0 : index
    %121 = vector.load %arg15[%c2_107, %c0_108, %c0_109] : memref<32x8x128xf32, #tpu.memory_space<vmem>>, vector<16x8x128xf32>
    %122 = vector.shape_cast %121 : vector<16x8x128xf32> to vector<128x128xf32>
    %c0_110 = arith.constant 0 : index
    %c256_111 = arith.constant 256 : index
    %123 = vector.load %arg16[%c0_110, %c256_111] : memref<128x2176xf32, #tpu.memory_space<vmem>>, vector<128x128xf32>
    tpu.vector_store %arg16[%c0_110, %c256_111], %122 {strides = array<i32>} : memref<128x2176xf32, #tpu.memory_space<vmem>>, vector<128x128xf32>,
    %c3_112 = arith.constant 3 : index
    %c0_113 = arith.constant 0 : index
    %c0_114 = arith.constant 0 : index
    %124 = vector.load %arg15[%c3_112, %c0_113, %c0_114] : memref<32x8x128xf32, #tpu.memory_space<vmem>>, vector<16x8x128xf32>
    %125 = vector.shape_cast %124 : vector<16x8x128xf32> to vector<128x128xf32>
    %c0_115 = arith.constant 0 : index
    %c384_116 = arith.constant 384 : index
    %126 = vector.load %arg16[%c0_115, %c384_116] : memref<128x2176xf32, #tpu.memory_space<vmem>>, vector<128x128xf32>
    tpu.vector_store %arg16[%c0_115, %c384_116], %125 {strides = array<i32>} : memref<128x2176xf32, #tpu.memory_space<vmem>>, vector<128x128xf32>,
    %c4_117 = arith.constant 4 : index
    %c0_118 = arith.constant 0 : index
    %c0_119 = arith.constant 0 : index
    %127 = vector.load %arg15[%c4_117, %c0_118, %c0_119] : memref<32x8x128xf32, #tpu.memory_space<vmem>>, vector<16x8x128xf32>
    %128 = vector.shape_cast %127 : vector<16x8x128xf32> to vector<128x128xf32>
    %c0_120 = arith.constant 0 : index
    %c512_121 = arith.constant 512 : index
    %129 = vector.load %arg16[%c0_120, %c512_121] : memref<128x2176xf32, #tpu.memory_space<vmem>>, vector<128x128xf32>
    tpu.vector_store %arg16[%c0_120, %c512_121], %128 {strides = array<i32>} : memref<128x2176xf32, #tpu.memory_space<vmem>>, vector<128x128xf32>,
    %c5_122 = arith.constant 5 : index
    %c0_123 = arith.constant 0 : index
    %c0_124 = arith.constant 0 : index
    %130 = vector.load %arg15[%c5_122, %c0_123, %c0_124] : memref<32x8x128xf32, #tpu.memory_space<vmem>>, vector<16x8x128xf32>
    %131 = vector.shape_cast %130 : vector<16x8x128xf32> to vector<128x128xf32>
    %c0_125 = arith.constant 0 : index
    %c640_126 = arith.constant 640 : index
    %132 = vector.load %arg16[%c0_125, %c640_126] : memref<128x2176xf32, #tpu.memory_space<vmem>>, vector<128x128xf32>
    tpu.vector_store %arg16[%c0_125, %c640_126], %131 {strides = array<i32>} : memref<128x2176xf32, #tpu.memory_space<vmem>>, vector<128x128xf32>,
    %c6_127 = arith.constant 6 : index
    %c0_128 = arith.constant 0 : index
    %c0_129 = arith.constant 0 : index
    %133 = vector.load %arg15[%c6_127, %c0_128, %c0_129] : memref<32x8x128xf32, #tpu.memory_space<vmem>>, vector<16x8x128xf32>
    %134 = vector.shape_cast %133 : vector<16x8x128xf32> to vector<128x128xf32>
    %c0_130 = arith.constant 0 : index
    %c768_131 = arith.constant 768 : index
    %135 = vector.load %arg16[%c0_130, %c768_131] : memref<128x2176xf32, #tpu.memory_space<vmem>>, vector<128x128xf32>
    tpu.vector_store %arg16[%c0_130, %c768_131], %134 {strides = array<i32>} : memref<128x2176xf32, #tpu.memory_space<vmem>>, vector<128x128xf32>,
    %c7_132 = arith.constant 7 : index
    %c0_133 = arith.constant 0 : index
    %c0_134 = arith.constant 0 : index
    %136 = vector.load %arg15[%c7_132, %c0_133, %c0_134] : memref<32x8x128xf32, #tpu.memory_space<vmem>>, vector<16x8x128xf32>
    %137 = vector.shape_cast %136 : vector<16x8x128xf32> to vector<128x128xf32>
    %c0_135 = arith.constant 0 : index
    %c896_136 = arith.constant 896 : index
    %138 = vector.load %arg16[%c0_135, %c896_136] : memref<128x2176xf32, #tpu.memory_space<vmem>>, vector<128x128xf32>
    tpu.vector_store %arg16[%c0_135, %c896_136], %137 {strides = array<i32>} : memref<128x2176xf32, #tpu.memory_space<vmem>>, vector<128x128xf32>,
    %c8_137 = arith.constant 8 : index
    %c0_138 = arith.constant 0 : index
    %c0_139 = arith.constant 0 : index
    %139 = vector.load %arg15[%c8_137, %c0_138, %c0_139] : memref<32x8x128xf32, #tpu.memory_space<vmem>>, vector<16x8x128xf32>
    %140 = vector.shape_cast %139 : vector<16x8x128xf32> to vector<128x128xf32>
    %c0_140 = arith.constant 0 : index
    %c1024_141 = arith.constant 1024 : index
    %141 = vector.load %arg16[%c0_140, %c1024_141] : memref<128x2176xf32, #tpu.memory_space<vmem>>, vector<128x128xf32>
    tpu.vector_store %arg16[%c0_140, %c1024_141], %140 {strides = array<i32>} : memref<128x2176xf32, #tpu.memory_space<vmem>>, vector<128x128xf32>,
    %c9_142 = arith.constant 9 : index
    %c0_143 = arith.constant 0 : index
    %c0_144 = arith.constant 0 : index
    %142 = vector.load %arg15[%c9_142, %c0_143, %c0_144] : memref<32x8x128xf32, #tpu.memory_space<vmem>>, vector<16x8x128xf32>
    %143 = vector.shape_cast %142 : vector<16x8x128xf32> to vector<128x128xf32>
    %c0_145 = arith.constant 0 : index
    %c1152_146 = arith.constant 1152 : index
    %144 = vector.load %arg16[%c0_145, %c1152_146] : memref<128x2176xf32, #tpu.memory_space<vmem>>, vector<128x128xf32>
    tpu.vector_store %arg16[%c0_145, %c1152_146], %143 {strides = array<i32>} : memref<128x2176xf32, #tpu.memory_space<vmem>>, vector<128x128xf32>,
    %c10_147 = arith.constant 10 : index
    %c0_148 = arith.constant 0 : index
    %c0_149 = arith.constant 0 : index
    %145 = vector.load %arg15[%c10_147, %c0_148, %c0_149] : memref<32x8x128xf32, #tpu.memory_space<vmem>>, vector<16x8x128xf32>
    %146 = vector.shape_cast %145 : vector<16x8x128xf32> to vector<128x128xf32>
    %c0_150 = arith.constant 0 : index
    %c1280_151 = arith.constant 1280 : index
    %147 = vector.load %arg16[%c0_150, %c1280_151] : memref<128x2176xf32, #tpu.memory_space<vmem>>, vector<128x128xf32>
    tpu.vector_store %arg16[%c0_150, %c1280_151], %146 {strides = array<i32>} : memref<128x2176xf32, #tpu.memory_space<vmem>>, vector<128x128xf32>,
    %c11_152 = arith.constant 11 : index
    %c0_153 = arith.constant 0 : index
    %c0_154 = arith.constant 0 : index
    %148 = vector.load %arg15[%c11_152, %c0_153, %c0_154] : memref<32x8x128xf32, #tpu.memory_space<vmem>>, vector<16x8x128xf32>
    %149 = vector.shape_cast %148 : vector<16x8x128xf32> to vector<128x128xf32>
    %c0_155 = arith.constant 0 : index
    %c1408_156 = arith.constant 1408 : index
    %150 = vector.load %arg16[%c0_155, %c1408_156] : memref<128x2176xf32, #tpu.memory_space<vmem>>, vector<128x128xf32>
    tpu.vector_store %arg16[%c0_155, %c1408_156], %149 {strides = array<i32>} : memref<128x2176xf32, #tpu.memory_space<vmem>>, vector<128x128xf32>,
    %c12_157 = arith.constant 12 : index
    %c0_158 = arith.constant 0 : index
    %c0_159 = arith.constant 0 : index
    %151 = vector.load %arg15[%c12_157, %c0_158, %c0_159] : memref<32x8x128xf32, #tpu.memory_space<vmem>>, vector<16x8x128xf32>
    %152 = vector.shape_cast %151 : vector<16x8x128xf32> to vector<128x128xf32>
    %c0_160 = arith.constant 0 : index
    %c1536_161 = arith.constant 1536 : index
    %153 = vector.load %arg16[%c0_160, %c1536_161] : memref<128x2176xf32, #tpu.memory_space<vmem>>, vector<128x128xf32>
    tpu.vector_store %arg16[%c0_160, %c1536_161], %152 {strides = array<i32>} : memref<128x2176xf32, #tpu.memory_space<vmem>>, vector<128x128xf32>,
    %c13_162 = arith.constant 13 : index
    %c0_163 = arith.constant 0 : index
    %c0_164 = arith.constant 0 : index
    %154 = vector.load %arg15[%c13_162, %c0_163, %c0_164] : memref<32x8x128xf32, #tpu.memory_space<vmem>>, vector<16x8x128xf32>
    %155 = vector.shape_cast %154 : vector<16x8x128xf32> to vector<128x128xf32>
    %c0_165 = arith.constant 0 : index
    %c1664_166 = arith.constant 1664 : index
    %156 = vector.load %arg16[%c0_165, %c1664_166] : memref<128x2176xf32, #tpu.memory_space<vmem>>, vector<128x128xf32>
    tpu.vector_store %arg16[%c0_165, %c1664_166], %155 {strides = array<i32>} : memref<128x2176xf32, #tpu.memory_space<vmem>>, vector<128x128xf32>,
    %c14_167 = arith.constant 14 : index
    %c0_168 = arith.constant 0 : index
    %c0_169 = arith.constant 0 : index
    %157 = vector.load %arg15[%c14_167, %c0_168, %c0_169] : memref<32x8x128xf32, #tpu.memory_space<vmem>>, vector<16x8x128xf32>
    %158 = vector.shape_cast %157 : vector<16x8x128xf32> to vector<128x128xf32>
    %c0_170 = arith.constant 0 : index
    %c1792_171 = arith.constant 1792 : index
    %159 = vector.load %arg16[%c0_170, %c1792_171] : memref<128x2176xf32, #tpu.memory_space<vmem>>, vector<128x128xf32>
    tpu.vector_store %arg16[%c0_170, %c1792_171], %158 {strides = array<i32>} : memref<128x2176xf32, #tpu.memory_space<vmem>>, vector<128x128xf32>,
    %c15_172 = arith.constant 15 : index
    %c0_173 = arith.constant 0 : index
    %c0_174 = arith.constant 0 : index
    %160 = vector.load %arg15[%c15_172, %c0_173, %c0_174] : memref<32x8x128xf32, #tpu.memory_space<vmem>>, vector<16x8x128xf32>
    %161 = vector.shape_cast %160 : vector<16x8x128xf32> to vector<128x128xf32>
    %c0_175 = arith.constant 0 : index
    %c1920_176 = arith.constant 1920 : index
    %162 = vector.load %arg16[%c0_175, %c1920_176] : memref<128x2176xf32, #tpu.memory_space<vmem>>, vector<128x128xf32>
    tpu.vector_store %arg16[%c0_175, %c1920_176], %161 {strides = array<i32>} : memref<128x2176xf32, #tpu.memory_space<vmem>>, vector<128x128xf32>,
    %c16_177 = arith.constant 16 : index
    %c0_178 = arith.constant 0 : index
    %c0_179 = arith.constant 0 : index
    %163 = vector.load %arg15[%c16_177, %c0_178, %c0_179] : memref<32x8x128xf32, #tpu.memory_space<vmem>>, vector<16x8x128xf32>
    %164 = vector.shape_cast %163 : vector<16x8x128xf32> to vector<128x128xf32>
    %c0_180 = arith.constant 0 : index
    %c2048_181 = arith.constant 2048 : index
    %165 = vector.load %arg16[%c0_180, %c2048_181] : memref<128x2176xf32, #tpu.memory_space<vmem>>, vector<128x128xf32>
    tpu.vector_store %arg16[%c0_180, %c2048_181], %164 {strides = array<i32>} : memref<128x2176xf32, #tpu.memory_space<vmem>>, vector<128x128xf32>,
    %c0_182 = arith.constant 0 : index
    %c0_183 = arith.constant 0 : index
    %166 = vector.load %arg16[%c0_182, %c0_183] : memref<128x2176xf32, #tpu.memory_space<vmem>>, vector<128x2176xf32>
    %167 = arith.index_cast %c1_i32 : i32 to index
    %c0_184 = arith.constant 0 : index
    %c0_185 = arith.constant 0 : index
    %168 = vector.load %arg8[%167, %c0_184, %c0_185] : memref<2x2176x128xf32, #tpu.memory_space<vmem>>, vector<1x2176x128xf32>
    %169 = vector.shape_cast %168 : vector<1x2176x128xf32> to vector<2176x128xf32>
    %cst_186 = arith.constant dense<0.000000e+00> : vector<128x128xf32>
    %170 = tpu.matmul %166, %169, %cst_186 {dimension_numbers = #tpu.dot_dimension_numbers<[1], [0], [0], [1], [0, 0, 1, 1], [], []>} : vector<128x2176xf32>, vector<2176x128xf32>, vector<128x128xf32> -> vector<128x128xf32>
    %171 = arith.index_cast %c1_i32 : i32 to index
    %c0_187 = arith.constant 0 : index
    %c0_188 = arith.constant 0 : index
    %172 = vector.load %arg9[%171, %c0_187, %c0_188] : memref<2x1x128xf32, #tpu.memory_space<vmem>>, vector<1x1x128xf32>
    %173 = vector.shape_cast %172 : vector<1x1x128xf32> to vector<1x128xf32>
    %174 = vector.broadcast %173 : vector<1x128xf32> to vector<128x128xf32>
    %175 = arith.mulf %170, %174 : vector<128x128xf32>
    %176 = arith.index_cast %c1_i32 : i32 to index
    %c0_189 = arith.constant 0 : index
    %c0_190 = arith.constant 0 : index
    %177 = vector.load %arg10[%176, %c0_189, %c0_190] : memref<2x1x128xf32, #tpu.memory_space<vmem>>, vector<1x1x128xf32>
    %178 = vector.shape_cast %177 : vector<1x1x128xf32> to vector<1x128xf32>
    %179 = vector.broadcast %178 : vector<1x128xf32> to vector<128x128xf32>
    %180 = arith.addf %175, %179 : vector<128x128xf32>
    %181 = arith.addf %180, %96 : vector<128x128xf32>
    %cst_191 = arith.constant 0.000000e+00 : f32
    %182 = vector.broadcast %cst_191 : f32 to vector<128x128xf32>
    %183 = arith.maximumf %181, %182 : vector<128x128xf32>
    %c2_i32 = arith.constant 2 : i32
    %c0_192 = arith.constant 0 : index
    %c0_193 = arith.constant 0 : index
    %184 = vector.load %arg11[%c0_192, %c0_193] : memref<128x128xf32, #tpu.memory_space<vmem>>, vector<128x128xf32>
    %cst_194 = arith.constant dense<0.000000e+00> : vector<128x128xf32>
    %185 = tpu.matmul %183, %184, %cst_194 {dimension_numbers = #tpu.dot_dimension_numbers<[1], [0], [0], [1], [0, 0, 1, 1], [], []>} : vector<128x128xf32>, vector<128x128xf32>, vector<128x128xf32> -> vector<128x128xf32>
    %c0_195 = arith.constant 0 : index
    %c0_196 = arith.constant 0 : index
    %186 = vector.load %arg12[%c0_195, %c0_196] : memref<1x128xf32, #tpu.memory_space<vmem>>, vector<1x128xf32>
    %187 = vector.broadcast %186 : vector<1x128xf32> to vector<128x128xf32>
    %188 = arith.addf %185, %187 : vector<128x128xf32>
    %189 = arith.mulf %188, %188 : vector<128x128xf32>
    %cst_197 = arith.constant dense<0.000000e+00> : vector<128xf32>
    %190 = vector.multi_reduction <add>, %189, %cst_197 [1] : vector<128x128xf32> to vector<128xf32>
    %191 = vector.shape_cast %190 : vector<128xf32> to vector<128x1xf32>
    %cst_198 = arith.constant dense<0.000000e+00> : vector<128x128xf32>
    %192 = tpu.matmul %188, %188, %cst_198 {dimension_numbers = #tpu.dot_dimension_numbers<[1], [1], [0], [0], [0, 0, 1, 0], [], []>} : vector<128x128xf32>, vector<128x128xf32>, vector<128x128xf32> -> vector<128x128xf32>
    %193 = tpu.transpose %191, [1, 0] : vector<128x1xf32> -> vector<1x128xf32>
    %194 = vector.broadcast %191 : vector<128x1xf32> to vector<128x128xf32>
    %195 = vector.broadcast %193 : vector<1x128xf32> to vector<128x128xf32>
    %196 = arith.addf %194, %195 : vector<128x128xf32>
    %cst_199 = arith.constant 2.000000e+00 : f32
    %197 = vector.broadcast %cst_199 : f32 to vector<128x128xf32>
    %198 = arith.mulf %197, %192 : vector<128x128xf32>
    %199 = arith.subf %196, %198 : vector<128x128xf32>
    %cst_200 = arith.constant 0.000000e+00 : f32
    %200 = vector.broadcast %cst_200 : f32 to vector<128x128xf32>
    %201 = arith.maximumf %199, %200 : vector<128x128xf32>
    %c0_201 = arith.constant 0 : index
    %202 = memref.load %arg13[%c0_201] : memref<1xf32, #tpu.memory_space<smem>>
    %203 = vector.broadcast %202 : f32 to vector<128x128xf32>
    %204 = arith.mulf %201, %203 : vector<128x128xf32>
    %205 = math.exp %204 : vector<128x128xf32>
    %c0_202 = arith.constant 0 : index
    %c0_203 = arith.constant 0 : index
    %c0_204 = arith.constant 0 : index
    %206 = vector.load %arg2[%c0_202, %c0_203, %c0_204] : memref<1x128x128xf32, #tpu.memory_space<vmem>>, vector<1x128x128xf32>
    %207 = vector.shape_cast %206 : vector<1x128x128xf32> to vector<128x128xf32>
    %208 = arith.mulf %205, %207 : vector<128x128xf32>
    %c0_205 = arith.constant 0 : index
    %c0_206 = arith.constant 0 : index
    %c0_207 = arith.constant 0 : index
    %209 = vector.load %arg14[%c0_205, %c0_206, %c0_207] : memref<1x128x128xf32, #tpu.memory_space<vmem>>, vector<1x128x128xf32>
    %210 = vector.shape_cast %209 : vector<1x128x128xf32> to vector<128x128xf32>
    %211 = vector.shape_cast %208 : vector<128x128xf32> to vector<1x128x128xf32>
    tpu.vector_store %arg14[%c0_205, %c0_206, %c0_207], %211 {strides = array<i32>} : memref<1x128x128xf32, #tpu.memory_space<vmem>>, vector<1x128x128xf32>,
    return
  }
  func.func @transform_0(%arg0: i32) -> (i32, i32, i32) {
    %c0_i32 = arith.constant 0 : i32
    %c0_i32_0 = arith.constant 0 : i32
    %c0_i32_1 = arith.constant 0 : i32
    return %arg0, %c0_i32, %c0_i32_0 : i32, i32, i32
  }
  func.func @transform_1(%arg0: i32) -> (i32, i32, i32) {
    %c0_i32 = arith.constant 0 : i32
    %c0_i32_0 = arith.constant 0 : i32
    %c0_i32_1 = arith.constant 0 : i32
    return %arg0, %c0_i32, %c0_i32_0 : i32, i32, i32
  }
  func.func @transform_2(%arg0: i32) -> (i32, i32) {
    %c0_i32 = arith.constant 0 : i32
    %c0_i32_0 = arith.constant 0 : i32
    %c0_i32_1 = arith.constant 0 : i32
    return %c0_i32, %c0_i32_0 : i32, i32
  }
  func.func @transform_3(%arg0: i32) -> (i32, i32) {
    %c0_i32 = arith.constant 0 : i32
    %c0_i32_0 = arith.constant 0 : i32
    %c0_i32_1 = arith.constant 0 : i32
    return %c0_i32, %c0_i32_0 : i32, i32
  }
  func.func @transform_4(%arg0: i32) -> (i32, i32, i32) {
    %c0_i32 = arith.constant 0 : i32
    %c0_i32_0 = arith.constant 0 : i32
    %c0_i32_1 = arith.constant 0 : i32
    %c0_i32_2 = arith.constant 0 : i32
    return %c0_i32, %c0_i32_0, %c0_i32_1 : i32, i32, i32
  }
  func.func @transform_5(%arg0: i32) -> (i32, i32, i32) {
    %c0_i32 = arith.constant 0 : i32
    %c0_i32_0 = arith.constant 0 : i32
    %c0_i32_1 = arith.constant 0 : i32
    %c0_i32_2 = arith.constant 0 : i32
    return %c0_i32, %c0_i32_0, %c0_i32_1 : i32, i32, i32
  }
  func.func @transform_6(%arg0: i32) -> (i32, i32, i32) {
    %c0_i32 = arith.constant 0 : i32
    %c0_i32_0 = arith.constant 0 : i32
    %c0_i32_1 = arith.constant 0 : i32
    %c0_i32_2 = arith.constant 0 : i32
    return %c0_i32, %c0_i32_0, %c0_i32_1 : i32, i32, i32
  }
  func.func @transform_7(%arg0: i32) -> (i32, i32, i32) {
    %c0_i32 = arith.constant 0 : i32
    %c0_i32_0 = arith.constant 0 : i32
    %c0_i32_1 = arith.constant 0 : i32
    %c0_i32_2 = arith.constant 0 : i32
    return %c0_i32, %c0_i32_0, %c0_i32_1 : i32, i32, i32
  }
  func.func @transform_8(%arg0: i32) -> (i32, i32, i32) {
    %c0_i32 = arith.constant 0 : i32
    %c0_i32_0 = arith.constant 0 : i32
    %c0_i32_1 = arith.constant 0 : i32
    %c0_i32_2 = arith.constant 0 : i32
    return %c0_i32, %c0_i32_0, %c0_i32_1 : i32, i32, i32
  }
  func.func @transform_9(%arg0: i32) -> (i32, i32, i32) {
    %c0_i32 = arith.constant 0 : i32
    %c0_i32_0 = arith.constant 0 : i32
    %c0_i32_1 = arith.constant 0 : i32
    %c0_i32_2 = arith.constant 0 : i32
    return %c0_i32, %c0_i32_0, %c0_i32_1 : i32, i32, i32
  }
  func.func @transform_10(%arg0: i32) -> (i32, i32) {
    %c0_i32 = arith.constant 0 : i32
    %c0_i32_0 = arith.constant 0 : i32
    %c0_i32_1 = arith.constant 0 : i32
    return %c0_i32, %c0_i32_0 : i32, i32
  }
  func.func @transform_11(%arg0: i32) -> (i32, i32) {
    %c0_i32 = arith.constant 0 : i32
    %c0_i32_0 = arith.constant 0 : i32
    %c0_i32_1 = arith.constant 0 : i32
    return %c0_i32, %c0_i32_0 : i32, i32
  }
  func.func @transform_12(%arg0: i32) -> i32 {
    %c0_i32 = arith.constant 0 : i32
    %c0_i32_0 = arith.constant 0 : i32
    return %c0_i32 : i32
  }
  func.func @transform_13(%arg0: i32) -> (i32, i32, i32) {
    %c0_i32 = arith.constant 0 : i32
    %c0_i32_0 = arith.constant 0 : i32
    %c0_i32_1 = arith.constant 0 : i32
    return %arg0, %c0_i32, %c0_i32_0 : i32, i32, i32
  }
}

</mosaic_0001>

<llo_original>
// kernel: tpu_custom_call.1
$region0: #{tpu_custom_call.1}
  #allocation0 [shape = 'u32[]', space=smem, size = 0x4, offset = 0x4, fixed_abs, tag = 'smem constant byte address 0x4 - core index']
  #allocation1 [shape = 'u32[144,128]{1,0:T(1,128)}', space=vmem, size = 0x12000, scoped, tag = 'internal scratch']
  #allocation2 [shape = 'f32[32,8,128]{2,1,0:T(8,128)}', space=vmem, size = 0x20000, scoped, tag = 'scratch operand']
  #allocation3 [shape = 'f32[128,2176]{1,0:T(8,128)}', space=vmem, size = 0x110000, scoped, tag = 'scratch operand']
  #allocation4 [shape = 'f32[1]{0:T(128)S(6)}', space=smem, size = 0x200, scoped, tag = 'scoped memory for tpu_custom_call.1']
  %s0 = inlined_call_operand.vmem [shape: f32[2,128,4], index: 0, kind: input, shape index: {}]
  %s1 = inlined_call_operand.hbm [shape: f32[2,128,128], index: 1, kind: input, shape index: {}]
  %s2 = inlined_call_operand.hbm [shape: f32[4,128], index: 2, kind: input, shape index: {}]
  %s3 = inlined_call_operand.hbm [shape: f32[1,128], index: 3, kind: input, shape index: {}]
  %s4 = inlined_call_operand.hbm [shape: f32[2,128,128], index: 4, kind: input, shape index: {}]
  %s5 = inlined_call_operand.hbm [shape: f32[2,1,128], index: 5, kind: input, shape index: {}]
  %s6 = inlined_call_operand.hbm [shape: f32[2,1,128], index: 6, kind: input, shape index: {}]
  %s7 = inlined_call_operand.hbm [shape: f32[2,2176,128], index: 7, kind: input, shape index: {}]
  %s8 = inlined_call_operand.hbm [shape: f32[2,1,128], index: 8, kind: input, shape index: {}]
  %s9 = inlined_call_operand.hbm [shape: f32[2,1,128], index: 9, kind: input, shape index: {}]
  %s10 = inlined_call_operand.hbm [shape: f32[128,128], index: 10, kind: input, shape index: {}]
  %s11 = inlined_call_operand.hbm [shape: f32[1,128], index: 11, kind: input, shape index: {}]
  %s12 = inlined_call_operand.<no memory space> [shape: f32[1], index: 12, kind: input, shape index: {}]
  %s13 = inlined_call_operand.hbm [shape: f32[2,128,128], index: 13, kind: output, shape index: {}]
  %s14 = sld [smem:[#allocation0]]
  $region129: #{tpu_custom_call.1} parent=0
    _
  %s16 = ssub.s32 1, %s14
  %s17 = scalar_select 0, %s16, %s14
  %18 = sst [smem:[#allocation4]] %s12
  $region1: #{tpu_custom_call.1} parent=0
    #allocation5 [shape = 'u8[131072]{0}', space=vmem, size = 0x20000, scoped, tag = 'input window, operand 1']
    #allocation6 [shape = 's32[2]{0}', space=sflag, size = 0x8, scoped, tag = 'scoped memory for tpu_custom_call.1']
    #allocation7 [shape = 's32[2]{0}', space=sflag, size = 0x8, scoped, tag = 'scoped memory for tpu_custom_call.1']
    #allocation8 [shape = 'u8[2048]{0}', space=vmem, size = 0x800, scoped, tag = 'input window, operand 2, single buffered']
    #allocation9 [shape = 's32[1]{0}', space=sflag, size = 0x4, scoped, tag = 'scoped memory for tpu_custom_call.1']
    #allocation10 [shape = 'u8[512]{0}', space=vmem, size = 0x400, scoped, tag = 'input window, operand 3, single buffered']
    #allocation11 [shape = 'u8[131072]{0}', space=vmem, size = 0x20000, scoped, tag = 'input window, operand 4, single buffered']
    #allocation12 [shape = 's32[1]{0}', space=sflag, size = 0x4, scoped, tag = 'scoped memory for tpu_custom_call.1']
    #allocation13 [shape = 'u8[1024]{0}', space=vmem, size = 0x400, scoped, tag = 'input window, operand 5, single buffered']
    #allocation14 [shape = 'u8[1024]{0}', space=vmem, size = 0x400, scoped, tag = 'input window, operand 6, single buffered']
    #allocation15 [shape = 's32[1]{0}', space=sflag, size = 0x4, scoped, tag = 'scoped memory for tpu_custom_call.1']
    #allocation16 [shape = 'u8[2228224]{0}', space=vmem, size = 0x220000, scoped, tag = 'input window, operand 7, single buffered']
    #allocation17 [shape = 'u8[1024]{0}', space=vmem, size = 0x400, scoped, tag = 'input window, operand 8, single buffered']
    #allocation18 [shape = 's32[1]{0}', space=sflag, size = 0x4, scoped, tag = 'scoped memory for tpu_custom_call.1']
    #allocation19 [shape = 'u8[1024]{0}', space=vmem, size = 0x400, scoped, tag = 'input window, operand 9, single buffered']
    #allocation20 [shape = 'u8[65536]{0}', space=vmem, size = 0x10000, scoped, tag = 'input window, operand 10, single buffered']
    #allocation21 [shape = 's32[1]{0}', space=sflag, size = 0x4, scoped, tag = 'scoped memory for tpu_custom_call.1']
    #allocation22 [shape = 'u8[512]{0}', space=vmem, size = 0x400, scoped, tag = 'input window, operand 11, single buffered']
    #allocation23 [shape = 'u8[131072]{0}', space=vmem, size = 0x20000, scoped, tag = 'output window, operand 0']
    %19 = vsyncpa [#allocation6], 0
    %s20 = scalar_lea.sflag [#allocation6], 1
    %21 = vsyncpa %s20, 0
    %22 = vsyncpa [#allocation9], 0
    %23 = vsyncpa [#allocation12], 0
    %24 = vsyncpa [#allocation15], 0
    %25 = vsyncpa [#allocation18], 0
    %26 = vsyncpa [#allocation21], 0
    %27 = vsyncpa [#allocation7], 0
    %s28 = scalar_lea.sflag [#allocation7], 1
    %29 = vsyncpa %s28, 0
    loop: start=0, step=1, limit=4
    $region2: #{tpu_custom_call.1} parent=1 // loop_pre_header
      _
    $region3: #{tpu_custom_call.1} parent=1 // loop_header
      %s31 = sphi 0, %s35
      %p32 = scmp.ge.s32.totalorder %s31, 4
      %s41 = sphi 0, %s43
      %s44 = sphi 0, %s41
      %s45 = sphi 0, %s44
      %s61 = sphi 0, %s45
      %s67 = sphi 0, %s69
      %s70 = sphi 0, %s67
      %s71 = sphi 0, %s70
      %s87 = sphi 0, %s71
      %s91 = sphi 0, %s91
      %s93 = sphi 0, %s91
      %s94 = sphi 0, %s93
      %s108 = sphi 0, %s94
      %s112 = sphi 0, %s112
      %s114 = sphi 0, %s112
      %s115 = sphi 0, %s114
      %s129 = sphi 0, %s115
      %s133 = sphi 0, %s133
      %s135 = sphi 0, %s133
      %s136 = sphi 0, %s135
      %s150 = sphi 0, %s136
      %s154 = sphi 0, %s154
      %s156 = sphi 0, %s154
      %s157 = sphi 0, %s156
      %s171 = sphi 0, %s157
      %s175 = sphi 0, %s175
      %s177 = sphi 0, %s175
      %s178 = sphi 0, %s177
      %s192 = sphi 0, %s178
      %s196 = sphi 0, %s196
      %s198 = sphi 0, %s196
      %s199 = sphi 0, %s198
      %s213 = sphi 0, %s199
      %s217 = sphi 0, %s217
      %s219 = sphi 0, %s217
      %s220 = sphi 0, %s219
      %s234 = sphi 0, %s220
      %s238 = sphi 0, %s238
      %s240 = sphi 0, %s238
      %s241 = sphi 0, %s240
      %s255 = sphi 0, %s241
      %s259 = sphi 0, %s259
      %s261 = sphi 0, %s259
      %s262 = sphi 0, %s261
      %s276 = sphi 0, %s262
      %s280 = sphi 0, %s280
      %s282 = sphi 0, %s280
      %s283 = sphi 0, %s282
      %s297 = sphi 0, %s283
      %s301 = sphi 0, %s301
      %s303 = sphi 0, %s301
      %s304 = sphi 0, %s303
      %s318 = sphi 0, %s304
      %s324 = sphi 0, %s326
      %s327 = sphi 0, %s324
      %s328 = sphi 0, %s327
      %s344 = sphi 0, %s328
    $region4: #{tpu_custom_call.1} parent=1 // loop_header_branch
      %34 = sbr.rel (%p32) target = $region8
    $region5: #{tpu_custom_call.1} parent=1 // loop_body
      %s36 = ssub.s32 %s31, 1
      %s37 = ssub.s32 %s31, 2
      %s38 = sadd.s32 %s31, 1
      %s39 = ssub.s32 %s31, %s38
      %p40 = scmp.eq.s32.totalorder %s39, 0
      %s42 = sadd.s32 %s41, 1
      %s43 = scalar_select %p40, %s41, %s42
      %p46 = pneg %p40
      %p47 = scmp.eq.s32.totalorder %s31, 1
      %p48 = por %p46, %p47
      %p49 = scmp.ne.s32.totalorder %s41, %s44
      %p50 = scmp.eq.s32.totalorder %s31, 0
      %p51 = por %p49, %p50
      %p52 = scmp.ne.s32.totalorder %s41, %s44
      %p53 = scmp.eq.s32.totalorder %s36, 1
      %p54 = por %p52, %p53
      %p55 = scmp.ne.s32.totalorder %s44, %s45
      %p56 = scmp.eq.s32.totalorder %s36, 0
      %p57 = por %p55, %p56
      %p58 = scmp.ne.s32.totalorder %s44, %s45
      %p59 = scmp.eq.s32.totalorder %s37, 1
      %p60 = por %p58, %p59
      %p62 = scmp.ne.s32.totalorder %s45, %s61
      %p63 = scmp.eq.s32.totalorder %s37, 0
      %p64 = por %p62, %p63
      %s65 = ssub.s32 %s31, %s38
      %p66 = scmp.eq.s32.totalorder %s65, 0
      %s68 = sadd.s32 %s67, 1
      %s69 = scalar_select %p66, %s67, %s68
      %p72 = pneg %p66
      %p73 = scmp.eq.s32.totalorder %s31, 1
      %p74 = por %p72, %p73
      %p75 = scmp.ne.s32.totalorder %s67, %s70
      %p76 = scmp.eq.s32.totalorder %s31, 0
      %p77 = por %p75, %p76
      %p78 = scmp.ne.s32.totalorder %s67, %s70
      %p79 = scmp.eq.s32.totalorder %s36, 1
      %p80 = por %p78, %p79
      %p81 = scmp.ne.s32.totalorder %s70, %s71
      %p82 = scmp.eq.s32.totalorder %s36, 0
      %p83 = por %p81, %p82
      %p84 = scmp.ne.s32.totalorder %s70, %s71
      %p85 = scmp.eq.s32.totalorder %s37, 1
      %p86 = por %p84, %p85
      %p88 = scmp.ne.s32.totalorder %s71, %s87
      %p89 = scmp.eq.s32.totalorder %s37, 0
      %p90 = por %p88, %p89
      %s92 = sadd.s32 %s91, 1
      %p95 = scmp.eq.s32.totalorder %s31, 1
      %p96 = scmp.ne.s32.totalorder %s91, %s93
      %p97 = scmp.eq.s32.totalorder %s31, 0
      %p98 = por %p96, %p97
      %p99 = scmp.ne.s32.totalorder %s91, %s93
      %p100 = scmp.eq.s32.totalorder %s36, 1
      %p101 = por %p99, %p100
      %p102 = scmp.ne.s32.totalorder %s93, %s94
      %p103 = scmp.eq.s32.totalorder %s36, 0
      %p104 = por %p102, %p103
      %p105 = scmp.ne.s32.totalorder %s93, %s94
      %p106 = scmp.eq.s32.totalorder %s37, 1
      %p107 = por %p105, %p106
      %p109 = scmp.ne.s32.totalorder %s94, %s108
      %p110 = scmp.eq.s32.totalorder %s37, 0
      %p111 = por %p109, %p110
      %s113 = sadd.s32 %s112, 1
      %p116 = scmp.eq.s32.totalorder %s31, 1
      %p117 = scmp.ne.s32.totalorder %s112, %s114
      %p118 = scmp.eq.s32.totalorder %s31, 0
      %p119 = por %p117, %p118
      %p120 = scmp.ne.s32.totalorder %s112, %s114
      %p121 = scmp.eq.s32.totalorder %s36, 1
      %p122 = por %p120, %p121
      %p123 = scmp.ne.s32.totalorder %s114, %s115
      %p124 = scmp.eq.s32.totalorder %s36, 0
      %p125 = por %p123, %p124
      %p126 = scmp.ne.s32.totalorder %s114, %s115
      %p127 = scmp.eq.s32.totalorder %s37, 1
      %p128 = por %p126, %p127
      %p130 = scmp.ne.s32.totalorder %s115, %s129
      %p131 = scmp.eq.s32.totalorder %s37, 0
      %p132 = por %p130, %p131
      %s134 = sadd.s32 %s133, 1
      %p137 = scmp.eq.s32.totalorder %s31, 1
      %p138 = scmp.ne.s32.totalorder %s133, %s135
      %p139 = scmp.eq.s32.totalorder %s31, 0
      %p140 = por %p138, %p139
      %p141 = scmp.ne.s32.totalorder %s133, %s135
      %p142 = scmp.eq.s32.totalorder %s36, 1
      %p143 = por %p141, %p142
      %p144 = scmp.ne.s32.totalorder %s135, %s136
      %p145 = scmp.eq.s32.totalorder %s36, 0
      %p146 = por %p144, %p145
      %p147 = scmp.ne.s32.totalorder %s135, %s136
      %p148 = scmp.eq.s32.totalorder %s37, 1
      %p149 = por %p147, %p148
      %p151 = scmp.ne.s32.totalorder %s136, %s150
      %p152 = scmp.eq.s32.totalorder %s37, 0
      %p153 = por %p151, %p152
      %s155 = sadd.s32 %s154, 1
      %p158 = scmp.eq.s32.totalorder %s31, 1
      %p159 = scmp.ne.s32.totalorder %s154, %s156
      %p160 = scmp.eq.s32.totalorder %s31, 0
      %p161 = por %p159, %p160
      %p162 = scmp.ne.s32.totalorder %s154, %s156
      %p163 = scmp.eq.s32.totalorder %s36, 1
      %p164 = por %p162, %p163
      %p165 = scmp.ne.s32.totalorder %s156, %s157
      %p166 = scmp.eq.s32.totalorder %s36, 0
      %p167 = por %p165, %p166
      %p168 = scmp.ne.s32.totalorder %s156, %s157
      %p169 = scmp.eq.s32.totalorder %s37, 1
      %p170 = por %p168, %p169
      %p172 = scmp.ne.s32.totalorder %s157, %s171
      %p173 = scmp.eq.s32.totalorder %s37, 0
      %p174 = por %p172, %p173
      %s176 = sadd.s32 %s175, 1
      %p179 = scmp.eq.s32.totalorder %s31, 1
      %p180 = scmp.ne.s32.totalorder %s175, %s177
      %p181 = scmp.eq.s32.totalorder %s31, 0
      %p182 = por %p180, %p181
      %p183 = scmp.ne.s32.totalorder %s175, %s177
      %p184 = scmp.eq.s32.totalorder %s36, 1
      %p185 = por %p183, %p184
      %p186 = scmp.ne.s32.totalorder %s177, %s178
      %p187 = scmp.eq.s32.totalorder %s36, 0
      %p188 = por %p186, %p187
      %p189 = scmp.ne.s32.totalorder %s177, %s178
      %p190 = scmp.eq.s32.totalorder %s37, 1
      %p191 = por %p189, %p190
      %p193 = scmp.ne.s32.totalorder %s178, %s192
      %p194 = scmp.eq.s32.totalorder %s37, 0
      %p195 = por %p193, %p194
      %s197 = sadd.s32 %s196, 1
      %p200 = scmp.eq.s32.totalorder %s31, 1
      %p201 = scmp.ne.s32.totalorder %s196, %s198
      %p202 = scmp.eq.s32.totalorder %s31, 0
      %p203 = por %p201, %p202
      %p204 = scmp.ne.s32.totalorder %s196, %s198
      %p205 = scmp.eq.s32.totalorder %s36, 1
      %p206 = por %p204, %p205
      %p207 = scmp.ne.s32.totalorder %s198, %s199
      %p208 = scmp.eq.s32.totalorder %s36, 0
      %p209 = por %p207, %p208
      %p210 = scmp.ne.s32.totalorder %s198, %s199
      %p211 = scmp.eq.s32.totalorder %s37, 1
      %p212 = por %p210, %p211
      %p214 = scmp.ne.s32.totalorder %s199, %s213
      %p215 = scmp.eq.s32.totalorder %s37, 0
      %p216 = por %p214, %p215
      %s218 = sadd.s32 %s217, 1
      %p221 = scmp.eq.s32.totalorder %s31, 1
      %p222 = scmp.ne.s32.totalorder %s217, %s219
      %p223 = scmp.eq.s32.totalorder %s31, 0
      %p224 = por %p222, %p223
      %p225 = scmp.ne.s32.totalorder %s217, %s219
      %p226 = scmp.eq.s32.totalorder %s36, 1
      %p227 = por %p225, %p226
      %p228 = scmp.ne.s32.totalorder %s219, %s220
      %p229 = scmp.eq.s32.totalorder %s36, 0
      %p230 = por %p228, %p229
      %p231 = scmp.ne.s32.totalorder %s219, %s220
      %p232 = scmp.eq.s32.totalorder %s37, 1
      %p233 = por %p231, %p232
      %p235 = scmp.ne.s32.totalorder %s220, %s234
      %p236 = scmp.eq.s32.totalorder %s37, 0
      %p237 = por %p235, %p236
      %s239 = sadd.s32 %s238, 1
      %p242 = scmp.eq.s32.totalorder %s31, 1
      %p243 = scmp.ne.s32.totalorder %s238, %s240
      %p244 = scmp.eq.s32.totalorder %s31, 0
      %p245 = por %p243, %p244
      %p246 = scmp.ne.s32.totalorder %s238, %s240
      %p247 = scmp.eq.s32.totalorder %s36, 1
      %p248 = por %p246, %p247
      %p249 = scmp.ne.s32.totalorder %s240, %s241
      %p250 = scmp.eq.s32.totalorder %s36, 0
      %p251 = por %p249, %p250
      %p252 = scmp.ne.s32.totalorder %s240, %s241
      %p253 = scmp.eq.s32.totalorder %s37, 1
      %p254 = por %p252, %p253
      %p256 = scmp.ne.s32.totalorder %s241, %s255
      %p257 = scmp.eq.s32.totalorder %s37, 0
      %p258 = por %p256, %p257
      %s260 = sadd.s32 %s259, 1
      %p263 = scmp.eq.s32.totalorder %s31, 1
      %p264 = scmp.ne.s32.totalorder %s259, %s261
      %p265 = scmp.eq.s32.totalorder %s31, 0
      %p266 = por %p264, %p265
      %p267 = scmp.ne.s32.totalorder %s259, %s261
      %p268 = scmp.eq.s32.totalorder %s36, 1
      %p269 = por %p267, %p268
      %p270 = scmp.ne.s32.totalorder %s261, %s262
      %p271 = scmp.eq.s32.totalorder %s36, 0
      %p272 = por %p270, %p271
      %p273 = scmp.ne.s32.totalorder %s261, %s262
      %p274 = scmp.eq.s32.totalorder %s37, 1
      %p275 = por %p273, %p274
      %p277 = scmp.ne.s32.totalorder %s262, %s276
      %p278 = scmp.eq.s32.totalorder %s37, 0
      %p279 = por %p277, %p278
      %s281 = sadd.s32 %s280, 1
      %p284 = scmp.eq.s32.totalorder %s31, 1
      %p285 = scmp.ne.s32.totalorder %s280, %s282
      %p286 = scmp.eq.s32.totalorder %s31, 0
      %p287 = por %p285, %p286
      %p288 = scmp.ne.s32.totalorder %s280, %s282
      %p289 = scmp.eq.s32.totalorder %s36, 1
      %p290 = por %p288, %p289
      %p291 = scmp.ne.s32.totalorder %s282, %s283
      %p292 = scmp.eq.s32.totalorder %s36, 0
      %p293 = por %p291, %p292
      %p294 = scmp.ne.s32.totalorder %s282, %s283
      %p295 = scmp.eq.s32.totalorder %s37, 1
      %p296 = por %p294, %p295
      %p298 = scmp.ne.s32.totalorder %s283, %s297
      %p299 = scmp.eq.s32.totalorder %s37, 0
      %p300 = por %p298, %p299
      %s302 = sadd.s32 %s301, 1
      %p305 = scmp.eq.s32.totalorder %s31, 1
      %p306 = scmp.ne.s32.totalorder %s301, %s303
      %p307 = scmp.eq.s32.totalorder %s31, 0
      %p308 = por %p306, %p307
      %p309 = scmp.ne.s32.totalorder %s301, %s303
      %p310 = scmp.eq.s32.totalorder %s36, 1
      %p311 = por %p309, %p310
      %p312 = scmp.ne.s32.totalorder %s303, %s304
      %p313 = scmp.eq.s32.totalorder %s36, 0
      %p314 = por %p312, %p313
      %p315 = scmp.ne.s32.totalorder %s303, %s304
      %p316 = scmp.eq.s32.totalorder %s37, 1
      %p317 = por %p315, %p316
      %p319 = scmp.ne.s32.totalorder %s304, %s318
      %p320 = scmp.eq.s32.totalorder %s37, 0
      %p321 = por %p319, %p320
      %s322 = ssub.s32 %s31, %s38
      %p323 = scmp.eq.s32.totalorder %s322, 0
      %s325 = sadd.s32 %s324, 1
      %s326 = scalar_select %p323, %s324, %s325
      %p329 = pneg %p323
      %p330 = scmp.eq.s32.totalorder %s31, 1
      %p331 = por %p329, %p330
      %p332 = scmp.ne.s32.totalorder %s324, %s327
      %p333 = scmp.eq.s32.totalorder %s31, 0
      %p334 = por %p332, %p333
      %p335 = scmp.ne.s32.totalorder %s324, %s327
      %p336 = scmp.eq.s32.totalorder %s36, 1
      %p337 = por %p335, %p336
      %p338 = scmp.ne.s32.totalorder %s327, %s328
      %p339 = scmp.eq.s32.totalorder %s36, 0
      %p340 = por %p338, %p339
      %p341 = scmp.ne.s32.totalorder %s327, %s328
      %p342 = scmp.eq.s32.totalorder %s37, 1
      %p343 = por %p341, %p342
      %p345 = scmp.ne.s32.totalorder %s328, %s344
      %p346 = scmp.eq.s32.totalorder %s37, 0
      %p347 = por %p345, %p346
      %p348 = scmp.le.s32.totalorder 1, %s31
      %p349 = scmp.lt.s32.totalorder %s31, 3
      %p350 = pnand %p348, %p349
      %p351 = pneg %p350
      // Predicated region
      $region9: #{tpu_custom_call.1} parent=5 // pred_check
        _
      $region10: #{tpu_custom_call.1} parent=5 // pred_check_branch
        %353 = sbr.rel (%p350) target = $region12
      $region11: #{tpu_custom_call.1} parent=5 // pred_region
        %s354 = ssub.s32 %s31, 1
        // Predicated region
        $region13: #{tpu_custom_call.1} parent=11 // pred_check
          %p355 = pneg %p104
        $region14: #{tpu_custom_call.1} parent=11 // pred_check_branch
          %357 = sbr.rel (%p355) target = $region16
        $region15: #{tpu_custom_call.1} parent=11 // pred_region
          %s359 = ssub.s32 64, 64
          %360 = vsyncadd [#allocation9], %s359
          %s362 = sshll.u32 [#allocation8], 4
          %s363 = int_to_ptr.vmem [resolvable:$true] %s362
          %365 = dma.hbm_to_vmem [thread:$0]  %s2, 64, %s363, [#allocation9]
        $region16: #{tpu_custom_call.1} parent=11 // pred_fallthru
          _
        // Predicated region
        $region17: #{tpu_custom_call.1} parent=11 // pred_check
          %p366 = pneg %p125
        $region18: #{tpu_custom_call.1} parent=11 // pred_check_branch
          %368 = sbr.rel (%p366) target = $region20
        $region19: #{tpu_custom_call.1} parent=11 // pred_region
          %s370 = ssub.s32 16, 16
          %371 = vsyncadd [#allocation9], %s370
          %s373 = sshll.u32 [#allocation10], 4
          %s374 = int_to_ptr.vmem [resolvable:$true] %s373
          %376 = dma.hbm_to_vmem [thread:$0]  %s3, 16, %s374, [#allocation9]
        $region20: #{tpu_custom_call.1} parent=11 // pred_fallthru
          _
        // Predicated region
        $region21: #{tpu_custom_call.1} parent=11 // pred_check
          %p377 = pneg %p146
        $region22: #{tpu_custom_call.1} parent=11 // pred_check_branch
          %379 = sbr.rel (%p377) target = $region24
        $region23: #{tpu_custom_call.1} parent=11 // pred_region
          %s381 = ssub.s32 4096, 4096
          %382 = vsyncadd [#allocation12], %s381
          %s383 = sshll.u32 [#allocation11], 4
          %s384 = int_to_ptr.vmem [resolvable:$true] %s383
          %389 = dma.hbm_to_vmem [thread:$0]  %s4, 4096, %s384, [#allocation12], 128, 128, 8
        $region24: #{tpu_custom_call.1} parent=11 // pred_fallthru
          _
        // Predicated region
        $region25: #{tpu_custom_call.1} parent=11 // pred_check
          %p390 = pneg %p167
        $region26: #{tpu_custom_call.1} parent=11 // pred_check_branch
          %392 = sbr.rel (%p390) target = $region28
        $region27: #{tpu_custom_call.1} parent=11 // pred_region
          %s394 = ssub.s32 32, 32
          %395 = vsyncadd [#allocation12], %s394
          %s396 = sshll.u32 [#allocation13], 4
          %s397 = int_to_ptr.vmem [resolvable:$true] %s396
          %402 = dma.hbm_to_vmem [thread:$0]  %s5, 32, %s397, [#allocation12], 16, 16, 1
        $region28: #{tpu_custom_call.1} parent=11 // pred_fallthru
          _
        // Predicated region
        $region29: #{tpu_custom_call.1} parent=11 // pred_check
          %p403 = pneg %p188
        $region30: #{tpu_custom_call.1} parent=11 // pred_check_branch
          %405 = sbr.rel (%p403) target = $region32
        $region31: #{tpu_custom_call.1} parent=11 // pred_region
          %s407 = ssub.s32 32, 32
          %408 = vsyncadd [#allocation15], %s407
          %s409 = sshll.u32 [#allocation14], 4
          %s410 = int_to_ptr.vmem [resolvable:$true] %s409
          %415 = dma.hbm_to_vmem [thread:$0]  %s6, 32, %s410, [#allocation15], 16, 16, 1
        $region32: #{tpu_custom_call.1} parent=11 // pred_fallthru
          _
        // Predicated region
        $region33: #{tpu_custom_call.1} parent=11 // pred_check
          %p416 = pneg %p209
        $region34: #{tpu_custom_call.1} parent=11 // pred_check_branch
          %418 = sbr.rel (%p416) target = $region36
        $region35: #{tpu_custom_call.1} parent=11 // pred_region
          %s420 = ssub.s32 69632, 69632
          %421 = vsyncadd [#allocation15], %s420
          %s422 = sshll.u32 [#allocation16], 4
          %s423 = int_to_ptr.vmem [resolvable:$true] %s422
          %428 = dma.hbm_to_vmem [thread:$0]  %s7, 69632, %s423, [#allocation15], 128, 128, 8
        $region36: #{tpu_custom_call.1} parent=11 // pred_fallthru
          _
        // Predicated region
        $region37: #{tpu_custom_call.1} parent=11 // pred_check
          %p429 = pneg %p230
        $region38: #{tpu_custom_call.1} parent=11 // pred_check_branch
          %431 = sbr.rel (%p429) target = $region40
        $region39: #{tpu_custom_call.1} parent=11 // pred_region
          %s433 = ssub.s32 32, 32
          %434 = vsyncadd [#allocation18], %s433
          %s435 = sshll.u32 [#allocation17], 4
          %s436 = int_to_ptr.vmem [resolvable:$true] %s435
          %441 = dma.hbm_to_vmem [thread:$0]  %s8, 32, %s436, [#allocation18], 16, 16, 1
        $region40: #{tpu_custom_call.1} parent=11 // pred_fallthru
          _
        // Predicated region
        $region41: #{tpu_custom_call.1} parent=11 // pred_check
          %p442 = pneg %p251
        $region42: #{tpu_custom_call.1} parent=11 // pred_check_branch
          %444 = sbr.rel (%p442) target = $region44
        $region43: #{tpu_custom_call.1} parent=11 // pred_region
          %s446 = ssub.s32 32, 32
          %447 = vsyncadd [#allocation18], %s446
          %s448 = sshll.u32 [#allocation19], 4
          %s449 = int_to_ptr.vmem [resolvable:$true] %s448
          %454 = dma.hbm_to_vmem [thread:$0]  %s9, 32, %s449, [#allocation18], 16, 16, 1
        $region44: #{tpu_custom_call.1} parent=11 // pred_fallthru
          _
        // Predicated region
        $region45: #{tpu_custom_call.1} parent=11 // pred_check
          %p455 = pneg %p272
        $region46: #{tpu_custom_call.1} parent=11 // pred_check_branch
          %457 = sbr.rel (%p455) target = $region48
        $region47: #{tpu_custom_call.1} parent=11 // pred_region
          %s459 = ssub.s32 2048, 2048
          %460 = vsyncadd [#allocation21], %s459
          %s461 = sshll.u32 [#allocation20], 4
          %s462 = int_to_ptr.vmem [resolvable:$true] %s461
          %467 = dma.hbm_to_vmem [thread:$0]  %s10, 2048, %s462, [#allocation21], 128, 128, 8
        $region48: #{tpu_custom_call.1} parent=11 // pred_fallthru
          _
        // Predicated region
        $region49: #{tpu_custom_call.1} parent=11 // pred_check
          %p468 = pneg %p293
        $region50: #{tpu_custom_call.1} parent=11 // pred_check_branch
          %470 = sbr.rel (%p468) target = $region52
        $region51: #{tpu_custom_call.1} parent=11 // pred_region
          %s472 = ssub.s32 16, 16
          %473 = vsyncadd [#allocation21], %s472
          %s475 = sshll.u32 [#allocation22], 4
          %s476 = int_to_ptr.vmem [resolvable:$true] %s475
          %478 = dma.hbm_to_vmem [thread:$0]  %s11, 16, %s476, [#allocation21]
        $region52: #{tpu_custom_call.1} parent=11 // pred_fallthru
          _
        // Predicated region
        $region53: #{tpu_custom_call.1} parent=11 // pred_check
          %p479 = pneg %p314
        $region54: #{tpu_custom_call.1} parent=11 // pred_check_branch
          %481 = sbr.rel (%p479) target = $region56
        $region55: #{tpu_custom_call.1} parent=11 // pred_region
          _
        $region56: #{tpu_custom_call.1} parent=11 // pred_fallthru
          _
      $region12: #{tpu_custom_call.1} parent=5 // pred_fallthru
        _
      %p482 = scmp.lt.s32.totalorder %s31, 2
      // Predicated region
      $region57: #{tpu_custom_call.1} parent=5 // pred_check
        %p483 = pneg %p482
      $region58: #{tpu_custom_call.1} parent=5 // pred_check_branch
        %485 = sbr.rel (%p483) target = $region60
      $region59: #{tpu_custom_call.1} parent=5 // pred_region
        // Predicated region
        $region61: #{tpu_custom_call.1} parent=59 // pred_check
          %p486 = pneg %p51
        $region62: #{tpu_custom_call.1} parent=59 // pred_check_branch
          %488 = sbr.rel (%p486) target = $region64
        $region63: #{tpu_custom_call.1} parent=59 // pred_region
          %p489 = scmp.lt.s32.totalorder %s31, 1
          %s490 = scalar_select %p489, %s31, 1
          %s491 = smul.addr %s490, 16
          %s492 = smul.addr %s491, 8
          %s493 = scalar_lea.vmem %s0, %s492
        $region64: #{tpu_custom_call.1} parent=59 // pred_fallthru
          _
        // Predicated region
        $region65: #{tpu_custom_call.1} parent=59 // pred_check
          %p494 = pneg %p77
        $region66: #{tpu_custom_call.1} parent=59 // pred_check_branch
          %496 = sbr.rel (%p494) target = $region68
        $region67: #{tpu_custom_call.1} parent=59 // pred_region
          %s497 = sand.u32 %s67, 1
          %s498 = scalar_lea.sflag [#allocation6], %s497
          %s499 = sand.u32 %s67, 1
          %s500 = smul.addr %s499, 128
          %s501 = scalar_lea.vmem [#allocation5], %s500
          %s503 = ssub.s32 2048, 2048
          %504 = vsyncadd %s498, %s503
          %s505 = smul.addr %s31, 16
          %s506 = smul.addr %s505, 128
          %s507 = scalar_lea.hbm %s1, %s506
          %s508 = sshll.u32 %s501, 4
          %s509 = int_to_ptr.vmem [resolvable:$true] %s508
          %514 = dma.hbm_to_vmem [thread:$0]  %s507, 2048, %s509, %s498, 128, 128, 8
        $region68: #{tpu_custom_call.1} parent=59 // pred_fallthru
          _
      $region60: #{tpu_custom_call.1} parent=5 // pred_fallthru
        _
      %p515 = scmp.le.s32.totalorder 1, %s31
      %p516 = scmp.lt.s32.totalorder %s31, 3
      %p517 = pnand %p515, %p516
      %p518 = pneg %p517
      // Predicated region
      $region69: #{tpu_custom_call.1} parent=5 // pred_check
        _
      $region70: #{tpu_custom_call.1} parent=5 // pred_check_branch
        %520 = sbr.rel (%p517) target = $region72
      $region71: #{tpu_custom_call.1} parent=5 // pred_region
        %s521 = ssub.s32 %s31, 1
        %s522 = sand.u32 %s70, 1
        %s523 = scalar_lea.sflag [#allocation6], %s522
        %s524 = sand.u32 %s70, 1
        %s525 = smul.addr %s524, 128
        %s526 = scalar_lea.vmem [#allocation5], %s525
        // Predicated region
        $region73: #{tpu_custom_call.1} parent=71 // pred_check
          %p527 = pneg %p83
        $region74: #{tpu_custom_call.1} parent=71 // pred_check_branch
          %529 = sbr.rel (%p527) target = $region76
        $region75: #{tpu_custom_call.1} parent=71 // pred_region
          %530 = dma.done %s523, 2048
        $region76: #{tpu_custom_call.1} parent=71 // pred_fallthru
          _
        // Predicated region
        $region77: #{tpu_custom_call.1} parent=71 // pred_check
          %p531 = pneg %p104
        $region78: #{tpu_custom_call.1} parent=71 // pred_check_branch
          %533 = sbr.rel (%p531) target = $region80
        $region79: #{tpu_custom_call.1} parent=71 // pred_region
          %534 = dma.done [#allocation9], 64
        $region80: #{tpu_custom_call.1} parent=71 // pred_fallthru
          _
        // Predicated region
        $region81: #{tpu_custom_call.1} parent=71 // pred_check
          %p535 = pneg %p125
        $region82: #{tpu_custom_call.1} parent=71 // pred_check_branch
          %537 = sbr.rel (%p535) target = $region84
        $region83: #{tpu_custom_call.1} parent=71 // pred_region
          %538 = dma.done [#allocation9], 16
        $region84: #{tpu_custom_call.1} parent=71 // pred_fallthru
          _
        // Predicated region
        $region85: #{tpu_custom_call.1} parent=71 // pred_check
          %p539 = pneg %p146
        $region86: #{tpu_custom_call.1} parent=71 // pred_check_branch
          %541 = sbr.rel (%p539) target = $region88
        $region87: #{tpu_custom_call.1} parent=71 // pred_region
          %542 = dma.done [#allocation12], 4096
        $region88: #{tpu_custom_call.1} parent=71 // pred_fallthru
          _
        // Predicated region
        $region89: #{tpu_custom_call.1} parent=71 // pred_check
          %p543 = pneg %p167
        $region90: #{tpu_custom_call.1} parent=71 // pred_check_branch
          %545 = sbr.rel (%p543) target = $region92
        $region91: #{tpu_custom_call.1} parent=71 // pred_region
          %546 = dma.done [#allocation12], 32
        $region92: #{tpu_custom_call.1} parent=71 // pred_fallthru
          _
        // Predicated region
        $region93: #{tpu_custom_call.1} parent=71 // pred_check
          %p547 = pneg %p188
        $region94: #{tpu_custom_call.1} parent=71 // pred_check_branch
          %549 = sbr.rel (%p547) target = $region96
        $region95: #{tpu_custom_call.1} parent=71 // pred_region
          %550 = dma.done [#allocation15], 32
        $region96: #{tpu_custom_call.1} parent=71 // pred_fallthru
          _
        // Predicated region
        $region97: #{tpu_custom_call.1} parent=71 // pred_check
          %p551 = pneg %p209
        $region98: #{tpu_custom_call.1} parent=71 // pred_check_branch
          %553 = sbr.rel (%p551) target = $region100
        $region99: #{tpu_custom_call.1} parent=71 // pred_region
          %554 = dma.done [#allocation15], 69632
        $region100: #{tpu_custom_call.1} parent=71 // pred_fallthru
          _
        // Predicated region
        $region101: #{tpu_custom_call.1} parent=71 // pred_check
          %p555 = pneg %p230
        $region102: #{tpu_custom_call.1} parent=71 // pred_check_branch
          %557 = sbr.rel (%p555) target = $region104
        $region103: #{tpu_custom_call.1} parent=71 // pred_region
          %558 = dma.done [#allocation18], 32
        $region104: #{tpu_custom_call.1} parent=71 // pred_fallthru
          _
        // Predicated region
        $region105: #{tpu_custom_call.1} parent=71 // pred_check
          %p559 = pneg %p251
        $region106: #{tpu_custom_call.1} parent=71 // pred_check_branch
          %561 = sbr.rel (%p559) target = $region108
        $region107: #{tpu_custom_call.1} parent=71 // pred_region
          %562 = dma.done [#allocation18], 32
        $region108: #{tpu_custom_call.1} parent=71 // pred_fallthru
          _
        // Predicated region
        $region109: #{tpu_custom_call.1} parent=71 // pred_check
          %p563 = pneg %p272
        $region110: #{tpu_custom_call.1} parent=71 // pred_check_branch
          %565 = sbr.rel (%p563) target = $region112
        $region111: #{tpu_custom_call.1} parent=71 // pred_region
          %566 = dma.done [#allocation21], 2048
        $region112: #{tpu_custom_call.1} parent=71 // pred_fallthru
          _
        // Predicated region
        $region113: #{tpu_custom_call.1} parent=71 // pred_check
          %p567 = pneg %p293
        $region114: #{tpu_custom_call.1} parent=71 // pred_check_branch
          %569 = sbr.rel (%p567) target = $region116
        $region115: #{tpu_custom_call.1} parent=71 // pred_region
          %570 = dma.done [#allocation21], 16
        $region116: #{tpu_custom_call.1} parent=71 // pred_fallthru
          _
        %p571 = scmp.lt.s32.totalorder %s36, 1
        %s572 = scalar_select %p571, %s36, 1
        %s573 = smul.addr %s572, 16
        %s574 = smul.addr %s573, 8
        %s575 = scalar_lea.vmem %s0, %s574
        %p576 = pneg %p57
        %p577 = pneg %p54
        %s578 = sand.u32 %s70, 1
        %s579 = scalar_lea.sflag [#allocation6], %s578
        %s580 = sand.u32 %s70, 1
        %s581 = smul.addr %s580, 128
        %s582 = scalar_lea.vmem [#allocation5], %s581
        %p583 = pneg %p83
        %p584 = pneg %p80
        %p585 = pneg %p104
        %p586 = pneg %p101
        %p587 = pneg %p125
        %p588 = pneg %p122
        %p589 = pneg %p146
        %p590 = pneg %p143
        %p591 = pneg %p167
        %p592 = pneg %p164
        %p593 = pneg %p188
        %p594 = pneg %p185
        %p595 = pneg %p209
        %p596 = pneg %p206
        %p597 = pneg %p230
        %p598 = pneg %p227
        %p599 = pneg %p251
        %p600 = pneg %p248
        %p601 = pneg %p272
        %p602 = pneg %p269
        %p603 = pneg %p293
        %p604 = pneg %p290
        %p605 = pneg %p314
        %p606 = pneg %p311
        %p607 = pneg %p340
        %p608 = pneg %p337
        %s609 = sand.u32 %s327, 1
        %s610 = scalar_lea.sflag [#allocation7], %s609
        %s611 = sand.u32 %s327, 1
        %s612 = smul.addr %s611, 128
        %s613 = scalar_lea.vmem [#allocation23], %s612
        %p614 = scmp.lt.s32.totalorder %s36, 1
        %s615 = scalar_select %p614, %s36, 1
        %s616 = smul.addr %s615, 16
        %s617 = smul.addr %s616, 8
        %s618 = scalar_lea.vmem %s0, %s617
        %619 = vst [vmem:[#allocation2] sm:$0xff] 0.0
        %620 = vst [vmem:[#allocation2 + $0x8] sm:$0xff] 0.0
        %621 = vst [vmem:[#allocation2 + $0x10] sm:$0xff] 0.0
        %622 = vst [vmem:[#allocation2 + $0x18] sm:$0xff] 0.0
        %623 = vst [vmem:[#allocation2 + $0x20] sm:$0xff] 0.0
        %624 = vst [vmem:[#allocation2 + $0x28] sm:$0xff] 0.0
        %625 = vst [vmem:[#allocation2 + $0x30] sm:$0xff] 0.0
        %626 = vst [vmem:[#allocation2 + $0x38] sm:$0xff] 0.0
        %s627 = scalar_lea.vmem [#allocation2], 192
        %628 = vst [vmem:[%s627] sm:$0xff] 0.0
        %629 = vst [vmem:[%s627 + $0x8] sm:$0xff] 0.0
        %630 = vst [vmem:[%s627 + $0x10] sm:$0xff] 0.0
        %631 = vst [vmem:[%s627 + $0x18] sm:$0xff] 0.0
        %632 = vst [vmem:[%s627 + $0x20] sm:$0xff] 0.0
        %633 = vst [vmem:[%s627 + $0x28] sm:$0xff] 0.0
        %634 = vst [vmem:[%s627 + $0x30] sm:$0xff] 0.0
        %635 = vst [vmem:[%s627 + $0x38] sm:$0xff] 0.0
        %v636 = vld [vmem:[%s618] sm:$0xff]
        %v637 = vld [vmem:[%s618 + $0x8] sm:$0xff]
        %v638 = vld [vmem:[%s618 + $0x10] sm:$0xff]
        %v639 = vld [vmem:[%s618 + $0x18] sm:$0xff]
        %v640 = vld [vmem:[%s618 + $0x20] sm:$0xff]
        %v641 = vld [vmem:[%s618 + $0x28] sm:$0xff]
        %v642 = vld [vmem:[%s618 + $0x30] sm:$0xff]
        %v643 = vld [vmem:[%s618 + $0x38] sm:$0xff]
        %v644 = vld [vmem:[%s618 + $0x40] sm:$0xff]
        %v645 = vld [vmem:[%s618 + $0x48] sm:$0xff]
        %v646 = vld [vmem:[%s618 + $0x50] sm:$0xff]
        %v647 = vld [vmem:[%s618 + $0x58] sm:$0xff]
        %v648 = vld [vmem:[%s618 + $0x60] sm:$0xff]
        %v649 = vld [vmem:[%s618 + $0x68] sm:$0xff]
        %v650 = vld [vmem:[%s618 + $0x70] sm:$0xff]
        %v651 = vld [vmem:[%s618 + $0x78] sm:$0xff]
        %v652 = vld [vmem:[#allocation8] sm:$0xf]
        %v653 = vld [vmem:[#allocation10] sm:$0x1]
        %v655 = vlaneseq
        %v656 = vshrl.u32 %v655, 7
        %v657 = vsub.s32 0, %v656
        %v658 = vrot.slane %v653, %v657
        %vm660 = vcmask 31744
        %v662 = vsel %vm660, %v636, 0
        %v665 = vsel %vm660, %v637, 0
        %v668 = vsel %vm660, %v638, 0
        %v671 = vsel %vm660, %v639, 0
        %v674 = vsel %vm660, %v640, 0
        %v677 = vsel %vm660, %v641, 0
        %v680 = vsel %vm660, %v642, 0
        %v683 = vsel %vm660, %v643, 0
        %v686 = vsel %vm660, %v644, 0
        %v689 = vsel %vm660, %v645, 0
        %v692 = vsel %vm660, %v646, 0
        %v695 = vsel %vm660, %v647, 0
        %v698 = vsel %vm660, %v648, 0
        %v701 = vsel %vm660, %v649, 0
        %v704 = vsel %vm660, %v650, 0
        %v707 = vsel %vm660, %v651, 0
        %vm709 = vcmask 1043456
        %v711 = vsel %vm709, %v652, 0
        %713 = vmatprep.subr.mxu0 0.0
        %714 = vmatpush1.msra.mxu0 %v711
        %715 = vmatprep.subr.mxu0 0.0
        %716 = vmatpush1.msra.mxu0 0.0
        %717 = vmatprep.subr.mxu0 0.0
        %718 = vmatpush1.msra.mxu0 0.0
        %719 = vmatprep.subr.mxu0 0.0
        %720 = vmatpush1.msra.mxu0 0.0
        %721 = vmatprep.subr.mxu0 0.0
        %722 = vmatpush1.msra.mxu0 0.0
        %723 = vmatprep.subr.mxu0 0.0
        %724 = vmatpush1.msra.mxu0 0.0
        %725 = vmatprep.subr.mxu0 0.0
        %726 = vmatpush1.msra.mxu0 0.0
        %727 = vmatprep.subr.mxu0 0.0
        %728 = vmatpush1.msra.mxu0 0.0
        %729 = vmatprep.subr.mxu0 0.0
        %730 = vmatpush1.msra.mxu0 0.0
        %731 = vmatprep.subr.mxu0 0.0
        %732 = vmatpush1.msra.mxu0 0.0
        %733 = vmatprep.subr.mxu0 0.0
        %734 = vmatpush1.msra.mxu0 0.0
        %735 = vmatprep.subr.mxu0 0.0
        %736 = vmatpush1.msra.mxu0 0.0
        %737 = vmatprep.subr.mxu0 0.0
        %738 = vmatpush1.msra.mxu0 0.0
        %739 = vmatprep.subr.mxu0 0.0
        %740 = vmatpush1.msra.mxu0 0.0
        %741 = vmatprep.subr.mxu0 0.0
        %742 = vmatpush1.msra.mxu0 0.0
        %743 = vmatprep.subr.mxu0 0.0
        %744 = vmatpush1.msra.mxu0 0.0
        %745 = vmatprep.subr.mxu0 0.0
        %746 = vmatpush1.msra.mxu0 0.0
        %747 = vmatprep.subr.mxu0 0.0
        %748 = vmatpush1.msra.mxu0 0.0
        %749 = vmatprep.subr.mxu0 0.0
        %750 = vmatpush1.msra.mxu0 0.0
        %751 = vmatprep.subr.mxu0 0.0
        %752 = vmatpush1.msra.mxu0 0.0
        %753 = vmatprep.subr.mxu0 0.0
        %754 = vmatpush1.msra.mxu0 0.0
        %755 = vmatprep.subr.mxu0 0.0
        %756 = vmatpush1.msra.mxu0 0.0
        %757 = vmatprep.subr.mxu0 0.0
        %758 = vmatpush1.msra.mxu0 0.0
        %759 = vmatprep.subr.mxu0 0.0
        %760 = vmatpush1.msra.mxu0 0.0
        %761 = vmatprep.subr.mxu0 0.0
        %762 = vmatpush1.msra.mxu0 0.0
        %763 = vmatprep.subr.mxu0 0.0
        %764 = vmatpush1.msra.mxu0 0.0
        %765 = vmatprep.subr.mxu0 0.0
        %766 = vmatpush1.msra.mxu0 0.0
        %767 = vmatprep.subr.mxu0 0.0
        %768 = vmatpush1.msra.mxu0 0.0
        %769 = vmatprep.subr.mxu0 0.0
        %770 = vmatpush1.msra.mxu0 0.0
        %771 = vmatprep.subr.mxu0 0.0
        %772 = vmatpush1.msra.mxu0 0.0
        %773 = vmatprep.subr.mxu0 0.0
        %774 = vmatpush1.msra.mxu0 0.0
        %775 = vmatprep.subr.mxu0 0.0
        %776 = vmatpush1.msra.mxu0 0.0
        %777 = vmatprep.mubr.f32.mxu0 0.0
        %778 = vmatmul.mubr.f32.gmra.mrb[0].mxu0 %v662
        %v779 = vpop.f32.mrb[0].mxu0
        %v780 = vadd.f32 %v658, %v779
        %v781 = vpop.f32.mrb[0].mxu0
        %782 = vmatprep.mubr.f32.mxu0 0.0
        %783 = vmatmul.mubr.f32.gmra.mrb[0].mxu0 %v665
        %v784 = vpop.f32.mrb[0].mxu0
        %v785 = vadd.f32 %v658, %v784
        %v786 = vpop.f32.mrb[0].mxu0
        %787 = vmatprep.mubr.f32.mxu0 0.0
        %788 = vmatmul.mubr.f32.gmra.mrb[0].mxu0 %v668
        %v789 = vpop.f32.mrb[0].mxu0
        %v790 = vadd.f32 %v658, %v789
        %v791 = vpop.f32.mrb[0].mxu0
        %792 = vmatprep.mubr.f32.mxu0 0.0
        %793 = vmatmul.mubr.f32.gmra.mrb[0].mxu0 %v671
        %v794 = vpop.f32.mrb[0].mxu0
        %v795 = vadd.f32 %v658, %v794
        %v796 = vpop.f32.mrb[0].mxu0
        %797 = vmatprep.mubr.f32.mxu0 0.0
        %798 = vmatmul.mubr.f32.gmra.mrb[0].mxu0 %v674
        %v799 = vpop.f32.mrb[0].mxu0
        %v800 = vadd.f32 %v658, %v799
        %v801 = vpop.f32.mrb[0].mxu0
        %802 = vmatprep.mubr.f32.mxu0 0.0
        %803 = vmatmul.mubr.f32.gmra.mrb[0].mxu0 %v677
        %v804 = vpop.f32.mrb[0].mxu0
        %v805 = vadd.f32 %v658, %v804
        %v806 = vpop.f32.mrb[0].mxu0
        %807 = vmatprep.mubr.f32.mxu0 0.0
        %808 = vmatmul.mubr.f32.gmra.mrb[0].mxu0 %v680
        %v809 = vpop.f32.mrb[0].mxu0
        %v810 = vadd.f32 %v658, %v809
        %v811 = vpop.f32.mrb[0].mxu0
        %812 = vmatprep.mubr.f32.mxu0 0.0
        %813 = vmatmul.mubr.f32.gmra.mrb[0].mxu0 %v683
        %v814 = vpop.f32.mrb[0].mxu0
        %v815 = vadd.f32 %v658, %v814
        %v816 = vpop.f32.mrb[0].mxu0
        %817 = vmatprep.mubr.f32.mxu0 0.0
        %818 = vmatmul.mubr.f32.gmra.mrb[0].mxu0 %v686
        %v819 = vpop.f32.mrb[0].mxu0
        %v820 = vadd.f32 %v658, %v819
        %v821 = vpop.f32.mrb[0].mxu0
        %822 = vmatprep.mubr.f32.mxu0 0.0
        %823 = vmatmul.mubr.f32.gmra.mrb[0].mxu0 %v689
        %v824 = vpop.f32.mrb[0].mxu0
        %v825 = vadd.f32 %v658, %v824
        %v826 = vpop.f32.mrb[0].mxu0
        %827 = vmatprep.mubr.f32.mxu0 0.0
        %828 = vmatmul.mubr.f32.gmra.mrb[0].mxu0 %v692
        %v829 = vpop.f32.mrb[0].mxu0
        %v830 = vadd.f32 %v658, %v829
        %v831 = vpop.f32.mrb[0].mxu0
        %832 = vmatprep.mubr.f32.mxu0 0.0
        %833 = vmatmul.mubr.f32.gmra.mrb[0].mxu0 %v695
        %v834 = vpop.f32.mrb[0].mxu0
        %v835 = vadd.f32 %v658, %v834
        %v836 = vpop.f32.mrb[0].mxu0
        %837 = vmatprep.mubr.f32.mxu0 0.0
        %838 = vmatmul.mubr.f32.gmra.mrb[0].mxu0 %v698
        %v839 = vpop.f32.mrb[0].mxu0
        %v840 = vadd.f32 %v658, %v839
        %v841 = vpop.f32.mrb[0].mxu0
        %842 = vmatprep.mubr.f32.mxu0 0.0
        %843 = vmatmul.mubr.f32.gmra.mrb[0].mxu0 %v701
        %v844 = vpop.f32.mrb[0].mxu0
        %v845 = vadd.f32 %v658, %v844
        %v846 = vpop.f32.mrb[0].mxu0
        %847 = vmatprep.mubr.f32.mxu0 0.0
        %848 = vmatmul.mubr.f32.gmra.mrb[0].mxu0 %v704
        %v849 = vpop.f32.mrb[0].mxu0
        %v850 = vadd.f32 %v658, %v849
        %v851 = vpop.f32.mrb[0].mxu0
        %852 = vmatprep.mubr.f32.mxu0 0.0
        %853 = vmatmul.mubr.f32.gmra.mrb[0].mxu0 %v707
        %v854 = vpop.f32.mrb[0].mxu0
        %v855 = vadd.f32 %v658, %v854
        %v856 = vpop.f32.mrb[0].mxu0
        %857 = vdwg.mxu0
        %v858 = vld [vmem:[#allocation11] sm:$0xff]
        %v859 = vld [vmem:[#allocation11 + $0x8] sm:$0xff]
        %v860 = vld [vmem:[#allocation11 + $0x10] sm:$0xff]
        %v861 = vld [vmem:[#allocation11 + $0x18] sm:$0xff]
        %v862 = vld [vmem:[#allocation11 + $0x20] sm:$0xff]
        %v863 = vld [vmem:[#allocation11 + $0x28] sm:$0xff]
        %v864 = vld [vmem:[#allocation11 + $0x30] sm:$0xff]
        %v865 = vld [vmem:[#allocation11 + $0x38] sm:$0xff]
        %v866 = vld [vmem:[#allocation11 + $0x40] sm:$0xff]
        %v867 = vld [vmem:[#allocation11 + $0x48] sm:$0xff]
        %v868 = vld [vmem:[#allocation11 + $0x50] sm:$0xff]
        %v869 = vld [vmem:[#allocation11 + $0x58] sm:$0xff]
        %v870 = vld [vmem:[#allocation11 + $0x60] sm:$0xff]
        %v871 = vld [vmem:[#allocation11 + $0x68] sm:$0xff]
        %v872 = vld [vmem:[#allocation11 + $0x70] sm:$0xff]
        %v873 = vld [vmem:[#allocation11 + $0x78] sm:$0xff]
        %874 = vmatprep.subr.mxu0 0.0
        %875 = vmatpush1.msra.mxu0 %v858
        %876 = vmatprep.subr.mxu0 0.0
        %877 = vmatpush1.msra.mxu0 %v859
        %878 = vmatprep.subr.mxu0 0.0
        %879 = vmatpush1.msra.mxu0 %v860
        %880 = vmatprep.subr.mxu0 0.0
        %881 = vmatpush1.msra.mxu0 %v861
        %882 = vmatprep.subr.mxu0 0.0
        %883 = vmatpush1.msra.mxu0 %v862
        %884 = vmatprep.subr.mxu0 0.0
        %885 = vmatpush1.msra.mxu0 %v863
        %886 = vmatprep.subr.mxu0 0.0
        %887 = vmatpush1.msra.mxu0 %v864
        %888 = vmatprep.subr.mxu0 0.0
        %889 = vmatpush1.msra.mxu0 %v865
        %890 = vmatprep.subr.mxu0 0.0
        %891 = vmatpush1.msra.mxu0 %v866
        %892 = vmatprep.subr.mxu0 0.0
        %893 = vmatpush1.msra.mxu0 %v867
        %894 = vmatprep.subr.mxu0 0.0
        %895 = vmatpush1.msra.mxu0 %v868
        %896 = vmatprep.subr.mxu0 0.0
        %897 = vmatpush1.msra.mxu0 %v869
        %898 = vmatprep.subr.mxu0 0.0
        %899 = vmatpush1.msra.mxu0 %v870
        %900 = vmatprep.subr.mxu0 0.0
        %901 = vmatpush1.msra.mxu0 %v871
        %902 = vmatprep.subr.mxu0 0.0
        %903 = vmatpush1.msra.mxu0 %v872
        %904 = vmatprep.subr.mxu0 0.0
        %905 = vmatpush1.msra.mxu0 %v873
        %906 = vmatprep.subr.mxu0 0.0
        %907 = vmatpush1.msra.mxu0 0.0
        %908 = vmatprep.subr.mxu0 0.0
        %909 = vmatpush1.msra.mxu0 0.0
        %910 = vmatprep.subr.mxu0 0.0
        %911 = vmatpush1.msra.mxu0 0.0
        %912 = vmatprep.subr.mxu0 0.0
        %913 = vmatpush1.msra.mxu0 0.0
        %914 = vmatprep.subr.mxu0 0.0
        %915 = vmatpush1.msra.mxu0 0.0
        %916 = vmatprep.subr.mxu0 0.0
        %917 = vmatpush1.msra.mxu0 0.0
        %918 = vmatprep.subr.mxu0 0.0
        %919 = vmatpush1.msra.mxu0 0.0
        %920 = vmatprep.subr.mxu0 0.0
        %921 = vmatpush1.msra.mxu0 0.0
        %922 = vmatprep.subr.mxu0 0.0
        %923 = vmatpush1.msra.mxu0 0.0
        %924 = vmatprep.subr.mxu0 0.0
        %925 = vmatpush1.msra.mxu0 0.0
        %926 = vmatprep.subr.mxu0 0.0
        %927 = vmatpush1.msra.mxu0 0.0
        %928 = vmatprep.subr.mxu0 0.0
        %929 = vmatpush1.msra.mxu0 0.0
        %930 = vmatprep.subr.mxu0 0.0
        %931 = vmatpush1.msra.mxu0 0.0
        %932 = vmatprep.subr.mxu0 0.0
        %933 = vmatpush1.msra.mxu0 0.0
        %934 = vmatprep.subr.mxu0 0.0
        %935 = vmatpush1.msra.mxu0 0.0
        %936 = vmatprep.subr.mxu0 0.0
        %937 = vmatpush1.msra.mxu0 0.0
        %938 = vmatprep.mubr.f32.mxu0 0.0
        %939 = vmatmul.mubr.f32.gmra.mrb[0].mxu0 %v780
        %v940 = vpop.f32.mrb[0].mxu0
        %v941 = vadd.f32 0.0, %v940
        %v942 = vpop.f32.mrb[0].mxu0
        %943 = vmatprep.mubr.f32.mxu0 0.0
        %944 = vmatmul.mubr.f32.gmra.mrb[0].mxu0 %v785
        %v945 = vpop.f32.mrb[0].mxu0
        %v946 = vadd.f32 0.0, %v945
        %v947 = vpop.f32.mrb[0].mxu0
        %948 = vmatprep.mubr.f32.mxu0 0.0
        %949 = vmatmul.mubr.f32.gmra.mrb[0].mxu0 %v790
        %v950 = vpop.f32.mrb[0].mxu0
        %v951 = vadd.f32 0.0, %v950
        %v952 = vpop.f32.mrb[0].mxu0
        %953 = vmatprep.mubr.f32.mxu0 0.0
        %954 = vmatmul.mubr.f32.gmra.mrb[0].mxu0 %v795
        %v955 = vpop.f32.mrb[0].mxu0
        %v956 = vadd.f32 0.0, %v955
        %v957 = vpop.f32.mrb[0].mxu0
        %958 = vmatprep.mubr.f32.mxu0 0.0
        %959 = vmatmul.mubr.f32.gmra.mrb[0].mxu0 %v800
        %v960 = vpop.f32.mrb[0].mxu0
        %v961 = vadd.f32 0.0, %v960
        %v962 = vpop.f32.mrb[0].mxu0
        %963 = vmatprep.mubr.f32.mxu0 0.0
        %964 = vmatmul.mubr.f32.gmra.mrb[0].mxu0 %v805
        %v965 = vpop.f32.mrb[0].mxu0
        %v966 = vadd.f32 0.0, %v965
        %v967 = vpop.f32.mrb[0].mxu0
        %968 = vmatprep.mubr.f32.mxu0 0.0
        %969 = vmatmul.mubr.f32.gmra.mrb[0].mxu0 %v810
        %v970 = vpop.f32.mrb[0].mxu0
        %v971 = vadd.f32 0.0, %v970
        %v972 = vpop.f32.mrb[0].mxu0
        %973 = vmatprep.mubr.f32.mxu0 0.0
        %974 = vmatmul.mubr.f32.gmra.mrb[0].mxu0 %v815
        %v975 = vpop.f32.mrb[0].mxu0
        %v976 = vadd.f32 0.0, %v975
        %v977 = vpop.f32.mrb[0].mxu0
        %978 = vmatprep.mubr.f32.mxu0 0.0
        %979 = vmatmul.mubr.f32.gmra.mrb[0].mxu0 %v820
        %v980 = vpop.f32.mrb[0].mxu0
        %v981 = vadd.f32 0.0, %v980
        %v982 = vpop.f32.mrb[0].mxu0
        %983 = vmatprep.mubr.f32.mxu0 0.0
        %984 = vmatmul.mubr.f32.gmra.mrb[0].mxu0 %v825
        %v985 = vpop.f32.mrb[0].mxu0
        %v986 = vadd.f32 0.0, %v985
        %v987 = vpop.f32.mrb[0].mxu0
        %988 = vmatprep.mubr.f32.mxu0 0.0
        %989 = vmatmul.mubr.f32.gmra.mrb[0].mxu0 %v830
        %v990 = vpop.f32.mrb[0].mxu0
        %v991 = vadd.f32 0.0, %v990
        %v992 = vpop.f32.mrb[0].mxu0
        %993 = vmatprep.mubr.f32.mxu0 0.0
        %994 = vmatmul.mubr.f32.gmra.mrb[0].mxu0 %v835
        %v995 = vpop.f32.mrb[0].mxu0
        %v996 = vadd.f32 0.0, %v995
        %v997 = vpop.f32.mrb[0].mxu0
        %998 = vmatprep.mubr.f32.mxu0 0.0
        %999 = vmatmul.mubr.f32.gmra.mrb[0].mxu0 %v840
        %v1000 = vpop.f32.mrb[0].mxu0
        %v1001 = vadd.f32 0.0, %v1000
        %v1002 = vpop.f32.mrb[0].mxu0
        %1003 = vmatprep.mubr.f32.mxu0 0.0
        %1004 = vmatmul.mubr.f32.gmra.mrb[0].mxu0 %v845
        %v1005 = vpop.f32.mrb[0].mxu0
        %v1006 = vadd.f32 0.0, %v1005
        %v1007 = vpop.f32.mrb[0].mxu0
        %1008 = vmatprep.mubr.f32.mxu0 0.0
        %1009 = vmatmul.mubr.f32.gmra.mrb[0].mxu0 %v850
        %v1010 = vpop.f32.mrb[0].mxu0
        %v1011 = vadd.f32 0.0, %v1010
        %v1012 = vpop.f32.mrb[0].mxu0
        %1013 = vmatprep.mubr.f32.mxu0 0.0
        %1014 = vmatmul.mubr.f32.gmra.mrb[0].mxu0 %v855
        %v1015 = vpop.f32.mrb[0].mxu0
        %v1016 = vadd.f32 0.0, %v1015
        %v1017 = vpop.f32.mrb[0].mxu0
        %1018 = vdwg.mxu0
        %v1019 = vld [vmem:[#allocation13] sm:$0x1]
        %v1021 = vlaneseq
        %v1022 = vshrl.u32 %v1021, 7
        %v1023 = vsub.s32 0, %v1022
        %v1024 = vrot.slane %v1019, %v1023
        %v1026 = vmul.f32 %v941, %v1024
        %v1027 = vmul.f32 %v946, %v1024
        %v1028 = vmul.f32 %v951, %v1024
        %v1029 = vmul.f32 %v956, %v1024
        %v1030 = vmul.f32 %v961, %v1024
        %v1031 = vmul.f32 %v966, %v1024
        %v1032 = vmul.f32 %v971, %v1024
        %v1033 = vmul.f32 %v976, %v1024
        %v1034 = vmul.f32 %v981, %v1024
        %v1035 = vmul.f32 %v986, %v1024
        %v1036 = vmul.f32 %v991, %v1024
        %v1037 = vmul.f32 %v996, %v1024
        %v1038 = vmul.f32 %v1001, %v1024
        %v1039 = vmul.f32 %v1006, %v1024
        %v1040 = vmul.f32 %v1011, %v1024
        %v1041 = vmul.f32 %v1016, %v1024
        %v1042 = vld [vmem:[#allocation14] sm:$0x1]
        %v1044 = vlaneseq
        %v1045 = vshrl.u32 %v1044, 7
        %v1046 = vsub.s32 0, %v1045
        %v1047 = vrot.slane %v1042, %v1046
        %v1049 = vadd.f32 %v1026, %v1047
        %v1050 = vadd.f32 %v1027, %v1047
        %v1051 = vadd.f32 %v1028, %v1047
        %v1052 = vadd.f32 %v1029, %v1047
        %v1053 = vadd.f32 %v1030, %v1047
        %v1054 = vadd.f32 %v1031, %v1047
        %v1055 = vadd.f32 %v1032, %v1047
        %v1056 = vadd.f32 %v1033, %v1047
        %v1057 = vadd.f32 %v1034, %v1047
        %v1058 = vadd.f32 %v1035, %v1047
        %v1059 = vadd.f32 %v1036, %v1047
        %v1060 = vadd.f32 %v1037, %v1047
        %v1061 = vadd.f32 %v1038, %v1047
        %v1062 = vadd.f32 %v1039, %v1047
        %v1063 = vadd.f32 %v1040, %v1047
        %v1064 = vadd.f32 %v1041, %v1047
        %v1065 = vmax.f32 %v1049, 0.0
        %v1066 = vmax.f32 %v1050, 0.0
        %v1067 = vmax.f32 %v1051, 0.0
        %v1068 = vmax.f32 %v1052, 0.0
        %v1069 = vmax.f32 %v1053, 0.0
        %v1070 = vmax.f32 %v1054, 0.0
        %v1071 = vmax.f32 %v1055, 0.0
        %v1072 = vmax.f32 %v1056, 0.0
        %v1073 = vmax.f32 %v1057, 0.0
        %v1074 = vmax.f32 %v1058, 0.0
        %v1075 = vmax.f32 %v1059, 0.0
        %v1076 = vmax.f32 %v1060, 0.0
        %v1077 = vmax.f32 %v1061, 0.0
        %v1078 = vmax.f32 %v1062, 0.0
        %v1079 = vmax.f32 %v1063, 0.0
        %v1080 = vmax.f32 %v1064, 0.0
        %s1081 = scalar_lea.vmem [#allocation2], 64
        %1082 = vst [vmem:[%s1081] sm:$0xff] %v1065
        %1083 = vst [vmem:[%s1081 + $0x8] sm:$0xff] %v1066
        %1084 = vst [vmem:[%s1081 + $0x10] sm:$0xff] %v1067
        %1085 = vst [vmem:[%s1081 + $0x18] sm:$0xff] %v1068
        %1086 = vst [vmem:[%s1081 + $0x20] sm:$0xff] %v1069
        %1087 = vst [vmem:[%s1081 + $0x28] sm:$0xff] %v1070
        %1088 = vst [vmem:[%s1081 + $0x30] sm:$0xff] %v1071
        %1089 = vst [vmem:[%s1081 + $0x38] sm:$0xff] %v1072
        %1090 = vst [vmem:[%s1081 + $0x40] sm:$0xff] %v1073
        %1091 = vst [vmem:[%s1081 + $0x48] sm:$0xff] %v1074
        %1092 = vst [vmem:[%s1081 + $0x50] sm:$0xff] %v1075
        %1093 = vst [vmem:[%s1081 + $0x58] sm:$0xff] %v1076
        %1094 = vst [vmem:[%s1081 + $0x60] sm:$0xff] %v1077
        %1095 = vst [vmem:[%s1081 + $0x68] sm:$0xff] %v1078
        %1096 = vst [vmem:[%s1081 + $0x70] sm:$0xff] %v1079
        %1097 = vst [vmem:[%s1081 + $0x78] sm:$0xff] %v1080
        %v1098 = vld [vmem:[#allocation2] sm:$0xff]
        %v1099 = vld [vmem:[#allocation2 + $0x8] sm:$0xff]
        %v1100 = vld [vmem:[#allocation2 + $0x10] sm:$0xff]
        %v1101 = vld [vmem:[#allocation2 + $0x18] sm:$0xff]
        %v1102 = vld [vmem:[#allocation2 + $0x20] sm:$0xff]
        %v1103 = vld [vmem:[#allocation2 + $0x28] sm:$0xff]
        %v1104 = vld [vmem:[#allocation2 + $0x30] sm:$0xff]
        %v1105 = vld [vmem:[#allocation2 + $0x38] sm:$0xff]
        %v1106 = vld [vmem:[#allocation2 + $0x40] sm:$0xff]
        %v1107 = vld [vmem:[#allocation2 + $0x48] sm:$0xff]
        %v1108 = vld [vmem:[#allocation2 + $0x50] sm:$0xff]
        %v1109 = vld [vmem:[#allocation2 + $0x58] sm:$0xff]
        %v1110 = vld [vmem:[#allocation2 + $0x60] sm:$0xff]
        %v1111 = vld [vmem:[#allocation2 + $0x68] sm:$0xff]
        %v1112 = vld [vmem:[#allocation2 + $0x70] sm:$0xff]
        %v1113 = vld [vmem:[#allocation2 + $0x78] sm:$0xff]
        %1114 = vst [vmem:[#allocation3] sm:$0xff] %v1098
        %1115 = vst [vmem:[#allocation3 + $0x88] sm:$0xff] %v1099
        %1116 = vst [vmem:[#allocation3 + $0x110] sm:$0xff] %v1100
        %1117 = vst [vmem:[#allocation3 + $0x198] sm:$0xff] %v1101
        %1118 = vst [vmem:[#allocation3 + $0x220] sm:$0xff] %v1102
        %1119 = vst [vmem:[#allocation3 + $0x2a8] sm:$0xff] %v1103
        %1120 = vst [vmem:[#allocation3 + $0x330] sm:$0xff] %v1104
        %1121 = vst [vmem:[#allocation3 + $0x3b8] sm:$0xff] %v1105
        %1122 = vst [vmem:[#allocation3 + $0x440] sm:$0xff] %v1106
        %1123 = vst [vmem:[#allocation3 + $0x4c8] sm:$0xff] %v1107
        %1124 = vst [vmem:[#allocation3 + $0x550] sm:$0xff] %v1108
        %1125 = vst [vmem:[#allocation3 + $0x5d8] sm:$0xff] %v1109
        %1126 = vst [vmem:[#allocation3 + $0x660] sm:$0xff] %v1110
        %1127 = vst [vmem:[#allocation3 + $0x6e8] sm:$0xff] %v1111
        %1128 = vst [vmem:[#allocation3 + $0x770] sm:$0xff] %v1112
        %1129 = vst [vmem:[#allocation3 + $0x7f8] sm:$0xff] %v1113
        %s1130 = scalar_lea.vmem [#allocation2], 8
        %v1131 = vld [vmem:[%s1130] sm:$0xff]
        %v1132 = vld [vmem:[%s1130 + $0x8] sm:$0xff]
        %v1133 = vld [vmem:[%s1130 + $0x10] sm:$0xff]
        %v1134 = vld [vmem:[%s1130 + $0x18] sm:$0xff]
        %v1135 = vld [vmem:[%s1130 + $0x20] sm:$0xff]
        %v1136 = vld [vmem:[%s1130 + $0x28] sm:$0xff]
        %v1137 = vld [vmem:[%s1130 + $0x30] sm:$0xff]
        %v1138 = vld [vmem:[%s1130 + $0x38] sm:$0xff]
        %v1139 = vld [vmem:[%s1130 + $0x40] sm:$0xff]
        %v1140 = vld [vmem:[%s1130 + $0x48] sm:$0xff]
        %v1141 = vld [vmem:[%s1130 + $0x50] sm:$0xff]
        %v1142 = vld [vmem:[%s1130 + $0x58] sm:$0xff]
        %v1143 = vld [vmem:[%s1130 + $0x60] sm:$0xff]
        %v1144 = vld [vmem:[%s1130 + $0x68] sm:$0xff]
        %v1145 = vld [vmem:[%s1130 + $0x70] sm:$0xff]
        %v1146 = vld [vmem:[%s1130 + $0x78] sm:$0xff]
        %1147 = vst [vmem:[#allocation3 + $0x8] sm:$0xff] %v1131
        %1148 = vst [vmem:[#allocation3 + $0x90] sm:$0xff] %v1132
        %1149 = vst [vmem:[#allocation3 + $0x118] sm:$0xff] %v1133
        %1150 = vst [vmem:[#allocation3 + $0x1a0] sm:$0xff] %v1134
        %1151 = vst [vmem:[#allocation3 + $0x228] sm:$0xff] %v1135
        %1152 = vst [vmem:[#allocation3 + $0x2b0] sm:$0xff] %v1136
        %1153 = vst [vmem:[#allocation3 + $0x338] sm:$0xff] %v1137
        %1154 = vst [vmem:[#allocation3 + $0x3c0] sm:$0xff] %v1138
        %1155 = vst [vmem:[#allocation3 + $0x448] sm:$0xff] %v1139
        %1156 = vst [vmem:[#allocation3 + $0x4d0] sm:$0xff] %v1140
        %1157 = vst [vmem:[#allocation3 + $0x558] sm:$0xff] %v1141
        %1158 = vst [vmem:[#allocation3 + $0x5e0] sm:$0xff] %v1142
        %1159 = vst [vmem:[#allocation3 + $0x668] sm:$0xff] %v1143
        %1160 = vst [vmem:[#allocation3 + $0x6f0] sm:$0xff] %v1144
        %1161 = vst [vmem:[#allocation3 + $0x778] sm:$0xff] %v1145
        %1162 = vst [vmem:[#allocation3 + $0x800] sm:$0xff] %v1146
        %s1163 = scalar_lea.vmem [#allocation2], 16
        %v1164 = vld [vmem:[%s1163] sm:$0xff]
        %v1165 = vld [vmem:[%s1163 + $0x8] sm:$0xff]
        %v1166 = vld [vmem:[%s1163 + $0x10] sm:$0xff]
        %v1167 = vld [vmem:[%s1163 + $0x18] sm:$0xff]
        %v1168 = vld [vmem:[%s1163 + $0x20] sm:$0xff]
        %v1169 = vld [vmem:[%s1163 + $0x28] sm:$0xff]
        %v1170 = vld [vmem:[%s1163 + $0x30] sm:$0xff]
        %v1171 = vld [vmem:[%s1163 + $0x38] sm:$0xff]
        %v1172 = vld [vmem:[%s1163 + $0x40] sm:$0xff]
        %v1173 = vld [vmem:[%s1163 + $0x48] sm:$0xff]
        %v1174 = vld [vmem:[%s1163 + $0x50] sm:$0xff]
        %v1175 = vld [vmem:[%s1163 + $0x58] sm:$0xff]
        %v1176 = vld [vmem:[%s1163 + $0x60] sm:$0xff]
        %v1177 = vld [vmem:[%s1163 + $0x68] sm:$0xff]
        %v1178 = vld [vmem:[%s1163 + $0x70] sm:$0xff]
        %v1179 = vld [vmem:[%s1163 + $0x78] sm:$0xff]
        %1180 = vst [vmem:[#allocation3 + $0x10] sm:$0xff] %v1164
        %1181 = vst [vmem:[#allocation3 + $0x98] sm:$0xff] %v1165
        %1182 = vst [vmem:[#allocation3 + $0x120] sm:$0xff] %v1166
        %1183 = vst [vmem:[#allocation3 + $0x1a8] sm:$0xff] %v1167
        %1184 = vst [vmem:[#allocation3 + $0x230] sm:$0xff] %v1168
        %1185 = vst [vmem:[#allocation3 + $0x2b8] sm:$0xff] %v1169
        %1186 = vst [vmem:[#allocation3 + $0x340] sm:$0xff] %v1170
        %1187 = vst [vmem:[#allocation3 + $0x3c8] sm:$0xff] %v1171
        %1188 = vst [vmem:[#allocation3 + $0x450] sm:$0xff] %v1172
        %1189 = vst [vmem:[#allocation3 + $0x4d8] sm:$0xff] %v1173
        %1190 = vst [vmem:[#allocation3 + $0x560] sm:$0xff] %v1174
        %1191 = vst [vmem:[#allocation3 + $0x5e8] sm:$0xff] %v1175
        %1192 = vst [vmem:[#allocation3 + $0x670] sm:$0xff] %v1176
        %1193 = vst [vmem:[#allocation3 + $0x6f8] sm:$0xff] %v1177
        %1194 = vst [vmem:[#allocation3 + $0x780] sm:$0xff] %v1178
        %1195 = vst [vmem:[#allocation3 + $0x808] sm:$0xff] %v1179
        %s1196 = scalar_lea.vmem [#allocation2], 24
        %v1197 = vld [vmem:[%s1196] sm:$0xff]
        %v1198 = vld [vmem:[%s1196 + $0x8] sm:$0xff]
        %v1199 = vld [vmem:[%s1196 + $0x10] sm:$0xff]
        %v1200 = vld [vmem:[%s1196 + $0x18] sm:$0xff]
        %v1201 = vld [vmem:[%s1196 + $0x20] sm:$0xff]
        %v1202 = vld [vmem:[%s1196 + $0x28] sm:$0xff]
        %v1203 = vld [vmem:[%s1196 + $0x30] sm:$0xff]
        %v1204 = vld [vmem:[%s1196 + $0x38] sm:$0xff]
        %v1205 = vld [vmem:[%s1196 + $0x40] sm:$0xff]
        %v1206 = vld [vmem:[%s1196 + $0x48] sm:$0xff]
        %v1207 = vld [vmem:[%s1196 + $0x50] sm:$0xff]
        %v1208 = vld [vmem:[%s1196 + $0x58] sm:$0xff]
        %v1209 = vld [vmem:[%s1196 + $0x60] sm:$0xff]
        %v1210 = vld [vmem:[%s1196 + $0x68] sm:$0xff]
        %v1211 = vld [vmem:[%s1196 + $0x70] sm:$0xff]
        %v1212 = vld [vmem:[%s1196 + $0x78] sm:$0xff]
        %1213 = vst [vmem:[#allocation3 + $0x18] sm:$0xff] %v1197
        %1214 = vst [vmem:[#allocation3 + $0xa0] sm:$0xff] %v1198
        %1215 = vst [vmem:[#allocation3 + $0x128] sm:$0xff] %v1199
        %1216 = vst [vmem:[#allocation3 + $0x1b0] sm:$0xff] %v1200
        %1217 = vst [vmem:[#allocation3 + $0x238] sm:$0xff] %v1201
        %1218 = vst [vmem:[#allocation3 + $0x2c0] sm:$0xff] %v1202
        %1219 = vst [vmem:[#allocation3 + $0x348] sm:$0xff] %v1203
        %1220 = vst [vmem:[#allocation3 + $0x3d0] sm:$0xff] %v1204
        %1221 = vst [vmem:[#allocation3 + $0x458] sm:$0xff] %v1205
        %1222 = vst [vmem:[#allocation3 + $0x4e0] sm:$0xff] %v1206
        %1223 = vst [vmem:[#allocation3 + $0x568] sm:$0xff] %v1207
        %1224 = vst [vmem:[#allocation3 + $0x5f0] sm:$0xff] %v1208
        %1225 = vst [vmem:[#allocation3 + $0x678] sm:$0xff] %v1209
        %1226 = vst [vmem:[#allocation3 + $0x700] sm:$0xff] %v1210
        %1227 = vst [vmem:[#allocation3 + $0x788] sm:$0xff] %v1211
        %1228 = vst [vmem:[#allocation3 + $0x810] sm:$0xff] %v1212
        %s1229 = scalar_lea.vmem [#allocation2], 32
        %v1230 = vld [vmem:[%s1229] sm:$0xff]
        %v1231 = vld [vmem:[%s1229 + $0x8] sm:$0xff]
        %v1232 = vld [vmem:[%s1229 + $0x10] sm:$0xff]
        %v1233 = vld [vmem:[%s1229 + $0x18] sm:$0xff]
        %v1234 = vld [vmem:[%s1229 + $0x20] sm:$0xff]
        %v1235 = vld [vmem:[%s1229 + $0x28] sm:$0xff]
        %v1236 = vld [vmem:[%s1229 + $0x30] sm:$0xff]
        %v1237 = vld [vmem:[%s1229 + $0x38] sm:$0xff]
        %v1238 = vld [vmem:[%s1229 + $0x40] sm:$0xff]
        %v1239 = vld [vmem:[%s1229 + $0x48] sm:$0xff]
        %v1240 = vld [vmem:[%s1229 + $0x50] sm:$0xff]
        %v1241 = vld [vmem:[%s1229 + $0x58] sm:$0xff]
        %v1242 = vld [vmem:[%s1229 + $0x60] sm:$0xff]
        %v1243 = vld [vmem:[%s1229 + $0x68] sm:$0xff]
        %v1244 = vld [vmem:[%s1229 + $0x70] sm:$0xff]
        %v1245 = vld [vmem:[%s1229 + $0x78] sm:$0xff]
        %1246 = vst [vmem:[#allocation3 + $0x20] sm:$0xff] %v1230
        %1247 = vst [vmem:[#allocation3 + $0xa8] sm:$0xff] %v1231
        %1248 = vst [vmem:[#allocation3 + $0x130] sm:$0xff] %v1232
        %1249 = vst [vmem:[#allocation3 + $0x1b8] sm:$0xff] %v1233
        %1250 = vst [vmem:[#allocation3 + $0x240] sm:$0xff] %v1234
        %1251 = vst [vmem:[#allocation3 + $0x2c8] sm:$0xff] %v1235
        %1252 = vst [vmem:[#allocation3 + $0x350] sm:$0xff] %v1236
        %1253 = vst [vmem:[#allocation3 + $0x3d8] sm:$0xff] %v1237
        %1254 = vst [vmem:[#allocation3 + $0x460] sm:$0xff] %v1238
        %1255 = vst [vmem:[#allocation3 + $0x4e8] sm:$0xff] %v1239
        %1256 = vst [vmem:[#allocation3 + $0x570] sm:$0xff] %v1240
        %1257 = vst [vmem:[#allocation3 + $0x5f8] sm:$0xff] %v1241
        %1258 = vst [vmem:[#allocation3 + $0x680] sm:$0xff] %v1242
        %1259 = vst [vmem:[#allocation3 + $0x708] sm:$0xff] %v1243
        %1260 = vst [vmem:[#allocation3 + $0x790] sm:$0xff] %v1244
        %1261 = vst [vmem:[#allocation3 + $0x818] sm:$0xff] %v1245
        %s1262 = scalar_lea.vmem [#allocation2], 40
        %v1263 = vld [vmem:[%s1262] sm:$0xff]
        %v1264 = vld [vmem:[%s1262 + $0x8] sm:$0xff]
        %v1265 = vld [vmem:[%s1262 + $0x10] sm:$0xff]
        %v1266 = vld [vmem:[%s1262 + $0x18] sm:$0xff]
        %v1267 = vld [vmem:[%s1262 + $0x20] sm:$0xff]
        %v1268 = vld [vmem:[%s1262 + $0x28] sm:$0xff]
        %v1269 = vld [vmem:[%s1262 + $0x30] sm:$0xff]
        %v1270 = vld [vmem:[%s1262 + $0x38] sm:$0xff]
        %v1271 = vld [vmem:[%s1262 + $0x40] sm:$0xff]
        %v1272 = vld [vmem:[%s1262 + $0x48] sm:$0xff]
        %v1273 = vld [vmem:[%s1262 + $0x50] sm:$0xff]
        %v1274 = vld [vmem:[%s1262 + $0x58] sm:$0xff]
        %v1275 = vld [vmem:[%s1262 + $0x60] sm:$0xff]
        %v1276 = vld [vmem:[%s1262 + $0x68] sm:$0xff]
        %v1277 = vld [vmem:[%s1262 + $0x70] sm:$0xff]
        %v1278 = vld [vmem:[%s1262 + $0x78] sm:$0xff]
        %1279 = vst [vmem:[#allocation3 + $0x28] sm:$0xff] %v1263
        %1280 = vst [vmem:[#allocation3 + $0xb0] sm:$0xff] %v1264
        %1281 = vst [vmem:[#allocation3 + $0x138] sm:$0xff] %v1265
        %1282 = vst [vmem:[#allocation3 + $0x1c0] sm:$0xff] %v1266
        %1283 = vst [vmem:[#allocation3 + $0x248] sm:$0xff] %v1267
        %1284 = vst [vmem:[#allocation3 + $0x2d0] sm:$0xff] %v1268
        %1285 = vst [vmem:[#allocation3 + $0x358] sm:$0xff] %v1269
        %1286 = vst [vmem:[#allocation3 + $0x3e0] sm:$0xff] %v1270
        %1287 = vst [vmem:[#allocation3 + $0x468] sm:$0xff] %v1271
        %1288 = vst [vmem:[#allocation3 + $0x4f0] sm:$0xff] %v1272
        %1289 = vst [vmem:[#allocation3 + $0x578] sm:$0xff] %v1273
        %1290 = vst [vmem:[#allocation3 + $0x600] sm:$0xff] %v1274
        %1291 = vst [vmem:[#allocation3 + $0x688] sm:$0xff] %v1275
        %1292 = vst [vmem:[#allocation3 + $0x710] sm:$0xff] %v1276
        %1293 = vst [vmem:[#allocation3 + $0x798] sm:$0xff] %v1277
        %1294 = vst [vmem:[#allocation3 + $0x820] sm:$0xff] %v1278
        %s1295 = scalar_lea.vmem [#allocation2], 48
        %v1296 = vld [vmem:[%s1295] sm:$0xff]
        %v1297 = vld [vmem:[%s1295 + $0x8] sm:$0xff]
        %v1298 = vld [vmem:[%s1295 + $0x10] sm:$0xff]
        %v1299 = vld [vmem:[%s1295 + $0x18] sm:$0xff]
        %v1300 = vld [vmem:[%s1295 + $0x20] sm:$0xff]
        %v1301 = vld [vmem:[%s1295 + $0x28] sm:$0xff]
        %v1302 = vld [vmem:[%s1295 + $0x30] sm:$0xff]
        %v1303 = vld [vmem:[%s1295 + $0x38] sm:$0xff]
        %v1304 = vld [vmem:[%s1295 + $0x40] sm:$0xff]
        %v1305 = vld [vmem:[%s1295 + $0x48] sm:$0xff]
        %v1306 = vld [vmem:[%s1295 + $0x50] sm:$0xff]
        %v1307 = vld [vmem:[%s1295 + $0x58] sm:$0xff]
        %v1308 = vld [vmem:[%s1295 + $0x60] sm:$0xff]
        %v1309 = vld [vmem:[%s1295 + $0x68] sm:$0xff]
        %v1310 = vld [vmem:[%s1295 + $0x70] sm:$0xff]
        %v1311 = vld [vmem:[%s1295 + $0x78] sm:$0xff]
        %1312 = vst [vmem:[#allocation3 + $0x30] sm:$0xff] %v1296
        %1313 = vst [vmem:[#allocation3 + $0xb8] sm:$0xff] %v1297
        %1314 = vst [vmem:[#allocation3 + $0x140] sm:$0xff] %v1298
        %1315 = vst [vmem:[#allocation3 + $0x1c8] sm:$0xff] %v1299
        %1316 = vst [vmem:[#allocation3 + $0x250] sm:$0xff] %v1300
        %1317 = vst [vmem:[#allocation3 + $0x2d8] sm:$0xff] %v1301
        %1318 = vst [vmem:[#allocation3 + $0x360] sm:$0xff] %v1302
        %1319 = vst [vmem:[#allocation3 + $0x3e8] sm:$0xff] %v1303
        %1320 = vst [vmem:[#allocation3 + $0x470] sm:$0xff] %v1304
        %1321 = vst [vmem:[#allocation3 + $0x4f8] sm:$0xff] %v1305
        %1322 = vst [vmem:[#allocation3 + $0x580] sm:$0xff] %v1306
        %1323 = vst [vmem:[#allocation3 + $0x608] sm:$0xff] %v1307
        %1324 = vst [vmem:[#allocation3 + $0x690] sm:$0xff] %v1308
        %1325 = vst [vmem:[#allocation3 + $0x718] sm:$0xff] %v1309
        %1326 = vst [vmem:[#allocation3 + $0x7a0] sm:$0xff] %v1310
        %1327 = vst [vmem:[#allocation3 + $0x828] sm:$0xff] %v1311
        %s1328 = scalar_lea.vmem [#allocation2], 56
        %v1329 = vld [vmem:[%s1328] sm:$0xff]
        %v1330 = vld [vmem:[%s1328 + $0x8] sm:$0xff]
        %v1331 = vld [vmem:[%s1328 + $0x10] sm:$0xff]
        %v1332 = vld [vmem:[%s1328 + $0x18] sm:$0xff]
        %v1333 = vld [vmem:[%s1328 + $0x20] sm:$0xff]
        %v1334 = vld [vmem:[%s1328 + $0x28] sm:$0xff]
        %v1335 = vld [vmem:[%s1328 + $0x30] sm:$0xff]
        %v1336 = vld [vmem:[%s1328 + $0x38] sm:$0xff]
        %v1337 = vld [vmem:[%s1328 + $0x40] sm:$0xff]
        %v1338 = vld [vmem:[%s1328 + $0x48] sm:$0xff]
        %v1339 = vld [vmem:[%s1328 + $0x50] sm:$0xff]
        %v1340 = vld [vmem:[%s1328 + $0x58] sm:$0xff]
        %v1341 = vld [vmem:[%s1328 + $0x60] sm:$0xff]
        %v1342 = vld [vmem:[%s1328 + $0x68] sm:$0xff]
        %v1343 = vld [vmem:[%s1328 + $0x70] sm:$0xff]
        %v1344 = vld [vmem:[%s1328 + $0x78] sm:$0xff]
        %1345 = vst [vmem:[#allocation3 + $0x38] sm:$0xff] %v1329
        %1346 = vst [vmem:[#allocation3 + $0xc0] sm:$0xff] %v1330
        %1347 = vst [vmem:[#allocation3 + $0x148] sm:$0xff] %v1331
        %1348 = vst [vmem:[#allocation3 + $0x1d0] sm:$0xff] %v1332
        %1349 = vst [vmem:[#allocation3 + $0x258] sm:$0xff] %v1333
        %1350 = vst [vmem:[#allocation3 + $0x2e0] sm:$0xff] %v1334
        %1351 = vst [vmem:[#allocation3 + $0x368] sm:$0xff] %v1335
        %1352 = vst [vmem:[#allocation3 + $0x3f0] sm:$0xff] %v1336
        %1353 = vst [vmem:[#allocation3 + $0x478] sm:$0xff] %v1337
        %1354 = vst [vmem:[#allocation3 + $0x500] sm:$0xff] %v1338
        %1355 = vst [vmem:[#allocation3 + $0x588] sm:$0xff] %v1339
        %1356 = vst [vmem:[#allocation3 + $0x610] sm:$0xff] %v1340
        %1357 = vst [vmem:[#allocation3 + $0x698] sm:$0xff] %v1341
        %1358 = vst [vmem:[#allocation3 + $0x720] sm:$0xff] %v1342
        %1359 = vst [vmem:[#allocation3 + $0x7a8] sm:$0xff] %v1343
        %1360 = vst [vmem:[#allocation3 + $0x830] sm:$0xff] %v1344
        %v1361 = vld [vmem:[%s1081] sm:$0xff]
        %v1362 = vld [vmem:[%s1081 + $0x8] sm:$0xff]
        %v1363 = vld [vmem:[%s1081 + $0x10] sm:$0xff]
        %v1364 = vld [vmem:[%s1081 + $0x18] sm:$0xff]
        %v1365 = vld [vmem:[%s1081 + $0x20] sm:$0xff]
        %v1366 = vld [vmem:[%s1081 + $0x28] sm:$0xff]
        %v1367 = vld [vmem:[%s1081 + $0x30] sm:$0xff]
        %v1368 = vld [vmem:[%s1081 + $0x38] sm:$0xff]
        %v1369 = vld [vmem:[%s1081 + $0x40] sm:$0xff]
        %v1370 = vld [vmem:[%s1081 + $0x48] sm:$0xff]
        %v1371 = vld [vmem:[%s1081 + $0x50] sm:$0xff]
        %v1372 = vld [vmem:[%s1081 + $0x58] sm:$0xff]
        %v1373 = vld [vmem:[%s1081 + $0x60] sm:$0xff]
        %v1374 = vld [vmem:[%s1081 + $0x68] sm:$0xff]
        %v1375 = vld [vmem:[%s1081 + $0x70] sm:$0xff]
        %v1376 = vld [vmem:[%s1081 + $0x78] sm:$0xff]
        %1377 = vst [vmem:[#allocation3 + $0x40] sm:$0xff] %v1361
        %1378 = vst [vmem:[#allocation3 + $0xc8] sm:$0xff] %v1362
        %1379 = vst [vmem:[#allocation3 + $0x150] sm:$0xff] %v1363
        %1380 = vst [vmem:[#allocation3 + $0x1d8] sm:$0xff] %v1364
        %1381 = vst [vmem:[#allocation3 + $0x260] sm:$0xff] %v1365
        %1382 = vst [vmem:[#allocation3 + $0x2e8] sm:$0xff] %v1366
        %1383 = vst [vmem:[#allocation3 + $0x370] sm:$0xff] %v1367
        %1384 = vst [vmem:[#allocation3 + $0x3f8] sm:$0xff] %v1368
        %1385 = vst [vmem:[#allocation3 + $0x480] sm:$0xff] %v1369
        %1386 = vst [vmem:[#allocation3 + $0x508] sm:$0xff] %v1370
        %1387 = vst [vmem:[#allocation3 + $0x590] sm:$0xff] %v1371
        %1388 = vst [vmem:[#allocation3 + $0x618] sm:$0xff] %v1372
        %1389 = vst [vmem:[#allocation3 + $0x6a0] sm:$0xff] %v1373
        %1390 = vst [vmem:[#allocation3 + $0x728] sm:$0xff] %v1374
        %1391 = vst [vmem:[#allocation3 + $0x7b0] sm:$0xff] %v1375
        %1392 = vst [vmem:[#allocation3 + $0x838] sm:$0xff] %v1376
        %s1393 = scalar_lea.vmem [#allocation2], 72
        %v1394 = vld [vmem:[%s1393] sm:$0xff]
        %v1395 = vld [vmem:[%s1393 + $0x8] sm:$0xff]
        %v1396 = vld [vmem:[%s1393 + $0x10] sm:$0xff]
        %v1397 = vld [vmem:[%s1393 + $0x18] sm:$0xff]
        %v1398 = vld [vmem:[%s1393 + $0x20] sm:$0xff]
        %v1399 = vld [vmem:[%s1393 + $0x28] sm:$0xff]
        %v1400 = vld [vmem:[%s1393 + $0x30] sm:$0xff]
        %v1401 = vld [vmem:[%s1393 + $0x38] sm:$0xff]
        %v1402 = vld [vmem:[%s1393 + $0x40] sm:$0xff]
        %v1403 = vld [vmem:[%s1393 + $0x48] sm:$0xff]
        %v1404 = vld [vmem:[%s1393 + $0x50] sm:$0xff]
        %v1405 = vld [vmem:[%s1393 + $0x58] sm:$0xff]
        %v1406 = vld [vmem:[%s1393 + $0x60] sm:$0xff]
        %v1407 = vld [vmem:[%s1393 + $0x68] sm:$0xff]
        %v1408 = vld [vmem:[%s1393 + $0x70] sm:$0xff]
        %v1409 = vld [vmem:[%s1393 + $0x78] sm:$0xff]
        %1410 = vst [vmem:[#allocation3 + $0x48] sm:$0xff] %v1394
        %1411 = vst [vmem:[#allocation3 + $0xd0] sm:$0xff] %v1395
        %1412 = vst [vmem:[#allocation3 + $0x158] sm:$0xff] %v1396
        %1413 = vst [vmem:[#allocation3 + $0x1e0] sm:$0xff] %v1397
        %1414 = vst [vmem:[#allocation3 + $0x268] sm:$0xff] %v1398
        %1415 = vst [vmem:[#allocation3 + $0x2f0] sm:$0xff] %v1399
        %1416 = vst [vmem:[#allocation3 + $0x378] sm:$0xff] %v1400
        %1417 = vst [vmem:[#allocation3 + $0x400] sm:$0xff] %v1401
        %1418 = vst [vmem:[#allocation3 + $0x488] sm:$0xff] %v1402
        %1419 = vst [vmem:[#allocation3 + $0x510] sm:$0xff] %v1403
        %1420 = vst [vmem:[#allocation3 + $0x598] sm:$0xff] %v1404
        %1421 = vst [vmem:[#allocation3 + $0x620] sm:$0xff] %v1405
        %1422 = vst [vmem:[#allocation3 + $0x6a8] sm:$0xff] %v1406
        %1423 = vst [vmem:[#allocation3 + $0x730] sm:$0xff] %v1407
        %1424 = vst [vmem:[#allocation3 + $0x7b8] sm:$0xff] %v1408
        %1425 = vst [vmem:[#allocation3 + $0x840] sm:$0xff] %v1409
        %s1426 = scalar_lea.vmem [#allocation2], 80
        %v1427 = vld [vmem:[%s1426] sm:$0xff]
        %v1428 = vld [vmem:[%s1426 + $0x8] sm:$0xff]
        %v1429 = vld [vmem:[%s1426 + $0x10] sm:$0xff]
        %v1430 = vld [vmem:[%s1426 + $0x18] sm:$0xff]
        %v1431 = vld [vmem:[%s1426 + $0x20] sm:$0xff]
        %v1432 = vld [vmem:[%s1426 + $0x28] sm:$0xff]
        %v1433 = vld [vmem:[%s1426 + $0x30] sm:$0xff]
        %v1434 = vld [vmem:[%s1426 + $0x38] sm:$0xff]
        %v1435 = vld [vmem:[%s1426 + $0x40] sm:$0xff]
        %v1436 = vld [vmem:[%s1426 + $0x48] sm:$0xff]
        %v1437 = vld [vmem:[%s1426 + $0x50] sm:$0xff]
        %v1438 = vld [vmem:[%s1426 + $0x58] sm:$0xff]
        %v1439 = vld [vmem:[%s1426 + $0x60] sm:$0xff]
        %v1440 = vld [vmem:[%s1426 + $0x68] sm:$0xff]
        %v1441 = vld [vmem:[%s1426 + $0x70] sm:$0xff]
        %v1442 = vld [vmem:[%s1426 + $0x78] sm:$0xff]
        %1443 = vst [vmem:[#allocation3 + $0x50] sm:$0xff] %v1427
        %1444 = vst [vmem:[#allocation3 + $0xd8] sm:$0xff] %v1428
        %1445 = vst [vmem:[#allocation3 + $0x160] sm:$0xff] %v1429
        %1446 = vst [vmem:[#allocation3 + $0x1e8] sm:$0xff] %v1430
        %1447 = vst [vmem:[#allocation3 + $0x270] sm:$0xff] %v1431
        %1448 = vst [vmem:[#allocation3 + $0x2f8] sm:$0xff] %v1432
        %1449 = vst [vmem:[#allocation3 + $0x380] sm:$0xff] %v1433
        %1450 = vst [vmem:[#allocation3 + $0x408] sm:$0xff] %v1434
        %1451 = vst [vmem:[#allocation3 + $0x490] sm:$0xff] %v1435
        %1452 = vst [vmem:[#allocation3 + $0x518] sm:$0xff] %v1436
        %1453 = vst [vmem:[#allocation3 + $0x5a0] sm:$0xff] %v1437
        %1454 = vst [vmem:[#allocation3 + $0x628] sm:$0xff] %v1438
        %1455 = vst [vmem:[#allocation3 + $0x6b0] sm:$0xff] %v1439
        %1456 = vst [vmem:[#allocation3 + $0x738] sm:$0xff] %v1440
        %1457 = vst [vmem:[#allocation3 + $0x7c0] sm:$0xff] %v1441
        %1458 = vst [vmem:[#allocation3 + $0x848] sm:$0xff] %v1442
        %s1459 = scalar_lea.vmem [#allocation2], 88
        %v1460 = vld [vmem:[%s1459] sm:$0xff]
        %v1461 = vld [vmem:[%s1459 + $0x8] sm:$0xff]
        %v1462 = vld [vmem:[%s1459 + $0x10] sm:$0xff]
        %v1463 = vld [vmem:[%s1459 + $0x18] sm:$0xff]
        %v1464 = vld [vmem:[%s1459 + $0x20] sm:$0xff]
        %v1465 = vld [vmem:[%s1459 + $0x28] sm:$0xff]
        %v1466 = vld [vmem:[%s1459 + $0x30] sm:$0xff]
        %v1467 = vld [vmem:[%s1459 + $0x38] sm:$0xff]
        %v1468 = vld [vmem:[%s1459 + $0x40] sm:$0xff]
        %v1469 = vld [vmem:[%s1459 + $0x48] sm:$0xff]
        %v1470 = vld [vmem:[%s1459 + $0x50] sm:$0xff]
        %v1471 = vld [vmem:[%s1459 + $0x58] sm:$0xff]
        %v1472 = vld [vmem:[%s1459 + $0x60] sm:$0xff]
        %v1473 = vld [vmem:[%s1459 + $0x68] sm:$0xff]
        %v1474 = vld [vmem:[%s1459 + $0x70] sm:$0xff]
        %v1475 = vld [vmem:[%s1459 + $0x78] sm:$0xff]
        %1476 = vst [vmem:[#allocation3 + $0x58] sm:$0xff] %v1460
        %1477 = vst [vmem:[#allocation3 + $0xe0] sm:$0xff] %v1461
        %1478 = vst [vmem:[#allocation3 + $0x168] sm:$0xff] %v1462
        %1479 = vst [vmem:[#allocation3 + $0x1f0] sm:$0xff] %v1463
        %1480 = vst [vmem:[#allocation3 + $0x278] sm:$0xff] %v1464
        %1481 = vst [vmem:[#allocation3 + $0x300] sm:$0xff] %v1465
        %1482 = vst [vmem:[#allocation3 + $0x388] sm:$0xff] %v1466
        %1483 = vst [vmem:[#allocation3 + $0x410] sm:$0xff] %v1467
        %1484 = vst [vmem:[#allocation3 + $0x498] sm:$0xff] %v1468
        %1485 = vst [vmem:[#allocation3 + $0x520] sm:$0xff] %v1469
        %1486 = vst [vmem:[#allocation3 + $0x5a8] sm:$0xff] %v1470
        %1487 = vst [vmem:[#allocation3 + $0x630] sm:$0xff] %v1471
        %1488 = vst [vmem:[#allocation3 + $0x6b8] sm:$0xff] %v1472
        %1489 = vst [vmem:[#allocation3 + $0x740] sm:$0xff] %v1473
        %1490 = vst [vmem:[#allocation3 + $0x7c8] sm:$0xff] %v1474
        %1491 = vst [vmem:[#allocation3 + $0x850] sm:$0xff] %v1475
        %s1492 = scalar_lea.vmem [#allocation2], 96
        %v1493 = vld [vmem:[%s1492] sm:$0xff]
        %v1494 = vld [vmem:[%s1492 + $0x8] sm:$0xff]
        %v1495 = vld [vmem:[%s1492 + $0x10] sm:$0xff]
        %v1496 = vld [vmem:[%s1492 + $0x18] sm:$0xff]
        %v1497 = vld [vmem:[%s1492 + $0x20] sm:$0xff]
        %v1498 = vld [vmem:[%s1492 + $0x28] sm:$0xff]
        %v1499 = vld [vmem:[%s1492 + $0x30] sm:$0xff]
        %v1500 = vld [vmem:[%s1492 + $0x38] sm:$0xff]
        %v1501 = vld [vmem:[%s1492 + $0x40] sm:$0xff]
        %v1502 = vld [vmem:[%s1492 + $0x48] sm:$0xff]
        %v1503 = vld [vmem:[%s1492 + $0x50] sm:$0xff]
        %v1504 = vld [vmem:[%s1492 + $0x58] sm:$0xff]
        %v1505 = vld [vmem:[%s1492 + $0x60] sm:$0xff]
        %v1506 = vld [vmem:[%s1492 + $0x68] sm:$0xff]
        %v1507 = vld [vmem:[%s1492 + $0x70] sm:$0xff]
        %v1508 = vld [vmem:[%s1492 + $0x78] sm:$0xff]
        %1509 = vst [vmem:[#allocation3 + $0x60] sm:$0xff] %v1493
        %1510 = vst [vmem:[#allocation3 + $0xe8] sm:$0xff] %v1494
        %1511 = vst [vmem:[#allocation3 + $0x170] sm:$0xff] %v1495
        %1512 = vst [vmem:[#allocation3 + $0x1f8] sm:$0xff] %v1496
        %1513 = vst [vmem:[#allocation3 + $0x280] sm:$0xff] %v1497
        %1514 = vst [vmem:[#allocation3 + $0x308] sm:$0xff] %v1498
        %1515 = vst [vmem:[#allocation3 + $0x390] sm:$0xff] %v1499
        %1516 = vst [vmem:[#allocation3 + $0x418] sm:$0xff] %v1500
        %1517 = vst [vmem:[#allocation3 + $0x4a0] sm:$0xff] %v1501
        %1518 = vst [vmem:[#allocation3 + $0x528] sm:$0xff] %v1502
        %1519 = vst [vmem:[#allocation3 + $0x5b0] sm:$0xff] %v1503
        %1520 = vst [vmem:[#allocation3 + $0x638] sm:$0xff] %v1504
        %1521 = vst [vmem:[#allocation3 + $0x6c0] sm:$0xff] %v1505
        %1522 = vst [vmem:[#allocation3 + $0x748] sm:$0xff] %v1506
        %1523 = vst [vmem:[#allocation3 + $0x7d0] sm:$0xff] %v1507
        %1524 = vst [vmem:[#allocation3 + $0x858] sm:$0xff] %v1508
        %s1525 = scalar_lea.vmem [#allocation2], 104
        %v1526 = vld [vmem:[%s1525] sm:$0xff]
        %v1527 = vld [vmem:[%s1525 + $0x8] sm:$0xff]
        %v1528 = vld [vmem:[%s1525 + $0x10] sm:$0xff]
        %v1529 = vld [vmem:[%s1525 + $0x18] sm:$0xff]
        %v1530 = vld [vmem:[%s1525 + $0x20] sm:$0xff]
        %v1531 = vld [vmem:[%s1525 + $0x28] sm:$0xff]
        %v1532 = vld [vmem:[%s1525 + $0x30] sm:$0xff]
        %v1533 = vld [vmem:[%s1525 + $0x38] sm:$0xff]
        %v1534 = vld [vmem:[%s1525 + $0x40] sm:$0xff]
        %v1535 = vld [vmem:[%s1525 + $0x48] sm:$0xff]
        %v1536 = vld [vmem:[%s1525 + $0x50] sm:$0xff]
        %v1537 = vld [vmem:[%s1525 + $0x58] sm:$0xff]
        %v1538 = vld [vmem:[%s1525 + $0x60] sm:$0xff]
        %v1539 = vld [vmem:[%s1525 + $0x68] sm:$0xff]
        %v1540 = vld [vmem:[%s1525 + $0x70] sm:$0xff]
        %v1541 = vld [vmem:[%s1525 + $0x78] sm:$0xff]
        %1542 = vst [vmem:[#allocation3 + $0x68] sm:$0xff] %v1526
        %1543 = vst [vmem:[#allocation3 + $0xf0] sm:$0xff] %v1527
        %1544 = vst [vmem:[#allocation3 + $0x178] sm:$0xff] %v1528
        %1545 = vst [vmem:[#allocation3 + $0x200] sm:$0xff] %v1529
        %1546 = vst [vmem:[#allocation3 + $0x288] sm:$0xff] %v1530
        %1547 = vst [vmem:[#allocation3 + $0x310] sm:$0xff] %v1531
        %1548 = vst [vmem:[#allocation3 + $0x398] sm:$0xff] %v1532
        %1549 = vst [vmem:[#allocation3 + $0x420] sm:$0xff] %v1533
        %1550 = vst [vmem:[#allocation3 + $0x4a8] sm:$0xff] %v1534
        %1551 = vst [vmem:[#allocation3 + $0x530] sm:$0xff] %v1535
        %1552 = vst [vmem:[#allocation3 + $0x5b8] sm:$0xff] %v1536
        %1553 = vst [vmem:[#allocation3 + $0x640] sm:$0xff] %v1537
        %1554 = vst [vmem:[#allocation3 + $0x6c8] sm:$0xff] %v1538
        %1555 = vst [vmem:[#allocation3 + $0x750] sm:$0xff] %v1539
        %1556 = vst [vmem:[#allocation3 + $0x7d8] sm:$0xff] %v1540
        %1557 = vst [vmem:[#allocation3 + $0x860] sm:$0xff] %v1541
        %s1558 = scalar_lea.vmem [#allocation2], 112
        %v1559 = vld [vmem:[%s1558] sm:$0xff]
        %v1560 = vld [vmem:[%s1558 + $0x8] sm:$0xff]
        %v1561 = vld [vmem:[%s1558 + $0x10] sm:$0xff]
        %v1562 = vld [vmem:[%s1558 + $0x18] sm:$0xff]
        %v1563 = vld [vmem:[%s1558 + $0x20] sm:$0xff]
        %v1564 = vld [vmem:[%s1558 + $0x28] sm:$0xff]
        %v1565 = vld [vmem:[%s1558 + $0x30] sm:$0xff]
        %v1566 = vld [vmem:[%s1558 + $0x38] sm:$0xff]
        %v1567 = vld [vmem:[%s1558 + $0x40] sm:$0xff]
        %v1568 = vld [vmem:[%s1558 + $0x48] sm:$0xff]
        %v1569 = vld [vmem:[%s1558 + $0x50] sm:$0xff]
        %v1570 = vld [vmem:[%s1558 + $0x58] sm:$0xff]
        %v1571 = vld [vmem:[%s1558 + $0x60] sm:$0xff]
        %v1572 = vld [vmem:[%s1558 + $0x68] sm:$0xff]
        %v1573 = vld [vmem:[%s1558 + $0x70] sm:$0xff]
        %v1574 = vld [vmem:[%s1558 + $0x78] sm:$0xff]
        %1575 = vst [vmem:[#allocation3 + $0x70] sm:$0xff] %v1559
        %1576 = vst [vmem:[#allocation3 + $0xf8] sm:$0xff] %v1560
        %1577 = vst [vmem:[#allocation3 + $0x180] sm:$0xff] %v1561
        %1578 = vst [vmem:[#allocation3 + $0x208] sm:$0xff] %v1562
        %1579 = vst [vmem:[#allocation3 + $0x290] sm:$0xff] %v1563
        %1580 = vst [vmem:[#allocation3 + $0x318] sm:$0xff] %v1564
        %1581 = vst [vmem:[#allocation3 + $0x3a0] sm:$0xff] %v1565
        %1582 = vst [vmem:[#allocation3 + $0x428] sm:$0xff] %v1566
        %1583 = vst [vmem:[#allocation3 + $0x4b0] sm:$0xff] %v1567
        %1584 = vst [vmem:[#allocation3 + $0x538] sm:$0xff] %v1568
        %1585 = vst [vmem:[#allocation3 + $0x5c0] sm:$0xff] %v1569
        %1586 = vst [vmem:[#allocation3 + $0x648] sm:$0xff] %v1570
        %1587 = vst [vmem:[#allocation3 + $0x6d0] sm:$0xff] %v1571
        %1588 = vst [vmem:[#allocation3 + $0x758] sm:$0xff] %v1572
        %1589 = vst [vmem:[#allocation3 + $0x7e0] sm:$0xff] %v1573
        %1590 = vst [vmem:[#allocation3 + $0x868] sm:$0xff] %v1574
        %s1591 = scalar_lea.vmem [#allocation2], 120
        %v1592 = vld [vmem:[%s1591] sm:$0xff]
        %v1593 = vld [vmem:[%s1591 + $0x8] sm:$0xff]
        %v1594 = vld [vmem:[%s1591 + $0x10] sm:$0xff]
        %v1595 = vld [vmem:[%s1591 + $0x18] sm:$0xff]
        %v1596 = vld [vmem:[%s1591 + $0x20] sm:$0xff]
        %v1597 = vld [vmem:[%s1591 + $0x28] sm:$0xff]
        %v1598 = vld [vmem:[%s1591 + $0x30] sm:$0xff]
        %v1599 = vld [vmem:[%s1591 + $0x38] sm:$0xff]
        %v1600 = vld [vmem:[%s1591 + $0x40] sm:$0xff]
        %v1601 = vld [vmem:[%s1591 + $0x48] sm:$0xff]
        %v1602 = vld [vmem:[%s1591 + $0x50] sm:$0xff]
        %v1603 = vld [vmem:[%s1591 + $0x58] sm:$0xff]
        %v1604 = vld [vmem:[%s1591 + $0x60] sm:$0xff]
        %v1605 = vld [vmem:[%s1591 + $0x68] sm:$0xff]
        %v1606 = vld [vmem:[%s1591 + $0x70] sm:$0xff]
        %v1607 = vld [vmem:[%s1591 + $0x78] sm:$0xff]
        %1608 = vst [vmem:[#allocation3 + $0x78] sm:$0xff] %v1592
        %1609 = vst [vmem:[#allocation3 + $0x100] sm:$0xff] %v1593
        %1610 = vst [vmem:[#allocation3 + $0x188] sm:$0xff] %v1594
        %1611 = vst [vmem:[#allocation3 + $0x210] sm:$0xff] %v1595
        %1612 = vst [vmem:[#allocation3 + $0x298] sm:$0xff] %v1596
        %1613 = vst [vmem:[#allocation3 + $0x320] sm:$0xff] %v1597
        %1614 = vst [vmem:[#allocation3 + $0x3a8] sm:$0xff] %v1598
        %1615 = vst [vmem:[#allocation3 + $0x430] sm:$0xff] %v1599
        %1616 = vst [vmem:[#allocation3 + $0x4b8] sm:$0xff] %v1600
        %1617 = vst [vmem:[#allocation3 + $0x540] sm:$0xff] %v1601
        %1618 = vst [vmem:[#allocation3 + $0x5c8] sm:$0xff] %v1602
        %1619 = vst [vmem:[#allocation3 + $0x650] sm:$0xff] %v1603
        %1620 = vst [vmem:[#allocation3 + $0x6d8] sm:$0xff] %v1604
        %1621 = vst [vmem:[#allocation3 + $0x760] sm:$0xff] %v1605
        %1622 = vst [vmem:[#allocation3 + $0x7e8] sm:$0xff] %v1606
        %1623 = vst [vmem:[#allocation3 + $0x870] sm:$0xff] %v1607
        %s1624 = scalar_lea.vmem [#allocation2], 128
        %v1625 = vld [vmem:[%s1624] sm:$0xff]
        %v1626 = vld [vmem:[%s1624 + $0x8] sm:$0xff]
        %v1627 = vld [vmem:[%s1624 + $0x10] sm:$0xff]
        %v1628 = vld [vmem:[%s1624 + $0x18] sm:$0xff]
        %v1629 = vld [vmem:[%s1624 + $0x20] sm:$0xff]
        %v1630 = vld [vmem:[%s1624 + $0x28] sm:$0xff]
        %v1631 = vld [vmem:[%s1624 + $0x30] sm:$0xff]
        %v1632 = vld [vmem:[%s1624 + $0x38] sm:$0xff]
        %v1633 = vld [vmem:[%s1624 + $0x40] sm:$0xff]
        %v1634 = vld [vmem:[%s1624 + $0x48] sm:$0xff]
        %v1635 = vld [vmem:[%s1624 + $0x50] sm:$0xff]
        %v1636 = vld [vmem:[%s1624 + $0x58] sm:$0xff]
        %v1637 = vld [vmem:[%s1624 + $0x60] sm:$0xff]
        %v1638 = vld [vmem:[%s1624 + $0x68] sm:$0xff]
        %v1639 = vld [vmem:[%s1624 + $0x70] sm:$0xff]
        %v1640 = vld [vmem:[%s1624 + $0x78] sm:$0xff]
        %1641 = vst [vmem:[#allocation3 + $0x80] sm:$0xff] %v1625
        %1642 = vst [vmem:[#allocation3 + $0x108] sm:$0xff] %v1626
        %1643 = vst [vmem:[#allocation3 + $0x190] sm:$0xff] %v1627
        %1644 = vst [vmem:[#allocation3 + $0x218] sm:$0xff] %v1628
        %1645 = vst [vmem:[#allocation3 + $0x2a0] sm:$0xff] %v1629
        %1646 = vst [vmem:[#allocation3 + $0x328] sm:$0xff] %v1630
        %1647 = vst [vmem:[#allocation3 + $0x3b0] sm:$0xff] %v1631
        %1648 = vst [vmem:[#allocation3 + $0x438] sm:$0xff] %v1632
        %1649 = vst [vmem:[#allocation3 + $0x4c0] sm:$0xff] %v1633
        %1650 = vst [vmem:[#allocation3 + $0x548] sm:$0xff] %v1634
        %1651 = vst [vmem:[#allocation3 + $0x5d0] sm:$0xff] %v1635
        %1652 = vst [vmem:[#allocation3 + $0x658] sm:$0xff] %v1636
        %1653 = vst [vmem:[#allocation3 + $0x6e0] sm:$0xff] %v1637
        %1654 = vst [vmem:[#allocation3 + $0x768] sm:$0xff] %v1638
        %1655 = vst [vmem:[#allocation3 + $0x7f0] sm:$0xff] %v1639
        %1656 = vst [vmem:[#allocation3 + $0x878] sm:$0xff] %v1640
        %v1657 = vld [vmem:[#allocation3] sm:$0xff]
        %v1658 = vld [vmem:[#allocation3 + $0x8] sm:$0xff]
        %v1659 = vld [vmem:[#allocation3 + $0x10] sm:$0xff]
        %v1660 = vld [vmem:[#allocation3 + $0x18] sm:$0xff]
        %v1661 = vld [vmem:[#allocation3 + $0x20] sm:$0xff]
        %v1662 = vld [vmem:[#allocation3 + $0x28] sm:$0xff]
        %v1663 = vld [vmem:[#allocation3 + $0x30] sm:$0xff]
        %v1664 = vld [vmem:[#allocation3 + $0x38] sm:$0xff]
        %v1665 = vld [vmem:[#allocation3 + $0x40] sm:$0xff]
        %v1666 = vld [vmem:[#allocation3 + $0x48] sm:$0xff]
        %v1667 = vld [vmem:[#allocation3 + $0x50] sm:$0xff]
        %v1668 = vld [vmem:[#allocation3 + $0x58] sm:$0xff]
        %v1669 = vld [vmem:[#allocation3 + $0x60] sm:$0xff]
        %v1670 = vld [vmem:[#allocation3 + $0x68] sm:$0xff]
        %v1671 = vld [vmem:[#allocation3 + $0x70] sm:$0xff]
        %v1672 = vld [vmem:[#allocation3 + $0x78] sm:$0xff]
        %v1673 = vld [vmem:[#allocation3 + $0x80] sm:$0xff]
        %v1674 = vld [vmem:[#allocation3 + $0x88] sm:$0xff]
        %v1675 = vld [vmem:[#allocation3 + $0x90] sm:$0xff]
        %v1676 = vld [vmem:[#allocation3 + $0x98] sm:$0xff]
        %v1677 = vld [vmem:[#allocation3 + $0xa0] sm:$0xff]
        %v1678 = vld [vmem:[#allocation3 + $0xa8] sm:$0xff]
        %v1679 = vld [vmem:[#allocation3 + $0xb0] sm:$0xff]
        %v1680 = vld [vmem:[#allocation3 + $0xb8] sm:$0xff]
        %v1681 = vld [vmem:[#allocation3 + $0xc0] sm:$0xff]
        %v1682 = vld [vmem:[#allocation3 + $0xc8] sm:$0xff]
        %v1683 = vld [vmem:[#allocation3 + $0xd0] sm:$0xff]
        %v1684 = vld [vmem:[#allocation3 + $0xd8] sm:$0xff]
        %v1685 = vld [vmem:[#allocation3 + $0xe0] sm:$0xff]
        %v1686 = vld [vmem:[#allocation3 + $0xe8] sm:$0xff]
        %v1687 = vld [vmem:[#allocation3 + $0xf0] sm:$0xff]
        %v1688 = vld [vmem:[#allocation3 + $0xf8] sm:$0xff]
        %v1689 = vld [vmem:[#allocation3 + $0x100] sm:$0xff]
        %v1690 = vld [vmem:[#allocation3 + $0x108] sm:$0xff]
        %v1691 = vld [vmem:[#allocation3 + $0x110] sm:$0xff]
        %v1692 = vld [vmem:[#allocation3 + $0x118] sm:$0xff]
        %v1693 = vld [vmem:[#allocation3 + $0x120] sm:$0xff]
        %v1694 = vld [vmem:[#allocation3 + $0x128] sm:$0xff]
        %v1695 = vld [vmem:[#allocation3 + $0x130] sm:$0xff]
        %v1696 = vld [vmem:[#allocation3 + $0x138] sm:$0xff]
        %v1697 = vld [vmem:[#allocation3 + $0x140] sm:$0xff]
        %v1698 = vld [vmem:[#allocation3 + $0x148] sm:$0xff]
        %v1699 = vld [vmem:[#allocation3 + $0x150] sm:$0xff]
        %v1700 = vld [vmem:[#allocation3 + $0x158] sm:$0xff]
        %v1701 = vld [vmem:[#allocation3 + $0x160] sm:$0xff]
        %v1702 = vld [vmem:[#allocation3 + $0x168] sm:$0xff]
        %v1703 = vld [vmem:[#allocation3 + $0x170] sm:$0xff]
        %v1704 = vld [vmem:[#allocation3 + $0x178] sm:$0xff]
        %v1705 = vld [vmem:[#allocation3 + $0x180] sm:$0xff]
        %v1706 = vld [vmem:[#allocation3 + $0x188] sm:$0xff]
        %v1707 = vld [vmem:[#allocation3 + $0x190] sm:$0xff]
        %v1708 = vld [vmem:[#allocation3 + $0x198] sm:$0xff]
        %v1709 = vld [vmem:[#allocation3 + $0x1a0] sm:$0xff]
        %v1710 = vld [vmem:[#allocation3 + $0x1a8] sm:$0xff]
        %v1711 = vld [vmem:[#allocation3 + $0x1b0] sm:$0xff]
        %v1712 = vld [vmem:[#allocation3 + $0x1b8] sm:$0xff]
        %v1713 = vld [vmem:[#allocation3 + $0x1c0] sm:$0xff]
        %v1714 = vld [vmem:[#allocation3 + $0x1c8] sm:$0xff]
        %v1715 = vld [vmem:[#allocation3 + $0x1d0] sm:$0xff]
        %v1716 = vld [vmem:[#allocation3 + $0x1d8] sm:$0xff]
        %v1717 = vld [vmem:[#allocation3 + $0x1e0] sm:$0xff]
        %v1718 = vld [vmem:[#allocation3 + $0x1e8] sm:$0xff]
        %v1719 = vld [vmem:[#allocation3 + $0x1f0] sm:$0xff]
        %v1720 = vld [vmem:[#allocation3 + $0x1f8] sm:$0xff]
        %v1721 = vld [vmem:[#allocation3 + $0x200] sm:$0xff]
        %v1722 = vld [vmem:[#allocation3 + $0x208] sm:$0xff]
        %v1723 = vld [vmem:[#allocation3 + $0x210] sm:$0xff]
        %v1724 = vld [vmem:[#allocation3 + $0x218] sm:$0xff]
        %v1725 = vld [vmem:[#allocation3 + $0x220] sm:$0xff]
        %v1726 = vld [vmem:[#allocation3 + $0x228] sm:$0xff]
        %v1727 = vld [vmem:[#allocation3 + $0x230] sm:$0xff]
        %v1728 = vld [vmem:[#allocation3 + $0x238] sm:$0xff]
        %v1729 = vld [vmem:[#allocation3 + $0x240] sm:$0xff]
        %v1730 = vld [vmem:[#allocation3 + $0x248] sm:$0xff]
        %v1731 = vld [vmem:[#allocation3 + $0x250] sm:$0xff]
        %v1732 = vld [vmem:[#allocation3 + $0x258] sm:$0xff]
        %v1733 = vld [vmem:[#allocation3 + $0x260] sm:$0xff]
        %v1734 = vld [vmem:[#allocation3 + $0x268] sm:$0xff]
        %v1735 = vld [vmem:[#allocation3 + $0x270] sm:$0xff]
        %v1736 = vld [vmem:[#allocation3 + $0x278] sm:$0xff]
        %v1737 = vld [vmem:[#allocation3 + $0x280] sm:$0xff]
        %v1738 = vld [vmem:[#allocation3 + $0x288] sm:$0xff]
        %v1739 = vld [vmem:[#allocation3 + $0x290] sm:$0xff]
        %v1740 = vld [vmem:[#allocation3 + $0x298] sm:$0xff]
        %v1741 = vld [vmem:[#allocation3 + $0x2a0] sm:$0xff]
        %v1742 = vld [vmem:[#allocation3 + $0x2a8] sm:$0xff]
        %v1743 = vld [vmem:[#allocation3 + $0x2b0] sm:$0xff]
        %v1744 = vld [vmem:[#allocation3 + $0x2b8] sm:$0xff]
        %v1745 = vld [vmem:[#allocation3 + $0x2c0] sm:$0xff]
        %v1746 = vld [vmem:[#allocation3 + $0x2c8] sm:$0xff]
        %v1747 = vld [vmem:[#allocation3 + $0x2d0] sm:$0xff]
        %v1748 = vld [vmem:[#allocation3 + $0x2d8] sm:$0xff]
        %v1749 = vld [vmem:[#allocation3 + $0x2e0] sm:$0xff]
        %v1750 = vld [vmem:[#allocation3 + $0x2e8] sm:$0xff]
        %v1751 = vld [vmem:[#allocation3 + $0x2f0] sm:$0xff]
        %v1752 = vld [vmem:[#allocation3 + $0x2f8] sm:$0xff]
        %v1753 = vld [vmem:[#allocation3 + $0x300] sm:$0xff]
        %v1754 = vld [vmem:[#allocation3 + $0x308] sm:$0xff]
        %v1755 = vld [vmem:[#allocation3 + $0x310] sm:$0xff]
        %v1756 = vld [vmem:[#allocation3 + $0x318] sm:$0xff]
        %v1757 = vld [vmem:[#allocation3 + $0x320] sm:$0xff]
        %v1758 = vld [vmem:[#allocation3 + $0x328] sm:$0xff]
        %v1759 = vld [vmem:[#allocation3 + $0x330] sm:$0xff]
        %v1760 = vld [vmem:[#allocation3 + $0x338] sm:$0xff]
        %v1761 = vld [vmem:[#allocation3 + $0x340] sm:$0xff]
        %v1762 = vld [vmem:[#allocation3 + $0x348] sm:$0xff]
        %v1763 = vld [vmem:[#allocation3 + $0x350] sm:$0xff]
        %v1764 = vld [vmem:[#allocation3 + $0x358] sm:$0xff]
        %v1765 = vld [vmem:[#allocation3 + $0x360] sm:$0xff]
        %v1766 = vld [vmem:[#allocation3 + $0x368] sm:$0xff]
        %v1767 = vld [vmem:[#allocation3 + $0x370] sm:$0xff]
        %v1768 = vld [vmem:[#allocation3 + $0x378] sm:$0xff]
        %v1769 = vld [vmem:[#allocation3 + $0x380] sm:$0xff]
        %v1770 = vld [vmem:[#allocation3 + $0x388] sm:$0xff]
        %v1771 = vld [vmem:[#allocation3 + $0x390] sm:$0xff]
        %v1772 = vld [vmem:[#allocation3 + $0x398] sm:$0xff]
        %v1773 = vld [vmem:[#allocation3 + $0x3a0] sm:$0xff]
        %v1774 = vld [vmem:[#allocation3 + $0x3a8] sm:$0xff]
        %v1775 = vld [vmem:[#allocation3 + $0x3b0] sm:$0xff]
        %v1776 = vld [vmem:[#allocation3 + $0x3b8] sm:$0xff]
        %v1777 = vld [vmem:[#allocation3 + $0x3c0] sm:$0xff]
        %v1778 = vld [vmem:[#allocation3 + $0x3c8] sm:$0xff]
        %v1779 = vld [vmem:[#allocation3 + $0x3d0] sm:$0xff]
        %v1780 = vld [vmem:[#allocation3 + $0x3d8] sm:$0xff]
        %v1781 = vld [vmem:[#allocation3 + $0x3e0] sm:$0xff]
        %v1782 = vld [vmem:[#allocation3 + $0x3e8] sm:$0xff]
        %v1783 = vld [vmem:[#allocation3 + $0x3f0] sm:$0xff]
        %v1784 = vld [vmem:[#allocation3 + $0x3f8] sm:$0xff]
        %v1785 = vld [vmem:[#allocation3 + $0x400] sm:$0xff]
        %v1786 = vld [vmem:[#allocation3 + $0x408] sm:$0xff]
        %v1787 = vld [vmem:[#allocation3 + $0x410] sm:$0xff]
        %v1788 = vld [vmem:[#allocation3 + $0x418] sm:$0xff]
        %v1789 = vld [vmem:[#allocation3 + $0x420] sm:$0xff]
        %v1790 = vld [vmem:[#allocation3 + $0x428] sm:$0xff]
        %v1791 = vld [vmem:[#allocation3 + $0x430] sm:$0xff]
        %v1792 = vld [vmem:[#allocation3 + $0x438] sm:$0xff]
        %v1793 = vld [vmem:[#allocation3 + $0x440] sm:$0xff]
        %v1794 = vld [vmem:[#allocation3 + $0x448] sm:$0xff]
        %v1795 = vld [vmem:[#allocation3 + $0x450] sm:$0xff]
        %v1796 = vld [vmem:[#allocation3 + $0x458] sm:$0xff]
        %v1797 = vld [vmem:[#allocation3 + $0x460] sm:$0xff]
        %v1798 = vld [vmem:[#allocation3 + $0x468] sm:$0xff]
        %v1799 = vld [vmem:[#allocation3 + $0x470] sm:$0xff]
        %v1800 = vld [vmem:[#allocation3 + $0x478] sm:$0xff]
        %v1801 = vld [vmem:[#allocation3 + $0x480] sm:$0xff]
        %v1802 = vld [vmem:[#allocation3 + $0x488] sm:$0xff]
        %v1803 = vld [vmem:[#allocation3 + $0x490] sm:$0xff]
        %v1804 = vld [vmem:[#allocation3 + $0x498] sm:$0xff]
        %v1805 = vld [vmem:[#allocation3 + $0x4a0] sm:$0xff]
        %v1806 = vld [vmem:[#allocation3 + $0x4a8] sm:$0xff]
        %v1807 = vld [vmem:[#allocation3 + $0x4b0] sm:$0xff]
        %v1808 = vld [vmem:[#allocation3 + $0x4b8] sm:$0xff]
        %v1809 = vld [vmem:[#allocation3 + $0x4c0] sm:$0xff]
        %v1810 = vld [vmem:[#allocation3 + $0x4c8] sm:$0xff]
        %v1811 = vld [vmem:[#allocation3 + $0x4d0] sm:$0xff]
        %v1812 = vld [vmem:[#allocation3 + $0x4d8] sm:$0xff]
        %v1813 = vld [vmem:[#allocation3 + $0x4e0] sm:$0xff]
        %v1814 = vld [vmem:[#allocation3 + $0x4e8] sm:$0xff]
        %v1815 = vld [vmem:[#allocation3 + $0x4f0] sm:$0xff]
        %v1816 = vld [vmem:[#allocation3 + $0x4f8] sm:$0xff]
        %v1817 = vld [vmem:[#allocation3 + $0x500] sm:$0xff]
        %v1818 = vld [vmem:[#allocation3 + $0x508] sm:$0xff]
        %v1819 = vld [vmem:[#allocation3 + $0x510] sm:$0xff]
        %v1820 = vld [vmem:[#allocation3 + $0x518] sm:$0xff]
        %v1821 = vld [vmem:[#allocation3 + $0x520] sm:$0xff]
        %v1822 = vld [vmem:[#allocation3 + $0x528] sm:$0xff]
        %v1823 = vld [vmem:[#allocation3 + $0x530] sm:$0xff]
        %v1824 = vld [vmem:[#allocation3 + $0x538] sm:$0xff]
        %v1825 = vld [vmem:[#allocation3 + $0x540] sm:$0xff]
        %v1826 = vld [vmem:[#allocation3 + $0x548] sm:$0xff]
        %v1827 = vld [vmem:[#allocation3 + $0x550] sm:$0xff]
        %v1828 = vld [vmem:[#allocation3 + $0x558] sm:$0xff]
        %v1829 = vld [vmem:[#allocation3 + $0x560] sm:$0xff]
        %v1830 = vld [vmem:[#allocation3 + $0x568] sm:$0xff]
        %v1831 = vld [vmem:[#allocation3 + $0x570] sm:$0xff]
        %v1832 = vld [vmem:[#allocation3 + $0x578] sm:$0xff]
        %v1833 = vld [vmem:[#allocation3 + $0x580] sm:$0xff]
        %v1834 = vld [vmem:[#allocation3 + $0x588] sm:$0xff]
        %v1835 = vld [vmem:[#allocation3 + $0x590] sm:$0xff]
        %v1836 = vld [vmem:[#allocation3 + $0x598] sm:$0xff]
        %v1837 = vld [vmem:[#allocation3 + $0x5a0] sm:$0xff]
        %v1838 = vld [vmem:[#allocation3 + $0x5a8] sm:$0xff]
        %v1839 = vld [vmem:[#allocation3 + $0x5b0] sm:$0xff]
        %v1840 = vld [vmem:[#allocation3 + $0x5b8] sm:$0xff]
        %v1841 = vld [vmem:[#allocation3 + $0x5c0] sm:$0xff]
        %v1842 = vld [vmem:[#allocation3 + $0x5c8] sm:$0xff]
        %v1843 = vld [vmem:[#allocation3 + $0x5d0] sm:$0xff]
        %v1844 = vld [vmem:[#allocation3 + $0x5d8] sm:$0xff]
        %v1845 = vld [vmem:[#allocation3 + $0x5e0] sm:$0xff]
        %v1846 = vld [vmem:[#allocation3 + $0x5e8] sm:$0xff]
        %v1847 = vld [vmem:[#allocation3 + $0x5f0] sm:$0xff]
        %v1848 = vld [vmem:[#allocation3 + $0x5f8] sm:$0xff]
        %v1849 = vld [vmem:[#allocation3 + $0x600] sm:$0xff]
        %v1850 = vld [vmem:[#allocation3 + $0x608] sm:$0xff]
        %v1851 = vld [vmem:[#allocation3 + $0x610] sm:$0xff]
        %v1852 = vld [vmem:[#allocation3 + $0x618] sm:$0xff]
        %v1853 = vld [vmem:[#allocation3 + $0x620] sm:$0xff]
        %v1854 = vld [vmem:[#allocation3 + $0x628] sm:$0xff]
        %v1855 = vld [vmem:[#allocation3 + $0x630] sm:$0xff]
        %v1856 = vld [vmem:[#allocation3 + $0x638] sm:$0xff]
        %v1857 = vld [vmem:[#allocation3 + $0x640] sm:$0xff]
        %v1858 = vld [vmem:[#allocation3 + $0x648] sm:$0xff]
        %v1859 = vld [vmem:[#allocation3 + $0x650] sm:$0xff]
        %v1860 = vld [vmem:[#allocation3 + $0x658] sm:$0xff]
        %v1861 = vld [vmem:[#allocation3 + $0x660] sm:$0xff]
        %v1862 = vld [vmem:[#allocation3 + $0x668] sm:$0xff]
        %v1863 = vld [vmem:[#allocation3 + $0x670] sm:$0xff]
        %v1864 = vld [vmem:[#allocation3 + $0x678] sm:$0xff]
        %v1865 = vld [vmem:[#allocation3 + $0x680] sm:$0xff]
        %v1866 = vld [vmem:[#allocation3 + $0x688] sm:$0xff]
        %v1867 = vld [vmem:[#allocation3 + $0x690] sm:$0xff]
        %v1868 = vld [vmem:[#allocation3 + $0x698] sm:$0xff]
        %v1869 = vld [vmem:[#allocation3 + $0x6a0] sm:$0xff]
        %v1870 = vld [vmem:[#allocation3 + $0x6a8] sm:$0xff]
        %v1871 = vld [vmem:[#allocation3 + $0x6b0] sm:$0xff]
        %v1872 = vld [vmem:[#allocation3 + $0x6b8] sm:$0xff]
        %v1873 = vld [vmem:[#allocation3 + $0x6c0] sm:$0xff]
        %v1874 = vld [vmem:[#allocation3 + $0x6c8] sm:$0xff]
        %v1875 = vld [vmem:[#allocation3 + $0x6d0] sm:$0xff]
        %v1876 = vld [vmem:[#allocation3 + $0x6d8] sm:$0xff]
        %v1877 = vld [vmem:[#allocation3 + $0x6e0] sm:$0xff]
        %v1878 = vld [vmem:[#allocation3 + $0x6e8] sm:$0xff]
        %v1879 = vld [vmem:[#allocation3 + $0x6f0] sm:$0xff]
        %v1880 = vld [vmem:[#allocation3 + $0x6f8] sm:$0xff]
        %v1881 = vld [vmem:[#allocation3 + $0x700] sm:$0xff]
        %v1882 = vld [vmem:[#allocation3 + $0x708] sm:$0xff]
        %v1883 = vld [vmem:[#allocation3 + $0x710] sm:$0xff]
        %v1884 = vld [vmem:[#allocation3 + $0x718] sm:$0xff]
        %v1885 = vld [vmem:[#allocation3 + $0x720] sm:$0xff]
        %v1886 = vld [vmem:[#allocation3 + $0x728] sm:$0xff]
        %v1887 = vld [vmem:[#allocation3 + $0x730] sm:$0xff]
        %v1888 = vld [vmem:[#allocation3 + $0x738] sm:$0xff]
        %v1889 = vld [vmem:[#allocation3 + $0x740] sm:$0xff]
        %v1890 = vld [vmem:[#allocation3 + $0x748] sm:$0xff]
        %v1891 = vld [vmem:[#allocation3 + $0x750] sm:$0xff]
        %v1892 = vld [vmem:[#allocation3 + $0x758] sm:$0xff]
        %v1893 = vld [vmem:[#allocation3 + $0x760] sm:$0xff]
        %v1894 = vld [vmem:[#allocation3 + $0x768] sm:$0xff]
        %v1895 = vld [vmem:[#allocation3 + $0x770] sm:$0xff]
        %v1896 = vld [vmem:[#allocation3 + $0x778] sm:$0xff]
        %v1897 = vld [vmem:[#allocation3 + $0x780] sm:$0xff]
        %v1898 = vld [vmem:[#allocation3 + $0x788] sm:$0xff]
        %v1899 = vld [vmem:[#allocation3 + $0x790] sm:$0xff]
        %v1900 = vld [vmem:[#allocation3 + $0x798] sm:$0xff]
        %v1901 = vld [vmem:[#allocation3 + $0x7a0] sm:$0xff]
        %v1902 = vld [vmem:[#allocation3 + $0x7a8] sm:$0xff]
        %v1903 = vld [vmem:[#allocation3 + $0x7b0] sm:$0xff]
        %v1904 = vld [vmem:[#allocation3 + $0x7b8] sm:$0xff]
        %v1905 = vld [vmem:[#allocation3 + $0x7c0] sm:$0xff]
        %v1906 = vld [vmem:[#allocation3 + $0x7c8] sm:$0xff]
        %v1907 = vld [vmem:[#allocation3 + $0x7d0] sm:$0xff]
        %v1908 = vld [vmem:[#allocation3 + $0x7d8] sm:$0xff]
        %v1909 = vld [vmem:[#allocation3 + $0x7e0] sm:$0xff]
        %v1910 = vld [vmem:[#allocation3 + $0x7e8] sm:$0xff]
        %v1911 = vld [vmem:[#allocation3 + $0x7f0] sm:$0xff]
        %v1912 = vld [vmem:[#allocation3 + $0x7f8] sm:$0xff]
        %v1913 = vld [vmem:[#allocation3 + $0x800] sm:$0xff]
        %v1914 = vld [vmem:[#allocation3 + $0x808] sm:$0xff]
        %v1915 = vld [vmem:[#allocation3 + $0x810] sm:$0xff]
        %v1916 = vld [vmem:[#allocation3 + $0x818] sm:$0xff]
        %v1917 = vld [vmem:[#allocation3 + $0x820] sm:$0xff]
        %v1918 = vld [vmem:[#allocation3 + $0x828] sm:$0xff]
        %v1919 = vld [vmem:[#allocation3 + $0x830] sm:$0xff]
        %v1920 = vld [vmem:[#allocation3 + $0x838] sm:$0xff]
        %v1921 = vld [vmem:[#allocation3 + $0x840] sm:$0xff]
        %v1922 = vld [vmem:[#allocation3 + $0x848] sm:$0xff]
        %v1923 = vld [vmem:[#allocation3 + $0x850] sm:$0xff]
        %v1924 = vld [vmem:[#allocation3 + $0x858] sm:$0xff]
        %v1925 = vld [vmem:[#allocation3 + $0x860] sm:$0xff]
        %v1926 = vld [vmem:[#allocation3 + $0x868] sm:$0xff]
        %v1927 = vld [vmem:[#allocation3 + $0x870] sm:$0xff]
        %v1928 = vld [vmem:[#allocation3 + $0x878] sm:$0xff]
        %v1929 = vld [vmem:[#allocation16] sm:$0xff]
        %v1930 = vld [vmem:[#allocation16 + $0x8] sm:$0xff]
        %v1931 = vld [vmem:[#allocation16 + $0x10] sm:$0xff]
        %v1932 = vld [vmem:[#allocation16 + $0x18] sm:$0xff]
        %v1933 = vld [vmem:[#allocation16 + $0x20] sm:$0xff]
        %v1934 = vld [vmem:[#allocation16 + $0x28] sm:$0xff]
        %v1935 = vld [vmem:[#allocation16 + $0x30] sm:$0xff]
        %v1936 = vld [vmem:[#allocation16 + $0x38] sm:$0xff]
        %v1937 = vld [vmem:[#allocation16 + $0x40] sm:$0xff]
        %v1938 = vld [vmem:[#allocation16 + $0x48] sm:$0xff]
        %v1939 = vld [vmem:[#allocation16 + $0x50] sm:$0xff]
        %v1940 = vld [vmem:[#allocation16 + $0x58] sm:$0xff]
        %v1941 = vld [vmem:[#allocation16 + $0x60] sm:$0xff]
        %v1942 = vld [vmem:[#allocation16 + $0x68] sm:$0xff]
        %v1943 = vld [vmem:[#allocation16 + $0x70] sm:$0xff]
        %v1944 = vld [vmem:[#allocation16 + $0x78] sm:$0xff]
        %v1945 = vld [vmem:[#allocation16 + $0x80] sm:$0xff]
        %v1946 = vld [vmem:[#allocation16 + $0x88] sm:$0xff]
        %v1947 = vld [vmem:[#allocation16 + $0x90] sm:$0xff]
        %v1948 = vld [vmem:[#allocation16 + $0x98] sm:$0xff]
        %v1949 = vld [vmem:[#allocation16 + $0xa0] sm:$0xff]
        %v1950 = vld [vmem:[#allocation16 + $0xa8] sm:$0xff]
        %v1951 = vld [vmem:[#allocation16 + $0xb0] sm:$0xff]
        %v1952 = vld [vmem:[#allocation16 + $0xb8] sm:$0xff]
        %v1953 = vld [vmem:[#allocation16 + $0xc0] sm:$0xff]
        %v1954 = vld [vmem:[#allocation16 + $0xc8] sm:$0xff]
        %v1955 = vld [vmem:[#allocation16 + $0xd0] sm:$0xff]
        %v1956 = vld [vmem:[#allocation16 + $0xd8] sm:$0xff]
        %v1957 = vld [vmem:[#allocation16 + $0xe0] sm:$0xff]
        %v1958 = vld [vmem:[#allocation16 + $0xe8] sm:$0xff]
        %v1959 = vld [vmem:[#allocation16 + $0xf0] sm:$0xff]
        %v1960 = vld [vmem:[#allocation16 + $0xf8] sm:$0xff]
        %v1961 = vld [vmem:[#allocation16 + $0x100] sm:$0xff]
        %v1962 = vld [vmem:[#allocation16 + $0x108] sm:$0xff]
        %v1963 = vld [vmem:[#allocation16 + $0x110] sm:$0xff]
        %v1964 = vld [vmem:[#allocation16 + $0x118] sm:$0xff]
        %v1965 = vld [vmem:[#allocation16 + $0x120] sm:$0xff]
        %v1966 = vld [vmem:[#allocation16 + $0x128] sm:$0xff]
        %v1967 = vld [vmem:[#allocation16 + $0x130] sm:$0xff]
        %v1968 = vld [vmem:[#allocation16 + $0x138] sm:$0xff]
        %v1969 = vld [vmem:[#allocation16 + $0x140] sm:$0xff]
        %v1970 = vld [vmem:[#allocation16 + $0x148] sm:$0xff]
        %v1971 = vld [vmem:[#allocation16 + $0x150] sm:$0xff]
        %v1972 = vld [vmem:[#allocation16 + $0x158] sm:$0xff]
        %v1973 = vld [vmem:[#allocation16 + $0x160] sm:$0xff]
        %v1974 = vld [vmem:[#allocation16 + $0x168] sm:$0xff]
        %v1975 = vld [vmem:[#allocation16 + $0x170] sm:$0xff]
        %v1976 = vld [vmem:[#allocation16 + $0x178] sm:$0xff]
        %v1977 = vld [vmem:[#allocation16 + $0x180] sm:$0xff]
        %v1978 = vld [vmem:[#allocation16 + $0x188] sm:$0xff]
        %v1979 = vld [vmem:[#allocation16 + $0x190] sm:$0xff]
        %v1980 = vld [vmem:[#allocation16 + $0x198] sm:$0xff]
        %v1981 = vld [vmem:[#allocation16 + $0x1a0] sm:$0xff]
        %v1982 = vld [vmem:[#allocation16 + $0x1a8] sm:$0xff]
        %v1983 = vld [vmem:[#allocation16 + $0x1b0] sm:$0xff]
        %v1984 = vld [vmem:[#allocation16 + $0x1b8] sm:$0xff]
        %v1985 = vld [vmem:[#allocation16 + $0x1c0] sm:$0xff]
        %v1986 = vld [vmem:[#allocation16 + $0x1c8] sm:$0xff]
        %v1987 = vld [vmem:[#allocation16 + $0x1d0] sm:$0xff]
        %v1988 = vld [vmem:[#allocation16 + $0x1d8] sm:$0xff]
        %v1989 = vld [vmem:[#allocation16 + $0x1e0] sm:$0xff]
        %v1990 = vld [vmem:[#allocation16 + $0x1e8] sm:$0xff]
        %v1991 = vld [vmem:[#allocation16 + $0x1f0] sm:$0xff]
        %v1992 = vld [vmem:[#allocation16 + $0x1f8] sm:$0xff]
        %v1993 = vld [vmem:[#allocation16 + $0x200] sm:$0xff]
        %v1994 = vld [vmem:[#allocation16 + $0x208] sm:$0xff]
        %v1995 = vld [vmem:[#allocation16 + $0x210] sm:$0xff]
        %v1996 = vld [vmem:[#allocation16 + $0x218] sm:$0xff]
        %v1997 = vld [vmem:[#allocation16 + $0x220] sm:$0xff]
        %v1998 = vld [vmem:[#allocation16 + $0x228] sm:$0xff]
        %v1999 = vld [vmem:[#allocation16 + $0x230] sm:$0xff]
        %v2000 = vld [vmem:[#allocation16 + $0x238] sm:$0xff]
        %v2001 = vld [vmem:[#allocation16 + $0x240] sm:$0xff]
        %v2002 = vld [vmem:[#allocation16 + $0x248] sm:$0xff]
        %v2003 = vld [vmem:[#allocation16 + $0x250] sm:$0xff]
        %v2004 = vld [vmem:[#allocation16 + $0x258] sm:$0xff]
        %v2005 = vld [vmem:[#allocation16 + $0x260] sm:$0xff]
        %v2006 = vld [vmem:[#allocation16 + $0x268] sm:$0xff]
        %v2007 = vld [vmem:[#allocation16 + $0x270] sm:$0xff]
        %v2008 = vld [vmem:[#allocation16 + $0x278] sm:$0xff]
        %v2009 = vld [vmem:[#allocation16 + $0x280] sm:$0xff]
        %v2010 = vld [vmem:[#allocation16 + $0x288] sm:$0xff]
        %v2011 = vld [vmem:[#allocation16 + $0x290] sm:$0xff]
        %v2012 = vld [vmem:[#allocation16 + $0x298] sm:$0xff]
        %v2013 = vld [vmem:[#allocation16 + $0x2a0] sm:$0xff]
        %v2014 = vld [vmem:[#allocation16 + $0x2a8] sm:$0xff]
        %v2015 = vld [vmem:[#allocation16 + $0x2b0] sm:$0xff]
        %v2016 = vld [vmem:[#allocation16 + $0x2b8] sm:$0xff]
        %v2017 = vld [vmem:[#allocation16 + $0x2c0] sm:$0xff]
        %v2018 = vld [vmem:[#allocation16 + $0x2c8] sm:$0xff]
        %v2019 = vld [vmem:[#allocation16 + $0x2d0] sm:$0xff]
        %v2020 = vld [vmem:[#allocation16 + $0x2d8] sm:$0xff]
        %v2021 = vld [vmem:[#allocation16 + $0x2e0] sm:$0xff]
        %v2022 = vld [vmem:[#allocation16 + $0x2e8] sm:$0xff]
        %v2023 = vld [vmem:[#allocation16 + $0x2f0] sm:$0xff]
        %v2024 = vld [vmem:[#allocation16 + $0x2f8] sm:$0xff]
        %v2025 = vld [vmem:[#allocation16 + $0x300] sm:$0xff]
        %v2026 = vld [vmem:[#allocation16 + $0x308] sm:$0xff]
        %v2027 = vld [vmem:[#allocation16 + $0x310] sm:$0xff]
        %v2028 = vld [vmem:[#allocation16 + $0x318] sm:$0xff]
        %v2029 = vld [vmem:[#allocation16 + $0x320] sm:$0xff]
        %v2030 = vld [vmem:[#allocation16 + $0x328] sm:$0xff]
        %v2031 = vld [vmem:[#allocation16 + $0x330] sm:$0xff]
        %v2032 = vld [vmem:[#allocation16 + $0x338] sm:$0xff]
        %v2033 = vld [vmem:[#allocation16 + $0x340] sm:$0xff]
        %v2034 = vld [vmem:[#allocation16 + $0x348] sm:$0xff]
        %v2035 = vld [vmem:[#allocation16 + $0x350] sm:$0xff]
        %v2036 = vld [vmem:[#allocation16 + $0x358] sm:$0xff]
        %v2037 = vld [vmem:[#allocation16 + $0x360] sm:$0xff]
        %v2038 = vld [vmem:[#allocation16 + $0x368] sm:$0xff]
        %v2039 = vld [vmem:[#allocation16 + $0x370] sm:$0xff]
        %v2040 = vld [vmem:[#allocation16 + $0x378] sm:$0xff]
        %v2041 = vld [vmem:[#allocation16 + $0x380] sm:$0xff]
        %v2042 = vld [vmem:[#allocation16 + $0x388] sm:$0xff]
        %v2043 = vld [vmem:[#allocation16 + $0x390] sm:$0xff]
        %v2044 = vld [vmem:[#allocation16 + $0x398] sm:$0xff]
        %v2045 = vld [vmem:[#allocation16 + $0x3a0] sm:$0xff]
        %v2046 = vld [vmem:[#allocation16 + $0x3a8] sm:$0xff]
        %v2047 = vld [vmem:[#allocation16 + $0x3b0] sm:$0xff]
        %v2048 = vld [vmem:[#allocation16 + $0x3b8] sm:$0xff]
        %v2049 = vld [vmem:[#allocation16 + $0x3c0] sm:$0xff]
        %v2050 = vld [vmem:[#allocation16 + $0x3c8] sm:$0xff]
        %v2051 = vld [vmem:[#allocation16 + $0x3d0] sm:$0xff]
        %v2052 = vld [vmem:[#allocation16 + $0x3d8] sm:$0xff]
        %v2053 = vld [vmem:[#allocation16 + $0x3e0] sm:$0xff]
        %v2054 = vld [vmem:[#allocation16 + $0x3e8] sm:$0xff]
        %v2055 = vld [vmem:[#allocation16 + $0x3f0] sm:$0xff]
        %v2056 = vld [vmem:[#allocation16 + $0x3f8] sm:$0xff]
        %v2057 = vld [vmem:[#allocation16 + $0x400] sm:$0xff]
        %v2058 = vld [vmem:[#allocation16 + $0x408] sm:$0xff]
        %v2059 = vld [vmem:[#allocation16 + $0x410] sm:$0xff]
        %v2060 = vld [vmem:[#allocation16 + $0x418] sm:$0xff]
        %v2061 = vld [vmem:[#allocation16 + $0x420] sm:$0xff]
        %v2062 = vld [vmem:[#allocation16 + $0x428] sm:$0xff]
        %v2063 = vld [vmem:[#allocation16 + $0x430] sm:$0xff]
        %v2064 = vld [vmem:[#allocation16 + $0x438] sm:$0xff]
        %v2065 = vld [vmem:[#allocation16 + $0x440] sm:$0xff]
        %v2066 = vld [vmem:[#allocation16 + $0x448] sm:$0xff]
        %v2067 = vld [vmem:[#allocation16 + $0x450] sm:$0xff]
        %v2068 = vld [vmem:[#allocation16 + $0x458] sm:$0xff]
        %v2069 = vld [vmem:[#allocation16 + $0x460] sm:$0xff]
        %v2070 = vld [vmem:[#allocation16 + $0x468] sm:$0xff]
        %v2071 = vld [vmem:[#allocation16 + $0x470] sm:$0xff]
        %v2072 = vld [vmem:[#allocation16 + $0x478] sm:$0xff]
        %v2073 = vld [vmem:[#allocation16 + $0x480] sm:$0xff]
        %v2074 = vld [vmem:[#allocation16 + $0x488] sm:$0xff]
        %v2075 = vld [vmem:[#allocation16 + $0x490] sm:$0xff]
        %v2076 = vld [vmem:[#allocation16 + $0x498] sm:$0xff]
        %v2077 = vld [vmem:[#allocation16 + $0x4a0] sm:$0xff]
        %v2078 = vld [vmem:[#allocation16 + $0x4a8] sm:$0xff]
        %v2079 = vld [vmem:[#allocation16 + $0x4b0] sm:$0xff]
        %v2080 = vld [vmem:[#allocation16 + $0x4b8] sm:$0xff]
        %v2081 = vld [vmem:[#allocation16 + $0x4c0] sm:$0xff]
        %v2082 = vld [vmem:[#allocation16 + $0x4c8] sm:$0xff]
        %v2083 = vld [vmem:[#allocation16 + $0x4d0] sm:$0xff]
        %v2084 = vld [vmem:[#allocation16 + $0x4d8] sm:$0xff]
        %v2085 = vld [vmem:[#allocation16 + $0x4e0] sm:$0xff]
        %v2086 = vld [vmem:[#allocation16 + $0x4e8] sm:$0xff]
        %v2087 = vld [vmem:[#allocation16 + $0x4f0] sm:$0xff]
        %v2088 = vld [vmem:[#allocation16 + $0x4f8] sm:$0xff]
        %v2089 = vld [vmem:[#allocation16 + $0x500] sm:$0xff]
        %v2090 = vld [vmem:[#allocation16 + $0x508] sm:$0xff]
        %v2091 = vld [vmem:[#allocation16 + $0x510] sm:$0xff]
        %v2092 = vld [vmem:[#allocation16 + $0x518] sm:$0xff]
        %v2093 = vld [vmem:[#allocation16 + $0x520] sm:$0xff]
        %v2094 = vld [vmem:[#allocation16 + $0x528] sm:$0xff]
        %v2095 = vld [vmem:[#allocation16 + $0x530] sm:$0xff]
        %v2096 = vld [vmem:[#allocation16 + $0x538] sm:$0xff]
        %v2097 = vld [vmem:[#allocation16 + $0x540] sm:$0xff]
        %v2098 = vld [vmem:[#allocation16 + $0x548] sm:$0xff]
        %v2099 = vld [vmem:[#allocation16 + $0x550] sm:$0xff]
        %v2100 = vld [vmem:[#allocation16 + $0x558] sm:$0xff]
        %v2101 = vld [vmem:[#allocation16 + $0x560] sm:$0xff]
        %v2102 = vld [vmem:[#allocation16 + $0x568] sm:$0xff]
        %v2103 = vld [vmem:[#allocation16 + $0x570] sm:$0xff]
        %v2104 = vld [vmem:[#allocation16 + $0x578] sm:$0xff]
        %v2105 = vld [vmem:[#allocation16 + $0x580] sm:$0xff]
        %v2106 = vld [vmem:[#allocation16 + $0x588] sm:$0xff]
        %v2107 = vld [vmem:[#allocation16 + $0x590] sm:$0xff]
        %v2108 = vld [vmem:[#allocation16 + $0x598] sm:$0xff]
        %v2109 = vld [vmem:[#allocation16 + $0x5a0] sm:$0xff]
        %v2110 = vld [vmem:[#allocation16 + $0x5a8] sm:$0xff]
        %v2111 = vld [vmem:[#allocation16 + $0x5b0] sm:$0xff]
        %v2112 = vld [vmem:[#allocation16 + $0x5b8] sm:$0xff]
        %v2113 = vld [vmem:[#allocation16 + $0x5c0] sm:$0xff]
        %v2114 = vld [vmem:[#allocation16 + $0x5c8] sm:$0xff]
        %v2115 = vld [vmem:[#allocation16 + $0x5d0] sm:$0xff]
        %v2116 = vld [vmem:[#allocation16 + $0x5d8] sm:$0xff]
        %v2117 = vld [vmem:[#allocation16 + $0x5e0] sm:$0xff]
        %v2118 = vld [vmem:[#allocation16 + $0x5e8] sm:$0xff]
        %v2119 = vld [vmem:[#allocation16 + $0x5f0] sm:$0xff]
        %v2120 = vld [vmem:[#allocation16 + $0x5f8] sm:$0xff]
        %v2121 = vld [vmem:[#allocation16 + $0x600] sm:$0xff]
        %v2122 = vld [vmem:[#allocation16 + $0x608] sm:$0xff]
        %v2123 = vld [vmem:[#allocation16 + $0x610] sm:$0xff]
        %v2124 = vld [vmem:[#allocation16 + $0x618] sm:$0xff]
        %v2125 = vld [vmem:[#allocation16 + $0x620] sm:$0xff]
        %v2126 = vld [vmem:[#allocation16 + $0x628] sm:$0xff]
        %v2127 = vld [vmem:[#allocation16 + $0x630] sm:$0xff]
        %v2128 = vld [vmem:[#allocation16 + $0x638] sm:$0xff]
        %v2129 = vld [vmem:[#allocation16 + $0x640] sm:$0xff]
        %v2130 = vld [vmem:[#allocation16 + $0x648] sm:$0xff]
        %v2131 = vld [vmem:[#allocation16 + $0x650] sm:$0xff]
        %v2132 = vld [vmem:[#allocation16 + $0x658] sm:$0xff]
        %v2133 = vld [vmem:[#allocation16 + $0x660] sm:$0xff]
        %v2134 = vld [vmem:[#allocation16 + $0x668] sm:$0xff]
        %v2135 = vld [vmem:[#allocation16 + $0x670] sm:$0xff]
        %v2136 = vld [vmem:[#allocation16 + $0x678] sm:$0xff]
        %v2137 = vld [vmem:[#allocation16 + $0x680] sm:$0xff]
        %v2138 = vld [vmem:[#allocation16 + $0x688] sm:$0xff]
        %v2139 = vld [vmem:[#allocation16 + $0x690] sm:$0xff]
        %v2140 = vld [vmem:[#allocation16 + $0x698] sm:$0xff]
        %v2141 = vld [vmem:[#allocation16 + $0x6a0] sm:$0xff]
        %v2142 = vld [vmem:[#allocation16 + $0x6a8] sm:$0xff]
        %v2143 = vld [vmem:[#allocation16 + $0x6b0] sm:$0xff]
        %v2144 = vld [vmem:[#allocation16 + $0x6b8] sm:$0xff]
        %v2145 = vld [vmem:[#allocation16 + $0x6c0] sm:$0xff]
        %v2146 = vld [vmem:[#allocation16 + $0x6c8] sm:$0xff]
        %v2147 = vld [vmem:[#allocation16 + $0x6d0] sm:$0xff]
        %v2148 = vld [vmem:[#allocation16 + $0x6d8] sm:$0xff]
        %v2149 = vld [vmem:[#allocation16 + $0x6e0] sm:$0xff]
        %v2150 = vld [vmem:[#allocation16 + $0x6e8] sm:$0xff]
        %v2151 = vld [vmem:[#allocation16 + $0x6f0] sm:$0xff]
        %v2152 = vld [vmem:[#allocation16 + $0x6f8] sm:$0xff]
        %v2153 = vld [vmem:[#allocation16 + $0x700] sm:$0xff]
        %v2154 = vld [vmem:[#allocation16 + $0x708] sm:$0xff]
        %v2155 = vld [vmem:[#allocation16 + $0x710] sm:$0xff]
        %v2156 = vld [vmem:[#allocation16 + $0x718] sm:$0xff]
        %v2157 = vld [vmem:[#allocation16 + $0x720] sm:$0xff]
        %v2158 = vld [vmem:[#allocation16 + $0x728] sm:$0xff]
        %v2159 = vld [vmem:[#allocation16 + $0x730] sm:$0xff]
        %v2160 = vld [vmem:[#allocation16 + $0x738] sm:$0xff]
        %v2161 = vld [vmem:[#allocation16 + $0x740] sm:$0xff]
        %v2162 = vld [vmem:[#allocation16 + $0x748] sm:$0xff]
        %v2163 = vld [vmem:[#allocation16 + $0x750] sm:$0xff]
        %v2164 = vld [vmem:[#allocation16 + $0x758] sm:$0xff]
        %v2165 = vld [vmem:[#allocation16 + $0x760] sm:$0xff]
        %v2166 = vld [vmem:[#allocation16 + $0x768] sm:$0xff]
        %v2167 = vld [vmem:[#allocation16 + $0x770] sm:$0xff]
        %v2168 = vld [vmem:[#allocation16 + $0x778] sm:$0xff]
        %v2169 = vld [vmem:[#allocation16 + $0x780] sm:$0xff]
        %v2170 = vld [vmem:[#allocation16 + $0x788] sm:$0xff]
        %v2171 = vld [vmem:[#allocation16 + $0x790] sm:$0xff]
        %v2172 = vld [vmem:[#allocation16 + $0x798] sm:$0xff]
        %v2173 = vld [vmem:[#allocation16 + $0x7a0] sm:$0xff]
        %v2174 = vld [vmem:[#allocation16 + $0x7a8] sm:$0xff]
        %v2175 = vld [vmem:[#allocation16 + $0x7b0] sm:$0xff]
        %v2176 = vld [vmem:[#allocation16 + $0x7b8] sm:$0xff]
        %v2177 = vld [vmem:[#allocation16 + $0x7c0] sm:$0xff]
        %v2178 = vld [vmem:[#allocation16 + $0x7c8] sm:$0xff]
        %v2179 = vld [vmem:[#allocation16 + $0x7d0] sm:$0xff]
        %v2180 = vld [vmem:[#allocation16 + $0x7d8] sm:$0xff]
        %v2181 = vld [vmem:[#allocation16 + $0x7e0] sm:$0xff]
        %v2182 = vld [vmem:[#allocation16 + $0x7e8] sm:$0xff]
        %v2183 = vld [vmem:[#allocation16 + $0x7f0] sm:$0xff]
        %v2184 = vld [vmem:[#allocation16 + $0x7f8] sm:$0xff]
        %v2185 = vld [vmem:[#allocation16 + $0x800] sm:$0xff]
        %v2186 = vld [vmem:[#allocation16 + $0x808] sm:$0xff]
        %v2187 = vld [vmem:[#allocation16 + $0x810] sm:$0xff]
        %v2188 = vld [vmem:[#allocation16 + $0x818] sm:$0xff]
        %v2189 = vld [vmem:[#allocation16 + $0x820] sm:$0xff]
        %v2190 = vld [vmem:[#allocation16 + $0x828] sm:$0xff]
        %v2191 = vld [vmem:[#allocation16 + $0x830] sm:$0xff]
        %v2192 = vld [vmem:[#allocation16 + $0x838] sm:$0xff]
        %v2193 = vld [vmem:[#allocation16 + $0x840] sm:$0xff]
        %v2194 = vld [vmem:[#allocation16 + $0x848] sm:$0xff]
        %v2195 = vld [vmem:[#allocation16 + $0x850] sm:$0xff]
        %v2196 = vld [vmem:[#allocation16 + $0x858] sm:$0xff]
        %v2197 = vld [vmem:[#allocation16 + $0x860] sm:$0xff]
        %v2198 = vld [vmem:[#allocation16 + $0x868] sm:$0xff]
        %v2199 = vld [vmem:[#allocation16 + $0x870] sm:$0xff]
        %v2200 = vld [vmem:[#allocation16 + $0x878] sm:$0xff]
        %2201 = vmatprep.subr.mxu0 0.0
        %2202 = vmatpush1.msra.mxu0 %v1929
        %2203 = vmatprep.subr.mxu0 0.0
        %2204 = vmatpush1.msra.mxu0 %v1930
        %2205 = vmatprep.subr.mxu0 0.0
        %2206 = vmatpush1.msra.mxu0 %v1931
        %2207 = vmatprep.subr.mxu0 0.0
        %2208 = vmatpush1.msra.mxu0 %v1932
        %2209 = vmatprep.subr.mxu0 0.0
        %2210 = vmatpush1.msra.mxu0 %v1933
        %2211 = vmatprep.subr.mxu0 0.0
        %2212 = vmatpush1.msra.mxu0 %v1934
        %2213 = vmatprep.subr.mxu0 0.0
        %2214 = vmatpush1.msra.mxu0 %v1935
        %2215 = vmatprep.subr.mxu0 0.0
        %2216 = vmatpush1.msra.mxu0 %v1936
        %2217 = vmatprep.subr.mxu0 0.0
        %2218 = vmatpush1.msra.mxu0 %v1937
        %2219 = vmatprep.subr.mxu0 0.0
        %2220 = vmatpush1.msra.mxu0 %v1938
        %2221 = vmatprep.subr.mxu0 0.0
        %2222 = vmatpush1.msra.mxu0 %v1939
        %2223 = vmatprep.subr.mxu0 0.0
        %2224 = vmatpush1.msra.mxu0 %v1940
        %2225 = vmatprep.subr.mxu0 0.0
        %2226 = vmatpush1.msra.mxu0 %v1941
        %2227 = vmatprep.subr.mxu0 0.0
        %2228 = vmatpush1.msra.mxu0 %v1942
        %2229 = vmatprep.subr.mxu0 0.0
        %2230 = vmatpush1.msra.mxu0 %v1943
        %2231 = vmatprep.subr.mxu0 0.0
        %2232 = vmatpush1.msra.mxu0 %v1944
        %2233 = vmatprep.subr.mxu0 0.0
        %2234 = vmatpush1.msra.mxu0 %v1945
        %2235 = vmatprep.subr.mxu0 0.0
        %2236 = vmatpush1.msra.mxu0 %v1946
        %2237 = vmatprep.subr.mxu0 0.0
        %2238 = vmatpush1.msra.mxu0 %v1947
        %2239 = vmatprep.subr.mxu0 0.0
        %2240 = vmatpush1.msra.mxu0 %v1948
        %2241 = vmatprep.subr.mxu0 0.0
        %2242 = vmatpush1.msra.mxu0 %v1949
        %2243 = vmatprep.subr.mxu0 0.0
        %2244 = vmatpush1.msra.mxu0 %v1950
        %2245 = vmatprep.subr.mxu0 0.0
        %2246 = vmatpush1.msra.mxu0 %v1951
        %2247 = vmatprep.subr.mxu0 0.0
        %2248 = vmatpush1.msra.mxu0 %v1952
        %2249 = vmatprep.subr.mxu0 0.0
        %2250 = vmatpush1.msra.mxu0 %v1953
        %2251 = vmatprep.subr.mxu0 0.0
        %2252 = vmatpush1.msra.mxu0 %v1954
        %2253 = vmatprep.subr.mxu0 0.0
        %2254 = vmatpush1.msra.mxu0 %v1955
        %2255 = vmatprep.subr.mxu0 0.0
        %2256 = vmatpush1.msra.mxu0 %v1956
        %2257 = vmatprep.subr.mxu0 0.0
        %2258 = vmatpush1.msra.mxu0 %v1957
        %2259 = vmatprep.subr.mxu0 0.0
        %2260 = vmatpush1.msra.mxu0 %v1958
        %2261 = vmatprep.subr.mxu0 0.0
        %2262 = vmatpush1.msra.mxu0 %v1959
        %2263 = vmatprep.subr.mxu0 0.0
        %2264 = vmatpush1.msra.mxu0 %v1960
        %2265 = vmatprep.mubr.f32.mxu0 %v1658
        %2266 = vmatmul.mubr.f32.gmra.mrb[0].mxu0 %v1657
        %v2267 = vpop.f32.mrb[0].mxu0
        %v2268 = vadd.f32 0.0, %v2267
        %v2269 = vpop.f32.mrb[0].mxu0
        %2270 = vmatprep.mubr.f32.mxu0 %v1675
        %2271 = vmatmul.mubr.f32.gmra.mrb[0].mxu0 %v1674
        %v2272 = vpop.f32.mrb[0].mxu0
        %v2273 = vadd.f32 0.0, %v2272
        %v2274 = vpop.f32.mrb[0].mxu0
        %2275 = vmatprep.mubr.f32.mxu0 %v1692
        %2276 = vmatmul.mubr.f32.gmra.mrb[0].mxu0 %v1691
        %v2277 = vpop.f32.mrb[0].mxu0
        %v2278 = vadd.f32 0.0, %v2277
        %v2279 = vpop.f32.mrb[0].mxu0
        %2280 = vmatprep.mubr.f32.mxu0 %v1709
        %2281 = vmatmul.mubr.f32.gmra.mrb[0].mxu0 %v1708
        %v2282 = vpop.f32.mrb[0].mxu0
        %v2283 = vadd.f32 0.0, %v2282
        %v2284 = vpop.f32.mrb[0].mxu0
        %2285 = vmatprep.mubr.f32.mxu0 %v1726
        %2286 = vmatmul.mubr.f32.gmra.mrb[0].mxu0 %v1725
        %v2287 = vpop.f32.mrb[0].mxu0
        %v2288 = vadd.f32 0.0, %v2287
        %v2289 = vpop.f32.mrb[0].mxu0
        %2290 = vmatprep.mubr.f32.mxu0 %v1743
        %2291 = vmatmul.mubr.f32.gmra.mrb[0].mxu0 %v1742
        %v2292 = vpop.f32.mrb[0].mxu0
        %v2293 = vadd.f32 0.0, %v2292
        %v2294 = vpop.f32.mrb[0].mxu0
        %2295 = vmatprep.mubr.f32.mxu0 %v1760
        %2296 = vmatmul.mubr.f32.gmra.mrb[0].mxu0 %v1759
        %v2297 = vpop.f32.mrb[0].mxu0
        %v2298 = vadd.f32 0.0, %v2297
        %v2299 = vpop.f32.mrb[0].mxu0
        %2300 = vmatprep.mubr.f32.mxu0 %v1777
        %2301 = vmatmul.mubr.f32.gmra.mrb[0].mxu0 %v1776
        %v2302 = vpop.f32.mrb[0].mxu0
        %v2303 = vadd.f32 0.0, %v2302
        %v2304 = vpop.f32.mrb[0].mxu0
        %2305 = vmatprep.mubr.f32.mxu0 %v1794
        %2306 = vmatmul.mubr.f32.gmra.mrb[0].mxu0 %v1793
        %v2307 = vpop.f32.mrb[0].mxu0
        %v2308 = vadd.f32 0.0, %v2307
        %v2309 = vpop.f32.mrb[0].mxu0
        %2310 = vmatprep.mubr.f32.mxu0 %v1811
        %2311 = vmatmul.mubr.f32.gmra.mrb[0].mxu0 %v1810
        %v2312 = vpop.f32.mrb[0].mxu0
        %v2313 = vadd.f32 0.0, %v2312
        %v2314 = vpop.f32.mrb[0].mxu0
        %2315 = vmatprep.mubr.f32.mxu0 %v1828
        %2316 = vmatmul.mubr.f32.gmra.mrb[0].mxu0 %v1827
        %v2317 = vpop.f32.mrb[0].mxu0
        %v2318 = vadd.f32 0.0, %v2317
        %v2319 = vpop.f32.mrb[0].mxu0
        %2320 = vmatprep.mubr.f32.mxu0 %v1845
        %2321 = vmatmul.mubr.f32.gmra.mrb[0].mxu0 %v1844
        %v2322 = vpop.f32.mrb[0].mxu0
        %v2323 = vadd.f32 0.0, %v2322
        %v2324 = vpop.f32.mrb[0].mxu0
        %2325 = vmatprep.mubr.f32.mxu0 %v1862
        %2326 = vmatmul.mubr.f32.gmra.mrb[0].mxu0 %v1861
        %v2327 = vpop.f32.mrb[0].mxu0
        %v2328 = vadd.f32 0.0, %v2327
        %v2329 = vpop.f32.mrb[0].mxu0
        %2330 = vmatprep.mubr.f32.mxu0 %v1879
        %2331 = vmatmul.mubr.f32.gmra.mrb[0].mxu0 %v1878
        %v2332 = vpop.f32.mrb[0].mxu0
        %v2333 = vadd.f32 0.0, %v2332
        %v2334 = vpop.f32.mrb[0].mxu0
        %2335 = vmatprep.mubr.f32.mxu0 %v1896
        %2336 = vmatmul.mubr.f32.gmra.mrb[0].mxu0 %v1895
        %v2337 = vpop.f32.mrb[0].mxu0
        %v2338 = vadd.f32 0.0, %v2337
        %v2339 = vpop.f32.mrb[0].mxu0
        %2340 = vmatprep.mubr.f32.mxu0 %v1913
        %2341 = vmatmul.mubr.f32.gmra.mrb[0].mxu0 %v1912
        %v2342 = vpop.f32.mrb[0].mxu0
        %v2343 = vadd.f32 0.0, %v2342
        %v2344 = vpop.f32.mrb[0].mxu0
        %2345 = vdwg.mxu0
        %2346 = vmatprep.subr.mxu0 0.0
        %2347 = vmatpush1.msra.mxu0 %v1961
        %2348 = vmatprep.subr.mxu0 0.0
        %2349 = vmatpush1.msra.mxu0 %v1962
        %2350 = vmatprep.subr.mxu0 0.0
        %2351 = vmatpush1.msra.mxu0 %v1963
        %2352 = vmatprep.subr.mxu0 0.0
        %2353 = vmatpush1.msra.mxu0 %v1964
        %2354 = vmatprep.subr.mxu0 0.0
        %2355 = vmatpush1.msra.mxu0 %v1965
        %2356 = vmatprep.subr.mxu0 0.0
        %2357 = vmatpush1.msra.mxu0 %v1966
        %2358 = vmatprep.subr.mxu0 0.0
        %2359 = vmatpush1.msra.mxu0 %v1967
        %2360 = vmatprep.subr.mxu0 0.0
        %2361 = vmatpush1.msra.mxu0 %v1968
        %2362 = vmatprep.subr.mxu0 0.0
        %2363 = vmatpush1.msra.mxu0 %v1969
        %2364 = vmatprep.subr.mxu0 0.0
        %2365 = vmatpush1.msra.mxu0 %v1970
        %2366 = vmatprep.subr.mxu0 0.0
        %2367 = vmatpush1.msra.mxu0 %v1971
        %2368 = vmatprep.subr.mxu0 0.0
        %2369 = vmatpush1.msra.mxu0 %v1972
        %2370 = vmatprep.subr.mxu0 0.0
        %2371 = vmatpush1.msra.mxu0 %v1973
        %2372 = vmatprep.subr.mxu0 0.0
        %2373 = vmatpush1.msra.mxu0 %v1974
        %2374 = vmatprep.subr.mxu0 0.0
        %2375 = vmatpush1.msra.mxu0 %v1975
        %2376 = vmatprep.subr.mxu0 0.0
        %2377 = vmatpush1.msra.mxu0 %v1976
        %2378 = vmatprep.subr.mxu0 0.0
        %2379 = vmatpush1.msra.mxu0 %v1977
        %2380 = vmatprep.subr.mxu0 0.0
        %2381 = vmatpush1.msra.mxu0 %v1978
        %2382 = vmatprep.subr.mxu0 0.0
        %2383 = vmatpush1.msra.mxu0 %v1979
        %2384 = vmatprep.subr.mxu0 0.0
        %2385 = vmatpush1.msra.mxu0 %v1980
        %2386 = vmatprep.subr.mxu0 0.0
        %2387 = vmatpush1.msra.mxu0 %v1981
        %2388 = vmatprep.subr.mxu0 0.0
        %2389 = vmatpush1.msra.mxu0 %v1982
        %2390 = vmatprep.subr.mxu0 0.0
        %2391 = vmatpush1.msra.mxu0 %v1983
        %2392 = vmatprep.subr.mxu0 0.0
        %2393 = vmatpush1.msra.mxu0 %v1984
        %2394 = vmatprep.subr.mxu0 0.0
        %2395 = vmatpush1.msra.mxu0 %v1985
        %2396 = vmatprep.subr.mxu0 0.0
        %2397 = vmatpush1.msra.mxu0 %v1986
        %2398 = vmatprep.subr.mxu0 0.0
        %2399 = vmatpush1.msra.mxu0 %v1987
        %2400 = vmatprep.subr.mxu0 0.0
        %2401 = vmatpush1.msra.mxu0 %v1988
        %2402 = vmatprep.subr.mxu0 0.0
        %2403 = vmatpush1.msra.mxu0 %v1989
        %2404 = vmatprep.subr.mxu0 0.0
        %2405 = vmatpush1.msra.mxu0 %v1990
        %2406 = vmatprep.subr.mxu0 0.0
        %2407 = vmatpush1.msra.mxu0 %v1991
        %2408 = vmatprep.subr.mxu0 0.0
        %2409 = vmatpush1.msra.mxu0 %v1992
        %2410 = vmatprep.mubr.f32.mxu0 %v1660
        %2411 = vmatmul.mubr.f32.gmra.mrb[0].mxu0 %v1659
        %v2412 = vpop.f32.mrb[0].mxu0
        %v2413 = vadd.f32 %v2268, %v2412
        %v2414 = vpop.f32.mrb[0].mxu0
        %2415 = vmatprep.mubr.f32.mxu0 %v1677
        %2416 = vmatmul.mubr.f32.gmra.mrb[0].mxu0 %v1676
        %v2417 = vpop.f32.mrb[0].mxu0
        %v2418 = vadd.f32 %v2273, %v2417
        %v2419 = vpop.f32.mrb[0].mxu0
        %2420 = vmatprep.mubr.f32.mxu0 %v1694
        %2421 = vmatmul.mubr.f32.gmra.mrb[0].mxu0 %v1693
        %v2422 = vpop.f32.mrb[0].mxu0
        %v2423 = vadd.f32 %v2278, %v2422
        %v2424 = vpop.f32.mrb[0].mxu0
        %2425 = vmatprep.mubr.f32.mxu0 %v1711
        %2426 = vmatmul.mubr.f32.gmra.mrb[0].mxu0 %v1710
        %v2427 = vpop.f32.mrb[0].mxu0
        %v2428 = vadd.f32 %v2283, %v2427
        %v2429 = vpop.f32.mrb[0].mxu0
        %2430 = vmatprep.mubr.f32.mxu0 %v1728
        %2431 = vmatmul.mubr.f32.gmra.mrb[0].mxu0 %v1727
        %v2432 = vpop.f32.mrb[0].mxu0
        %v2433 = vadd.f32 %v2288, %v2432
        %v2434 = vpop.f32.mrb[0].mxu0
        %2435 = vmatprep.mubr.f32.mxu0 %v1745
        %2436 = vmatmul.mubr.f32.gmra.mrb[0].mxu0 %v1744
        %v2437 = vpop.f32.mrb[0].mxu0
        %v2438 = vadd.f32 %v2293, %v2437
        %v2439 = vpop.f32.mrb[0].mxu0
        %2440 = vmatprep.mubr.f32.mxu0 %v1762
        %2441 = vmatmul.mubr.f32.gmra.mrb[0].mxu0 %v1761
        %v2442 = vpop.f32.mrb[0].mxu0
        %v2443 = vadd.f32 %v2298, %v2442
        %v2444 = vpop.f32.mrb[0].mxu0
        %2445 = vmatprep.mubr.f32.mxu0 %v1779
        %2446 = vmatmul.mubr.f32.gmra.mrb[0].mxu0 %v1778
        %v2447 = vpop.f32.mrb[0].mxu0
        %v2448 = vadd.f32 %v2303, %v2447
        %v2449 = vpop.f32.mrb[0].mxu0
        %2450 = vmatprep.mubr.f32.mxu0 %v1796
        %2451 = vmatmul.mubr.f32.gmra.mrb[0].mxu0 %v1795
        %v2452 = vpop.f32.mrb[0].mxu0
        %v2453 = vadd.f32 %v2308, %v2452
        %v2454 = vpop.f32.mrb[0].mxu0
        %2455 = vmatprep.mubr.f32.mxu0 %v1813
        %2456 = vmatmul.mubr.f32.gmra.mrb[0].mxu0 %v1812
        %v2457 = vpop.f32.mrb[0].mxu0
        %v2458 = vadd.f32 %v2313, %v2457
        %v2459 = vpop.f32.mrb[0].mxu0
        %2460 = vmatprep.mubr.f32.mxu0 %v1830
        %2461 = vmatmul.mubr.f32.gmra.mrb[0].mxu0 %v1829
        %v2462 = vpop.f32.mrb[0].mxu0
        %v2463 = vadd.f32 %v2318, %v2462
        %v2464 = vpop.f32.mrb[0].mxu0
        %2465 = vmatprep.mubr.f32.mxu0 %v1847
        %2466 = vmatmul.mubr.f32.gmra.mrb[0].mxu0 %v1846
        %v2467 = vpop.f32.mrb[0].mxu0
        %v2468 = vadd.f32 %v2323, %v2467
        %v2469 = vpop.f32.mrb[0].mxu0
        %2470 = vmatprep.mubr.f32.mxu0 %v1864
        %2471 = vmatmul.mubr.f32.gmra.mrb[0].mxu0 %v1863
        %v2472 = vpop.f32.mrb[0].mxu0
        %v2473 = vadd.f32 %v2328, %v2472
        %v2474 = vpop.f32.mrb[0].mxu0
        %2475 = vmatprep.mubr.f32.mxu0 %v1881
        %2476 = vmatmul.mubr.f32.gmra.mrb[0].mxu0 %v1880
        %v2477 = vpop.f32.mrb[0].mxu0
        %v2478 = vadd.f32 %v2333, %v2477
        %v2479 = vpop.f32.mrb[0].mxu0
        %2480 = vmatprep.mubr.f32.mxu0 %v1898
        %2481 = vmatmul.mubr.f32.gmra.mrb[0].mxu0 %v1897
        %v2482 = vpop.f32.mrb[0].mxu0
        %v2483 = vadd.f32 %v2338, %v2482
        %v2484 = vpop.f32.mrb[0].mxu0
        %2485 = vmatprep.mubr.f32.mxu0 %v1915
        %2486 = vmatmul.mubr.f32.gmra.mrb[0].mxu0 %v1914
        %v2487 = vpop.f32.mrb[0].mxu0
        %v2488 = vadd.f32 %v2343, %v2487
        %v2489 = vpop.f32.mrb[0].mxu0
        %2490 = vdwg.mxu0
        %2491 = vmatprep.subr.mxu0 0.0
        %2492 = vmatpush1.msra.mxu0 %v1993
        %2493 = vmatprep.subr.mxu0 0.0
        %2494 = vmatpush1.msra.mxu0 %v1994
        %2495 = vmatprep.subr.mxu0 0.0
        %2496 = vmatpush1.msra.mxu0 %v1995
        %2497 = vmatprep.subr.mxu0 0.0
        %2498 = vmatpush1.msra.mxu0 %v1996
        %2499 = vmatprep.subr.mxu0 0.0
        %2500 = vmatpush1.msra.mxu0 %v1997
        %2501 = vmatprep.subr.mxu0 0.0
        %2502 = vmatpush1.msra.mxu0 %v1998
        %2503 = vmatprep.subr.mxu0 0.0
        %2504 = vmatpush1.msra.mxu0 %v1999
        %2505 = vmatprep.subr.mxu0 0.0
        %2506 = vmatpush1.msra.mxu0 %v2000
        %2507 = vmatprep.subr.mxu0 0.0
        %2508 = vmatpush1.msra.mxu0 %v2001
        %2509 = vmatprep.subr.mxu0 0.0
        %2510 = vmatpush1.msra.mxu0 %v2002
        %2511 = vmatprep.subr.mxu0 0.0
        %2512 = vmatpush1.msra.mxu0 %v2003
        %2513 = vmatprep.subr.mxu0 0.0
        %2514 = vmatpush1.msra.mxu0 %v2004
        %2515 = vmatprep.subr.mxu0 0.0
        %2516 = vmatpush1.msra.mxu0 %v2005
        %2517 = vmatprep.subr.mxu0 0.0
        %2518 = vmatpush1.msra.mxu0 %v2006
        %2519 = vmatprep.subr.mxu0 0.0
        %2520 = vmatpush1.msra.mxu0 %v2007
        %2521 = vmatprep.subr.mxu0 0.0
        %2522 = vmatpush1.msra.mxu0 %v2008
        %2523 = vmatprep.subr.mxu0 0.0
        %2524 = vmatpush1.msra.mxu0 %v2009
        %2525 = vmatprep.subr.mxu0 0.0
        %2526 = vmatpush1.msra.mxu0 %v2010
        %2527 = vmatprep.subr.mxu0 0.0
        %2528 = vmatpush1.msra.mxu0 %v2011
        %2529 = vmatprep.subr.mxu0 0.0
        %2530 = vmatpush1.msra.mxu0 %v2012
        %2531 = vmatprep.subr.mxu0 0.0
        %2532 = vmatpush1.msra.mxu0 %v2013
        %2533 = vmatprep.subr.mxu0 0.0
        %2534 = vmatpush1.msra.mxu0 %v2014
        %2535 = vmatprep.subr.mxu0 0.0
        %2536 = vmatpush1.msra.mxu0 %v2015
        %2537 = vmatprep.subr.mxu0 0.0
        %2538 = vmatpush1.msra.mxu0 %v2016
        %2539 = vmatprep.subr.mxu0 0.0
        %2540 = vmatpush1.msra.mxu0 %v2017
        %2541 = vmatprep.subr.mxu0 0.0
        %2542 = vmatpush1.msra.mxu0 %v2018
        %2543 = vmatprep.subr.mxu0 0.0
        %2544 = vmatpush1.msra.mxu0 %v2019
        %2545 = vmatprep.subr.mxu0 0.0
        %2546 = vmatpush1.msra.mxu0 %v2020
        %2547 = vmatprep.subr.mxu0 0.0
        %2548 = vmatpush1.msra.mxu0 %v2021
        %2549 = vmatprep.subr.mxu0 0.0
        %2550 = vmatpush1.msra.mxu0 %v2022
        %2551 = vmatprep.subr.mxu0 0.0
        %2552 = vmatpush1.msra.mxu0 %v2023
        %2553 = vmatprep.subr.mxu0 0.0
        %2554 = vmatpush1.msra.mxu0 %v2024
        %2555 = vmatprep.mubr.f32.mxu0 %v1662
        %2556 = vmatmul.mubr.f32.gmra.mrb[0].mxu0 %v1661
        %v2557 = vpop.f32.mrb[0].mxu0
        %v2558 = vadd.f32 %v2413, %v2557
        %v2559 = vpop.f32.mrb[0].mxu0
        %2560 = vmatprep.mubr.f32.mxu0 %v1679
        %2561 = vmatmul.mubr.f32.gmra.mrb[0].mxu0 %v1678
        %v2562 = vpop.f32.mrb[0].mxu0
        %v2563 = vadd.f32 %v2418, %v2562
        %v2564 = vpop.f32.mrb[0].mxu0
        %2565 = vmatprep.mubr.f32.mxu0 %v1696
        %2566 = vmatmul.mubr.f32.gmra.mrb[0].mxu0 %v1695
        %v2567 = vpop.f32.mrb[0].mxu0
        %v2568 = vadd.f32 %v2423, %v2567
        %v2569 = vpop.f32.mrb[0].mxu0
        %2570 = vmatprep.mubr.f32.mxu0 %v1713
        %2571 = vmatmul.mubr.f32.gmra.mrb[0].mxu0 %v1712
        %v2572 = vpop.f32.mrb[0].mxu0
        %v2573 = vadd.f32 %v2428, %v2572
        %v2574 = vpop.f32.mrb[0].mxu0
        %2575 = vmatprep.mubr.f32.mxu0 %v1730
        %2576 = vmatmul.mubr.f32.gmra.mrb[0].mxu0 %v1729
        %v2577 = vpop.f32.mrb[0].mxu0
        %v2578 = vadd.f32 %v2433, %v2577
        %v2579 = vpop.f32.mrb[0].mxu0
        %2580 = vmatprep.mubr.f32.mxu0 %v1747
        %2581 = vmatmul.mubr.f32.gmra.mrb[0].mxu0 %v1746
        %v2582 = vpop.f32.mrb[0].mxu0
        %v2583 = vadd.f32 %v2438, %v2582
        %v2584 = vpop.f32.mrb[0].mxu0
        %2585 = vmatprep.mubr.f32.mxu0 %v1764
        %2586 = vmatmul.mubr.f32.gmra.mrb[0].mxu0 %v1763
        %v2587 = vpop.f32.mrb[0].mxu0
        %v2588 = vadd.f32 %v2443, %v2587
        %v2589 = vpop.f32.mrb[0].mxu0
        %2590 = vmatprep.mubr.f32.mxu0 %v1781
        %2591 = vmatmul.mubr.f32.gmra.mrb[0].mxu0 %v1780
        %v2592 = vpop.f32.mrb[0].mxu0
        %v2593 = vadd.f32 %v2448, %v2592
        %v2594 = vpop.f32.mrb[0].mxu0
        %2595 = vmatprep.mubr.f32.mxu0 %v1798
        %2596 = vmatmul.mubr.f32.gmra.mrb[0].mxu0 %v1797
        %v2597 = vpop.f32.mrb[0].mxu0
        %v2598 = vadd.f32 %v2453, %v2597
        %v2599 = vpop.f32.mrb[0].mxu0
        %2600 = vmatprep.mubr.f32.mxu0 %v1815
        %2601 = vmatmul.mubr.f32.gmra.mrb[0].mxu0 %v1814
        %v2602 = vpop.f32.mrb[0].mxu0
        %v2603 = vadd.f32 %v2458, %v2602
        %v2604 = vpop.f32.mrb[0].mxu0
        %2605 = vmatprep.mubr.f32.mxu0 %v1832
        %2606 = vmatmul.mubr.f32.gmra.mrb[0].mxu0 %v1831
        %v2607 = vpop.f32.mrb[0].mxu0
        %v2608 = vadd.f32 %v2463, %v2607
        %v2609 = vpop.f32.mrb[0].mxu0
        %2610 = vmatprep.mubr.f32.mxu0 %v1849
        %2611 = vmatmul.mubr.f32.gmra.mrb[0].mxu0 %v1848
        %v2612 = vpop.f32.mrb[0].mxu0
        %v2613 = vadd.f32 %v2468, %v2612
        %v2614 = vpop.f32.mrb[0].mxu0
        %2615 = vmatprep.mubr.f32.mxu0 %v1866
        %2616 = vmatmul.mubr.f32.gmra.mrb[0].mxu0 %v1865
        %v2617 = vpop.f32.mrb[0].mxu0
        %v2618 = vadd.f32 %v2473, %v2617
        %v2619 = vpop.f32.mrb[0].mxu0
        %2620 = vmatprep.mubr.f32.mxu0 %v1883
        %2621 = vmatmul.mubr.f32.gmra.mrb[0].mxu0 %v1882
        %v2622 = vpop.f32.mrb[0].mxu0
        %v2623 = vadd.f32 %v2478, %v2622
        %v2624 = vpop.f32.mrb[0].mxu0
        %2625 = vmatprep.mubr.f32.mxu0 %v1900
        %2626 = vmatmul.mubr.f32.gmra.mrb[0].mxu0 %v1899
        %v2627 = vpop.f32.mrb[0].mxu0
        %v2628 = vadd.f32 %v2483, %v2627
        %v2629 = vpop.f32.mrb[0].mxu0
        %2630 = vmatprep.mubr.f32.mxu0 %v1917
        %2631 = vmatmul.mubr.f32.gmra.mrb[0].mxu0 %v1916
        %v2632 = vpop.f32.mrb[0].mxu0
        %v2633 = vadd.f32 %v2488, %v2632
        %v2634 = vpop.f32.mrb[0].mxu0
        %2635 = vdwg.mxu0
        %2636 = vmatprep.subr.mxu0 0.0
        %2637 = vmatpush1.msra.mxu0 %v2025
        %2638 = vmatprep.subr.mxu0 0.0
        %2639 = vmatpush1.msra.mxu0 %v2026
        %2640 = vmatprep.subr.mxu0 0.0
        %2641 = vmatpush1.msra.mxu0 %v2027
        %2642 = vmatprep.subr.mxu0 0.0
        %2643 = vmatpush1.msra.mxu0 %v2028
        %2644 = vmatprep.subr.mxu0 0.0
        %2645 = vmatpush1.msra.mxu0 %v2029
        %2646 = vmatprep.subr.mxu0 0.0
        %2647 = vmatpush1.msra.mxu0 %v2030
        %2648 = vmatprep.subr.mxu0 0.0
        %2649 = vmatpush1.msra.mxu0 %v2031
        %2650 = vmatprep.subr.mxu0 0.0
        %2651 = vmatpush1.msra.mxu0 %v2032
        %2652 = vmatprep.subr.mxu0 0.0
        %2653 = vmatpush1.msra.mxu0 %v2033
        %2654 = vmatprep.subr.mxu0 0.0
        %2655 = vmatpush1.msra.mxu0 %v2034
        %2656 = vmatprep.subr.mxu0 0.0
        %2657 = vmatpush1.msra.mxu0 %v2035
        %2658 = vmatprep.subr.mxu0 0.0
        %2659 = vmatpush1.msra.mxu0 %v2036
        %2660 = vmatprep.subr.mxu0 0.0
        %2661 = vmatpush1.msra.mxu0 %v2037
        %2662 = vmatprep.subr.mxu0 0.0
        %2663 = vmatpush1.msra.mxu0 %v2038
        %2664 = vmatprep.subr.mxu0 0.0
        %2665 = vmatpush1.msra.mxu0 %v2039
        %2666 = vmatprep.subr.mxu0 0.0
        %2667 = vmatpush1.msra.mxu0 %v2040
        %2668 = vmatprep.subr.mxu0 0.0
        %2669 = vmatpush1.msra.mxu0 %v2041
        %2670 = vmatprep.subr.mxu0 0.0
        %2671 = vmatpush1.msra.mxu0 %v2042
        %2672 = vmatprep.subr.mxu0 0.0
        %2673 = vmatpush1.msra.mxu0 %v2043
        %2674 = vmatprep.subr.mxu0 0.0
        %2675 = vmatpush1.msra.mxu0 %v2044
        %2676 = vmatprep.subr.mxu0 0.0
        %2677 = vmatpush1.msra.mxu0 %v2045
        %2678 = vmatprep.subr.mxu0 0.0
        %2679 = vmatpush1.msra.mxu0 %v2046
        %2680 = vmatprep.subr.mxu0 0.0
        %2681 = vmatpush1.msra.mxu0 %v2047
        %2682 = vmatprep.subr.mxu0 0.0
        %2683 = vmatpush1.msra.mxu0 %v2048
        %2684 = vmatprep.subr.mxu0 0.0
        %2685 = vmatpush1.msra.mxu0 %v2049
        %2686 = vmatprep.subr.mxu0 0.0
        %2687 = vmatpush1.msra.mxu0 %v2050
        %2688 = vmatprep.subr.mxu0 0.0
        %2689 = vmatpush1.msra.mxu0 %v2051
        %2690 = vmatprep.subr.mxu0 0.0
        %2691 = vmatpush1.msra.mxu0 %v2052
        %2692 = vmatprep.subr.mxu0 0.0
        %2693 = vmatpush1.msra.mxu0 %v2053
        %2694 = vmatprep.subr.mxu0 0.0
        %2695 = vmatpush1.msra.mxu0 %v2054
        %2696 = vmatprep.subr.mxu0 0.0
        %2697 = vmatpush1.msra.mxu0 %v2055
        %2698 = vmatprep.subr.mxu0 0.0
        %2699 = vmatpush1.msra.mxu0 %v2056
        %2700 = vmatprep.mubr.f32.mxu0 %v1664
        %2701 = vmatmul.mubr.f32.gmra.mrb[0].mxu0 %v1663
        %v2702 = vpop.f32.mrb[0].mxu0
        %v2703 = vadd.f32 %v2558, %v2702
        %v2704 = vpop.f32.mrb[0].mxu0
        %2705 = vmatprep.mubr.f32.mxu0 %v1681
        %2706 = vmatmul.mubr.f32.gmra.mrb[0].mxu0 %v1680
        %v2707 = vpop.f32.mrb[0].mxu0
        %v2708 = vadd.f32 %v2563, %v2707
        %v2709 = vpop.f32.mrb[0].mxu0
        %2710 = vmatprep.mubr.f32.mxu0 %v1698
        %2711 = vmatmul.mubr.f32.gmra.mrb[0].mxu0 %v1697
        %v2712 = vpop.f32.mrb[0].mxu0
        %v2713 = vadd.f32 %v2568, %v2712
        %v2714 = vpop.f32.mrb[0].mxu0
        %2715 = vmatprep.mubr.f32.mxu0 %v1715
        %2716 = vmatmul.mubr.f32.gmra.mrb[0].mxu0 %v1714
        %v2717 = vpop.f32.mrb[0].mxu0
        %v2718 = vadd.f32 %v2573, %v2717
        %v2719 = vpop.f32.mrb[0].mxu0
        %2720 = vmatprep.mubr.f32.mxu0 %v1732
        %2721 = vmatmul.mubr.f32.gmra.mrb[0].mxu0 %v1731
        %v2722 = vpop.f32.mrb[0].mxu0
        %v2723 = vadd.f32 %v2578, %v2722
        %v2724 = vpop.f32.mrb[0].mxu0
        %2725 = vmatprep.mubr.f32.mxu0 %v1749
        %2726 = vmatmul.mubr.f32.gmra.mrb[0].mxu0 %v1748
        %v2727 = vpop.f32.mrb[0].mxu0
        %v2728 = vadd.f32 %v2583, %v2727
        %v2729 = vpop.f32.mrb[0].mxu0
        %2730 = vmatprep.mubr.f32.mxu0 %v1766
        %2731 = vmatmul.mubr.f32.gmra.mrb[0].mxu0 %v1765
        %v2732 = vpop.f32.mrb[0].mxu0
        %v2733 = vadd.f32 %v2588, %v2732
        %v2734 = vpop.f32.mrb[0].mxu0
        %2735 = vmatprep.mubr.f32.mxu0 %v1783
        %2736 = vmatmul.mubr.f32.gmra.mrb[0].mxu0 %v1782
        %v2737 = vpop.f32.mrb[0].mxu0
        %v2738 = vadd.f32 %v2593, %v2737
        %v2739 = vpop.f32.mrb[0].mxu0
        %2740 = vmatprep.mubr.f32.mxu0 %v1800
        %2741 = vmatmul.mubr.f32.gmra.mrb[0].mxu0 %v1799
        %v2742 = vpop.f32.mrb[0].mxu0
        %v2743 = vadd.f32 %v2598, %v2742
        %v2744 = vpop.f32.mrb[0].mxu0
        %2745 = vmatprep.mubr.f32.mxu0 %v1817
        %2746 = vmatmul.mubr.f32.gmra.mrb[0].mxu0 %v1816
        %v2747 = vpop.f32.mrb[0].mxu0
        %v2748 = vadd.f32 %v2603, %v2747
        %v2749 = vpop.f32.mrb[0].mxu0
        %2750 = vmatprep.mubr.f32.mxu0 %v1834
        %2751 = vmatmul.mubr.f32.gmra.mrb[0].mxu0 %v1833
        %v2752 = vpop.f32.mrb[0].mxu0
        %v2753 = vadd.f32 %v2608, %v2752
        %v2754 = vpop.f32.mrb[0].mxu0
        %2755 = vmatprep.mubr.f32.mxu0 %v1851
        %2756 = vmatmul.mubr.f32.gmra.mrb[0].mxu0 %v1850
        %v2757 = vpop.f32.mrb[0].mxu0
        %v2758 = vadd.f32 %v2613, %v2757
        %v2759 = vpop.f32.mrb[0].mxu0
        %2760 = vmatprep.mubr.f32.mxu0 %v1868
        %2761 = vmatmul.mubr.f32.gmra.mrb[0].mxu0 %v1867
        %v2762 = vpop.f32.mrb[0].mxu0
        %v2763 = vadd.f32 %v2618, %v2762
        %v2764 = vpop.f32.mrb[0].mxu0
        %2765 = vmatprep.mubr.f32.mxu0 %v1885
        %2766 = vmatmul.mubr.f32.gmra.mrb[0].mxu0 %v1884
        %v2767 = vpop.f32.mrb[0].mxu0
        %v2768 = vadd.f32 %v2623, %v2767
        %v2769 = vpop.f32.mrb[0].mxu0
        %2770 = vmatprep.mubr.f32.mxu0 %v1902
        %2771 = vmatmul.mubr.f32.gmra.mrb[0].mxu0 %v1901
        %v2772 = vpop.f32.mrb[0].mxu0
        %v2773 = vadd.f32 %v2628, %v2772
        %v2774 = vpop.f32.mrb[0].mxu0
        %2775 = vmatprep.mubr.f32.mxu0 %v1919
        %2776 = vmatmul.mubr.f32.gmra.mrb[0].mxu0 %v1918
        %v2777 = vpop.f32.mrb[0].mxu0
        %v2778 = vadd.f32 %v2633, %v2777
        %v2779 = vpop.f32.mrb[0].mxu0
        %2780 = vdwg.mxu0
        %2781 = vmatprep.subr.mxu0 0.0
        %2782 = vmatpush1.msra.mxu0 %v2057
        %2783 = vmatprep.subr.mxu0 0.0
        %2784 = vmatpush1.msra.mxu0 %v2058
        %2785 = vmatprep.subr.mxu0 0.0
        %2786 = vmatpush1.msra.mxu0 %v2059
        %2787 = vmatprep.subr.mxu0 0.0
        %2788 = vmatpush1.msra.mxu0 %v2060
        %2789 = vmatprep.subr.mxu0 0.0
        %2790 = vmatpush1.msra.mxu0 %v2061
        %2791 = vmatprep.subr.mxu0 0.0
        %2792 = vmatpush1.msra.mxu0 %v2062
        %2793 = vmatprep.subr.mxu0 0.0
        %2794 = vmatpush1.msra.mxu0 %v2063
        %2795 = vmatprep.subr.mxu0 0.0
        %2796 = vmatpush1.msra.mxu0 %v2064
        %2797 = vmatprep.subr.mxu0 0.0
        %2798 = vmatpush1.msra.mxu0 %v2065
        %2799 = vmatprep.subr.mxu0 0.0
        %2800 = vmatpush1.msra.mxu0 %v2066
        %2801 = vmatprep.subr.mxu0 0.0
        %2802 = vmatpush1.msra.mxu0 %v2067
        %2803 = vmatprep.subr.mxu0 0.0
        %2804 = vmatpush1.msra.mxu0 %v2068
        %2805 = vmatprep.subr.mxu0 0.0
        %2806 = vmatpush1.msra.mxu0 %v2069
        %2807 = vmatprep.subr.mxu0 0.0
        %2808 = vmatpush1.msra.mxu0 %v2070
        %2809 = vmatprep.subr.mxu0 0.0
        %2810 = vmatpush1.msra.mxu0 %v2071
        %2811 = vmatprep.subr.mxu0 0.0
        %2812 = vmatpush1.msra.mxu0 %v2072
        %2813 = vmatprep.subr.mxu0 0.0
        %2814 = vmatpush1.msra.mxu0 %v2073
        %2815 = vmatprep.subr.mxu0 0.0
        %2816 = vmatpush1.msra.mxu0 %v2074
        %2817 = vmatprep.subr.mxu0 0.0
        %2818 = vmatpush1.msra.mxu0 %v2075
        %2819 = vmatprep.subr.mxu0 0.0
        %2820 = vmatpush1.msra.mxu0 %v2076
        %2821 = vmatprep.subr.mxu0 0.0
        %2822 = vmatpush1.msra.mxu0 %v2077
        %2823 = vmatprep.subr.mxu0 0.0
        %2824 = vmatpush1.msra.mxu0 %v2078
        %2825 = vmatprep.subr.mxu0 0.0
        %2826 = vmatpush1.msra.mxu0 %v2079
        %2827 = vmatprep.subr.mxu0 0.0
        %2828 = vmatpush1.msra.mxu0 %v2080
        %2829 = vmatprep.subr.mxu0 0.0
        %2830 = vmatpush1.msra.mxu0 %v2081
        %2831 = vmatprep.subr.mxu0 0.0
        %2832 = vmatpush1.msra.mxu0 %v2082
        %2833 = vmatprep.subr.mxu0 0.0
        %2834 = vmatpush1.msra.mxu0 %v2083
        %2835 = vmatprep.subr.mxu0 0.0
        %2836 = vmatpush1.msra.mxu0 %v2084
        %2837 = vmatprep.subr.mxu0 0.0
        %2838 = vmatpush1.msra.mxu0 %v2085
        %2839 = vmatprep.subr.mxu0 0.0
        %2840 = vmatpush1.msra.mxu0 %v2086
        %2841 = vmatprep.subr.mxu0 0.0
        %2842 = vmatpush1.msra.mxu0 %v2087
        %2843 = vmatprep.subr.mxu0 0.0
        %2844 = vmatpush1.msra.mxu0 %v2088
        %2845 = vmatprep.mubr.f32.mxu0 %v1666
        %2846 = vmatmul.mubr.f32.gmra.mrb[0].mxu0 %v1665
        %v2847 = vpop.f32.mrb[0].mxu0
        %v2848 = vadd.f32 %v2703, %v2847
        %v2849 = vpop.f32.mrb[0].mxu0
        %2850 = vmatprep.mubr.f32.mxu0 %v1683
        %2851 = vmatmul.mubr.f32.gmra.mrb[0].mxu0 %v1682
        %v2852 = vpop.f32.mrb[0].mxu0
        %v2853 = vadd.f32 %v2708, %v2852
        %v2854 = vpop.f32.mrb[0].mxu0
        %2855 = vmatprep.mubr.f32.mxu0 %v1700
        %2856 = vmatmul.mubr.f32.gmra.mrb[0].mxu0 %v1699
        %v2857 = vpop.f32.mrb[0].mxu0
        %v2858 = vadd.f32 %v2713, %v2857
        %v2859 = vpop.f32.mrb[0].mxu0
        %2860 = vmatprep.mubr.f32.mxu0 %v1717
        %2861 = vmatmul.mubr.f32.gmra.mrb[0].mxu0 %v1716
        %v2862 = vpop.f32.mrb[0].mxu0
        %v2863 = vadd.f32 %v2718, %v2862
        %v2864 = vpop.f32.mrb[0].mxu0
        %2865 = vmatprep.mubr.f32.mxu0 %v1734
        %2866 = vmatmul.mubr.f32.gmra.mrb[0].mxu0 %v1733
        %v2867 = vpop.f32.mrb[0].mxu0
        %v2868 = vadd.f32 %v2723, %v2867
        %v2869 = vpop.f32.mrb[0].mxu0
        %2870 = vmatprep.mubr.f32.mxu0 %v1751
        %2871 = vmatmul.mubr.f32.gmra.mrb[0].mxu0 %v1750
        %v2872 = vpop.f32.mrb[0].mxu0
        %v2873 = vadd.f32 %v2728, %v2872
        %v2874 = vpop.f32.mrb[0].mxu0
        %2875 = vmatprep.mubr.f32.mxu0 %v1768
        %2876 = vmatmul.mubr.f32.gmra.mrb[0].mxu0 %v1767
        %v2877 = vpop.f32.mrb[0].mxu0
        %v2878 = vadd.f32 %v2733, %v2877
        %v2879 = vpop.f32.mrb[0].mxu0
        %2880 = vmatprep.mubr.f32.mxu0 %v1785
        %2881 = vmatmul.mubr.f32.gmra.mrb[0].mxu0 %v1784
        %v2882 = vpop.f32.mrb[0].mxu0
        %v2883 = vadd.f32 %v2738, %v2882
        %v2884 = vpop.f32.mrb[0].mxu0
        %2885 = vmatprep.mubr.f32.mxu0 %v1802
        %2886 = vmatmul.mubr.f32.gmra.mrb[0].mxu0 %v1801
        %v2887 = vpop.f32.mrb[0].mxu0
        %v2888 = vadd.f32 %v2743, %v2887
        %v2889 = vpop.f32.mrb[0].mxu0
        %2890 = vmatprep.mubr.f32.mxu0 %v1819
        %2891 = vmatmul.mubr.f32.gmra.mrb[0].mxu0 %v1818
        %v2892 = vpop.f32.mrb[0].mxu0
        %v2893 = vadd.f32 %v2748, %v2892
        %v2894 = vpop.f32.mrb[0].mxu0
        %2895 = vmatprep.mubr.f32.mxu0 %v1836
        %2896 = vmatmul.mubr.f32.gmra.mrb[0].mxu0 %v1835
        %v2897 = vpop.f32.mrb[0].mxu0
        %v2898 = vadd.f32 %v2753, %v2897
        %v2899 = vpop.f32.mrb[0].mxu0
        %2900 = vmatprep.mubr.f32.mxu0 %v1853
        %2901 = vmatmul.mubr.f32.gmra.mrb[0].mxu0 %v1852
        %v2902 = vpop.f32.mrb[0].mxu0
        %v2903 = vadd.f32 %v2758, %v2902
        %v2904 = vpop.f32.mrb[0].mxu0
        %2905 = vmatprep.mubr.f32.mxu0 %v1870
        %2906 = vmatmul.mubr.f32.gmra.mrb[0].mxu0 %v1869
        %v2907 = vpop.f32.mrb[0].mxu0
        %v2908 = vadd.f32 %v2763, %v2907
        %v2909 = vpop.f32.mrb[0].mxu0
        %2910 = vmatprep.mubr.f32.mxu0 %v1887
        %2911 = vmatmul.mubr.f32.gmra.mrb[0].mxu0 %v1886
        %v2912 = vpop.f32.mrb[0].mxu0
        %v2913 = vadd.f32 %v2768, %v2912
        %v2914 = vpop.f32.mrb[0].mxu0
        %2915 = vmatprep.mubr.f32.mxu0 %v1904
        %2916 = vmatmul.mubr.f32.gmra.mrb[0].mxu0 %v1903
        %v2917 = vpop.f32.mrb[0].mxu0
        %v2918 = vadd.f32 %v2773, %v2917
        %v2919 = vpop.f32.mrb[0].mxu0
        %2920 = vmatprep.mubr.f32.mxu0 %v1921
        %2921 = vmatmul.mubr.f32.gmra.mrb[0].mxu0 %v1920
        %v2922 = vpop.f32.mrb[0].mxu0
        %v2923 = vadd.f32 %v2778, %v2922
        %v2924 = vpop.f32.mrb[0].mxu0
        %2925 = vdwg.mxu0
        %2926 = vmatprep.subr.mxu0 0.0
        %2927 = vmatpush1.msra.mxu0 %v2089
        %2928 = vmatprep.subr.mxu0 0.0
        %2929 = vmatpush1.msra.mxu0 %v2090
        %2930 = vmatprep.subr.mxu0 0.0
        %2931 = vmatpush1.msra.mxu0 %v2091
        %2932 = vmatprep.subr.mxu0 0.0
        %2933 = vmatpush1.msra.mxu0 %v2092
        %2934 = vmatprep.subr.mxu0 0.0
        %2935 = vmatpush1.msra.mxu0 %v2093
        %2936 = vmatprep.subr.mxu0 0.0
        %2937 = vmatpush1.msra.mxu0 %v2094
        %2938 = vmatprep.subr.mxu0 0.0
        %2939 = vmatpush1.msra.mxu0 %v2095
        %2940 = vmatprep.subr.mxu0 0.0
        %2941 = vmatpush1.msra.mxu0 %v2096
        %2942 = vmatprep.subr.mxu0 0.0
        %2943 = vmatpush1.msra.mxu0 %v2097
        %2944 = vmatprep.subr.mxu0 0.0
        %2945 = vmatpush1.msra.mxu0 %v2098
        %2946 = vmatprep.subr.mxu0 0.0
        %2947 = vmatpush1.msra.mxu0 %v2099
        %2948 = vmatprep.subr.mxu0 0.0
        %2949 = vmatpush1.msra.mxu0 %v2100
        %2950 = vmatprep.subr.mxu0 0.0
        %2951 = vmatpush1.msra.mxu0 %v2101
        %2952 = vmatprep.subr.mxu0 0.0
        %2953 = vmatpush1.msra.mxu0 %v2102
        %2954 = vmatprep.subr.mxu0 0.0
        %2955 = vmatpush1.msra.mxu0 %v2103
        %2956 = vmatprep.subr.mxu0 0.0
        %2957 = vmatpush1.msra.mxu0 %v2104
        %2958 = vmatprep.subr.mxu0 0.0
        %2959 = vmatpush1.msra.mxu0 %v2105
        %2960 = vmatprep.subr.mxu0 0.0
        %2961 = vmatpush1.msra.mxu0 %v2106
        %2962 = vmatprep.subr.mxu0 0.0
        %2963 = vmatpush1.msra.mxu0 %v2107
        %2964 = vmatprep.subr.mxu0 0.0
        %2965 = vmatpush1.msra.mxu0 %v2108
        %2966 = vmatprep.subr.mxu0 0.0
        %2967 = vmatpush1.msra.mxu0 %v2109
        %2968 = vmatprep.subr.mxu0 0.0
        %2969 = vmatpush1.msra.mxu0 %v2110
        %2970 = vmatprep.subr.mxu0 0.0
        %2971 = vmatpush1.msra.mxu0 %v2111
        %2972 = vmatprep.subr.mxu0 0.0
        %2973 = vmatpush1.msra.mxu0 %v2112
        %2974 = vmatprep.subr.mxu0 0.0
        %2975 = vmatpush1.msra.mxu0 %v2113
        %2976 = vmatprep.subr.mxu0 0.0
        %2977 = vmatpush1.msra.mxu0 %v2114
        %2978 = vmatprep.subr.mxu0 0.0
        %2979 = vmatpush1.msra.mxu0 %v2115
        %2980 = vmatprep.subr.mxu0 0.0
        %2981 = vmatpush1.msra.mxu0 %v2116
        %2982 = vmatprep.subr.mxu0 0.0
        %2983 = vmatpush1.msra.mxu0 %v2117
        %2984 = vmatprep.subr.mxu0 0.0
        %2985 = vmatpush1.msra.mxu0 %v2118
        %2986 = vmatprep.subr.mxu0 0.0
        %2987 = vmatpush1.msra.mxu0 %v2119
        %2988 = vmatprep.subr.mxu0 0.0
        %2989 = vmatpush1.msra.mxu0 %v2120
        %2990 = vmatprep.mubr.f32.mxu0 %v1668
        %2991 = vmatmul.mubr.f32.gmra.mrb[0].mxu0 %v1667
        %v2992 = vpop.f32.mrb[0].mxu0
        %v2993 = vadd.f32 %v2848, %v2992
        %v2994 = vpop.f32.mrb[0].mxu0
        %2995 = vmatprep.mubr.f32.mxu0 %v1685
        %2996 = vmatmul.mubr.f32.gmra.mrb[0].mxu0 %v1684
        %v2997 = vpop.f32.mrb[0].mxu0
        %v2998 = vadd.f32 %v2853, %v2997
        %v2999 = vpop.f32.mrb[0].mxu0
        %3000 = vmatprep.mubr.f32.mxu0 %v1702
        %3001 = vmatmul.mubr.f32.gmra.mrb[0].mxu0 %v1701
        %v3002 = vpop.f32.mrb[0].mxu0
        %v3003 = vadd.f32 %v2858, %v3002
        %v3004 = vpop.f32.mrb[0].mxu0
        %3005 = vmatprep.mubr.f32.mxu0 %v1719
        %3006 = vmatmul.mubr.f32.gmra.mrb[0].mxu0 %v1718
        %v3007 = vpop.f32.mrb[0].mxu0
        %v3008 = vadd.f32 %v2863, %v3007
        %v3009 = vpop.f32.mrb[0].mxu0
        %3010 = vmatprep.mubr.f32.mxu0 %v1736
        %3011 = vmatmul.mubr.f32.gmra.mrb[0].mxu0 %v1735
        %v3012 = vpop.f32.mrb[0].mxu0
        %v3013 = vadd.f32 %v2868, %v3012
        %v3014 = vpop.f32.mrb[0].mxu0
        %3015 = vmatprep.mubr.f32.mxu0 %v1753
        %3016 = vmatmul.mubr.f32.gmra.mrb[0].mxu0 %v1752
        %v3017 = vpop.f32.mrb[0].mxu0
        %v3018 = vadd.f32 %v2873, %v3017
        %v3019 = vpop.f32.mrb[0].mxu0
        %3020 = vmatprep.mubr.f32.mxu0 %v1770
        %3021 = vmatmul.mubr.f32.gmra.mrb[0].mxu0 %v1769
        %v3022 = vpop.f32.mrb[0].mxu0
        %v3023 = vadd.f32 %v2878, %v3022
        %v3024 = vpop.f32.mrb[0].mxu0
        %3025 = vmatprep.mubr.f32.mxu0 %v1787
        %3026 = vmatmul.mubr.f32.gmra.mrb[0].mxu0 %v1786
        %v3027 = vpop.f32.mrb[0].mxu0
        %v3028 = vadd.f32 %v2883, %v3027
        %v3029 = vpop.f32.mrb[0].mxu0
        %3030 = vmatprep.mubr.f32.mxu0 %v1804
        %3031 = vmatmul.mubr.f32.gmra.mrb[0].mxu0 %v1803
        %v3032 = vpop.f32.mrb[0].mxu0
        %v3033 = vadd.f32 %v2888, %v3032
        %v3034 = vpop.f32.mrb[0].mxu0
        %3035 = vmatprep.mubr.f32.mxu0 %v1821
        %3036 = vmatmul.mubr.f32.gmra.mrb[0].mxu0 %v1820
        %v3037 = vpop.f32.mrb[0].mxu0
        %v3038 = vadd.f32 %v2893, %v3037
        %v3039 = vpop.f32.mrb[0].mxu0
        %3040 = vmatprep.mubr.f32.mxu0 %v1838
        %3041 = vmatmul.mubr.f32.gmra.mrb[0].mxu0 %v1837
        %v3042 = vpop.f32.mrb[0].mxu0
        %v3043 = vadd.f32 %v2898, %v3042
        %v3044 = vpop.f32.mrb[0].mxu0
        %3045 = vmatprep.mubr.f32.mxu0 %v1855
        %3046 = vmatmul.mubr.f32.gmra.mrb[0].mxu0 %v1854
        %v3047 = vpop.f32.mrb[0].mxu0
        %v3048 = vadd.f32 %v2903, %v3047
        %v3049 = vpop.f32.mrb[0].mxu0
        %3050 = vmatprep.mubr.f32.mxu0 %v1872
        %3051 = vmatmul.mubr.f32.gmra.mrb[0].mxu0 %v1871
        %v3052 = vpop.f32.mrb[0].mxu0
        %v3053 = vadd.f32 %v2908, %v3052
        %v3054 = vpop.f32.mrb[0].mxu0
        %3055 = vmatprep.mubr.f32.mxu0 %v1889
        %3056 = vmatmul.mubr.f32.gmra.mrb[0].mxu0 %v1888
        %v3057 = vpop.f32.mrb[0].mxu0
        %v3058 = vadd.f32 %v2913, %v3057
        %v3059 = vpop.f32.mrb[0].mxu0
        %3060 = vmatprep.mubr.f32.mxu0 %v1906
        %3061 = vmatmul.mubr.f32.gmra.mrb[0].mxu0 %v1905
        %v3062 = vpop.f32.mrb[0].mxu0
        %v3063 = vadd.f32 %v2918, %v3062
        %v3064 = vpop.f32.mrb[0].mxu0
        %3065 = vmatprep.mubr.f32.mxu0 %v1923
        %3066 = vmatmul.mubr.f32.gmra.mrb[0].mxu0 %v1922
        %v3067 = vpop.f32.mrb[0].mxu0
        %v3068 = vadd.f32 %v2923, %v3067
        %v3069 = vpop.f32.mrb[0].mxu0
        %3070 = vdwg.mxu0
        %3071 = vmatprep.subr.mxu0 0.0
        %3072 = vmatpush1.msra.mxu0 %v2121
        %3073 = vmatprep.subr.mxu0 0.0
        %3074 = vmatpush1.msra.mxu0 %v2122
        %3075 = vmatprep.subr.mxu0 0.0
        %3076 = vmatpush1.msra.mxu0 %v2123
        %3077 = vmatprep.subr.mxu0 0.0
        %3078 = vmatpush1.msra.mxu0 %v2124
        %3079 = vmatprep.subr.mxu0 0.0
        %3080 = vmatpush1.msra.mxu0 %v2125
        %3081 = vmatprep.subr.mxu0 0.0
        %3082 = vmatpush1.msra.mxu0 %v2126
        %3083 = vmatprep.subr.mxu0 0.0
        %3084 = vmatpush1.msra.mxu0 %v2127
        %3085 = vmatprep.subr.mxu0 0.0
        %3086 = vmatpush1.msra.mxu0 %v2128
        %3087 = vmatprep.subr.mxu0 0.0
        %3088 = vmatpush1.msra.mxu0 %v2129
        %3089 = vmatprep.subr.mxu0 0.0
        %3090 = vmatpush1.msra.mxu0 %v2130
        %3091 = vmatprep.subr.mxu0 0.0
        %3092 = vmatpush1.msra.mxu0 %v2131
        %3093 = vmatprep.subr.mxu0 0.0
        %3094 = vmatpush1.msra.mxu0 %v2132
        %3095 = vmatprep.subr.mxu0 0.0
        %3096 = vmatpush1.msra.mxu0 %v2133
        %3097 = vmatprep.subr.mxu0 0.0
        %3098 = vmatpush1.msra.mxu0 %v2134
        %3099 = vmatprep.subr.mxu0 0.0
        %3100 = vmatpush1.msra.mxu0 %v2135
        %3101 = vmatprep.subr.mxu0 0.0
        %3102 = vmatpush1.msra.mxu0 %v2136
        %3103 = vmatprep.subr.mxu0 0.0
        %3104 = vmatpush1.msra.mxu0 %v2137
        %3105 = vmatprep.subr.mxu0 0.0
        %3106 = vmatpush1.msra.mxu0 %v2138
        %3107 = vmatprep.subr.mxu0 0.0
        %3108 = vmatpush1.msra.mxu0 %v2139
        %3109 = vmatprep.subr.mxu0 0.0
        %3110 = vmatpush1.msra.mxu0 %v2140
        %3111 = vmatprep.subr.mxu0 0.0
        %3112 = vmatpush1.msra.mxu0 %v2141
        %3113 = vmatprep.subr.mxu0 0.0
        %3114 = vmatpush1.msra.mxu0 %v2142
        %3115 = vmatprep.subr.mxu0 0.0
        %3116 = vmatpush1.msra.mxu0 %v2143
        %3117 = vmatprep.subr.mxu0 0.0
        %3118 = vmatpush1.msra.mxu0 %v2144
        %3119 = vmatprep.subr.mxu0 0.0
        %3120 = vmatpush1.msra.mxu0 %v2145
        %3121 = vmatprep.subr.mxu0 0.0
        %3122 = vmatpush1.msra.mxu0 %v2146
        %3123 = vmatprep.subr.mxu0 0.0
        %3124 = vmatpush1.msra.mxu0 %v2147
        %3125 = vmatprep.subr.mxu0 0.0
        %3126 = vmatpush1.msra.mxu0 %v2148
        %3127 = vmatprep.subr.mxu0 0.0
        %3128 = vmatpush1.msra.mxu0 %v2149
        %3129 = vmatprep.subr.mxu0 0.0
        %3130 = vmatpush1.msra.mxu0 %v2150
        %3131 = vmatprep.subr.mxu0 0.0
        %3132 = vmatpush1.msra.mxu0 %v2151
        %3133 = vmatprep.subr.mxu0 0.0
        %3134 = vmatpush1.msra.mxu0 %v2152
        %3135 = vmatprep.mubr.f32.mxu0 %v1670
        %3136 = vmatmul.mubr.f32.gmra.mrb[0].mxu0 %v1669
        %v3137 = vpop.f32.mrb[0].mxu0
        %v3138 = vadd.f32 %v2993, %v3137
        %v3139 = vpop.f32.mrb[0].mxu0
        %3140 = vmatprep.mubr.f32.mxu0 %v1687
        %3141 = vmatmul.mubr.f32.gmra.mrb[0].mxu0 %v1686
        %v3142 = vpop.f32.mrb[0].mxu0
        %v3143 = vadd.f32 %v2998, %v3142
        %v3144 = vpop.f32.mrb[0].mxu0
        %3145 = vmatprep.mubr.f32.mxu0 %v1704
        %3146 = vmatmul.mubr.f32.gmra.mrb[0].mxu0 %v1703
        %v3147 = vpop.f32.mrb[0].mxu0
        %v3148 = vadd.f32 %v3003, %v3147
        %v3149 = vpop.f32.mrb[0].mxu0
        %3150 = vmatprep.mubr.f32.mxu0 %v1721
        %3151 = vmatmul.mubr.f32.gmra.mrb[0].mxu0 %v1720
        %v3152 = vpop.f32.mrb[0].mxu0
        %v3153 = vadd.f32 %v3008, %v3152
        %v3154 = vpop.f32.mrb[0].mxu0
        %3155 = vmatprep.mubr.f32.mxu0 %v1738
        %3156 = vmatmul.mubr.f32.gmra.mrb[0].mxu0 %v1737
        %v3157 = vpop.f32.mrb[0].mxu0
        %v3158 = vadd.f32 %v3013, %v3157
        %v3159 = vpop.f32.mrb[0].mxu0
        %3160 = vmatprep.mubr.f32.mxu0 %v1755
        %3161 = vmatmul.mubr.f32.gmra.mrb[0].mxu0 %v1754
        %v3162 = vpop.f32.mrb[0].mxu0
        %v3163 = vadd.f32 %v3018, %v3162
        %v3164 = vpop.f32.mrb[0].mxu0
        %3165 = vmatprep.mubr.f32.mxu0 %v1772
        %3166 = vmatmul.mubr.f32.gmra.mrb[0].mxu0 %v1771
        %v3167 = vpop.f32.mrb[0].mxu0
        %v3168 = vadd.f32 %v3023, %v3167
        %v3169 = vpop.f32.mrb[0].mxu0
        %3170 = vmatprep.mubr.f32.mxu0 %v1789
        %3171 = vmatmul.mubr.f32.gmra.mrb[0].mxu0 %v1788
        %v3172 = vpop.f32.mrb[0].mxu0
        %v3173 = vadd.f32 %v3028, %v3172
        %v3174 = vpop.f32.mrb[0].mxu0
        %3175 = vmatprep.mubr.f32.mxu0 %v1806
        %3176 = vmatmul.mubr.f32.gmra.mrb[0].mxu0 %v1805
        %v3177 = vpop.f32.mrb[0].mxu0
        %v3178 = vadd.f32 %v3033, %v3177
        %v3179 = vpop.f32.mrb[0].mxu0
        %3180 = vmatprep.mubr.f32.mxu0 %v1823
        %3181 = vmatmul.mubr.f32.gmra.mrb[0].mxu0 %v1822
        %v3182 = vpop.f32.mrb[0].mxu0
        %v3183 = vadd.f32 %v3038, %v3182
        %v3184 = vpop.f32.mrb[0].mxu0
        %3185 = vmatprep.mubr.f32.mxu0 %v1840
        %3186 = vmatmul.mubr.f32.gmra.mrb[0].mxu0 %v1839
        %v3187 = vpop.f32.mrb[0].mxu0
        %v3188 = vadd.f32 %v3043, %v3187
        %v3189 = vpop.f32.mrb[0].mxu0
        %3190 = vmatprep.mubr.f32.mxu0 %v1857
        %3191 = vmatmul.mubr.f32.gmra.mrb[0].mxu0 %v1856
        %v3192 = vpop.f32.mrb[0].mxu0
        %v3193 = vadd.f32 %v3048, %v3192
        %v3194 = vpop.f32.mrb[0].mxu0
        %3195 = vmatprep.mubr.f32.mxu0 %v1874
        %3196 = vmatmul.mubr.f32.gmra.mrb[0].mxu0 %v1873
        %v3197 = vpop.f32.mrb[0].mxu0
        %v3198 = vadd.f32 %v3053, %v3197
        %v3199 = vpop.f32.mrb[0].mxu0
        %3200 = vmatprep.mubr.f32.mxu0 %v1891
        %3201 = vmatmul.mubr.f32.gmra.mrb[0].mxu0 %v1890
        %v3202 = vpop.f32.mrb[0].mxu0
        %v3203 = vadd.f32 %v3058, %v3202
        %v3204 = vpop.f32.mrb[0].mxu0
        %3205 = vmatprep.mubr.f32.mxu0 %v1908
        %3206 = vmatmul.mubr.f32.gmra.mrb[0].mxu0 %v1907
        %v3207 = vpop.f32.mrb[0].mxu0
        %v3208 = vadd.f32 %v3063, %v3207
        %v3209 = vpop.f32.mrb[0].mxu0
        %3210 = vmatprep.mubr.f32.mxu0 %v1925
        %3211 = vmatmul.mubr.f32.gmra.mrb[0].mxu0 %v1924
        %v3212 = vpop.f32.mrb[0].mxu0
        %v3213 = vadd.f32 %v3068, %v3212
        %v3214 = vpop.f32.mrb[0].mxu0
        %3215 = vdwg.mxu0
        %3216 = vmatprep.subr.mxu0 0.0
        %3217 = vmatpush1.msra.mxu0 %v2153
        %3218 = vmatprep.subr.mxu0 0.0
        %3219 = vmatpush1.msra.mxu0 %v2154
        %3220 = vmatprep.subr.mxu0 0.0
        %3221 = vmatpush1.msra.mxu0 %v2155
        %3222 = vmatprep.subr.mxu0 0.0
        %3223 = vmatpush1.msra.mxu0 %v2156
        %3224 = vmatprep.subr.mxu0 0.0
        %3225 = vmatpush1.msra.mxu0 %v2157
        %3226 = vmatprep.subr.mxu0 0.0
        %3227 = vmatpush1.msra.mxu0 %v2158
        %3228 = vmatprep.subr.mxu0 0.0
        %3229 = vmatpush1.msra.mxu0 %v2159
        %3230 = vmatprep.subr.mxu0 0.0
        %3231 = vmatpush1.msra.mxu0 %v2160
        %3232 = vmatprep.subr.mxu0 0.0
        %3233 = vmatpush1.msra.mxu0 %v2161
        %3234 = vmatprep.subr.mxu0 0.0
        %3235 = vmatpush1.msra.mxu0 %v2162
        %3236 = vmatprep.subr.mxu0 0.0
        %3237 = vmatpush1.msra.mxu0 %v2163
        %3238 = vmatprep.subr.mxu0 0.0
        %3239 = vmatpush1.msra.mxu0 %v2164
        %3240 = vmatprep.subr.mxu0 0.0
        %3241 = vmatpush1.msra.mxu0 %v2165
        %3242 = vmatprep.subr.mxu0 0.0
        %3243 = vmatpush1.msra.mxu0 %v2166
        %3244 = vmatprep.subr.mxu0 0.0
        %3245 = vmatpush1.msra.mxu0 %v2167
        %3246 = vmatprep.subr.mxu0 0.0
        %3247 = vmatpush1.msra.mxu0 %v2168
        %3248 = vmatprep.subr.mxu0 0.0
        %3249 = vmatpush1.msra.mxu0 %v2169
        %3250 = vmatprep.subr.mxu0 0.0
        %3251 = vmatpush1.msra.mxu0 %v2170
        %3252 = vmatprep.subr.mxu0 0.0
        %3253 = vmatpush1.msra.mxu0 %v2171
        %3254 = vmatprep.subr.mxu0 0.0
        %3255 = vmatpush1.msra.mxu0 %v2172
        %3256 = vmatprep.subr.mxu0 0.0
        %3257 = vmatpush1.msra.mxu0 %v2173
        %3258 = vmatprep.subr.mxu0 0.0
        %3259 = vmatpush1.msra.mxu0 %v2174
        %3260 = vmatprep.subr.mxu0 0.0
        %3261 = vmatpush1.msra.mxu0 %v2175
        %3262 = vmatprep.subr.mxu0 0.0
        %3263 = vmatpush1.msra.mxu0 %v2176
        %3264 = vmatprep.subr.mxu0 0.0
        %3265 = vmatpush1.msra.mxu0 %v2177
        %3266 = vmatprep.subr.mxu0 0.0
        %3267 = vmatpush1.msra.mxu0 %v2178
        %3268 = vmatprep.subr.mxu0 0.0
        %3269 = vmatpush1.msra.mxu0 %v2179
        %3270 = vmatprep.subr.mxu0 0.0
        %3271 = vmatpush1.msra.mxu0 %v2180
        %3272 = vmatprep.subr.mxu0 0.0
        %3273 = vmatpush1.msra.mxu0 %v2181
        %3274 = vmatprep.subr.mxu0 0.0
        %3275 = vmatpush1.msra.mxu0 %v2182
        %3276 = vmatprep.subr.mxu0 0.0
        %3277 = vmatpush1.msra.mxu0 %v2183
        %3278 = vmatprep.subr.mxu0 0.0
        %3279 = vmatpush1.msra.mxu0 %v2184
        %3280 = vmatprep.mubr.f32.mxu0 %v1672
        %3281 = vmatmul.mubr.f32.gmra.mrb[0].mxu0 %v1671
        %v3282 = vpop.f32.mrb[0].mxu0
        %v3283 = vadd.f32 %v3138, %v3282
        %v3284 = vpop.f32.mrb[0].mxu0
        %3285 = vmatprep.mubr.f32.mxu0 %v1689
        %3286 = vmatmul.mubr.f32.gmra.mrb[0].mxu0 %v1688
        %v3287 = vpop.f32.mrb[0].mxu0
        %v3288 = vadd.f32 %v3143, %v3287
        %v3289 = vpop.f32.mrb[0].mxu0
        %3290 = vmatprep.mubr.f32.mxu0 %v1706
        %3291 = vmatmul.mubr.f32.gmra.mrb[0].mxu0 %v1705
        %v3292 = vpop.f32.mrb[0].mxu0
        %v3293 = vadd.f32 %v3148, %v3292
        %v3294 = vpop.f32.mrb[0].mxu0
        %3295 = vmatprep.mubr.f32.mxu0 %v1723
        %3296 = vmatmul.mubr.f32.gmra.mrb[0].mxu0 %v1722
        %v3297 = vpop.f32.mrb[0].mxu0
        %v3298 = vadd.f32 %v3153, %v3297
        %v3299 = vpop.f32.mrb[0].mxu0
        %3300 = vmatprep.mubr.f32.mxu0 %v1740
        %3301 = vmatmul.mubr.f32.gmra.mrb[0].mxu0 %v1739
        %v3302 = vpop.f32.mrb[0].mxu0
        %v3303 = vadd.f32 %v3158, %v3302
        %v3304 = vpop.f32.mrb[0].mxu0
        %3305 = vmatprep.mubr.f32.mxu0 %v1757
        %3306 = vmatmul.mubr.f32.gmra.mrb[0].mxu0 %v1756
        %v3307 = vpop.f32.mrb[0].mxu0
        %v3308 = vadd.f32 %v3163, %v3307
        %v3309 = vpop.f32.mrb[0].mxu0
        %3310 = vmatprep.mubr.f32.mxu0 %v1774
        %3311 = vmatmul.mubr.f32.gmra.mrb[0].mxu0 %v1773
        %v3312 = vpop.f32.mrb[0].mxu0
        %v3313 = vadd.f32 %v3168, %v3312
        %v3314 = vpop.f32.mrb[0].mxu0
        %3315 = vmatprep.mubr.f32.mxu0 %v1791
        %3316 = vmatmul.mubr.f32.gmra.mrb[0].mxu0 %v1790
        %v3317 = vpop.f32.mrb[0].mxu0
        %v3318 = vadd.f32 %v3173, %v3317
        %v3319 = vpop.f32.mrb[0].mxu0
        %3320 = vmatprep.mubr.f32.mxu0 %v1808
        %3321 = vmatmul.mubr.f32.gmra.mrb[0].mxu0 %v1807
        %v3322 = vpop.f32.mrb[0].mxu0
        %v3323 = vadd.f32 %v3178, %v3322
        %v3324 = vpop.f32.mrb[0].mxu0
        %3325 = vmatprep.mubr.f32.mxu0 %v1825
        %3326 = vmatmul.mubr.f32.gmra.mrb[0].mxu0 %v1824
        %v3327 = vpop.f32.mrb[0].mxu0
        %v3328 = vadd.f32 %v3183, %v3327
        %v3329 = vpop.f32.mrb[0].mxu0
        %3330 = vmatprep.mubr.f32.mxu0 %v1842
        %3331 = vmatmul.mubr.f32.gmra.mrb[0].mxu0 %v1841
        %v3332 = vpop.f32.mrb[0].mxu0
        %v3333 = vadd.f32 %v3188, %v3332
        %v3334 = vpop.f32.mrb[0].mxu0
        %3335 = vmatprep.mubr.f32.mxu0 %v1859
        %3336 = vmatmul.mubr.f32.gmra.mrb[0].mxu0 %v1858
        %v3337 = vpop.f32.mrb[0].mxu0
        %v3338 = vadd.f32 %v3193, %v3337
        %v3339 = vpop.f32.mrb[0].mxu0
        %3340 = vmatprep.mubr.f32.mxu0 %v1876
        %3341 = vmatmul.mubr.f32.gmra.mrb[0].mxu0 %v1875
        %v3342 = vpop.f32.mrb[0].mxu0
        %v3343 = vadd.f32 %v3198, %v3342
        %v3344 = vpop.f32.mrb[0].mxu0
        %3345 = vmatprep.mubr.f32.mxu0 %v1893
        %3346 = vmatmul.mubr.f32.gmra.mrb[0].mxu0 %v1892
        %v3347 = vpop.f32.mrb[0].mxu0
        %v3348 = vadd.f32 %v3203, %v3347
        %v3349 = vpop.f32.mrb[0].mxu0
        %3350 = vmatprep.mubr.f32.mxu0 %v1910
        %3351 = vmatmul.mubr.f32.gmra.mrb[0].mxu0 %v1909
        %v3352 = vpop.f32.mrb[0].mxu0
        %v3353 = vadd.f32 %v3208, %v3352
        %v3354 = vpop.f32.mrb[0].mxu0
        %3355 = vmatprep.mubr.f32.mxu0 %v1927
        %3356 = vmatmul.mubr.f32.gmra.mrb[0].mxu0 %v1926
        %v3357 = vpop.f32.mrb[0].mxu0
        %v3358 = vadd.f32 %v3213, %v3357
        %v3359 = vpop.f32.mrb[0].mxu0
        %3360 = vdwg.mxu0
        %3361 = vmatprep.subr.mxu0 0.0
        %3362 = vmatpush1.msra.mxu0 %v2185
        %3363 = vmatprep.subr.mxu0 0.0
        %3364 = vmatpush1.msra.mxu0 %v2186
        %3365 = vmatprep.subr.mxu0 0.0
        %3366 = vmatpush1.msra.mxu0 %v2187
        %3367 = vmatprep.subr.mxu0 0.0
        %3368 = vmatpush1.msra.mxu0 %v2188
        %3369 = vmatprep.subr.mxu0 0.0
        %3370 = vmatpush1.msra.mxu0 %v2189
        %3371 = vmatprep.subr.mxu0 0.0
        %3372 = vmatpush1.msra.mxu0 %v2190
        %3373 = vmatprep.subr.mxu0 0.0
        %3374 = vmatpush1.msra.mxu0 %v2191
        %3375 = vmatprep.subr.mxu0 0.0
        %3376 = vmatpush1.msra.mxu0 %v2192
        %3377 = vmatprep.subr.mxu0 0.0
        %3378 = vmatpush1.msra.mxu0 %v2193
        %3379 = vmatprep.subr.mxu0 0.0
        %3380 = vmatpush1.msra.mxu0 %v2194
        %3381 = vmatprep.subr.mxu0 0.0
        %3382 = vmatpush1.msra.mxu0 %v2195
        %3383 = vmatprep.subr.mxu0 0.0
        %3384 = vmatpush1.msra.mxu0 %v2196
        %3385 = vmatprep.subr.mxu0 0.0
        %3386 = vmatpush1.msra.mxu0 %v2197
        %3387 = vmatprep.subr.mxu0 0.0
        %3388 = vmatpush1.msra.mxu0 %v2198
        %3389 = vmatprep.subr.mxu0 0.0
        %3390 = vmatpush1.msra.mxu0 %v2199
        %3391 = vmatprep.subr.mxu0 0.0
        %3392 = vmatpush1.msra.mxu0 %v2200
        %3393 = vmatprep.subr.mxu0 0.0
        %3394 = vmatpush1.msra.mxu0 0.0
        %3395 = vmatprep.subr.mxu0 0.0
        %3396 = vmatpush1.msra.mxu0 0.0
        %3397 = vmatprep.subr.mxu0 0.0
        %3398 = vmatpush1.msra.mxu0 0.0
        %3399 = vmatprep.subr.mxu0 0.0
        %3400 = vmatpush1.msra.mxu0 0.0
        %3401 = vmatprep.subr.mxu0 0.0
        %3402 = vmatpush1.msra.mxu0 0.0
        %3403 = vmatprep.subr.mxu0 0.0
        %3404 = vmatpush1.msra.mxu0 0.0
        %3405 = vmatprep.subr.mxu0 0.0
        %3406 = vmatpush1.msra.mxu0 0.0
        %3407 = vmatprep.subr.mxu0 0.0
        %3408 = vmatpush1.msra.mxu0 0.0
        %3409 = vmatprep.subr.mxu0 0.0
        %3410 = vmatpush1.msra.mxu0 0.0
        %3411 = vmatprep.subr.mxu0 0.0
        %3412 = vmatpush1.msra.mxu0 0.0
        %3413 = vmatprep.subr.mxu0 0.0
        %3414 = vmatpush1.msra.mxu0 0.0
        %3415 = vmatprep.subr.mxu0 0.0
        %3416 = vmatpush1.msra.mxu0 0.0
        %3417 = vmatprep.subr.mxu0 0.0
        %3418 = vmatpush1.msra.mxu0 0.0
        %3419 = vmatprep.subr.mxu0 0.0
        %3420 = vmatpush1.msra.mxu0 0.0
        %3421 = vmatprep.subr.mxu0 0.0
        %3422 = vmatpush1.msra.mxu0 0.0
        %3423 = vmatprep.subr.mxu0 0.0
        %3424 = vmatpush1.msra.mxu0 0.0
        %3425 = vmatprep.mubr.f32.mxu0 0.0
        %3426 = vmatmul.mubr.f32.gmra.mrb[0].mxu0 %v1673
        %v3427 = vpop.f32.mrb[0].mxu0
        %v3428 = vadd.f32 %v3283, %v3427
        %v3429 = vpop.f32.mrb[0].mxu0
        %3430 = vmatprep.mubr.f32.mxu0 0.0
        %3431 = vmatmul.mubr.f32.gmra.mrb[0].mxu0 %v1690
        %v3432 = vpop.f32.mrb[0].mxu0
        %v3433 = vadd.f32 %v3288, %v3432
        %v3434 = vpop.f32.mrb[0].mxu0
        %3435 = vmatprep.mubr.f32.mxu0 0.0
        %3436 = vmatmul.mubr.f32.gmra.mrb[0].mxu0 %v1707
        %v3437 = vpop.f32.mrb[0].mxu0
        %v3438 = vadd.f32 %v3293, %v3437
        %v3439 = vpop.f32.mrb[0].mxu0
        %3440 = vmatprep.mubr.f32.mxu0 0.0
        %3441 = vmatmul.mubr.f32.gmra.mrb[0].mxu0 %v1724
        %v3442 = vpop.f32.mrb[0].mxu0
        %v3443 = vadd.f32 %v3298, %v3442
        %v3444 = vpop.f32.mrb[0].mxu0
        %3445 = vmatprep.mubr.f32.mxu0 0.0
        %3446 = vmatmul.mubr.f32.gmra.mrb[0].mxu0 %v1741
        %v3447 = vpop.f32.mrb[0].mxu0
        %v3448 = vadd.f32 %v3303, %v3447
        %v3449 = vpop.f32.mrb[0].mxu0
        %3450 = vmatprep.mubr.f32.mxu0 0.0
        %3451 = vmatmul.mubr.f32.gmra.mrb[0].mxu0 %v1758
        %v3452 = vpop.f32.mrb[0].mxu0
        %v3453 = vadd.f32 %v3308, %v3452
        %v3454 = vpop.f32.mrb[0].mxu0
        %3455 = vmatprep.mubr.f32.mxu0 0.0
        %3456 = vmatmul.mubr.f32.gmra.mrb[0].mxu0 %v1775
        %v3457 = vpop.f32.mrb[0].mxu0
        %v3458 = vadd.f32 %v3313, %v3457
        %v3459 = vpop.f32.mrb[0].mxu0
        %3460 = vmatprep.mubr.f32.mxu0 0.0
        %3461 = vmatmul.mubr.f32.gmra.mrb[0].mxu0 %v1792
        %v3462 = vpop.f32.mrb[0].mxu0
        %v3463 = vadd.f32 %v3318, %v3462
        %v3464 = vpop.f32.mrb[0].mxu0
        %3465 = vmatprep.mubr.f32.mxu0 0.0
        %3466 = vmatmul.mubr.f32.gmra.mrb[0].mxu0 %v1809
        %v3467 = vpop.f32.mrb[0].mxu0
        %v3468 = vadd.f32 %v3323, %v3467
        %v3469 = vpop.f32.mrb[0].mxu0
        %3470 = vmatprep.mubr.f32.mxu0 0.0
        %3471 = vmatmul.mubr.f32.gmra.mrb[0].mxu0 %v1826
        %v3472 = vpop.f32.mrb[0].mxu0
        %v3473 = vadd.f32 %v3328, %v3472
        %v3474 = vpop.f32.mrb[0].mxu0
        %3475 = vmatprep.mubr.f32.mxu0 0.0
        %3476 = vmatmul.mubr.f32.gmra.mrb[0].mxu0 %v1843
        %v3477 = vpop.f32.mrb[0].mxu0
        %v3478 = vadd.f32 %v3333, %v3477
        %v3479 = vpop.f32.mrb[0].mxu0
        %3480 = vmatprep.mubr.f32.mxu0 0.0
        %3481 = vmatmul.mubr.f32.gmra.mrb[0].mxu0 %v1860
        %v3482 = vpop.f32.mrb[0].mxu0
        %v3483 = vadd.f32 %v3338, %v3482
        %v3484 = vpop.f32.mrb[0].mxu0
        %3485 = vmatprep.mubr.f32.mxu0 0.0
        %3486 = vmatmul.mubr.f32.gmra.mrb[0].mxu0 %v1877
        %v3487 = vpop.f32.mrb[0].mxu0
        %v3488 = vadd.f32 %v3343, %v3487
        %v3489 = vpop.f32.mrb[0].mxu0
        %3490 = vmatprep.mubr.f32.mxu0 0.0
        %3491 = vmatmul.mubr.f32.gmra.mrb[0].mxu0 %v1894
        %v3492 = vpop.f32.mrb[0].mxu0
        %v3493 = vadd.f32 %v3348, %v3492
        %v3494 = vpop.f32.mrb[0].mxu0
        %3495 = vmatprep.mubr.f32.mxu0 0.0
        %3496 = vmatmul.mubr.f32.gmra.mrb[0].mxu0 %v1911
        %v3497 = vpop.f32.mrb[0].mxu0
        %v3498 = vadd.f32 %v3353, %v3497
        %v3499 = vpop.f32.mrb[0].mxu0
        %3500 = vmatprep.mubr.f32.mxu0 0.0
        %3501 = vmatmul.mubr.f32.gmra.mrb[0].mxu0 %v1928
        %v3502 = vpop.f32.mrb[0].mxu0
        %v3503 = vadd.f32 %v3358, %v3502
        %v3504 = vpop.f32.mrb[0].mxu0
        %3505 = vdwg.mxu0
        %v3506 = vld [vmem:[#allocation17] sm:$0x1]
        %v3508 = vlaneseq
        %v3509 = vshrl.u32 %v3508, 7
        %v3510 = vsub.s32 0, %v3509
        %v3511 = vrot.slane %v3506, %v3510
        %v3513 = vmul.f32 %v3428, %v3511
        %v3514 = vmul.f32 %v3433, %v3511
        %v3515 = vmul.f32 %v3438, %v3511
        %v3516 = vmul.f32 %v3443, %v3511
        %v3517 = vmul.f32 %v3448, %v3511
        %v3518 = vmul.f32 %v3453, %v3511
        %v3519 = vmul.f32 %v3458, %v3511
        %v3520 = vmul.f32 %v3463, %v3511
        %v3521 = vmul.f32 %v3468, %v3511
        %v3522 = vmul.f32 %v3473, %v3511
        %v3523 = vmul.f32 %v3478, %v3511
        %v3524 = vmul.f32 %v3483, %v3511
        %v3525 = vmul.f32 %v3488, %v3511
        %v3526 = vmul.f32 %v3493, %v3511
        %v3527 = vmul.f32 %v3498, %v3511
        %v3528 = vmul.f32 %v3503, %v3511
        %v3529 = vld [vmem:[#allocation19] sm:$0x1]
        %v3531 = vlaneseq
        %v3532 = vshrl.u32 %v3531, 7
        %v3533 = vsub.s32 0, %v3532
        %v3534 = vrot.slane %v3529, %v3533
        %v3536 = vadd.f32 %v3513, %v3534
        %v3537 = vadd.f32 %v3514, %v3534
        %v3538 = vadd.f32 %v3515, %v3534
        %v3539 = vadd.f32 %v3516, %v3534
        %v3540 = vadd.f32 %v3517, %v3534
        %v3541 = vadd.f32 %v3518, %v3534
        %v3542 = vadd.f32 %v3519, %v3534
        %v3543 = vadd.f32 %v3520, %v3534
        %v3544 = vadd.f32 %v3521, %v3534
        %v3545 = vadd.f32 %v3522, %v3534
        %v3546 = vadd.f32 %v3523, %v3534
        %v3547 = vadd.f32 %v3524, %v3534
        %v3548 = vadd.f32 %v3525, %v3534
        %v3549 = vadd.f32 %v3526, %v3534
        %v3550 = vadd.f32 %v3527, %v3534
        %v3551 = vadd.f32 %v3528, %v3534
        %v3552 = vadd.f32 %v3536, %v780
        %v3553 = vadd.f32 %v3537, %v785
        %v3554 = vadd.f32 %v3538, %v790
        %v3555 = vadd.f32 %v3539, %v795
        %v3556 = vadd.f32 %v3540, %v800
        %v3557 = vadd.f32 %v3541, %v805
        %v3558 = vadd.f32 %v3542, %v810
        %v3559 = vadd.f32 %v3543, %v815
        %v3560 = vadd.f32 %v3544, %v820
        %v3561 = vadd.f32 %v3545, %v825
        %v3562 = vadd.f32 %v3546, %v830
        %v3563 = vadd.f32 %v3547, %v835
        %v3564 = vadd.f32 %v3548, %v840
        %v3565 = vadd.f32 %v3549, %v845
        %v3566 = vadd.f32 %v3550, %v850
        %v3567 = vadd.f32 %v3551, %v855
        %v3568 = vmax.f32 %v3552, 0.0
        %v3569 = vmax.f32 %v3553, 0.0
        %v3570 = vmax.f32 %v3554, 0.0
        %v3571 = vmax.f32 %v3555, 0.0
        %v3572 = vmax.f32 %v3556, 0.0
        %v3573 = vmax.f32 %v3557, 0.0
        %v3574 = vmax.f32 %v3558, 0.0
        %v3575 = vmax.f32 %v3559, 0.0
        %v3576 = vmax.f32 %v3560, 0.0
        %v3577 = vmax.f32 %v3561, 0.0
        %v3578 = vmax.f32 %v3562, 0.0
        %v3579 = vmax.f32 %v3563, 0.0
        %v3580 = vmax.f32 %v3564, 0.0
        %v3581 = vmax.f32 %v3565, 0.0
        %v3582 = vmax.f32 %v3566, 0.0
        %v3583 = vmax.f32 %v3567, 0.0
        %s3584 = scalar_lea.vmem [#allocation11], 128
        %v3585 = vld [vmem:[%s3584] sm:$0xff]
        %v3586 = vld [vmem:[%s3584 + $0x8] sm:$0xff]
        %v3587 = vld [vmem:[%s3584 + $0x10] sm:$0xff]
        %v3588 = vld [vmem:[%s3584 + $0x18] sm:$0xff]
        %v3589 = vld [vmem:[%s3584 + $0x20] sm:$0xff]
        %v3590 = vld [vmem:[%s3584 + $0x28] sm:$0xff]
        %v3591 = vld [vmem:[%s3584 + $0x30] sm:$0xff]
        %v3592 = vld [vmem:[%s3584 + $0x38] sm:$0xff]
        %v3593 = vld [vmem:[%s3584 + $0x40] sm:$0xff]
        %v3594 = vld [vmem:[%s3584 + $0x48] sm:$0xff]
        %v3595 = vld [vmem:[%s3584 + $0x50] sm:$0xff]
        %v3596 = vld [vmem:[%s3584 + $0x58] sm:$0xff]
        %v3597 = vld [vmem:[%s3584 + $0x60] sm:$0xff]
        %v3598 = vld [vmem:[%s3584 + $0x68] sm:$0xff]
        %v3599 = vld [vmem:[%s3584 + $0x70] sm:$0xff]
        %v3600 = vld [vmem:[%s3584 + $0x78] sm:$0xff]
        %3601 = vmatprep.subr.mxu0 0.0
        %3602 = vmatpush1.msra.mxu0 %v3585
        %3603 = vmatprep.subr.mxu0 0.0
        %3604 = vmatpush1.msra.mxu0 %v3586
        %3605 = vmatprep.subr.mxu0 0.0
        %3606 = vmatpush1.msra.mxu0 %v3587
        %3607 = vmatprep.subr.mxu0 0.0
        %3608 = vmatpush1.msra.mxu0 %v3588
        %3609 = vmatprep.subr.mxu0 0.0
        %3610 = vmatpush1.msra.mxu0 %v3589
        %3611 = vmatprep.subr.mxu0 0.0
        %3612 = vmatpush1.msra.mxu0 %v3590
        %3613 = vmatprep.subr.mxu0 0.0
        %3614 = vmatpush1.msra.mxu0 %v3591
        %3615 = vmatprep.subr.mxu0 0.0
        %3616 = vmatpush1.msra.mxu0 %v3592
        %3617 = vmatprep.subr.mxu0 0.0
        %3618 = vmatpush1.msra.mxu0 %v3593
        %3619 = vmatprep.subr.mxu0 0.0
        %3620 = vmatpush1.msra.mxu0 %v3594
        %3621 = vmatprep.subr.mxu0 0.0
        %3622 = vmatpush1.msra.mxu0 %v3595
        %3623 = vmatprep.subr.mxu0 0.0
        %3624 = vmatpush1.msra.mxu0 %v3596
        %3625 = vmatprep.subr.mxu0 0.0
        %3626 = vmatpush1.msra.mxu0 %v3597
        %3627 = vmatprep.subr.mxu0 0.0
        %3628 = vmatpush1.msra.mxu0 %v3598
        %3629 = vmatprep.subr.mxu0 0.0
        %3630 = vmatpush1.msra.mxu0 %v3599
        %3631 = vmatprep.subr.mxu0 0.0
        %3632 = vmatpush1.msra.mxu0 %v3600
        %3633 = vmatprep.subr.mxu0 0.0
        %3634 = vmatpush1.msra.mxu0 0.0
        %3635 = vmatprep.subr.mxu0 0.0
        %3636 = vmatpush1.msra.mxu0 0.0
        %3637 = vmatprep.subr.mxu0 0.0
        %3638 = vmatpush1.msra.mxu0 0.0
        %3639 = vmatprep.subr.mxu0 0.0
        %3640 = vmatpush1.msra.mxu0 0.0
        %3641 = vmatprep.subr.mxu0 0.0
        %3642 = vmatpush1.msra.mxu0 0.0
        %3643 = vmatprep.subr.mxu0 0.0
        %3644 = vmatpush1.msra.mxu0 0.0
        %3645 = vmatprep.subr.mxu0 0.0
        %3646 = vmatpush1.msra.mxu0 0.0
        %3647 = vmatprep.subr.mxu0 0.0
        %3648 = vmatpush1.msra.mxu0 0.0
        %3649 = vmatprep.subr.mxu0 0.0
        %3650 = vmatpush1.msra.mxu0 0.0
        %3651 = vmatprep.subr.mxu0 0.0
        %3652 = vmatpush1.msra.mxu0 0.0
        %3653 = vmatprep.subr.mxu0 0.0
        %3654 = vmatpush1.msra.mxu0 0.0
        %3655 = vmatprep.subr.mxu0 0.0
        %3656 = vmatpush1.msra.mxu0 0.0
        %3657 = vmatprep.subr.mxu0 0.0
        %3658 = vmatpush1.msra.mxu0 0.0
        %3659 = vmatprep.subr.mxu0 0.0
        %3660 = vmatpush1.msra.mxu0 0.0
        %3661 = vmatprep.subr.mxu0 0.0
        %3662 = vmatpush1.msra.mxu0 0.0
        %3663 = vmatprep.subr.mxu0 0.0
        %3664 = vmatpush1.msra.mxu0 0.0
        %3665 = vmatprep.mubr.f32.mxu0 0.0
        %3666 = vmatmul.mubr.f32.gmra.mrb[0].mxu0 %v3568
        %v3667 = vpop.f32.mrb[0].mxu0
        %v3668 = vadd.f32 0.0, %v3667
        %v3669 = vpop.f32.mrb[0].mxu0
        %3670 = vmatprep.mubr.f32.mxu0 0.0
        %3671 = vmatmul.mubr.f32.gmra.mrb[0].mxu0 %v3569
        %v3672 = vpop.f32.mrb[0].mxu0
        %v3673 = vadd.f32 0.0, %v3672
        %v3674 = vpop.f32.mrb[0].mxu0
        %3675 = vmatprep.mubr.f32.mxu0 0.0
        %3676 = vmatmul.mubr.f32.gmra.mrb[0].mxu0 %v3570
        %v3677 = vpop.f32.mrb[0].mxu0
        %v3678 = vadd.f32 0.0, %v3677
        %v3679 = vpop.f32.mrb[0].mxu0
        %3680 = vmatprep.mubr.f32.mxu0 0.0
        %3681 = vmatmul.mubr.f32.gmra.mrb[0].mxu0 %v3571
        %v3682 = vpop.f32.mrb[0].mxu0
        %v3683 = vadd.f32 0.0, %v3682
        %v3684 = vpop.f32.mrb[0].mxu0
        %3685 = vmatprep.mubr.f32.mxu0 0.0
        %3686 = vmatmul.mubr.f32.gmra.mrb[0].mxu0 %v3572
        %v3687 = vpop.f32.mrb[0].mxu0
        %v3688 = vadd.f32 0.0, %v3687
        %v3689 = vpop.f32.mrb[0].mxu0
        %3690 = vmatprep.mubr.f32.mxu0 0.0
        %3691 = vmatmul.mubr.f32.gmra.mrb[0].mxu0 %v3573
        %v3692 = vpop.f32.mrb[0].mxu0
        %v3693 = vadd.f32 0.0, %v3692
        %v3694 = vpop.f32.mrb[0].mxu0
        %3695 = vmatprep.mubr.f32.mxu0 0.0
        %3696 = vmatmul.mubr.f32.gmra.mrb[0].mxu0 %v3574
        %v3697 = vpop.f32.mrb[0].mxu0
        %v3698 = vadd.f32 0.0, %v3697
        %v3699 = vpop.f32.mrb[0].mxu0
        %3700 = vmatprep.mubr.f32.mxu0 0.0
        %3701 = vmatmul.mubr.f32.gmra.mrb[0].mxu0 %v3575
        %v3702 = vpop.f32.mrb[0].mxu0
        %v3703 = vadd.f32 0.0, %v3702
        %v3704 = vpop.f32.mrb[0].mxu0
        %3705 = vmatprep.mubr.f32.mxu0 0.0
        %3706 = vmatmul.mubr.f32.gmra.mrb[0].mxu0 %v3576
        %v3707 = vpop.f32.mrb[0].mxu0
        %v3708 = vadd.f32 0.0, %v3707
        %v3709 = vpop.f32.mrb[0].mxu0
        %3710 = vmatprep.mubr.f32.mxu0 0.0
        %3711 = vmatmul.mubr.f32.gmra.mrb[0].mxu0 %v3577
        %v3712 = vpop.f32.mrb[0].mxu0
        %v3713 = vadd.f32 0.0, %v3712
        %v3714 = vpop.f32.mrb[0].mxu0
        %3715 = vmatprep.mubr.f32.mxu0 0.0
        %3716 = vmatmul.mubr.f32.gmra.mrb[0].mxu0 %v3578
        %v3717 = vpop.f32.mrb[0].mxu0
        %v3718 = vadd.f32 0.0, %v3717
        %v3719 = vpop.f32.mrb[0].mxu0
        %3720 = vmatprep.mubr.f32.mxu0 0.0
        %3721 = vmatmul.mubr.f32.gmra.mrb[0].mxu0 %v3579
        %v3722 = vpop.f32.mrb[0].mxu0
        %v3723 = vadd.f32 0.0, %v3722
        %v3724 = vpop.f32.mrb[0].mxu0
        %3725 = vmatprep.mubr.f32.mxu0 0.0
        %3726 = vmatmul.mubr.f32.gmra.mrb[0].mxu0 %v3580
        %v3727 = vpop.f32.mrb[0].mxu0
        %v3728 = vadd.f32 0.0, %v3727
        %v3729 = vpop.f32.mrb[0].mxu0
        %3730 = vmatprep.mubr.f32.mxu0 0.0
        %3731 = vmatmul.mubr.f32.gmra.mrb[0].mxu0 %v3581
        %v3732 = vpop.f32.mrb[0].mxu0
        %v3733 = vadd.f32 0.0, %v3732
        %v3734 = vpop.f32.mrb[0].mxu0
        %3735 = vmatprep.mubr.f32.mxu0 0.0
        %3736 = vmatmul.mubr.f32.gmra.mrb[0].mxu0 %v3582
        %v3737 = vpop.f32.mrb[0].mxu0
        %v3738 = vadd.f32 0.0, %v3737
        %v3739 = vpop.f32.mrb[0].mxu0
        %3740 = vmatprep.mubr.f32.mxu0 0.0
        %3741 = vmatmul.mubr.f32.gmra.mrb[0].mxu0 %v3583
        %v3742 = vpop.f32.mrb[0].mxu0
        %v3743 = vadd.f32 0.0, %v3742
        %v3744 = vpop.f32.mrb[0].mxu0
        %3745 = vdwg.mxu0
        %s3746 = scalar_lea.vmem [#allocation13], 1
        %v3747 = vld [vmem:[%s3746] sm:$0x1]
        %v3749 = vlaneseq
        %v3750 = vshrl.u32 %v3749, 7
        %v3751 = vsub.s32 0, %v3750
        %v3752 = vrot.slane %v3747, %v3751
        %v3754 = vmul.f32 %v3668, %v3752
        %v3755 = vmul.f32 %v3673, %v3752
        %v3756 = vmul.f32 %v3678, %v3752
        %v3757 = vmul.f32 %v3683, %v3752
        %v3758 = vmul.f32 %v3688, %v3752
        %v3759 = vmul.f32 %v3693, %v3752
        %v3760 = vmul.f32 %v3698, %v3752
        %v3761 = vmul.f32 %v3703, %v3752
        %v3762 = vmul.f32 %v3708, %v3752
        %v3763 = vmul.f32 %v3713, %v3752
        %v3764 = vmul.f32 %v3718, %v3752
        %v3765 = vmul.f32 %v3723, %v3752
        %v3766 = vmul.f32 %v3728, %v3752
        %v3767 = vmul.f32 %v3733, %v3752
        %v3768 = vmul.f32 %v3738, %v3752
        %v3769 = vmul.f32 %v3743, %v3752
        %s3770 = scalar_lea.vmem [#allocation14], 1
        %v3771 = vld [vmem:[%s3770] sm:$0x1]
        %v3773 = vlaneseq
        %v3774 = vshrl.u32 %v3773, 7
        %v3775 = vsub.s32 0, %v3774
        %v3776 = vrot.slane %v3771, %v3775
        %v3778 = vadd.f32 %v3754, %v3776
        %v3779 = vadd.f32 %v3755, %v3776
        %v3780 = vadd.f32 %v3756, %v3776
        %v3781 = vadd.f32 %v3757, %v3776
        %v3782 = vadd.f32 %v3758, %v3776
        %v3783 = vadd.f32 %v3759, %v3776
        %v3784 = vadd.f32 %v3760, %v3776
        %v3785 = vadd.f32 %v3761, %v3776
        %v3786 = vadd.f32 %v3762, %v3776
        %v3787 = vadd.f32 %v3763, %v3776
        %v3788 = vadd.f32 %v3764, %v3776
        %v3789 = vadd.f32 %v3765, %v3776
        %v3790 = vadd.f32 %v3766, %v3776
        %v3791 = vadd.f32 %v3767, %v3776
        %v3792 = vadd.f32 %v3768, %v3776
        %v3793 = vadd.f32 %v3769, %v3776
        %v3794 = vmax.f32 %v3778, 0.0
        %v3795 = vmax.f32 %v3779, 0.0
        %v3796 = vmax.f32 %v3780, 0.0
        %v3797 = vmax.f32 %v3781, 0.0
        %v3798 = vmax.f32 %v3782, 0.0
        %v3799 = vmax.f32 %v3783, 0.0
        %v3800 = vmax.f32 %v3784, 0.0
        %v3801 = vmax.f32 %v3785, 0.0
        %v3802 = vmax.f32 %v3786, 0.0
        %v3803 = vmax.f32 %v3787, 0.0
        %v3804 = vmax.f32 %v3788, 0.0
        %v3805 = vmax.f32 %v3789, 0.0
        %v3806 = vmax.f32 %v3790, 0.0
        %v3807 = vmax.f32 %v3791, 0.0
        %v3808 = vmax.f32 %v3792, 0.0
        %v3809 = vmax.f32 %v3793, 0.0
        %3810 = vst [vmem:[%s1081] sm:$0xff] %v3794
        %3811 = vst [vmem:[%s1081 + $0x8] sm:$0xff] %v3795
        %3812 = vst [vmem:[%s1081 + $0x10] sm:$0xff] %v3796
        %3813 = vst [vmem:[%s1081 + $0x18] sm:$0xff] %v3797
        %3814 = vst [vmem:[%s1081 + $0x20] sm:$0xff] %v3798
        %3815 = vst [vmem:[%s1081 + $0x28] sm:$0xff] %v3799
        %3816 = vst [vmem:[%s1081 + $0x30] sm:$0xff] %v3800
        %3817 = vst [vmem:[%s1081 + $0x38] sm:$0xff] %v3801
        %3818 = vst [vmem:[%s1081 + $0x40] sm:$0xff] %v3802
        %3819 = vst [vmem:[%s1081 + $0x48] sm:$0xff] %v3803
        %3820 = vst [vmem:[%s1081 + $0x50] sm:$0xff] %v3804
        %3821 = vst [vmem:[%s1081 + $0x58] sm:$0xff] %v3805
        %3822 = vst [vmem:[%s1081 + $0x60] sm:$0xff] %v3806
        %3823 = vst [vmem:[%s1081 + $0x68] sm:$0xff] %v3807
        %3824 = vst [vmem:[%s1081 + $0x70] sm:$0xff] %v3808
        %3825 = vst [vmem:[%s1081 + $0x78] sm:$0xff] %v3809
        %v3826 = vld [vmem:[#allocation2] sm:$0xff]
        %v3827 = vld [vmem:[#allocation2 + $0x8] sm:$0xff]
        %v3828 = vld [vmem:[#allocation2 + $0x10] sm:$0xff]
        %v3829 = vld [vmem:[#allocation2 + $0x18] sm:$0xff]
        %v3830 = vld [vmem:[#allocation2 + $0x20] sm:$0xff]
        %v3831 = vld [vmem:[#allocation2 + $0x28] sm:$0xff]
        %v3832 = vld [vmem:[#allocation2 + $0x30] sm:$0xff]
        %v3833 = vld [vmem:[#allocation2 + $0x38] sm:$0xff]
        %v3834 = vld [vmem:[#allocation2 + $0x40] sm:$0xff]
        %v3835 = vld [vmem:[#allocation2 + $0x48] sm:$0xff]
        %v3836 = vld [vmem:[#allocation2 + $0x50] sm:$0xff]
        %v3837 = vld [vmem:[#allocation2 + $0x58] sm:$0xff]
        %v3838 = vld [vmem:[#allocation2 + $0x60] sm:$0xff]
        %v3839 = vld [vmem:[#allocation2 + $0x68] sm:$0xff]
        %v3840 = vld [vmem:[#allocation2 + $0x70] sm:$0xff]
        %v3841 = vld [vmem:[#allocation2 + $0x78] sm:$0xff]
        %3842 = vst [vmem:[#allocation3] sm:$0xff] %v3826
        %3843 = vst [vmem:[#allocation3 + $0x88] sm:$0xff] %v3827
        %3844 = vst [vmem:[#allocation3 + $0x110] sm:$0xff] %v3828
        %3845 = vst [vmem:[#allocation3 + $0x198] sm:$0xff] %v3829
        %3846 = vst [vmem:[#allocation3 + $0x220] sm:$0xff] %v3830
        %3847 = vst [vmem:[#allocation3 + $0x2a8] sm:$0xff] %v3831
        %3848 = vst [vmem:[#allocation3 + $0x330] sm:$0xff] %v3832
        %3849 = vst [vmem:[#allocation3 + $0x3b8] sm:$0xff] %v3833
        %3850 = vst [vmem:[#allocation3 + $0x440] sm:$0xff] %v3834
        %3851 = vst [vmem:[#allocation3 + $0x4c8] sm:$0xff] %v3835
        %3852 = vst [vmem:[#allocation3 + $0x550] sm:$0xff] %v3836
        %3853 = vst [vmem:[#allocation3 + $0x5d8] sm:$0xff] %v3837
        %3854 = vst [vmem:[#allocation3 + $0x660] sm:$0xff] %v3838
        %3855 = vst [vmem:[#allocation3 + $0x6e8] sm:$0xff] %v3839
        %3856 = vst [vmem:[#allocation3 + $0x770] sm:$0xff] %v3840
        %3857 = vst [vmem:[#allocation3 + $0x7f8] sm:$0xff] %v3841
        %v3858 = vld [vmem:[%s1130] sm:$0xff]
        %v3859 = vld [vmem:[%s1130 + $0x8] sm:$0xff]
        %v3860 = vld [vmem:[%s1130 + $0x10] sm:$0xff]
        %v3861 = vld [vmem:[%s1130 + $0x18] sm:$0xff]
        %v3862 = vld [vmem:[%s1130 + $0x20] sm:$0xff]
        %v3863 = vld [vmem:[%s1130 + $0x28] sm:$0xff]
        %v3864 = vld [vmem:[%s1130 + $0x30] sm:$0xff]
        %v3865 = vld [vmem:[%s1130 + $0x38] sm:$0xff]
        %v3866 = vld [vmem:[%s1130 + $0x40] sm:$0xff]
        %v3867 = vld [vmem:[%s1130 + $0x48] sm:$0xff]
        %v3868 = vld [vmem:[%s1130 + $0x50] sm:$0xff]
        %v3869 = vld [vmem:[%s1130 + $0x58] sm:$0xff]
        %v3870 = vld [vmem:[%s1130 + $0x60] sm:$0xff]
        %v3871 = vld [vmem:[%s1130 + $0x68] sm:$0xff]
        %v3872 = vld [vmem:[%s1130 + $0x70] sm:$0xff]
        %v3873 = vld [vmem:[%s1130 + $0x78] sm:$0xff]
        %3874 = vst [vmem:[#allocation3 + $0x8] sm:$0xff] %v3858
        %3875 = vst [vmem:[#allocation3 + $0x90] sm:$0xff] %v3859
        %3876 = vst [vmem:[#allocation3 + $0x118] sm:$0xff] %v3860
        %3877 = vst [vmem:[#allocation3 + $0x1a0] sm:$0xff] %v3861
        %3878 = vst [vmem:[#allocation3 + $0x228] sm:$0xff] %v3862
        %3879 = vst [vmem:[#allocation3 + $0x2b0] sm:$0xff] %v3863
        %3880 = vst [vmem:[#allocation3 + $0x338] sm:$0xff] %v3864
        %3881 = vst [vmem:[#allocation3 + $0x3c0] sm:$0xff] %v3865
        %3882 = vst [vmem:[#allocation3 + $0x448] sm:$0xff] %v3866
        %3883 = vst [vmem:[#allocation3 + $0x4d0] sm:$0xff] %v3867
        %3884 = vst [vmem:[#allocation3 + $0x558] sm:$0xff] %v3868
        %3885 = vst [vmem:[#allocation3 + $0x5e0] sm:$0xff] %v3869
        %3886 = vst [vmem:[#allocation3 + $0x668] sm:$0xff] %v3870
        %3887 = vst [vmem:[#allocation3 + $0x6f0] sm:$0xff] %v3871
        %3888 = vst [vmem:[#allocation3 + $0x778] sm:$0xff] %v3872
        %3889 = vst [vmem:[#allocation3 + $0x800] sm:$0xff] %v3873
        %v3890 = vld [vmem:[%s1163] sm:$0xff]
        %v3891 = vld [vmem:[%s1163 + $0x8] sm:$0xff]
        %v3892 = vld [vmem:[%s1163 + $0x10] sm:$0xff]
        %v3893 = vld [vmem:[%s1163 + $0x18] sm:$0xff]
        %v3894 = vld [vmem:[%s1163 + $0x20] sm:$0xff]
        %v3895 = vld [vmem:[%s1163 + $0x28] sm:$0xff]
        %v3896 = vld [vmem:[%s1163 + $0x30] sm:$0xff]
        %v3897 = vld [vmem:[%s1163 + $0x38] sm:$0xff]
        %v3898 = vld [vmem:[%s1163 + $0x40] sm:$0xff]
        %v3899 = vld [vmem:[%s1163 + $0x48] sm:$0xff]
        %v3900 = vld [vmem:[%s1163 + $0x50] sm:$0xff]
        %v3901 = vld [vmem:[%s1163 + $0x58] sm:$0xff]
        %v3902 = vld [vmem:[%s1163 + $0x60] sm:$0xff]
        %v3903 = vld [vmem:[%s1163 + $0x68] sm:$0xff]
        %v3904 = vld [vmem:[%s1163 + $0x70] sm:$0xff]
        %v3905 = vld [vmem:[%s1163 + $0x78] sm:$0xff]
        %3906 = vst [vmem:[#allocation3 + $0x10] sm:$0xff] %v3890
        %3907 = vst [vmem:[#allocation3 + $0x98] sm:$0xff] %v3891
        %3908 = vst [vmem:[#allocation3 + $0x120] sm:$0xff] %v3892
        %3909 = vst [vmem:[#allocation3 + $0x1a8] sm:$0xff] %v3893
        %3910 = vst [vmem:[#allocation3 + $0x230] sm:$0xff] %v3894
        %3911 = vst [vmem:[#allocation3 + $0x2b8] sm:$0xff] %v3895
        %3912 = vst [vmem:[#allocation3 + $0x340] sm:$0xff] %v3896
        %3913 = vst [vmem:[#allocation3 + $0x3c8] sm:$0xff] %v3897
        %3914 = vst [vmem:[#allocation3 + $0x450] sm:$0xff] %v3898
        %3915 = vst [vmem:[#allocation3 + $0x4d8] sm:$0xff] %v3899
        %3916 = vst [vmem:[#allocation3 + $0x560] sm:$0xff] %v3900
        %3917 = vst [vmem:[#allocation3 + $0x5e8] sm:$0xff] %v3901
        %3918 = vst [vmem:[#allocation3 + $0x670] sm:$0xff] %v3902
        %3919 = vst [vmem:[#allocation3 + $0x6f8] sm:$0xff] %v3903
        %3920 = vst [vmem:[#allocation3 + $0x780] sm:$0xff] %v3904
        %3921 = vst [vmem:[#allocation3 + $0x808] sm:$0xff] %v3905
        %v3922 = vld [vmem:[%s1196] sm:$0xff]
        %v3923 = vld [vmem:[%s1196 + $0x8] sm:$0xff]
        %v3924 = vld [vmem:[%s1196 + $0x10] sm:$0xff]
        %v3925 = vld [vmem:[%s1196 + $0x18] sm:$0xff]
        %v3926 = vld [vmem:[%s1196 + $0x20] sm:$0xff]
        %v3927 = vld [vmem:[%s1196 + $0x28] sm:$0xff]
        %v3928 = vld [vmem:[%s1196 + $0x30] sm:$0xff]
        %v3929 = vld [vmem:[%s1196 + $0x38] sm:$0xff]
        %v3930 = vld [vmem:[%s1196 + $0x40] sm:$0xff]
        %v3931 = vld [vmem:[%s1196 + $0x48] sm:$0xff]
        %v3932 = vld [vmem:[%s1196 + $0x50] sm:$0xff]
        %v3933 = vld [vmem:[%s1196 + $0x58] sm:$0xff]
        %v3934 = vld [vmem:[%s1196 + $0x60] sm:$0xff]
        %v3935 = vld [vmem:[%s1196 + $0x68] sm:$0xff]
        %v3936 = vld [vmem:[%s1196 + $0x70] sm:$0xff]
        %v3937 = vld [vmem:[%s1196 + $0x78] sm:$0xff]
        %3938 = vst [vmem:[#allocation3 + $0x18] sm:$0xff] %v3922
        %3939 = vst [vmem:[#allocation3 + $0xa0] sm:$0xff] %v3923
        %3940 = vst [vmem:[#allocation3 + $0x128] sm:$0xff] %v3924
        %3941 = vst [vmem:[#allocation3 + $0x1b0] sm:$0xff] %v3925
        %3942 = vst [vmem:[#allocation3 + $0x238] sm:$0xff] %v3926
        %3943 = vst [vmem:[#allocation3 + $0x2c0] sm:$0xff] %v3927
        %3944 = vst [vmem:[#allocation3 + $0x348] sm:$0xff] %v3928
        %3945 = vst [vmem:[#allocation3 + $0x3d0] sm:$0xff] %v3929
        %3946 = vst [vmem:[#allocation3 + $0x458] sm:$0xff] %v3930
        %3947 = vst [vmem:[#allocation3 + $0x4e0] sm:$0xff] %v3931
        %3948 = vst [vmem:[#allocation3 + $0x568] sm:$0xff] %v3932
        %3949 = vst [vmem:[#allocation3 + $0x5f0] sm:$0xff] %v3933
        %3950 = vst [vmem:[#allocation3 + $0x678] sm:$0xff] %v3934
        %3951 = vst [vmem:[#allocation3 + $0x700] sm:$0xff] %v3935
        %3952 = vst [vmem:[#allocation3 + $0x788] sm:$0xff] %v3936
        %3953 = vst [vmem:[#allocation3 + $0x810] sm:$0xff] %v3937
        %v3954 = vld [vmem:[%s1229] sm:$0xff]
        %v3955 = vld [vmem:[%s1229 + $0x8] sm:$0xff]
        %v3956 = vld [vmem:[%s1229 + $0x10] sm:$0xff]
        %v3957 = vld [vmem:[%s1229 + $0x18] sm:$0xff]
        %v3958 = vld [vmem:[%s1229 + $0x20] sm:$0xff]
        %v3959 = vld [vmem:[%s1229 + $0x28] sm:$0xff]
        %v3960 = vld [vmem:[%s1229 + $0x30] sm:$0xff]
        %v3961 = vld [vmem:[%s1229 + $0x38] sm:$0xff]
        %v3962 = vld [vmem:[%s1229 + $0x40] sm:$0xff]
        %v3963 = vld [vmem:[%s1229 + $0x48] sm:$0xff]
        %v3964 = vld [vmem:[%s1229 + $0x50] sm:$0xff]
        %v3965 = vld [vmem:[%s1229 + $0x58] sm:$0xff]
        %v3966 = vld [vmem:[%s1229 + $0x60] sm:$0xff]
        %v3967 = vld [vmem:[%s1229 + $0x68] sm:$0xff]
        %v3968 = vld [vmem:[%s1229 + $0x70] sm:$0xff]
        %v3969 = vld [vmem:[%s1229 + $0x78] sm:$0xff]
        %3970 = vst [vmem:[#allocation3 + $0x20] sm:$0xff] %v3954
        %3971 = vst [vmem:[#allocation3 + $0xa8] sm:$0xff] %v3955
        %3972 = vst [vmem:[#allocation3 + $0x130] sm:$0xff] %v3956
        %3973 = vst [vmem:[#allocation3 + $0x1b8] sm:$0xff] %v3957
        %3974 = vst [vmem:[#allocation3 + $0x240] sm:$0xff] %v3958
        %3975 = vst [vmem:[#allocation3 + $0x2c8] sm:$0xff] %v3959
        %3976 = vst [vmem:[#allocation3 + $0x350] sm:$0xff] %v3960
        %3977 = vst [vmem:[#allocation3 + $0x3d8] sm:$0xff] %v3961
        %3978 = vst [vmem:[#allocation3 + $0x460] sm:$0xff] %v3962
        %3979 = vst [vmem:[#allocation3 + $0x4e8] sm:$0xff] %v3963
        %3980 = vst [vmem:[#allocation3 + $0x570] sm:$0xff] %v3964
        %3981 = vst [vmem:[#allocation3 + $0x5f8] sm:$0xff] %v3965
        %3982 = vst [vmem:[#allocation3 + $0x680] sm:$0xff] %v3966
        %3983 = vst [vmem:[#allocation3 + $0x708] sm:$0xff] %v3967
        %3984 = vst [vmem:[#allocation3 + $0x790] sm:$0xff] %v3968
        %3985 = vst [vmem:[#allocation3 + $0x818] sm:$0xff] %v3969
        %v3986 = vld [vmem:[%s1262] sm:$0xff]
        %v3987 = vld [vmem:[%s1262 + $0x8] sm:$0xff]
        %v3988 = vld [vmem:[%s1262 + $0x10] sm:$0xff]
        %v3989 = vld [vmem:[%s1262 + $0x18] sm:$0xff]
        %v3990 = vld [vmem:[%s1262 + $0x20] sm:$0xff]
        %v3991 = vld [vmem:[%s1262 + $0x28] sm:$0xff]
        %v3992 = vld [vmem:[%s1262 + $0x30] sm:$0xff]
        %v3993 = vld [vmem:[%s1262 + $0x38] sm:$0xff]
        %v3994 = vld [vmem:[%s1262 + $0x40] sm:$0xff]
        %v3995 = vld [vmem:[%s1262 + $0x48] sm:$0xff]
        %v3996 = vld [vmem:[%s1262 + $0x50] sm:$0xff]
        %v3997 = vld [vmem:[%s1262 + $0x58] sm:$0xff]
        %v3998 = vld [vmem:[%s1262 + $0x60] sm:$0xff]
        %v3999 = vld [vmem:[%s1262 + $0x68] sm:$0xff]
        %v4000 = vld [vmem:[%s1262 + $0x70] sm:$0xff]
        %v4001 = vld [vmem:[%s1262 + $0x78] sm:$0xff]
        %4002 = vst [vmem:[#allocation3 + $0x28] sm:$0xff] %v3986
        %4003 = vst [vmem:[#allocation3 + $0xb0] sm:$0xff] %v3987
        %4004 = vst [vmem:[#allocation3 + $0x138] sm:$0xff] %v3988
        %4005 = vst [vmem:[#allocation3 + $0x1c0] sm:$0xff] %v3989
        %4006 = vst [vmem:[#allocation3 + $0x248] sm:$0xff] %v3990
        %4007 = vst [vmem:[#allocation3 + $0x2d0] sm:$0xff] %v3991
        %4008 = vst [vmem:[#allocation3 + $0x358] sm:$0xff] %v3992
        %4009 = vst [vmem:[#allocation3 + $0x3e0] sm:$0xff] %v3993
        %4010 = vst [vmem:[#allocation3 + $0x468] sm:$0xff] %v3994
        %4011 = vst [vmem:[#allocation3 + $0x4f0] sm:$0xff] %v3995
        %4012 = vst [vmem:[#allocation3 + $0x578] sm:$0xff] %v3996
        %4013 = vst [vmem:[#allocation3 + $0x600] sm:$0xff] %v3997
        %4014 = vst [vmem:[#allocation3 + $0x688] sm:$0xff] %v3998
        %4015 = vst [vmem:[#allocation3 + $0x710] sm:$0xff] %v3999
        %4016 = vst [vmem:[#allocation3 + $0x798] sm:$0xff] %v4000
        %4017 = vst [vmem:[#allocation3 + $0x820] sm:$0xff] %v4001
        %v4018 = vld [vmem:[%s1295] sm:$0xff]
        %v4019 = vld [vmem:[%s1295 + $0x8] sm:$0xff]
        %v4020 = vld [vmem:[%s1295 + $0x10] sm:$0xff]
        %v4021 = vld [vmem:[%s1295 + $0x18] sm:$0xff]
        %v4022 = vld [vmem:[%s1295 + $0x20] sm:$0xff]
        %v4023 = vld [vmem:[%s1295 + $0x28] sm:$0xff]
        %v4024 = vld [vmem:[%s1295 + $0x30] sm:$0xff]
        %v4025 = vld [vmem:[%s1295 + $0x38] sm:$0xff]
        %v4026 = vld [vmem:[%s1295 + $0x40] sm:$0xff]
        %v4027 = vld [vmem:[%s1295 + $0x48] sm:$0xff]
        %v4028 = vld [vmem:[%s1295 + $0x50] sm:$0xff]
        %v4029 = vld [vmem:[%s1295 + $0x58] sm:$0xff]
        %v4030 = vld [vmem:[%s1295 + $0x60] sm:$0xff]
        %v4031 = vld [vmem:[%s1295 + $0x68] sm:$0xff]
        %v4032 = vld [vmem:[%s1295 + $0x70] sm:$0xff]
        %v4033 = vld [vmem:[%s1295 + $0x78] sm:$0xff]
        %4034 = vst [vmem:[#allocation3 + $0x30] sm:$0xff] %v4018
        %4035 = vst [vmem:[#allocation3 + $0xb8] sm:$0xff] %v4019
        %4036 = vst [vmem:[#allocation3 + $0x140] sm:$0xff] %v4020
        %4037 = vst [vmem:[#allocation3 + $0x1c8] sm:$0xff] %v4021
        %4038 = vst [vmem:[#allocation3 + $0x250] sm:$0xff] %v4022
        %4039 = vst [vmem:[#allocation3 + $0x2d8] sm:$0xff] %v4023
        %4040 = vst [vmem:[#allocation3 + $0x360] sm:$0xff] %v4024
        %4041 = vst [vmem:[#allocation3 + $0x3e8] sm:$0xff] %v4025
        %4042 = vst [vmem:[#allocation3 + $0x470] sm:$0xff] %v4026
        %4043 = vst [vmem:[#allocation3 + $0x4f8] sm:$0xff] %v4027
        %4044 = vst [vmem:[#allocation3 + $0x580] sm:$0xff] %v4028
        %4045 = vst [vmem:[#allocation3 + $0x608] sm:$0xff] %v4029
        %4046 = vst [vmem:[#allocation3 + $0x690] sm:$0xff] %v4030
        %4047 = vst [vmem:[#allocation3 + $0x718] sm:$0xff] %v4031
        %4048 = vst [vmem:[#allocation3 + $0x7a0] sm:$0xff] %v4032
        %4049 = vst [vmem:[#allocation3 + $0x828] sm:$0xff] %v4033
        %v4050 = vld [vmem:[%s1328] sm:$0xff]
        %v4051 = vld [vmem:[%s1328 + $0x8] sm:$0xff]
        %v4052 = vld [vmem:[%s1328 + $0x10] sm:$0xff]
        %v4053 = vld [vmem:[%s1328 + $0x18] sm:$0xff]
        %v4054 = vld [vmem:[%s1328 + $0x20] sm:$0xff]
        %v4055 = vld [vmem:[%s1328 + $0x28] sm:$0xff]
        %v4056 = vld [vmem:[%s1328 + $0x30] sm:$0xff]
        %v4057 = vld [vmem:[%s1328 + $0x38] sm:$0xff]
        %v4058 = vld [vmem:[%s1328 + $0x40] sm:$0xff]
        %v4059 = vld [vmem:[%s1328 + $0x48] sm:$0xff]
        %v4060 = vld [vmem:[%s1328 + $0x50] sm:$0xff]
        %v4061 = vld [vmem:[%s1328 + $0x58] sm:$0xff]
        %v4062 = vld [vmem:[%s1328 + $0x60] sm:$0xff]
        %v4063 = vld [vmem:[%s1328 + $0x68] sm:$0xff]
        %v4064 = vld [vmem:[%s1328 + $0x70] sm:$0xff]
        %v4065 = vld [vmem:[%s1328 + $0x78] sm:$0xff]
        %4066 = vst [vmem:[#allocation3 + $0x38] sm:$0xff] %v4050
        %4067 = vst [vmem:[#allocation3 + $0xc0] sm:$0xff] %v4051
        %4068 = vst [vmem:[#allocation3 + $0x148] sm:$0xff] %v4052
        %4069 = vst [vmem:[#allocation3 + $0x1d0] sm:$0xff] %v4053
        %4070 = vst [vmem:[#allocation3 + $0x258] sm:$0xff] %v4054
        %4071 = vst [vmem:[#allocation3 + $0x2e0] sm:$0xff] %v4055
        %4072 = vst [vmem:[#allocation3 + $0x368] sm:$0xff] %v4056
        %4073 = vst [vmem:[#allocation3 + $0x3f0] sm:$0xff] %v4057
        %4074 = vst [vmem:[#allocation3 + $0x478] sm:$0xff] %v4058
        %4075 = vst [vmem:[#allocation3 + $0x500] sm:$0xff] %v4059
        %4076 = vst [vmem:[#allocation3 + $0x588] sm:$0xff] %v4060
        %4077 = vst [vmem:[#allocation3 + $0x610] sm:$0xff] %v4061
        %4078 = vst [vmem:[#allocation3 + $0x698] sm:$0xff] %v4062
        %4079 = vst [vmem:[#allocation3 + $0x720] sm:$0xff] %v4063
        %4080 = vst [vmem:[#allocation3 + $0x7a8] sm:$0xff] %v4064
        %4081 = vst [vmem:[#allocation3 + $0x830] sm:$0xff] %v4065
        %v4082 = vld [vmem:[%s1081] sm:$0xff]
        %v4083 = vld [vmem:[%s1081 + $0x8] sm:$0xff]
        %v4084 = vld [vmem:[%s1081 + $0x10] sm:$0xff]
        %v4085 = vld [vmem:[%s1081 + $0x18] sm:$0xff]
        %v4086 = vld [vmem:[%s1081 + $0x20] sm:$0xff]
        %v4087 = vld [vmem:[%s1081 + $0x28] sm:$0xff]
        %v4088 = vld [vmem:[%s1081 + $0x30] sm:$0xff]
        %v4089 = vld [vmem:[%s1081 + $0x38] sm:$0xff]
        %v4090 = vld [vmem:[%s1081 + $0x40] sm:$0xff]
        %v4091 = vld [vmem:[%s1081 + $0x48] sm:$0xff]
        %v4092 = vld [vmem:[%s1081 + $0x50] sm:$0xff]
        %v4093 = vld [vmem:[%s1081 + $0x58] sm:$0xff]
        %v4094 = vld [vmem:[%s1081 + $0x60] sm:$0xff]
        %v4095 = vld [vmem:[%s1081 + $0x68] sm:$0xff]
        %v4096 = vld [vmem:[%s1081 + $0x70] sm:$0xff]
        %v4097 = vld [vmem:[%s1081 + $0x78] sm:$0xff]
        %4098 = vst [vmem:[#allocation3 + $0x40] sm:$0xff] %v4082
        %4099 = vst [vmem:[#allocation3 + $0xc8] sm:$0xff] %v4083
        %4100 = vst [vmem:[#allocation3 + $0x150] sm:$0xff] %v4084
        %4101 = vst [vmem:[#allocation3 + $0x1d8] sm:$0xff] %v4085
        %4102 = vst [vmem:[#allocation3 + $0x260] sm:$0xff] %v4086
        %4103 = vst [vmem:[#allocation3 + $0x2e8] sm:$0xff] %v4087
        %4104 = vst [vmem:[#allocation3 + $0x370] sm:$0xff] %v4088
        %4105 = vst [vmem:[#allocation3 + $0x3f8] sm:$0xff] %v4089
        %4106 = vst [vmem:[#allocation3 + $0x480] sm:$0xff] %v4090
        %4107 = vst [vmem:[#allocation3 + $0x508] sm:$0xff] %v4091
        %4108 = vst [vmem:[#allocation3 + $0x590] sm:$0xff] %v4092
        %4109 = vst [vmem:[#allocation3 + $0x618] sm:$0xff] %v4093
        %4110 = vst [vmem:[#allocation3 + $0x6a0] sm:$0xff] %v4094
        %4111 = vst [vmem:[#allocation3 + $0x728] sm:$0xff] %v4095
        %4112 = vst [vmem:[#allocation3 + $0x7b0] sm:$0xff] %v4096
        %4113 = vst [vmem:[#allocation3 + $0x838] sm:$0xff] %v4097
        %v4114 = vld [vmem:[%s1393] sm:$0xff]
        %v4115 = vld [vmem:[%s1393 + $0x8] sm:$0xff]
        %v4116 = vld [vmem:[%s1393 + $0x10] sm:$0xff]
        %v4117 = vld [vmem:[%s1393 + $0x18] sm:$0xff]
        %v4118 = vld [vmem:[%s1393 + $0x20] sm:$0xff]
        %v4119 = vld [vmem:[%s1393 + $0x28] sm:$0xff]
        %v4120 = vld [vmem:[%s1393 + $0x30] sm:$0xff]
        %v4121 = vld [vmem:[%s1393 + $0x38] sm:$0xff]
        %v4122 = vld [vmem:[%s1393 + $0x40] sm:$0xff]
        %v4123 = vld [vmem:[%s1393 + $0x48] sm:$0xff]
        %v4124 = vld [vmem:[%s1393 + $0x50] sm:$0xff]
        %v4125 = vld [vmem:[%s1393 + $0x58] sm:$0xff]
        %v4126 = vld [vmem:[%s1393 + $0x60] sm:$0xff]
        %v4127 = vld [vmem:[%s1393 + $0x68] sm:$0xff]
        %v4128 = vld [vmem:[%s1393 + $0x70] sm:$0xff]
        %v4129 = vld [vmem:[%s1393 + $0x78] sm:$0xff]
        %4130 = vst [vmem:[#allocation3 + $0x48] sm:$0xff] %v4114
        %4131 = vst [vmem:[#allocation3 + $0xd0] sm:$0xff] %v4115
        %4132 = vst [vmem:[#allocation3 + $0x158] sm:$0xff] %v4116
        %4133 = vst [vmem:[#allocation3 + $0x1e0] sm:$0xff] %v4117
        %4134 = vst [vmem:[#allocation3 + $0x268] sm:$0xff] %v4118
        %4135 = vst [vmem:[#allocation3 + $0x2f0] sm:$0xff] %v4119
        %4136 = vst [vmem:[#allocation3 + $0x378] sm:$0xff] %v4120
        %4137 = vst [vmem:[#allocation3 + $0x400] sm:$0xff] %v4121
        %4138 = vst [vmem:[#allocation3 + $0x488] sm:$0xff] %v4122
        %4139 = vst [vmem:[#allocation3 + $0x510] sm:$0xff] %v4123
        %4140 = vst [vmem:[#allocation3 + $0x598] sm:$0xff] %v4124
        %4141 = vst [vmem:[#allocation3 + $0x620] sm:$0xff] %v4125
        %4142 = vst [vmem:[#allocation3 + $0x6a8] sm:$0xff] %v4126
        %4143 = vst [vmem:[#allocation3 + $0x730] sm:$0xff] %v4127
        %4144 = vst [vmem:[#allocation3 + $0x7b8] sm:$0xff] %v4128
        %4145 = vst [vmem:[#allocation3 + $0x840] sm:$0xff] %v4129
        %v4146 = vld [vmem:[%s1426] sm:$0xff]
        %v4147 = vld [vmem:[%s1426 + $0x8] sm:$0xff]
        %v4148 = vld [vmem:[%s1426 + $0x10] sm:$0xff]
        %v4149 = vld [vmem:[%s1426 + $0x18] sm:$0xff]
        %v4150 = vld [vmem:[%s1426 + $0x20] sm:$0xff]
        %v4151 = vld [vmem:[%s1426 + $0x28] sm:$0xff]
        %v4152 = vld [vmem:[%s1426 + $0x30] sm:$0xff]
        %v4153 = vld [vmem:[%s1426 + $0x38] sm:$0xff]
        %v4154 = vld [vmem:[%s1426 + $0x40] sm:$0xff]
        %v4155 = vld [vmem:[%s1426 + $0x48] sm:$0xff]
        %v4156 = vld [vmem:[%s1426 + $0x50] sm:$0xff]
        %v4157 = vld [vmem:[%s1426 + $0x58] sm:$0xff]
        %v4158 = vld [vmem:[%s1426 + $0x60] sm:$0xff]
        %v4159 = vld [vmem:[%s1426 + $0x68] sm:$0xff]
        %v4160 = vld [vmem:[%s1426 + $0x70] sm:$0xff]
        %v4161 = vld [vmem:[%s1426 + $0x78] sm:$0xff]
        %4162 = vst [vmem:[#allocation3 + $0x50] sm:$0xff] %v4146
        %4163 = vst [vmem:[#allocation3 + $0xd8] sm:$0xff] %v4147
        %4164 = vst [vmem:[#allocation3 + $0x160] sm:$0xff] %v4148
        %4165 = vst [vmem:[#allocation3 + $0x1e8] sm:$0xff] %v4149
        %4166 = vst [vmem:[#allocation3 + $0x270] sm:$0xff] %v4150
        %4167 = vst [vmem:[#allocation3 + $0x2f8] sm:$0xff] %v4151
        %4168 = vst [vmem:[#allocation3 + $0x380] sm:$0xff] %v4152
        %4169 = vst [vmem:[#allocation3 + $0x408] sm:$0xff] %v4153
        %4170 = vst [vmem:[#allocation3 + $0x490] sm:$0xff] %v4154
        %4171 = vst [vmem:[#allocation3 + $0x518] sm:$0xff] %v4155
        %4172 = vst [vmem:[#allocation3 + $0x5a0] sm:$0xff] %v4156
        %4173 = vst [vmem:[#allocation3 + $0x628] sm:$0xff] %v4157
        %4174 = vst [vmem:[#allocation3 + $0x6b0] sm:$0xff] %v4158
        %4175 = vst [vmem:[#allocation3 + $0x738] sm:$0xff] %v4159
        %4176 = vst [vmem:[#allocation3 + $0x7c0] sm:$0xff] %v4160
        %4177 = vst [vmem:[#allocation3 + $0x848] sm:$0xff] %v4161
        %v4178 = vld [vmem:[%s1459] sm:$0xff]
        %v4179 = vld [vmem:[%s1459 + $0x8] sm:$0xff]
        %v4180 = vld [vmem:[%s1459 + $0x10] sm:$0xff]
        %v4181 = vld [vmem:[%s1459 + $0x18] sm:$0xff]
        %v4182 = vld [vmem:[%s1459 + $0x20] sm:$0xff]
        %v4183 = vld [vmem:[%s1459 + $0x28] sm:$0xff]
        %v4184 = vld [vmem:[%s1459 + $0x30] sm:$0xff]
        %v4185 = vld [vmem:[%s1459 + $0x38] sm:$0xff]
        %v4186 = vld [vmem:[%s1459 + $0x40] sm:$0xff]
        %v4187 = vld [vmem:[%s1459 + $0x48] sm:$0xff]
        %v4188 = vld [vmem:[%s1459 + $0x50] sm:$0xff]
        %v4189 = vld [vmem:[%s1459 + $0x58] sm:$0xff]
        %v4190 = vld [vmem:[%s1459 + $0x60] sm:$0xff]
        %v4191 = vld [vmem:[%s1459 + $0x68] sm:$0xff]
        %v4192 = vld [vmem:[%s1459 + $0x70] sm:$0xff]
        %v4193 = vld [vmem:[%s1459 + $0x78] sm:$0xff]
        %4194 = vst [vmem:[#allocation3 + $0x58] sm:$0xff] %v4178
        %4195 = vst [vmem:[#allocation3 + $0xe0] sm:$0xff] %v4179
        %4196 = vst [vmem:[#allocation3 + $0x168] sm:$0xff] %v4180
        %4197 = vst [vmem:[#allocation3 + $0x1f0] sm:$0xff] %v4181
        %4198 = vst [vmem:[#allocation3 + $0x278] sm:$0xff] %v4182
        %4199 = vst [vmem:[#allocation3 + $0x300] sm:$0xff] %v4183
        %4200 = vst [vmem:[#allocation3 + $0x388] sm:$0xff] %v4184
        %4201 = vst [vmem:[#allocation3 + $0x410] sm:$0xff] %v4185
        %4202 = vst [vmem:[#allocation3 + $0x498] sm:$0xff] %v4186
        %4203 = vst [vmem:[#allocation3 + $0x520] sm:$0xff] %v4187
        %4204 = vst [vmem:[#allocation3 + $0x5a8] sm:$0xff] %v4188
        %4205 = vst [vmem:[#allocation3 + $0x630] sm:$0xff] %v4189
        %4206 = vst [vmem:[#allocation3 + $0x6b8] sm:$0xff] %v4190
        %4207 = vst [vmem:[#allocation3 + $0x740] sm:$0xff] %v4191
        %4208 = vst [vmem:[#allocation3 + $0x7c8] sm:$0xff] %v4192
        %4209 = vst [vmem:[#allocation3 + $0x850] sm:$0xff] %v4193
        %v4210 = vld [vmem:[%s1492] sm:$0xff]
        %v4211 = vld [vmem:[%s1492 + $0x8] sm:$0xff]
        %v4212 = vld [vmem:[%s1492 + $0x10] sm:$0xff]
        %v4213 = vld [vmem:[%s1492 + $0x18] sm:$0xff]
        %v4214 = vld [vmem:[%s1492 + $0x20] sm:$0xff]
        %v4215 = vld [vmem:[%s1492 + $0x28] sm:$0xff]
        %v4216 = vld [vmem:[%s1492 + $0x30] sm:$0xff]
        %v4217 = vld [vmem:[%s1492 + $0x38] sm:$0xff]
        %v4218 = vld [vmem:[%s1492 + $0x40] sm:$0xff]
        %v4219 = vld [vmem:[%s1492 + $0x48] sm:$0xff]
        %v4220 = vld [vmem:[%s1492 + $0x50] sm:$0xff]
        %v4221 = vld [vmem:[%s1492 + $0x58] sm:$0xff]
        %v4222 = vld [vmem:[%s1492 + $0x60] sm:$0xff]
        %v4223 = vld [vmem:[%s1492 + $0x68] sm:$0xff]
        %v4224 = vld [vmem:[%s1492 + $0x70] sm:$0xff]
        %v4225 = vld [vmem:[%s1492 + $0x78] sm:$0xff]
        %4226 = vst [vmem:[#allocation3 + $0x60] sm:$0xff] %v4210
        %4227 = vst [vmem:[#allocation3 + $0xe8] sm:$0xff] %v4211
        %4228 = vst [vmem:[#allocation3 + $0x170] sm:$0xff] %v4212
        %4229 = vst [vmem:[#allocation3 + $0x1f8] sm:$0xff] %v4213
        %4230 = vst [vmem:[#allocation3 + $0x280] sm:$0xff] %v4214
        %4231 = vst [vmem:[#allocation3 + $0x308] sm:$0xff] %v4215
        %4232 = vst [vmem:[#allocation3 + $0x390] sm:$0xff] %v4216
        %4233 = vst [vmem:[#allocation3 + $0x418] sm:$0xff] %v4217
        %4234 = vst [vmem:[#allocation3 + $0x4a0] sm:$0xff] %v4218
        %4235 = vst [vmem:[#allocation3 + $0x528] sm:$0xff] %v4219
        %4236 = vst [vmem:[#allocation3 + $0x5b0] sm:$0xff] %v4220
        %4237 = vst [vmem:[#allocation3 + $0x638] sm:$0xff] %v4221
        %4238 = vst [vmem:[#allocation3 + $0x6c0] sm:$0xff] %v4222
        %4239 = vst [vmem:[#allocation3 + $0x748] sm:$0xff] %v4223
        %4240 = vst [vmem:[#allocation3 + $0x7d0] sm:$0xff] %v4224
        %4241 = vst [vmem:[#allocation3 + $0x858] sm:$0xff] %v4225
        %v4242 = vld [vmem:[%s1525] sm:$0xff]
        %v4243 = vld [vmem:[%s1525 + $0x8] sm:$0xff]
        %v4244 = vld [vmem:[%s1525 + $0x10] sm:$0xff]
        %v4245 = vld [vmem:[%s1525 + $0x18] sm:$0xff]
        %v4246 = vld [vmem:[%s1525 + $0x20] sm:$0xff]
        %v4247 = vld [vmem:[%s1525 + $0x28] sm:$0xff]
        %v4248 = vld [vmem:[%s1525 + $0x30] sm:$0xff]
        %v4249 = vld [vmem:[%s1525 + $0x38] sm:$0xff]
        %v4250 = vld [vmem:[%s1525 + $0x40] sm:$0xff]
        %v4251 = vld [vmem:[%s1525 + $0x48] sm:$0xff]
        %v4252 = vld [vmem:[%s1525 + $0x50] sm:$0xff]
        %v4253 = vld [vmem:[%s1525 + $0x58] sm:$0xff]
        %v4254 = vld [vmem:[%s1525 + $0x60] sm:$0xff]
        %v4255 = vld [vmem:[%s1525 + $0x68] sm:$0xff]
        %v4256 = vld [vmem:[%s1525 + $0x70] sm:$0xff]
        %v4257 = vld [vmem:[%s1525 + $0x78] sm:$0xff]
        %4258 = vst [vmem:[#allocation3 + $0x68] sm:$0xff] %v4242
        %4259 = vst [vmem:[#allocation3 + $0xf0] sm:$0xff] %v4243
        %4260 = vst [vmem:[#allocation3 + $0x178] sm:$0xff] %v4244
        %4261 = vst [vmem:[#allocation3 + $0x200] sm:$0xff] %v4245
        %4262 = vst [vmem:[#allocation3 + $0x288] sm:$0xff] %v4246
        %4263 = vst [vmem:[#allocation3 + $0x310] sm:$0xff] %v4247
        %4264 = vst [vmem:[#allocation3 + $0x398] sm:$0xff] %v4248
        %4265 = vst [vmem:[#allocation3 + $0x420] sm:$0xff] %v4249
        %4266 = vst [vmem:[#allocation3 + $0x4a8] sm:$0xff] %v4250
        %4267 = vst [vmem:[#allocation3 + $0x530] sm:$0xff] %v4251
        %4268 = vst [vmem:[#allocation3 + $0x5b8] sm:$0xff] %v4252
        %4269 = vst [vmem:[#allocation3 + $0x640] sm:$0xff] %v4253
        %4270 = vst [vmem:[#allocation3 + $0x6c8] sm:$0xff] %v4254
        %4271 = vst [vmem:[#allocation3 + $0x750] sm:$0xff] %v4255
        %4272 = vst [vmem:[#allocation3 + $0x7d8] sm:$0xff] %v4256
        %4273 = vst [vmem:[#allocation3 + $0x860] sm:$0xff] %v4257
        %v4274 = vld [vmem:[%s1558] sm:$0xff]
        %v4275 = vld [vmem:[%s1558 + $0x8] sm:$0xff]
        %v4276 = vld [vmem:[%s1558 + $0x10] sm:$0xff]
        %v4277 = vld [vmem:[%s1558 + $0x18] sm:$0xff]
        %v4278 = vld [vmem:[%s1558 + $0x20] sm:$0xff]
        %v4279 = vld [vmem:[%s1558 + $0x28] sm:$0xff]
        %v4280 = vld [vmem:[%s1558 + $0x30] sm:$0xff]
        %v4281 = vld [vmem:[%s1558 + $0x38] sm:$0xff]
        %v4282 = vld [vmem:[%s1558 + $0x40] sm:$0xff]
        %v4283 = vld [vmem:[%s1558 + $0x48] sm:$0xff]
        %v4284 = vld [vmem:[%s1558 + $0x50] sm:$0xff]
        %v4285 = vld [vmem:[%s1558 + $0x58] sm:$0xff]
        %v4286 = vld [vmem:[%s1558 + $0x60] sm:$0xff]
        %v4287 = vld [vmem:[%s1558 + $0x68] sm:$0xff]
        %v4288 = vld [vmem:[%s1558 + $0x70] sm:$0xff]
        %v4289 = vld [vmem:[%s1558 + $0x78] sm:$0xff]
        %4290 = vst [vmem:[#allocation3 + $0x70] sm:$0xff] %v4274
        %4291 = vst [vmem:[#allocation3 + $0xf8] sm:$0xff] %v4275
        %4292 = vst [vmem:[#allocation3 + $0x180] sm:$0xff] %v4276
        %4293 = vst [vmem:[#allocation3 + $0x208] sm:$0xff] %v4277
        %4294 = vst [vmem:[#allocation3 + $0x290] sm:$0xff] %v4278
        %4295 = vst [vmem:[#allocation3 + $0x318] sm:$0xff] %v4279
        %4296 = vst [vmem:[#allocation3 + $0x3a0] sm:$0xff] %v4280
        %4297 = vst [vmem:[#allocation3 + $0x428] sm:$0xff] %v4281
        %4298 = vst [vmem:[#allocation3 + $0x4b0] sm:$0xff] %v4282
        %4299 = vst [vmem:[#allocation3 + $0x538] sm:$0xff] %v4283
        %4300 = vst [vmem:[#allocation3 + $0x5c0] sm:$0xff] %v4284
        %4301 = vst [vmem:[#allocation3 + $0x648] sm:$0xff] %v4285
        %4302 = vst [vmem:[#allocation3 + $0x6d0] sm:$0xff] %v4286
        %4303 = vst [vmem:[#allocation3 + $0x758] sm:$0xff] %v4287
        %4304 = vst [vmem:[#allocation3 + $0x7e0] sm:$0xff] %v4288
        %4305 = vst [vmem:[#allocation3 + $0x868] sm:$0xff] %v4289
        %v4306 = vld [vmem:[%s1591] sm:$0xff]
        %v4307 = vld [vmem:[%s1591 + $0x8] sm:$0xff]
        %v4308 = vld [vmem:[%s1591 + $0x10] sm:$0xff]
        %v4309 = vld [vmem:[%s1591 + $0x18] sm:$0xff]
        %v4310 = vld [vmem:[%s1591 + $0x20] sm:$0xff]
        %v4311 = vld [vmem:[%s1591 + $0x28] sm:$0xff]
        %v4312 = vld [vmem:[%s1591 + $0x30] sm:$0xff]
        %v4313 = vld [vmem:[%s1591 + $0x38] sm:$0xff]
        %v4314 = vld [vmem:[%s1591 + $0x40] sm:$0xff]
        %v4315 = vld [vmem:[%s1591 + $0x48] sm:$0xff]
        %v4316 = vld [vmem:[%s1591 + $0x50] sm:$0xff]
        %v4317 = vld [vmem:[%s1591 + $0x58] sm:$0xff]
        %v4318 = vld [vmem:[%s1591 + $0x60] sm:$0xff]
        %v4319 = vld [vmem:[%s1591 + $0x68] sm:$0xff]
        %v4320 = vld [vmem:[%s1591 + $0x70] sm:$0xff]
        %v4321 = vld [vmem:[%s1591 + $0x78] sm:$0xff]
        %4322 = vst [vmem:[#allocation3 + $0x78] sm:$0xff] %v4306
        %4323 = vst [vmem:[#allocation3 + $0x100] sm:$0xff] %v4307
        %4324 = vst [vmem:[#allocation3 + $0x188] sm:$0xff] %v4308
        %4325 = vst [vmem:[#allocation3 + $0x210] sm:$0xff] %v4309
        %4326 = vst [vmem:[#allocation3 + $0x298] sm:$0xff] %v4310
        %4327 = vst [vmem:[#allocation3 + $0x320] sm:$0xff] %v4311
        %4328 = vst [vmem:[#allocation3 + $0x3a8] sm:$0xff] %v4312
        %4329 = vst [vmem:[#allocation3 + $0x430] sm:$0xff] %v4313
        %4330 = vst [vmem:[#allocation3 + $0x4b8] sm:$0xff] %v4314
        %4331 = vst [vmem:[#allocation3 + $0x540] sm:$0xff] %v4315
        %4332 = vst [vmem:[#allocation3 + $0x5c8] sm:$0xff] %v4316
        %4333 = vst [vmem:[#allocation3 + $0x650] sm:$0xff] %v4317
        %4334 = vst [vmem:[#allocation3 + $0x6d8] sm:$0xff] %v4318
        %4335 = vst [vmem:[#allocation3 + $0x760] sm:$0xff] %v4319
        %4336 = vst [vmem:[#allocation3 + $0x7e8] sm:$0xff] %v4320
        %4337 = vst [vmem:[#allocation3 + $0x870] sm:$0xff] %v4321
        %v4338 = vld [vmem:[%s1624] sm:$0xff]
        %v4339 = vld [vmem:[%s1624 + $0x8] sm:$0xff]
        %v4340 = vld [vmem:[%s1624 + $0x10] sm:$0xff]
        %v4341 = vld [vmem:[%s1624 + $0x18] sm:$0xff]
        %v4342 = vld [vmem:[%s1624 + $0x20] sm:$0xff]
        %v4343 = vld [vmem:[%s1624 + $0x28] sm:$0xff]
        %v4344 = vld [vmem:[%s1624 + $0x30] sm:$0xff]
        %v4345 = vld [vmem:[%s1624 + $0x38] sm:$0xff]
        %v4346 = vld [vmem:[%s1624 + $0x40] sm:$0xff]
        %v4347 = vld [vmem:[%s1624 + $0x48] sm:$0xff]
        %v4348 = vld [vmem:[%s1624 + $0x50] sm:$0xff]
        %v4349 = vld [vmem:[%s1624 + $0x58] sm:$0xff]
        %v4350 = vld [vmem:[%s1624 + $0x60] sm:$0xff]
        %v4351 = vld [vmem:[%s1624 + $0x68] sm:$0xff]
        %v4352 = vld [vmem:[%s1624 + $0x70] sm:$0xff]
        %v4353 = vld [vmem:[%s1624 + $0x78] sm:$0xff]
        %4354 = vst [vmem:[#allocation3 + $0x80] sm:$0xff] %v4338
        %4355 = vst [vmem:[#allocation3 + $0x108] sm:$0xff] %v4339
        %4356 = vst [vmem:[#allocation3 + $0x190] sm:$0xff] %v4340
        %4357 = vst [vmem:[#allocation3 + $0x218] sm:$0xff] %v4341
        %4358 = vst [vmem:[#allocation3 + $0x2a0] sm:$0xff] %v4342
        %4359 = vst [vmem:[#allocation3 + $0x328] sm:$0xff] %v4343
        %4360 = vst [vmem:[#allocation3 + $0x3b0] sm:$0xff] %v4344
        %4361 = vst [vmem:[#allocation3 + $0x438] sm:$0xff] %v4345
        %4362 = vst [vmem:[#allocation3 + $0x4c0] sm:$0xff] %v4346
        %4363 = vst [vmem:[#allocation3 + $0x548] sm:$0xff] %v4347
        %4364 = vst [vmem:[#allocation3 + $0x5d0] sm:$0xff] %v4348
        %4365 = vst [vmem:[#allocation3 + $0x658] sm:$0xff] %v4349
        %4366 = vst [vmem:[#allocation3 + $0x6e0] sm:$0xff] %v4350
        %4367 = vst [vmem:[#allocation3 + $0x768] sm:$0xff] %v4351
        %4368 = vst [vmem:[#allocation3 + $0x7f0] sm:$0xff] %v4352
        %4369 = vst [vmem:[#allocation3 + $0x878] sm:$0xff] %v4353
        %v4370 = vld [vmem:[#allocation3] sm:$0xff]
        %v4371 = vld [vmem:[#allocation3 + $0x8] sm:$0xff]
        %v4372 = vld [vmem:[#allocation3 + $0x10] sm:$0xff]
        %v4373 = vld [vmem:[#allocation3 + $0x18] sm:$0xff]
        %v4374 = vld [vmem:[#allocation3 + $0x20] sm:$0xff]
        %v4375 = vld [vmem:[#allocation3 + $0x28] sm:$0xff]
        %v4376 = vld [vmem:[#allocation3 + $0x30] sm:$0xff]
        %v4377 = vld [vmem:[#allocation3 + $0x38] sm:$0xff]
        %v4378 = vld [vmem:[#allocation3 + $0x40] sm:$0xff]
        %v4379 = vld [vmem:[#allocation3 + $0x48] sm:$0xff]
        %v4380 = vld [vmem:[#allocation3 + $0x50] sm:$0xff]
        %v4381 = vld [vmem:[#allocation3 + $0x58] sm:$0xff]
        %v4382 = vld [vmem:[#allocation3 + $0x60] sm:$0xff]
        %v4383 = vld [vmem:[#allocation3 + $0x68] sm:$0xff]
        %v4384 = vld [vmem:[#allocation3 + $0x70] sm:$0xff]
        %v4385 = vld [vmem:[#allocation3 + $0x78] sm:$0xff]
        %v4386 = vld [vmem:[#allocation3 + $0x80] sm:$0xff]
        %v4387 = vld [vmem:[#allocation3 + $0x88] sm:$0xff]
        %v4388 = vld [vmem:[#allocation3 + $0x90] sm:$0xff]
        %v4389 = vld [vmem:[#allocation3 + $0x98] sm:$0xff]
        %v4390 = vld [vmem:[#allocation3 + $0xa0] sm:$0xff]
        %v4391 = vld [vmem:[#allocation3 + $0xa8] sm:$0xff]
        %v4392 = vld [vmem:[#allocation3 + $0xb0] sm:$0xff]
        %v4393 = vld [vmem:[#allocation3 + $0xb8] sm:$0xff]
        %v4394 = vld [vmem:[#allocation3 + $0xc0] sm:$0xff]
        %v4395 = vld [vmem:[#allocation3 + $0xc8] sm:$0xff]
        %v4396 = vld [vmem:[#allocation3 + $0xd0] sm:$0xff]
        %v4397 = vld [vmem:[#allocation3 + $0xd8] sm:$0xff]
        %v4398 = vld [vmem:[#allocation3 + $0xe0] sm:$0xff]
        %v4399 = vld [vmem:[#allocation3 + $0xe8] sm:$0xff]
        %v4400 = vld [vmem:[#allocation3 + $0xf0] sm:$0xff]
        %v4401 = vld [vmem:[#allocation3 + $0xf8] sm:$0xff]
        %v4402 = vld [vmem:[#allocation3 + $0x100] sm:$0xff]
        %v4403 = vld [vmem:[#allocation3 + $0x108] sm:$0xff]
        %v4404 = vld [vmem:[#allocation3 + $0x110] sm:$0xff]
        %v4405 = vld [vmem:[#allocation3 + $0x118] sm:$0xff]
        %v4406 = vld [vmem:[#allocation3 + $0x120] sm:$0xff]
        %v4407 = vld [vmem:[#allocation3 + $0x128] sm:$0xff]
        %v4408 = vld [vmem:[#allocation3 + $0x130] sm:$0xff]
        %v4409 = vld [vmem:[#allocation3 + $0x138] sm:$0xff]
        %v4410 = vld [vmem:[#allocation3 + $0x140] sm:$0xff]
        %v4411 = vld [vmem:[#allocation3 + $0x148] sm:$0xff]
        %v4412 = vld [vmem:[#allocation3 + $0x150] sm:$0xff]
        %v4413 = vld [vmem:[#allocation3 + $0x158] sm:$0xff]
        %v4414 = vld [vmem:[#allocation3 + $0x160] sm:$0xff]
        %v4415 = vld [vmem:[#allocation3 + $0x168] sm:$0xff]
        %v4416 = vld [vmem:[#allocation3 + $0x170] sm:$0xff]
        %v4417 = vld [vmem:[#allocation3 + $0x178] sm:$0xff]
        %v4418 = vld [vmem:[#allocation3 + $0x180] sm:$0xff]
        %v4419 = vld [vmem:[#allocation3 + $0x188] sm:$0xff]
        %v4420 = vld [vmem:[#allocation3 + $0x190] sm:$0xff]
        %v4421 = vld [vmem:[#allocation3 + $0x198] sm:$0xff]
        %v4422 = vld [vmem:[#allocation3 + $0x1a0] sm:$0xff]
        %v4423 = vld [vmem:[#allocation3 + $0x1a8] sm:$0xff]
        %v4424 = vld [vmem:[#allocation3 + $0x1b0] sm:$0xff]
        %v4425 = vld [vmem:[#allocation3 + $0x1b8] sm:$0xff]
        %v4426 = vld [vmem:[#allocation3 + $0x1c0] sm:$0xff]
        %v4427 = vld [vmem:[#allocation3 + $0x1c8] sm:$0xff]
        %v4428 = vld [vmem:[#allocation3 + $0x1d0] sm:$0xff]
        %v4429 = vld [vmem:[#allocation3 + $0x1d8] sm:$0xff]
        %v4430 = vld [vmem:[#allocation3 + $0x1e0] sm:$0xff]
        %v4431 = vld [vmem:[#allocation3 + $0x1e8] sm:$0xff]
        %v4432 = vld [vmem:[#allocation3 + $0x1f0] sm:$0xff]
        %v4433 = vld [vmem:[#allocation3 + $0x1f8] sm:$0xff]
        %v4434 = vld [vmem:[#allocation3 + $0x200] sm:$0xff]
        %v4435 = vld [vmem:[#allocation3 + $0x208] sm:$0xff]
        %v4436 = vld [vmem:[#allocation3 + $0x210] sm:$0xff]
        %v4437 = vld [vmem:[#allocation3 + $0x218] sm:$0xff]
        %v4438 = vld [vmem:[#allocation3 + $0x220] sm:$0xff]
        %v4439 = vld [vmem:[#allocation3 + $0x228] sm:$0xff]
        %v4440 = vld [vmem:[#allocation3 + $0x230] sm:$0xff]
        %v4441 = vld [vmem:[#allocation3 + $0x238] sm:$0xff]
        %v4442 = vld [vmem:[#allocation3 + $0x240] sm:$0xff]
        %v4443 = vld [vmem:[#allocation3 + $0x248] sm:$0xff]
        %v4444 = vld [vmem:[#allocation3 + $0x250] sm:$0xff]
        %v4445 = vld [vmem:[#allocation3 + $0x258] sm:$0xff]
        %v4446 = vld [vmem:[#allocation3 + $0x260] sm:$0xff]
        %v4447 = vld [vmem:[#allocation3 + $0x268] sm:$0xff]
        %v4448 = vld [vmem:[#allocation3 + $0x270] sm:$0xff]
        %v4449 = vld [vmem:[#allocation3 + $0x278] sm:$0xff]
        %v4450 = vld [vmem:[#allocation3 + $0x280] sm:$0xff]
        %v4451 = vld [vmem:[#allocation3 + $0x288] sm:$0xff]
        %v4452 = vld [vmem:[#allocation3 + $0x290] sm:$0xff]
        %v4453 = vld [vmem:[#allocation3 + $0x298] sm:$0xff]
        %v4454 = vld [vmem:[#allocation3 + $0x2a0] sm:$0xff]
        %v4455 = vld [vmem:[#allocation3 + $0x2a8] sm:$0xff]
        %v4456 = vld [vmem:[#allocation3 + $0x2b0] sm:$0xff]
        %v4457 = vld [vmem:[#allocation3 + $0x2b8] sm:$0xff]
        %v4458 = vld [vmem:[#allocation3 + $0x2c0] sm:$0xff]
        %v4459 = vld [vmem:[#allocation3 + $0x2c8] sm:$0xff]
        %v4460 = vld [vmem:[#allocation3 + $0x2d0] sm:$0xff]
        %v4461 = vld [vmem:[#allocation3 + $0x2d8] sm:$0xff]
        %v4462 = vld [vmem:[#allocation3 + $0x2e0] sm:$0xff]
        %v4463 = vld [vmem:[#allocation3 + $0x2e8] sm:$0xff]
        %v4464 = vld [vmem:[#allocation3 + $0x2f0] sm:$0xff]
        %v4465 = vld [vmem:[#allocation3 + $0x2f8] sm:$0xff]
        %v4466 = vld [vmem:[#allocation3 + $0x300] sm:$0xff]
        %v4467 = vld [vmem:[#allocation3 + $0x308] sm:$0xff]
        %v4468 = vld [vmem:[#allocation3 + $0x310] sm:$0xff]
        %v4469 = vld [vmem:[#allocation3 + $0x318] sm:$0xff]
        %v4470 = vld [vmem:[#allocation3 + $0x320] sm:$0xff]
        %v4471 = vld [vmem:[#allocation3 + $0x328] sm:$0xff]
        %v4472 = vld [vmem:[#allocation3 + $0x330] sm:$0xff]
        %v4473 = vld [vmem:[#allocation3 + $0x338] sm:$0xff]
        %v4474 = vld [vmem:[#allocation3 + $0x340] sm:$0xff]
        %v4475 = vld [vmem:[#allocation3 + $0x348] sm:$0xff]
        %v4476 = vld [vmem:[#allocation3 + $0x350] sm:$0xff]
        %v4477 = vld [vmem:[#allocation3 + $0x358] sm:$0xff]
        %v4478 = vld [vmem:[#allocation3 + $0x360] sm:$0xff]
        %v4479 = vld [vmem:[#allocation3 + $0x368] sm:$0xff]
        %v4480 = vld [vmem:[#allocation3 + $0x370] sm:$0xff]
        %v4481 = vld [vmem:[#allocation3 + $0x378] sm:$0xff]
        %v4482 = vld [vmem:[#allocation3 + $0x380] sm:$0xff]
        %v4483 = vld [vmem:[#allocation3 + $0x388] sm:$0xff]
        %v4484 = vld [vmem:[#allocation3 + $0x390] sm:$0xff]
        %v4485 = vld [vmem:[#allocation3 + $0x398] sm:$0xff]
        %v4486 = vld [vmem:[#allocation3 + $0x3a0] sm:$0xff]
        %v4487 = vld [vmem:[#allocation3 + $0x3a8] sm:$0xff]
        %v4488 = vld [vmem:[#allocation3 + $0x3b0] sm:$0xff]
        %v4489 = vld [vmem:[#allocation3 + $0x3b8] sm:$0xff]
        %v4490 = vld [vmem:[#allocation3 + $0x3c0] sm:$0xff]
        %v4491 = vld [vmem:[#allocation3 + $0x3c8] sm:$0xff]
        %v4492 = vld [vmem:[#allocation3 + $0x3d0] sm:$0xff]
        %v4493 = vld [vmem:[#allocation3 + $0x3d8] sm:$0xff]
        %v4494 = vld [vmem:[#allocation3 + $0x3e0] sm:$0xff]
        %v4495 = vld [vmem:[#allocation3 + $0x3e8] sm:$0xff]
        %v4496 = vld [vmem:[#allocation3 + $0x3f0] sm:$0xff]
        %v4497 = vld [vmem:[#allocation3 + $0x3f8] sm:$0xff]
        %v4498 = vld [vmem:[#allocation3 + $0x400] sm:$0xff]
        %v4499 = vld [vmem:[#allocation3 + $0x408] sm:$0xff]
        %v4500 = vld [vmem:[#allocation3 + $0x410] sm:$0xff]
        %v4501 = vld [vmem:[#allocation3 + $0x418] sm:$0xff]
        %v4502 = vld [vmem:[#allocation3 + $0x420] sm:$0xff]
        %v4503 = vld [vmem:[#allocation3 + $0x428] sm:$0xff]
        %v4504 = vld [vmem:[#allocation3 + $0x430] sm:$0xff]
        %v4505 = vld [vmem:[#allocation3 + $0x438] sm:$0xff]
        %v4506 = vld [vmem:[#allocation3 + $0x440] sm:$0xff]
        %v4507 = vld [vmem:[#allocation3 + $0x448] sm:$0xff]
        %v4508 = vld [vmem:[#allocation3 + $0x450] sm:$0xff]
        %v4509 = vld [vmem:[#allocation3 + $0x458] sm:$0xff]
        %v4510 = vld [vmem:[#allocation3 + $0x460] sm:$0xff]
        %v4511 = vld [vmem:[#allocation3 + $0x468] sm:$0xff]
        %v4512 = vld [vmem:[#allocation3 + $0x470] sm:$0xff]
        %v4513 = vld [vmem:[#allocation3 + $0x478] sm:$0xff]
        %v4514 = vld [vmem:[#allocation3 + $0x480] sm:$0xff]
        %v4515 = vld [vmem:[#allocation3 + $0x488] sm:$0xff]
        %v4516 = vld [vmem:[#allocation3 + $0x490] sm:$0xff]
        %v4517 = vld [vmem:[#allocation3 + $0x498] sm:$0xff]
        %v4518 = vld [vmem:[#allocation3 + $0x4a0] sm:$0xff]
        %v4519 = vld [vmem:[#allocation3 + $0x4a8] sm:$0xff]
        %v4520 = vld [vmem:[#allocation3 + $0x4b0] sm:$0xff]
        %v4521 = vld [vmem:[#allocation3 + $0x4b8] sm:$0xff]
        %v4522 = vld [vmem:[#allocation3 + $0x4c0] sm:$0xff]
        %v4523 = vld [vmem:[#allocation3 + $0x4c8] sm:$0xff]
        %v4524 = vld [vmem:[#allocation3 + $0x4d0] sm:$0xff]
        %v4525 = vld [vmem:[#allocation3 + $0x4d8] sm:$0xff]
        %v4526 = vld [vmem:[#allocation3 + $0x4e0] sm:$0xff]
        %v4527 = vld [vmem:[#allocation3 + $0x4e8] sm:$0xff]
        %v4528 = vld [vmem:[#allocation3 + $0x4f0] sm:$0xff]
        %v4529 = vld [vmem:[#allocation3 + $0x4f8] sm:$0xff]
        %v4530 = vld [vmem:[#allocation3 + $0x500] sm:$0xff]
        %v4531 = vld [vmem:[#allocation3 + $0x508] sm:$0xff]
        %v4532 = vld [vmem:[#allocation3 + $0x510] sm:$0xff]
        %v4533 = vld [vmem:[#allocation3 + $0x518] sm:$0xff]
        %v4534 = vld [vmem:[#allocation3 + $0x520] sm:$0xff]
        %v4535 = vld [vmem:[#allocation3 + $0x528] sm:$0xff]
        %v4536 = vld [vmem:[#allocation3 + $0x530] sm:$0xff]
        %v4537 = vld [vmem:[#allocation3 + $0x538] sm:$0xff]
        %v4538 = vld [vmem:[#allocation3 + $0x540] sm:$0xff]
        %v4539 = vld [vmem:[#allocation3 + $0x548] sm:$0xff]
        %v4540 = vld [vmem:[#allocation3 + $0x550] sm:$0xff]
        %v4541 = vld [vmem:[#allocation3 + $0x558] sm:$0xff]
        %v4542 = vld [vmem:[#allocation3 + $0x560] sm:$0xff]
        %v4543 = vld [vmem:[#allocation3 + $0x568] sm:$0xff]
        %v4544 = vld [vmem:[#allocation3 + $0x570] sm:$0xff]
        %v4545 = vld [vmem:[#allocation3 + $0x578] sm:$0xff]
        %v4546 = vld [vmem:[#allocation3 + $0x580] sm:$0xff]
        %v4547 = vld [vmem:[#allocation3 + $0x588] sm:$0xff]
        %v4548 = vld [vmem:[#allocation3 + $0x590] sm:$0xff]
        %v4549 = vld [vmem:[#allocation3 + $0x598] sm:$0xff]
        %v4550 = vld [vmem:[#allocation3 + $0x5a0] sm:$0xff]
        %v4551 = vld [vmem:[#allocation3 + $0x5a8] sm:$0xff]
        %v4552 = vld [vmem:[#allocation3 + $0x5b0] sm:$0xff]
        %v4553 = vld [vmem:[#allocation3 + $0x5b8] sm:$0xff]
        %v4554 = vld [vmem:[#allocation3 + $0x5c0] sm:$0xff]
        %v4555 = vld [vmem:[#allocation3 + $0x5c8] sm:$0xff]
        %v4556 = vld [vmem:[#allocation3 + $0x5d0] sm:$0xff]
        %v4557 = vld [vmem:[#allocation3 + $0x5d8] sm:$0xff]
        %v4558 = vld [vmem:[#allocation3 + $0x5e0] sm:$0xff]
        %v4559 = vld [vmem:[#allocation3 + $0x5e8] sm:$0xff]
        %v4560 = vld [vmem:[#allocation3 + $0x5f0] sm:$0xff]
        %v4561 = vld [vmem:[#allocation3 + $0x5f8] sm:$0xff]
        %v4562 = vld [vmem:[#allocation3 + $0x600] sm:$0xff]
        %v4563 = vld [vmem:[#allocation3 + $0x608] sm:$0xff]
        %v4564 = vld [vmem:[#allocation3 + $0x610] sm:$0xff]
        %v4565 = vld [vmem:[#allocation3 + $0x618] sm:$0xff]
        %v4566 = vld [vmem:[#allocation3 + $0x620] sm:$0xff]
        %v4567 = vld [vmem:[#allocation3 + $0x628] sm:$0xff]
        %v4568 = vld [vmem:[#allocation3 + $0x630] sm:$0xff]
        %v4569 = vld [vmem:[#allocation3 + $0x638] sm:$0xff]
        %v4570 = vld [vmem:[#allocation3 + $0x640] sm:$0xff]
        %v4571 = vld [vmem:[#allocation3 + $0x648] sm:$0xff]
        %v4572 = vld [vmem:[#allocation3 + $0x650] sm:$0xff]
        %v4573 = vld [vmem:[#allocation3 + $0x658] sm:$0xff]
        %v4574 = vld [vmem:[#allocation3 + $0x660] sm:$0xff]
        %v4575 = vld [vmem:[#allocation3 + $0x668] sm:$0xff]
        %v4576 = vld [vmem:[#allocation3 + $0x670] sm:$0xff]
        %v4577 = vld [vmem:[#allocation3 + $0x678] sm:$0xff]
        %v4578 = vld [vmem:[#allocation3 + $0x680] sm:$0xff]
        %v4579 = vld [vmem:[#allocation3 + $0x688] sm:$0xff]
        %v4580 = vld [vmem:[#allocation3 + $0x690] sm:$0xff]
        %v4581 = vld [vmem:[#allocation3 + $0x698] sm:$0xff]
        %v4582 = vld [vmem:[#allocation3 + $0x6a0] sm:$0xff]
        %v4583 = vld [vmem:[#allocation3 + $0x6a8] sm:$0xff]
        %v4584 = vld [vmem:[#allocation3 + $0x6b0] sm:$0xff]
        %v4585 = vld [vmem:[#allocation3 + $0x6b8] sm:$0xff]
        %v4586 = vld [vmem:[#allocation3 + $0x6c0] sm:$0xff]
        %v4587 = vld [vmem:[#allocation3 + $0x6c8] sm:$0xff]
        %v4588 = vld [vmem:[#allocation3 + $0x6d0] sm:$0xff]
        %v4589 = vld [vmem:[#allocation3 + $0x6d8] sm:$0xff]
        %v4590 = vld [vmem:[#allocation3 + $0x6e0] sm:$0xff]
        %v4591 = vld [vmem:[#allocation3 + $0x6e8] sm:$0xff]
        %v4592 = vld [vmem:[#allocation3 + $0x6f0] sm:$0xff]
        %v4593 = vld [vmem:[#allocation3 + $0x6f8] sm:$0xff]
        %v4594 = vld [vmem:[#allocation3 + $0x700] sm:$0xff]
        %v4595 = vld [vmem:[#allocation3 + $0x708] sm:$0xff]
        %v4596 = vld [vmem:[#allocation3 + $0x710] sm:$0xff]
        %v4597 = vld [vmem:[#allocation3 + $0x718] sm:$0xff]
        %v4598 = vld [vmem:[#allocation3 + $0x720] sm:$0xff]
        %v4599 = vld [vmem:[#allocation3 + $0x728] sm:$0xff]
        %v4600 = vld [vmem:[#allocation3 + $0x730] sm:$0xff]
        %v4601 = vld [vmem:[#allocation3 + $0x738] sm:$0xff]
        %v4602 = vld [vmem:[#allocation3 + $0x740] sm:$0xff]
        %v4603 = vld [vmem:[#allocation3 + $0x748] sm:$0xff]
        %v4604 = vld [vmem:[#allocation3 + $0x750] sm:$0xff]
        %v4605 = vld [vmem:[#allocation3 + $0x758] sm:$0xff]
        %v4606 = vld [vmem:[#allocation3 + $0x760] sm:$0xff]
        %v4607 = vld [vmem:[#allocation3 + $0x768] sm:$0xff]
        %v4608 = vld [vmem:[#allocation3 + $0x770] sm:$0xff]
        %v4609 = vld [vmem:[#allocation3 + $0x778] sm:$0xff]
        %v4610 = vld [vmem:[#allocation3 + $0x780] sm:$0xff]
        %v4611 = vld [vmem:[#allocation3 + $0x788] sm:$0xff]
        %v4612 = vld [vmem:[#allocation3 + $0x790] sm:$0xff]
        %v4613 = vld [vmem:[#allocation3 + $0x798] sm:$0xff]
        %v4614 = vld [vmem:[#allocation3 + $0x7a0] sm:$0xff]
        %v4615 = vld [vmem:[#allocation3 + $0x7a8] sm:$0xff]
        %v4616 = vld [vmem:[#allocation3 + $0x7b0] sm:$0xff]
        %v4617 = vld [vmem:[#allocation3 + $0x7b8] sm:$0xff]
        %v4618 = vld [vmem:[#allocation3 + $0x7c0] sm:$0xff]
        %v4619 = vld [vmem:[#allocation3 + $0x7c8] sm:$0xff]
        %v4620 = vld [vmem:[#allocation3 + $0x7d0] sm:$0xff]
        %v4621 = vld [vmem:[#allocation3 + $0x7d8] sm:$0xff]
        %v4622 = vld [vmem:[#allocation3 + $0x7e0] sm:$0xff]
        %v4623 = vld [vmem:[#allocation3 + $0x7e8] sm:$0xff]
        %v4624 = vld [vmem:[#allocation3 + $0x7f0] sm:$0xff]
        %v4625 = vld [vmem:[#allocation3 + $0x7f8] sm:$0xff]
        %v4626 = vld [vmem:[#allocation3 + $0x800] sm:$0xff]
        %v4627 = vld [vmem:[#allocation3 + $0x808] sm:$0xff]
        %v4628 = vld [vmem:[#allocation3 + $0x810] sm:$0xff]
        %v4629 = vld [vmem:[#allocation3 + $0x818] sm:$0xff]
        %v4630 = vld [vmem:[#allocation3 + $0x820] sm:$0xff]
        %v4631 = vld [vmem:[#allocation3 + $0x828] sm:$0xff]
        %v4632 = vld [vmem:[#allocation3 + $0x830] sm:$0xff]
        %v4633 = vld [vmem:[#allocation3 + $0x838] sm:$0xff]
        %v4634 = vld [vmem:[#allocation3 + $0x840] sm:$0xff]
        %v4635 = vld [vmem:[#allocation3 + $0x848] sm:$0xff]
        %v4636 = vld [vmem:[#allocation3 + $0x850] sm:$0xff]
        %v4637 = vld [vmem:[#allocation3 + $0x858] sm:$0xff]
        %v4638 = vld [vmem:[#allocation3 + $0x860] sm:$0xff]
        %v4639 = vld [vmem:[#allocation3 + $0x868] sm:$0xff]
        %v4640 = vld [vmem:[#allocation3 + $0x870] sm:$0xff]
        %v4641 = vld [vmem:[#allocation3 + $0x878] sm:$0xff]
        %s4642 = scalar_lea.vmem [#allocation16], 2176
        %v4643 = vld [vmem:[%s4642] sm:$0xff]
        %v4644 = vld [vmem:[%s4642 + $0x8] sm:$0xff]
        %v4645 = vld [vmem:[%s4642 + $0x10] sm:$0xff]
        %v4646 = vld [vmem:[%s4642 + $0x18] sm:$0xff]
        %v4647 = vld [vmem:[%s4642 + $0x20] sm:$0xff]
        %v4648 = vld [vmem:[%s4642 + $0x28] sm:$0xff]
        %v4649 = vld [vmem:[%s4642 + $0x30] sm:$0xff]
        %v4650 = vld [vmem:[%s4642 + $0x38] sm:$0xff]
        %v4651 = vld [vmem:[%s4642 + $0x40] sm:$0xff]
        %v4652 = vld [vmem:[%s4642 + $0x48] sm:$0xff]
        %v4653 = vld [vmem:[%s4642 + $0x50] sm:$0xff]
        %v4654 = vld [vmem:[%s4642 + $0x58] sm:$0xff]
        %v4655 = vld [vmem:[%s4642 + $0x60] sm:$0xff]
        %v4656 = vld [vmem:[%s4642 + $0x68] sm:$0xff]
        %v4657 = vld [vmem:[%s4642 + $0x70] sm:$0xff]
        %v4658 = vld [vmem:[%s4642 + $0x78] sm:$0xff]
        %v4659 = vld [vmem:[%s4642 + $0x80] sm:$0xff]
        %v4660 = vld [vmem:[%s4642 + $0x88] sm:$0xff]
        %v4661 = vld [vmem:[%s4642 + $0x90] sm:$0xff]
        %v4662 = vld [vmem:[%s4642 + $0x98] sm:$0xff]
        %v4663 = vld [vmem:[%s4642 + $0xa0] sm:$0xff]
        %v4664 = vld [vmem:[%s4642 + $0xa8] sm:$0xff]
        %v4665 = vld [vmem:[%s4642 + $0xb0] sm:$0xff]
        %v4666 = vld [vmem:[%s4642 + $0xb8] sm:$0xff]
        %v4667 = vld [vmem:[%s4642 + $0xc0] sm:$0xff]
        %v4668 = vld [vmem:[%s4642 + $0xc8] sm:$0xff]
        %v4669 = vld [vmem:[%s4642 + $0xd0] sm:$0xff]
        %v4670 = vld [vmem:[%s4642 + $0xd8] sm:$0xff]
        %v4671 = vld [vmem:[%s4642 + $0xe0] sm:$0xff]
        %v4672 = vld [vmem:[%s4642 + $0xe8] sm:$0xff]
        %v4673 = vld [vmem:[%s4642 + $0xf0] sm:$0xff]
        %v4674 = vld [vmem:[%s4642 + $0xf8] sm:$0xff]
        %v4675 = vld [vmem:[%s4642 + $0x100] sm:$0xff]
        %v4676 = vld [vmem:[%s4642 + $0x108] sm:$0xff]
        %v4677 = vld [vmem:[%s4642 + $0x110] sm:$0xff]
        %v4678 = vld [vmem:[%s4642 + $0x118] sm:$0xff]
        %v4679 = vld [vmem:[%s4642 + $0x120] sm:$0xff]
        %v4680 = vld [vmem:[%s4642 + $0x128] sm:$0xff]
        %v4681 = vld [vmem:[%s4642 + $0x130] sm:$0xff]
        %v4682 = vld [vmem:[%s4642 + $0x138] sm:$0xff]
        %v4683 = vld [vmem:[%s4642 + $0x140] sm:$0xff]
        %v4684 = vld [vmem:[%s4642 + $0x148] sm:$0xff]
        %v4685 = vld [vmem:[%s4642 + $0x150] sm:$0xff]
        %v4686 = vld [vmem:[%s4642 + $0x158] sm:$0xff]
        %v4687 = vld [vmem:[%s4642 + $0x160] sm:$0xff]
        %v4688 = vld [vmem:[%s4642 + $0x168] sm:$0xff]
        %v4689 = vld [vmem:[%s4642 + $0x170] sm:$0xff]
        %v4690 = vld [vmem:[%s4642 + $0x178] sm:$0xff]
        %v4691 = vld [vmem:[%s4642 + $0x180] sm:$0xff]
        %v4692 = vld [vmem:[%s4642 + $0x188] sm:$0xff]
        %v4693 = vld [vmem:[%s4642 + $0x190] sm:$0xff]
        %v4694 = vld [vmem:[%s4642 + $0x198] sm:$0xff]
        %v4695 = vld [vmem:[%s4642 + $0x1a0] sm:$0xff]
        %v4696 = vld [vmem:[%s4642 + $0x1a8] sm:$0xff]
        %v4697 = vld [vmem:[%s4642 + $0x1b0] sm:$0xff]
        %v4698 = vld [vmem:[%s4642 + $0x1b8] sm:$0xff]
        %v4699 = vld [vmem:[%s4642 + $0x1c0] sm:$0xff]
        %v4700 = vld [vmem:[%s4642 + $0x1c8] sm:$0xff]
        %v4701 = vld [vmem:[%s4642 + $0x1d0] sm:$0xff]
        %v4702 = vld [vmem:[%s4642 + $0x1d8] sm:$0xff]
        %v4703 = vld [vmem:[%s4642 + $0x1e0] sm:$0xff]
        %v4704 = vld [vmem:[%s4642 + $0x1e8] sm:$0xff]
        %v4705 = vld [vmem:[%s4642 + $0x1f0] sm:$0xff]
        %v4706 = vld [vmem:[%s4642 + $0x1f8] sm:$0xff]
        %v4707 = vld [vmem:[%s4642 + $0x200] sm:$0xff]
        %v4708 = vld [vmem:[%s4642 + $0x208] sm:$0xff]
        %v4709 = vld [vmem:[%s4642 + $0x210] sm:$0xff]
        %v4710 = vld [vmem:[%s4642 + $0x218] sm:$0xff]
        %v4711 = vld [vmem:[%s4642 + $0x220] sm:$0xff]
        %v4712 = vld [vmem:[%s4642 + $0x228] sm:$0xff]
        %v4713 = vld [vmem:[%s4642 + $0x230] sm:$0xff]
        %v4714 = vld [vmem:[%s4642 + $0x238] sm:$0xff]
        %v4715 = vld [vmem:[%s4642 + $0x240] sm:$0xff]
        %v4716 = vld [vmem:[%s4642 + $0x248] sm:$0xff]
        %v4717 = vld [vmem:[%s4642 + $0x250] sm:$0xff]
        %v4718 = vld [vmem:[%s4642 + $0x258] sm:$0xff]
        %v4719 = vld [vmem:[%s4642 + $0x260] sm:$0xff]
        %v4720 = vld [vmem:[%s4642 + $0x268] sm:$0xff]
        %v4721 = vld [vmem:[%s4642 + $0x270] sm:$0xff]
        %v4722 = vld [vmem:[%s4642 + $0x278] sm:$0xff]
        %v4723 = vld [vmem:[%s4642 + $0x280] sm:$0xff]
        %v4724 = vld [vmem:[%s4642 + $0x288] sm:$0xff]
        %v4725 = vld [vmem:[%s4642 + $0x290] sm:$0xff]
        %v4726 = vld [vmem:[%s4642 + $0x298] sm:$0xff]
        %v4727 = vld [vmem:[%s4642 + $0x2a0] sm:$0xff]
        %v4728 = vld [vmem:[%s4642 + $0x2a8] sm:$0xff]
        %v4729 = vld [vmem:[%s4642 + $0x2b0] sm:$0xff]
        %v4730 = vld [vmem:[%s4642 + $0x2b8] sm:$0xff]
        %v4731 = vld [vmem:[%s4642 + $0x2c0] sm:$0xff]
        %v4732 = vld [vmem:[%s4642 + $0x2c8] sm:$0xff]
        %v4733 = vld [vmem:[%s4642 + $0x2d0] sm:$0xff]
        %v4734 = vld [vmem:[%s4642 + $0x2d8] sm:$0xff]
        %v4735 = vld [vmem:[%s4642 + $0x2e0] sm:$0xff]
        %v4736 = vld [vmem:[%s4642 + $0x2e8] sm:$0xff]
        %v4737 = vld [vmem:[%s4642 + $0x2f0] sm:$0xff]
        %v4738 = vld [vmem:[%s4642 + $0x2f8] sm:$0xff]
        %v4739 = vld [vmem:[%s4642 + $0x300] sm:$0xff]
        %v4740 = vld [vmem:[%s4642 + $0x308] sm:$0xff]
        %v4741 = vld [vmem:[%s4642 + $0x310] sm:$0xff]
        %v4742 = vld [vmem:[%s4642 + $0x318] sm:$0xff]
        %v4743 = vld [vmem:[%s4642 + $0x320] sm:$0xff]
        %v4744 = vld [vmem:[%s4642 + $0x328] sm:$0xff]
        %v4745 = vld [vmem:[%s4642 + $0x330] sm:$0xff]
        %v4746 = vld [vmem:[%s4642 + $0x338] sm:$0xff]
        %v4747 = vld [vmem:[%s4642 + $0x340] sm:$0xff]
        %v4748 = vld [vmem:[%s4642 + $0x348] sm:$0xff]
        %v4749 = vld [vmem:[%s4642 + $0x350] sm:$0xff]
        %v4750 = vld [vmem:[%s4642 + $0x358] sm:$0xff]
        %v4751 = vld [vmem:[%s4642 + $0x360] sm:$0xff]
        %v4752 = vld [vmem:[%s4642 + $0x368] sm:$0xff]
        %v4753 = vld [vmem:[%s4642 + $0x370] sm:$0xff]
        %v4754 = vld [vmem:[%s4642 + $0x378] sm:$0xff]
        %v4755 = vld [vmem:[%s4642 + $0x380] sm:$0xff]
        %v4756 = vld [vmem:[%s4642 + $0x388] sm:$0xff]
        %v4757 = vld [vmem:[%s4642 + $0x390] sm:$0xff]
        %v4758 = vld [vmem:[%s4642 + $0x398] sm:$0xff]
        %v4759 = vld [vmem:[%s4642 + $0x3a0] sm:$0xff]
        %v4760 = vld [vmem:[%s4642 + $0x3a8] sm:$0xff]
        %v4761 = vld [vmem:[%s4642 + $0x3b0] sm:$0xff]
        %v4762 = vld [vmem:[%s4642 + $0x3b8] sm:$0xff]
        %v4763 = vld [vmem:[%s4642 + $0x3c0] sm:$0xff]
        %v4764 = vld [vmem:[%s4642 + $0x3c8] sm:$0xff]
        %v4765 = vld [vmem:[%s4642 + $0x3d0] sm:$0xff]
        %v4766 = vld [vmem:[%s4642 + $0x3d8] sm:$0xff]
        %v4767 = vld [vmem:[%s4642 + $0x3e0] sm:$0xff]
        %v4768 = vld [vmem:[%s4642 + $0x3e8] sm:$0xff]
        %v4769 = vld [vmem:[%s4642 + $0x3f0] sm:$0xff]
        %v4770 = vld [vmem:[%s4642 + $0x3f8] sm:$0xff]
        %v4771 = vld [vmem:[%s4642 + $0x400] sm:$0xff]
        %v4772 = vld [vmem:[%s4642 + $0x408] sm:$0xff]
        %v4773 = vld [vmem:[%s4642 + $0x410] sm:$0xff]
        %v4774 = vld [vmem:[%s4642 + $0x418] sm:$0xff]
        %v4775 = vld [vmem:[%s4642 + $0x420] sm:$0xff]
        %v4776 = vld [vmem:[%s4642 + $0x428] sm:$0xff]
        %v4777 = vld [vmem:[%s4642 + $0x430] sm:$0xff]
        %v4778 = vld [vmem:[%s4642 + $0x438] sm:$0xff]
        %v4779 = vld [vmem:[%s4642 + $0x440] sm:$0xff]
        %v4780 = vld [vmem:[%s4642 + $0x448] sm:$0xff]
        %v4781 = vld [vmem:[%s4642 + $0x450] sm:$0xff]
        %v4782 = vld [vmem:[%s4642 + $0x458] sm:$0xff]
        %v4783 = vld [vmem:[%s4642 + $0x460] sm:$0xff]
        %v4784 = vld [vmem:[%s4642 + $0x468] sm:$0xff]
        %v4785 = vld [vmem:[%s4642 + $0x470] sm:$0xff]
        %v4786 = vld [vmem:[%s4642 + $0x478] sm:$0xff]
        %v4787 = vld [vmem:[%s4642 + $0x480] sm:$0xff]
        %v4788 = vld [vmem:[%s4642 + $0x488] sm:$0xff]
        %v4789 = vld [vmem:[%s4642 + $0x490] sm:$0xff]
        %v4790 = vld [vmem:[%s4642 + $0x498] sm:$0xff]
        %v4791 = vld [vmem:[%s4642 + $0x4a0] sm:$0xff]
        %v4792 = vld [vmem:[%s4642 + $0x4a8] sm:$0xff]
        %v4793 = vld [vmem:[%s4642 + $0x4b0] sm:$0xff]
        %v4794 = vld [vmem:[%s4642 + $0x4b8] sm:$0xff]
        %v4795 = vld [vmem:[%s4642 + $0x4c0] sm:$0xff]
        %v4796 = vld [vmem:[%s4642 + $0x4c8] sm:$0xff]
        %v4797 = vld [vmem:[%s4642 + $0x4d0] sm:$0xff]
        %v4798 = vld [vmem:[%s4642 + $0x4d8] sm:$0xff]
        %v4799 = vld [vmem:[%s4642 + $0x4e0] sm:$0xff]
        %v4800 = vld [vmem:[%s4642 + $0x4e8] sm:$0xff]
        %v4801 = vld [vmem:[%s4642 + $0x4f0] sm:$0xff]
        %v4802 = vld [vmem:[%s4642 + $0x4f8] sm:$0xff]
        %v4803 = vld [vmem:[%s4642 + $0x500] sm:$0xff]
        %v4804 = vld [vmem:[%s4642 + $0x508] sm:$0xff]
        %v4805 = vld [vmem:[%s4642 + $0x510] sm:$0xff]
        %v4806 = vld [vmem:[%s4642 + $0x518] sm:$0xff]
        %v4807 = vld [vmem:[%s4642 + $0x520] sm:$0xff]
        %v4808 = vld [vmem:[%s4642 + $0x528] sm:$0xff]
        %v4809 = vld [vmem:[%s4642 + $0x530] sm:$0xff]
        %v4810 = vld [vmem:[%s4642 + $0x538] sm:$0xff]
        %v4811 = vld [vmem:[%s4642 + $0x540] sm:$0xff]
        %v4812 = vld [vmem:[%s4642 + $0x548] sm:$0xff]
        %v4813 = vld [vmem:[%s4642 + $0x550] sm:$0xff]
        %v4814 = vld [vmem:[%s4642 + $0x558] sm:$0xff]
        %v4815 = vld [vmem:[%s4642 + $0x560] sm:$0xff]
        %v4816 = vld [vmem:[%s4642 + $0x568] sm:$0xff]
        %v4817 = vld [vmem:[%s4642 + $0x570] sm:$0xff]
        %v4818 = vld [vmem:[%s4642 + $0x578] sm:$0xff]
        %v4819 = vld [vmem:[%s4642 + $0x580] sm:$0xff]
        %v4820 = vld [vmem:[%s4642 + $0x588] sm:$0xff]
        %v4821 = vld [vmem:[%s4642 + $0x590] sm:$0xff]
        %v4822 = vld [vmem:[%s4642 + $0x598] sm:$0xff]
        %v4823 = vld [vmem:[%s4642 + $0x5a0] sm:$0xff]
        %v4824 = vld [vmem:[%s4642 + $0x5a8] sm:$0xff]
        %v4825 = vld [vmem:[%s4642 + $0x5b0] sm:$0xff]
        %v4826 = vld [vmem:[%s4642 + $0x5b8] sm:$0xff]
        %v4827 = vld [vmem:[%s4642 + $0x5c0] sm:$0xff]
        %v4828 = vld [vmem:[%s4642 + $0x5c8] sm:$0xff]
        %v4829 = vld [vmem:[%s4642 + $0x5d0] sm:$0xff]
        %v4830 = vld [vmem:[%s4642 + $0x5d8] sm:$0xff]
        %v4831 = vld [vmem:[%s4642 + $0x5e0] sm:$0xff]
        %v4832 = vld [vmem:[%s4642 + $0x5e8] sm:$0xff]
        %v4833 = vld [vmem:[%s4642 + $0x5f0] sm:$0xff]
        %v4834 = vld [vmem:[%s4642 + $0x5f8] sm:$0xff]
        %v4835 = vld [vmem:[%s4642 + $0x600] sm:$0xff]
        %v4836 = vld [vmem:[%s4642 + $0x608] sm:$0xff]
        %v4837 = vld [vmem:[%s4642 + $0x610] sm:$0xff]
        %v4838 = vld [vmem:[%s4642 + $0x618] sm:$0xff]
        %v4839 = vld [vmem:[%s4642 + $0x620] sm:$0xff]
        %v4840 = vld [vmem:[%s4642 + $0x628] sm:$0xff]
        %v4841 = vld [vmem:[%s4642 + $0x630] sm:$0xff]
        %v4842 = vld [vmem:[%s4642 + $0x638] sm:$0xff]
        %v4843 = vld [vmem:[%s4642 + $0x640] sm:$0xff]
        %v4844 = vld [vmem:[%s4642 + $0x648] sm:$0xff]
        %v4845 = vld [vmem:[%s4642 + $0x650] sm:$0xff]
        %v4846 = vld [vmem:[%s4642 + $0x658] sm:$0xff]
        %v4847 = vld [vmem:[%s4642 + $0x660] sm:$0xff]
        %v4848 = vld [vmem:[%s4642 + $0x668] sm:$0xff]
        %v4849 = vld [vmem:[%s4642 + $0x670] sm:$0xff]
        %v4850 = vld [vmem:[%s4642 + $0x678] sm:$0xff]
        %v4851 = vld [vmem:[%s4642 + $0x680] sm:$0xff]
        %v4852 = vld [vmem:[%s4642 + $0x688] sm:$0xff]
        %v4853 = vld [vmem:[%s4642 + $0x690] sm:$0xff]
        %v4854 = vld [vmem:[%s4642 + $0x698] sm:$0xff]
        %v4855 = vld [vmem:[%s4642 + $0x6a0] sm:$0xff]
        %v4856 = vld [vmem:[%s4642 + $0x6a8] sm:$0xff]
        %v4857 = vld [vmem:[%s4642 + $0x6b0] sm:$0xff]
        %v4858 = vld [vmem:[%s4642 + $0x6b8] sm:$0xff]
        %v4859 = vld [vmem:[%s4642 + $0x6c0] sm:$0xff]
        %v4860 = vld [vmem:[%s4642 + $0x6c8] sm:$0xff]
        %v4861 = vld [vmem:[%s4642 + $0x6d0] sm:$0xff]
        %v4862 = vld [vmem:[%s4642 + $0x6d8] sm:$0xff]
        %v4863 = vld [vmem:[%s4642 + $0x6e0] sm:$0xff]
        %v4864 = vld [vmem:[%s4642 + $0x6e8] sm:$0xff]
        %v4865 = vld [vmem:[%s4642 + $0x6f0] sm:$0xff]
        %v4866 = vld [vmem:[%s4642 + $0x6f8] sm:$0xff]
        %v4867 = vld [vmem:[%s4642 + $0x700] sm:$0xff]
        %v4868 = vld [vmem:[%s4642 + $0x708] sm:$0xff]
        %v4869 = vld [vmem:[%s4642 + $0x710] sm:$0xff]
        %v4870 = vld [vmem:[%s4642 + $0x718] sm:$0xff]
        %v4871 = vld [vmem:[%s4642 + $0x720] sm:$0xff]
        %v4872 = vld [vmem:[%s4642 + $0x728] sm:$0xff]
        %v4873 = vld [vmem:[%s4642 + $0x730] sm:$0xff]
        %v4874 = vld [vmem:[%s4642 + $0x738] sm:$0xff]
        %v4875 = vld [vmem:[%s4642 + $0x740] sm:$0xff]
        %v4876 = vld [vmem:[%s4642 + $0x748] sm:$0xff]
        %v4877 = vld [vmem:[%s4642 + $0x750] sm:$0xff]
        %v4878 = vld [vmem:[%s4642 + $0x758] sm:$0xff]
        %v4879 = vld [vmem:[%s4642 + $0x760] sm:$0xff]
        %v4880 = vld [vmem:[%s4642 + $0x768] sm:$0xff]
        %v4881 = vld [vmem:[%s4642 + $0x770] sm:$0xff]
        %v4882 = vld [vmem:[%s4642 + $0x778] sm:$0xff]
        %v4883 = vld [vmem:[%s4642 + $0x780] sm:$0xff]
        %v4884 = vld [vmem:[%s4642 + $0x788] sm:$0xff]
        %v4885 = vld [vmem:[%s4642 + $0x790] sm:$0xff]
        %v4886 = vld [vmem:[%s4642 + $0x798] sm:$0xff]
        %v4887 = vld [vmem:[%s4642 + $0x7a0] sm:$0xff]
        %v4888 = vld [vmem:[%s4642 + $0x7a8] sm:$0xff]
        %v4889 = vld [vmem:[%s4642 + $0x7b0] sm:$0xff]
        %v4890 = vld [vmem:[%s4642 + $0x7b8] sm:$0xff]
        %v4891 = vld [vmem:[%s4642 + $0x7c0] sm:$0xff]
        %v4892 = vld [vmem:[%s4642 + $0x7c8] sm:$0xff]
        %v4893 = vld [vmem:[%s4642 + $0x7d0] sm:$0xff]
        %v4894 = vld [vmem:[%s4642 + $0x7d8] sm:$0xff]
        %v4895 = vld [vmem:[%s4642 + $0x7e0] sm:$0xff]
        %v4896 = vld [vmem:[%s4642 + $0x7e8] sm:$0xff]
        %v4897 = vld [vmem:[%s4642 + $0x7f0] sm:$0xff]
        %v4898 = vld [vmem:[%s4642 + $0x7f8] sm:$0xff]
        %v4899 = vld [vmem:[%s4642 + $0x800] sm:$0xff]
        %v4900 = vld [vmem:[%s4642 + $0x808] sm:$0xff]
        %v4901 = vld [vmem:[%s4642 + $0x810] sm:$0xff]
        %v4902 = vld [vmem:[%s4642 + $0x818] sm:$0xff]
        %v4903 = vld [vmem:[%s4642 + $0x820] sm:$0xff]
        %v4904 = vld [vmem:[%s4642 + $0x828] sm:$0xff]
        %v4905 = vld [vmem:[%s4642 + $0x830] sm:$0xff]
        %v4906 = vld [vmem:[%s4642 + $0x838] sm:$0xff]
        %v4907 = vld [vmem:[%s4642 + $0x840] sm:$0xff]
        %v4908 = vld [vmem:[%s4642 + $0x848] sm:$0xff]
        %v4909 = vld [vmem:[%s4642 + $0x850] sm:$0xff]
        %v4910 = vld [vmem:[%s4642 + $0x858] sm:$0xff]
        %v4911 = vld [vmem:[%s4642 + $0x860] sm:$0xff]
        %v4912 = vld [vmem:[%s4642 + $0x868] sm:$0xff]
        %v4913 = vld [vmem:[%s4642 + $0x870] sm:$0xff]
        %v4914 = vld [vmem:[%s4642 + $0x878] sm:$0xff]
        %4915 = vmatprep.subr.mxu0 0.0
        %4916 = vmatpush1.msra.mxu0 %v4643
        %4917 = vmatprep.subr.mxu0 0.0
        %4918 = vmatpush1.msra.mxu0 %v4644
        %4919 = vmatprep.subr.mxu0 0.0
        %4920 = vmatpush1.msra.mxu0 %v4645
        %4921 = vmatprep.subr.mxu0 0.0
        %4922 = vmatpush1.msra.mxu0 %v4646
        %4923 = vmatprep.subr.mxu0 0.0
        %4924 = vmatpush1.msra.mxu0 %v4647
        %4925 = vmatprep.subr.mxu0 0.0
        %4926 = vmatpush1.msra.mxu0 %v4648
        %4927 = vmatprep.subr.mxu0 0.0
        %4928 = vmatpush1.msra.mxu0 %v4649
        %4929 = vmatprep.subr.mxu0 0.0
        %4930 = vmatpush1.msra.mxu0 %v4650
        %4931 = vmatprep.subr.mxu0 0.0
        %4932 = vmatpush1.msra.mxu0 %v4651
        %4933 = vmatprep.subr.mxu0 0.0
        %4934 = vmatpush1.msra.mxu0 %v4652
        %4935 = vmatprep.subr.mxu0 0.0
        %4936 = vmatpush1.msra.mxu0 %v4653
        %4937 = vmatprep.subr.mxu0 0.0
        %4938 = vmatpush1.msra.mxu0 %v4654
        %4939 = vmatprep.subr.mxu0 0.0
        %4940 = vmatpush1.msra.mxu0 %v4655
        %4941 = vmatprep.subr.mxu0 0.0
        %4942 = vmatpush1.msra.mxu0 %v4656
        %4943 = vmatprep.subr.mxu0 0.0
        %4944 = vmatpush1.msra.mxu0 %v4657
        %4945 = vmatprep.subr.mxu0 0.0
        %4946 = vmatpush1.msra.mxu0 %v4658
        %4947 = vmatprep.subr.mxu0 0.0
        %4948 = vmatpush1.msra.mxu0 %v4659
        %4949 = vmatprep.subr.mxu0 0.0
        %4950 = vmatpush1.msra.mxu0 %v4660
        %4951 = vmatprep.subr.mxu0 0.0
        %4952 = vmatpush1.msra.mxu0 %v4661
        %4953 = vmatprep.subr.mxu0 0.0
        %4954 = vmatpush1.msra.mxu0 %v4662
        %4955 = vmatprep.subr.mxu0 0.0
        %4956 = vmatpush1.msra.mxu0 %v4663
        %4957 = vmatprep.subr.mxu0 0.0
        %4958 = vmatpush1.msra.mxu0 %v4664
        %4959 = vmatprep.subr.mxu0 0.0
        %4960 = vmatpush1.msra.mxu0 %v4665
        %4961 = vmatprep.subr.mxu0 0.0
        %4962 = vmatpush1.msra.mxu0 %v4666
        %4963 = vmatprep.subr.mxu0 0.0
        %4964 = vmatpush1.msra.mxu0 %v4667
        %4965 = vmatprep.subr.mxu0 0.0
        %4966 = vmatpush1.msra.mxu0 %v4668
        %4967 = vmatprep.subr.mxu0 0.0
        %4968 = vmatpush1.msra.mxu0 %v4669
        %4969 = vmatprep.subr.mxu0 0.0
        %4970 = vmatpush1.msra.mxu0 %v4670
        %4971 = vmatprep.subr.mxu0 0.0
        %4972 = vmatpush1.msra.mxu0 %v4671
        %4973 = vmatprep.subr.mxu0 0.0
        %4974 = vmatpush1.msra.mxu0 %v4672
        %4975 = vmatprep.subr.mxu0 0.0
        %4976 = vmatpush1.msra.mxu0 %v4673
        %4977 = vmatprep.subr.mxu0 0.0
        %4978 = vmatpush1.msra.mxu0 %v4674
        %4979 = vmatprep.mubr.f32.mxu0 %v4371
        %4980 = vmatmul.mubr.f32.gmra.mrb[0].mxu0 %v4370
        %v4981 = vpop.f32.mrb[0].mxu0
        %v4982 = vadd.f32 0.0, %v4981
        %v4983 = vpop.f32.mrb[0].mxu0
        %4984 = vmatprep.mubr.f32.mxu0 %v4388
        %4985 = vmatmul.mubr.f32.gmra.mrb[0].mxu0 %v4387
        %v4986 = vpop.f32.mrb[0].mxu0
        %v4987 = vadd.f32 0.0, %v4986
        %v4988 = vpop.f32.mrb[0].mxu0
        %4989 = vmatprep.mubr.f32.mxu0 %v4405
        %4990 = vmatmul.mubr.f32.gmra.mrb[0].mxu0 %v4404
        %v4991 = vpop.f32.mrb[0].mxu0
        %v4992 = vadd.f32 0.0, %v4991
        %v4993 = vpop.f32.mrb[0].mxu0
        %4994 = vmatprep.mubr.f32.mxu0 %v4422
        %4995 = vmatmul.mubr.f32.gmra.mrb[0].mxu0 %v4421
        %v4996 = vpop.f32.mrb[0].mxu0
        %v4997 = vadd.f32 0.0, %v4996
        %v4998 = vpop.f32.mrb[0].mxu0
        %4999 = vmatprep.mubr.f32.mxu0 %v4439
        %5000 = vmatmul.mubr.f32.gmra.mrb[0].mxu0 %v4438
        %v5001 = vpop.f32.mrb[0].mxu0
        %v5002 = vadd.f32 0.0, %v5001
        %v5003 = vpop.f32.mrb[0].mxu0
        %5004 = vmatprep.mubr.f32.mxu0 %v4456
        %5005 = vmatmul.mubr.f32.gmra.mrb[0].mxu0 %v4455
        %v5006 = vpop.f32.mrb[0].mxu0
        %v5007 = vadd.f32 0.0, %v5006
        %v5008 = vpop.f32.mrb[0].mxu0
        %5009 = vmatprep.mubr.f32.mxu0 %v4473
        %5010 = vmatmul.mubr.f32.gmra.mrb[0].mxu0 %v4472
        %v5011 = vpop.f32.mrb[0].mxu0
        %v5012 = vadd.f32 0.0, %v5011
        %v5013 = vpop.f32.mrb[0].mxu0
        %5014 = vmatprep.mubr.f32.mxu0 %v4490
        %5015 = vmatmul.mubr.f32.gmra.mrb[0].mxu0 %v4489
        %v5016 = vpop.f32.mrb[0].mxu0
        %v5017 = vadd.f32 0.0, %v5016
        %v5018 = vpop.f32.mrb[0].mxu0
        %5019 = vmatprep.mubr.f32.mxu0 %v4507
        %5020 = vmatmul.mubr.f32.gmra.mrb[0].mxu0 %v4506
        %v5021 = vpop.f32.mrb[0].mxu0
        %v5022 = vadd.f32 0.0, %v5021
        %v5023 = vpop.f32.mrb[0].mxu0
        %5024 = vmatprep.mubr.f32.mxu0 %v4524
        %5025 = vmatmul.mubr.f32.gmra.mrb[0].mxu0 %v4523
        %v5026 = vpop.f32.mrb[0].mxu0
        %v5027 = vadd.f32 0.0, %v5026
        %v5028 = vpop.f32.mrb[0].mxu0
        %5029 = vmatprep.mubr.f32.mxu0 %v4541
        %5030 = vmatmul.mubr.f32.gmra.mrb[0].mxu0 %v4540
        %v5031 = vpop.f32.mrb[0].mxu0
        %v5032 = vadd.f32 0.0, %v5031
        %v5033 = vpop.f32.mrb[0].mxu0
        %5034 = vmatprep.mubr.f32.mxu0 %v4558
        %5035 = vmatmul.mubr.f32.gmra.mrb[0].mxu0 %v4557
        %v5036 = vpop.f32.mrb[0].mxu0
        %v5037 = vadd.f32 0.0, %v5036
        %v5038 = vpop.f32.mrb[0].mxu0
        %5039 = vmatprep.mubr.f32.mxu0 %v4575
        %5040 = vmatmul.mubr.f32.gmra.mrb[0].mxu0 %v4574
        %v5041 = vpop.f32.mrb[0].mxu0
        %v5042 = vadd.f32 0.0, %v5041
        %v5043 = vpop.f32.mrb[0].mxu0
        %5044 = vmatprep.mubr.f32.mxu0 %v4592
        %5045 = vmatmul.mubr.f32.gmra.mrb[0].mxu0 %v4591
        %v5046 = vpop.f32.mrb[0].mxu0
        %v5047 = vadd.f32 0.0, %v5046
        %v5048 = vpop.f32.mrb[0].mxu0
        %5049 = vmatprep.mubr.f32.mxu0 %v4609
        %5050 = vmatmul.mubr.f32.gmra.mrb[0].mxu0 %v4608
        %v5051 = vpop.f32.mrb[0].mxu0
        %v5052 = vadd.f32 0.0, %v5051
        %v5053 = vpop.f32.mrb[0].mxu0
        %5054 = vmatprep.mubr.f32.mxu0 %v4626
        %5055 = vmatmul.mubr.f32.gmra.mrb[0].mxu0 %v4625
        %v5056 = vpop.f32.mrb[0].mxu0
        %v5057 = vadd.f32 0.0, %v5056
        %v5058 = vpop.f32.mrb[0].mxu0
        %5059 = vdwg.mxu0
        %5060 = vmatprep.subr.mxu0 0.0
        %5061 = vmatpush1.msra.mxu0 %v4675
        %5062 = vmatprep.subr.mxu0 0.0
        %5063 = vmatpush1.msra.mxu0 %v4676
        %5064 = vmatprep.subr.mxu0 0.0
        %5065 = vmatpush1.msra.mxu0 %v4677
        %5066 = vmatprep.subr.mxu0 0.0
        %5067 = vmatpush1.msra.mxu0 %v4678
        %5068 = vmatprep.subr.mxu0 0.0
        %5069 = vmatpush1.msra.mxu0 %v4679
        %5070 = vmatprep.subr.mxu0 0.0
        %5071 = vmatpush1.msra.mxu0 %v4680
        %5072 = vmatprep.subr.mxu0 0.0
        %5073 = vmatpush1.msra.mxu0 %v4681
        %5074 = vmatprep.subr.mxu0 0.0
        %5075 = vmatpush1.msra.mxu0 %v4682
        %5076 = vmatprep.subr.mxu0 0.0
        %5077 = vmatpush1.msra.mxu0 %v4683
        %5078 = vmatprep.subr.mxu0 0.0
        %5079 = vmatpush1.msra.mxu0 %v4684
        %5080 = vmatprep.subr.mxu0 0.0
        %5081 = vmatpush1.msra.mxu0 %v4685
        %5082 = vmatprep.subr.mxu0 0.0
        %5083 = vmatpush1.msra.mxu0 %v4686
        %5084 = vmatprep.subr.mxu0 0.0
        %5085 = vmatpush1.msra.mxu0 %v4687
        %5086 = vmatprep.subr.mxu0 0.0
        %5087 = vmatpush1.msra.mxu0 %v4688
        %5088 = vmatprep.subr.mxu0 0.0
        %5089 = vmatpush1.msra.mxu0 %v4689
        %5090 = vmatprep.subr.mxu0 0.0
        %5091 = vmatpush1.msra.mxu0 %v4690
        %5092 = vmatprep.subr.mxu0 0.0
        %5093 = vmatpush1.msra.mxu0 %v4691
        %5094 = vmatprep.subr.mxu0 0.0
        %5095 = vmatpush1.msra.mxu0 %v4692
        %5096 = vmatprep.subr.mxu0 0.0
        %5097 = vmatpush1.msra.mxu0 %v4693
        %5098 = vmatprep.subr.mxu0 0.0
        %5099 = vmatpush1.msra.mxu0 %v4694
        %5100 = vmatprep.subr.mxu0 0.0
        %5101 = vmatpush1.msra.mxu0 %v4695
        %5102 = vmatprep.subr.mxu0 0.0
        %5103 = vmatpush1.msra.mxu0 %v4696
        %5104 = vmatprep.subr.mxu0 0.0
        %5105 = vmatpush1.msra.mxu0 %v4697
        %5106 = vmatprep.subr.mxu0 0.0
        %5107 = vmatpush1.msra.mxu0 %v4698
        %5108 = vmatprep.subr.mxu0 0.0
        %5109 = vmatpush1.msra.mxu0 %v4699
        %5110 = vmatprep.subr.mxu0 0.0
        %5111 = vmatpush1.msra.mxu0 %v4700
        %5112 = vmatprep.subr.mxu0 0.0
        %5113 = vmatpush1.msra.mxu0 %v4701
        %5114 = vmatprep.subr.mxu0 0.0
        %5115 = vmatpush1.msra.mxu0 %v4702
        %5116 = vmatprep.subr.mxu0 0.0
        %5117 = vmatpush1.msra.mxu0 %v4703
        %5118 = vmatprep.subr.mxu0 0.0
        %5119 = vmatpush1.msra.mxu0 %v4704
        %5120 = vmatprep.subr.mxu0 0.0
        %5121 = vmatpush1.msra.mxu0 %v4705
        %5122 = vmatprep.subr.mxu0 0.0
        %5123 = vmatpush1.msra.mxu0 %v4706
        %5124 = vmatprep.mubr.f32.mxu0 %v4373
        %5125 = vmatmul.mubr.f32.gmra.mrb[0].mxu0 %v4372
        %v5126 = vpop.f32.mrb[0].mxu0
        %v5127 = vadd.f32 %v4982, %v5126
        %v5128 = vpop.f32.mrb[0].mxu0
        %5129 = vmatprep.mubr.f32.mxu0 %v4390
        %5130 = vmatmul.mubr.f32.gmra.mrb[0].mxu0 %v4389
        %v5131 = vpop.f32.mrb[0].mxu0
        %v5132 = vadd.f32 %v4987, %v5131
        %v5133 = vpop.f32.mrb[0].mxu0
        %5134 = vmatprep.mubr.f32.mxu0 %v4407
        %5135 = vmatmul.mubr.f32.gmra.mrb[0].mxu0 %v4406
        %v5136 = vpop.f32.mrb[0].mxu0
        %v5137 = vadd.f32 %v4992, %v5136
        %v5138 = vpop.f32.mrb[0].mxu0
        %5139 = vmatprep.mubr.f32.mxu0 %v4424
        %5140 = vmatmul.mubr.f32.gmra.mrb[0].mxu0 %v4423
        %v5141 = vpop.f32.mrb[0].mxu0
        %v5142 = vadd.f32 %v4997, %v5141
        %v5143 = vpop.f32.mrb[0].mxu0
        %5144 = vmatprep.mubr.f32.mxu0 %v4441
        %5145 = vmatmul.mubr.f32.gmra.mrb[0].mxu0 %v4440
        %v5146 = vpop.f32.mrb[0].mxu0
        %v5147 = vadd.f32 %v5002, %v5146
        %v5148 = vpop.f32.mrb[0].mxu0
        %5149 = vmatprep.mubr.f32.mxu0 %v4458
        %5150 = vmatmul.mubr.f32.gmra.mrb[0].mxu0 %v4457
        %v5151 = vpop.f32.mrb[0].mxu0
        %v5152 = vadd.f32 %v5007, %v5151
        %v5153 = vpop.f32.mrb[0].mxu0
        %5154 = vmatprep.mubr.f32.mxu0 %v4475
        %5155 = vmatmul.mubr.f32.gmra.mrb[0].mxu0 %v4474
        %v5156 = vpop.f32.mrb[0].mxu0
        %v5157 = vadd.f32 %v5012, %v5156
        %v5158 = vpop.f32.mrb[0].mxu0
        %5159 = vmatprep.mubr.f32.mxu0 %v4492
        %5160 = vmatmul.mubr.f32.gmra.mrb[0].mxu0 %v4491
        %v5161 = vpop.f32.mrb[0].mxu0
        %v5162 = vadd.f32 %v5017, %v5161
        %v5163 = vpop.f32.mrb[0].mxu0
        %5164 = vmatprep.mubr.f32.mxu0 %v4509
        %5165 = vmatmul.mubr.f32.gmra.mrb[0].mxu0 %v4508
        %v5166 = vpop.f32.mrb[0].mxu0
        %v5167 = vadd.f32 %v5022, %v5166
        %v5168 = vpop.f32.mrb[0].mxu0
        %5169 = vmatprep.mubr.f32.mxu0 %v4526
        %5170 = vmatmul.mubr.f32.gmra.mrb[0].mxu0 %v4525
        %v5171 = vpop.f32.mrb[0].mxu0
        %v5172 = vadd.f32 %v5027, %v5171
        %v5173 = vpop.f32.mrb[0].mxu0
        %5174 = vmatprep.mubr.f32.mxu0 %v4543
        %5175 = vmatmul.mubr.f32.gmra.mrb[0].mxu0 %v4542
        %v5176 = vpop.f32.mrb[0].mxu0
        %v5177 = vadd.f32 %v5032, %v5176
        %v5178 = vpop.f32.mrb[0].mxu0
        %5179 = vmatprep.mubr.f32.mxu0 %v4560
        %5180 = vmatmul.mubr.f32.gmra.mrb[0].mxu0 %v4559
        %v5181 = vpop.f32.mrb[0].mxu0
        %v5182 = vadd.f32 %v5037, %v5181
        %v5183 = vpop.f32.mrb[0].mxu0
        %5184 = vmatprep.mubr.f32.mxu0 %v4577
        %5185 = vmatmul.mubr.f32.gmra.mrb[0].mxu0 %v4576
        %v5186 = vpop.f32.mrb[0].mxu0
        %v5187 = vadd.f32 %v5042, %v5186
        %v5188 = vpop.f32.mrb[0].mxu0
        %5189 = vmatprep.mubr.f32.mxu0 %v4594
        %5190 = vmatmul.mubr.f32.gmra.mrb[0].mxu0 %v4593
        %v5191 = vpop.f32.mrb[0].mxu0
        %v5192 = vadd.f32 %v5047, %v5191
        %v5193 = vpop.f32.mrb[0].mxu0
        %5194 = vmatprep.mubr.f32.mxu0 %v4611
        %5195 = vmatmul.mubr.f32.gmra.mrb[0].mxu0 %v4610
        %v5196 = vpop.f32.mrb[0].mxu0
        %v5197 = vadd.f32 %v5052, %v5196
        %v5198 = vpop.f32.mrb[0].mxu0
        %5199 = vmatprep.mubr.f32.mxu0 %v4628
        %5200 = vmatmul.mubr.f32.gmra.mrb[0].mxu0 %v4627
        %v5201 = vpop.f32.mrb[0].mxu0
        %v5202 = vadd.f32 %v5057, %v5201
        %v5203 = vpop.f32.mrb[0].mxu0
        %5204 = vdwg.mxu0
        %5205 = vmatprep.subr.mxu0 0.0
        %5206 = vmatpush1.msra.mxu0 %v4707
        %5207 = vmatprep.subr.mxu0 0.0
        %5208 = vmatpush1.msra.mxu0 %v4708
        %5209 = vmatprep.subr.mxu0 0.0
        %5210 = vmatpush1.msra.mxu0 %v4709
        %5211 = vmatprep.subr.mxu0 0.0
        %5212 = vmatpush1.msra.mxu0 %v4710
        %5213 = vmatprep.subr.mxu0 0.0
        %5214 = vmatpush1.msra.mxu0 %v4711
        %5215 = vmatprep.subr.mxu0 0.0
        %5216 = vmatpush1.msra.mxu0 %v4712
        %5217 = vmatprep.subr.mxu0 0.0
        %5218 = vmatpush1.msra.mxu0 %v4713
        %5219 = vmatprep.subr.mxu0 0.0
        %5220 = vmatpush1.msra.mxu0 %v4714
        %5221 = vmatprep.subr.mxu0 0.0
        %5222 = vmatpush1.msra.mxu0 %v4715
        %5223 = vmatprep.subr.mxu0 0.0
        %5224 = vmatpush1.msra.mxu0 %v4716
        %5225 = vmatprep.subr.mxu0 0.0
        %5226 = vmatpush1.msra.mxu0 %v4717
        %5227 = vmatprep.subr.mxu0 0.0
        %5228 = vmatpush1.msra.mxu0 %v4718
        %5229 = vmatprep.subr.mxu0 0.0
        %5230 = vmatpush1.msra.mxu0 %v4719
        %5231 = vmatprep.subr.mxu0 0.0
        %5232 = vmatpush1.msra.mxu0 %v4720
        %5233 = vmatprep.subr.mxu0 0.0
        %5234 = vmatpush1.msra.mxu0 %v4721
        %5235 = vmatprep.subr.mxu0 0.0
        %5236 = vmatpush1.msra.mxu0 %v4722
        %5237 = vmatprep.subr.mxu0 0.0
        %5238 = vmatpush1.msra.mxu0 %v4723
        %5239 = vmatprep.subr.mxu0 0.0
        %5240 = vmatpush1.msra.mxu0 %v4724
        %5241 = vmatprep.subr.mxu0 0.0
        %5242 = vmatpush1.msra.mxu0 %v4725
        %5243 = vmatprep.subr.mxu0 0.0
        %5244 = vmatpush1.msra.mxu0 %v4726
        %5245 = vmatprep.subr.mxu0 0.0
        %5246 = vmatpush1.msra.mxu0 %v4727
        %5247 = vmatprep.subr.mxu0 0.0
        %5248 = vmatpush1.msra.mxu0 %v4728
        %5249 = vmatprep.subr.mxu0 0.0
        %5250 = vmatpush1.msra.mxu0 %v4729
        %5251 = vmatprep.subr.mxu0 0.0
        %5252 = vmatpush1.msra.mxu0 %v4730
        %5253 = vmatprep.subr.mxu0 0.0
        %5254 = vmatpush1.msra.mxu0 %v4731
        %5255 = vmatprep.subr.mxu0 0.0
        %5256 = vmatpush1.msra.mxu0 %v4732
        %5257 = vmatprep.subr.mxu0 0.0
        %5258 = vmatpush1.msra.mxu0 %v4733
        %5259 = vmatprep.subr.mxu0 0.0
        %5260 = vmatpush1.msra.mxu0 %v4734
        %5261 = vmatprep.subr.mxu0 0.0
        %5262 = vmatpush1.msra.mxu0 %v4735
        %5263 = vmatprep.subr.mxu0 0.0
        %5264 = vmatpush1.msra.mxu0 %v4736
        %5265 = vmatprep.subr.mxu0 0.0
        %5266 = vmatpush1.msra.mxu0 %v4737
        %5267 = vmatprep.subr.mxu0 0.0
        %5268 = vmatpush1.msra.mxu0 %v4738
        %5269 = vmatprep.mubr.f32.mxu0 %v4375
        %5270 = vmatmul.mubr.f32.gmra.mrb[0].mxu0 %v4374
        %v5271 = vpop.f32.mrb[0].mxu0
        %v5272 = vadd.f32 %v5127, %v5271
        %v5273 = vpop.f32.mrb[0].mxu0
        %5274 = vmatprep.mubr.f32.mxu0 %v4392
        %5275 = vmatmul.mubr.f32.gmra.mrb[0].mxu0 %v4391
        %v5276 = vpop.f32.mrb[0].mxu0
        %v5277 = vadd.f32 %v5132, %v5276
        %v5278 = vpop.f32.mrb[0].mxu0
        %5279 = vmatprep.mubr.f32.mxu0 %v4409
        %5280 = vmatmul.mubr.f32.gmra.mrb[0].mxu0 %v4408
        %v5281 = vpop.f32.mrb[0].mxu0
        %v5282 = vadd.f32 %v5137, %v5281
        %v5283 = vpop.f32.mrb[0].mxu0
        %5284 = vmatprep.mubr.f32.mxu0 %v4426
        %5285 = vmatmul.mubr.f32.gmra.mrb[0].mxu0 %v4425
        %v5286 = vpop.f32.mrb[0].mxu0
        %v5287 = vadd.f32 %v5142, %v5286
        %v5288 = vpop.f32.mrb[0].mxu0
        %5289 = vmatprep.mubr.f32.mxu0 %v4443
        %5290 = vmatmul.mubr.f32.gmra.mrb[0].mxu0 %v4442
        %v5291 = vpop.f32.mrb[0].mxu0
        %v5292 = vadd.f32 %v5147, %v5291
        %v5293 = vpop.f32.mrb[0].mxu0
        %5294 = vmatprep.mubr.f32.mxu0 %v4460
        %5295 = vmatmul.mubr.f32.gmra.mrb[0].mxu0 %v4459
        %v5296 = vpop.f32.mrb[0].mxu0
        %v5297 = vadd.f32 %v5152, %v5296
        %v5298 = vpop.f32.mrb[0].mxu0
        %5299 = vmatprep.mubr.f32.mxu0 %v4477
        %5300 = vmatmul.mubr.f32.gmra.mrb[0].mxu0 %v4476
        %v5301 = vpop.f32.mrb[0].mxu0
        %v5302 = vadd.f32 %v5157, %v5301
        %v5303 = vpop.f32.mrb[0].mxu0
        %5304 = vmatprep.mubr.f32.mxu0 %v4494
        %5305 = vmatmul.mubr.f32.gmra.mrb[0].mxu0 %v4493
        %v5306 = vpop.f32.mrb[0].mxu0
        %v5307 = vadd.f32 %v5162, %v5306
        %v5308 = vpop.f32.mrb[0].mxu0
        %5309 = vmatprep.mubr.f32.mxu0 %v4511
        %5310 = vmatmul.mubr.f32.gmra.mrb[0].mxu0 %v4510
        %v5311 = vpop.f32.mrb[0].mxu0
        %v5312 = vadd.f32 %v5167, %v5311
        %v5313 = vpop.f32.mrb[0].mxu0
        %5314 = vmatprep.mubr.f32.mxu0 %v4528
        %5315 = vmatmul.mubr.f32.gmra.mrb[0].mxu0 %v4527
        %v5316 = vpop.f32.mrb[0].mxu0
        %v5317 = vadd.f32 %v5172, %v5316
        %v5318 = vpop.f32.mrb[0].mxu0
        %5319 = vmatprep.mubr.f32.mxu0 %v4545
        %5320 = vmatmul.mubr.f32.gmra.mrb[0].mxu0 %v4544
        %v5321 = vpop.f32.mrb[0].mxu0
        %v5322 = vadd.f32 %v5177, %v5321
        %v5323 = vpop.f32.mrb[0].mxu0
        %5324 = vmatprep.mubr.f32.mxu0 %v4562
        %5325 = vmatmul.mubr.f32.gmra.mrb[0].mxu0 %v4561
        %v5326 = vpop.f32.mrb[0].mxu0
        %v5327 = vadd.f32 %v5182, %v5326
        %v5328 = vpop.f32.mrb[0].mxu0
        %5329 = vmatprep.mubr.f32.mxu0 %v4579
        %5330 = vmatmul.mubr.f32.gmra.mrb[0].mxu0 %v4578
        %v5331 = vpop.f32.mrb[0].mxu0
        %v5332 = vadd.f32 %v5187, %v5331
        %v5333 = vpop.f32.mrb[0].mxu0
        %5334 = vmatprep.mubr.f32.mxu0 %v4596
        %5335 = vmatmul.mubr.f32.gmra.mrb[0].mxu0 %v4595
        %v5336 = vpop.f32.mrb[0].mxu0
        %v5337 = vadd.f32 %v5192, %v5336
        %v5338 = vpop.f32.mrb[0].mxu0
        %5339 = vmatprep.mubr.f32.mxu0 %v4613
        %5340 = vmatmul.mubr.f32.gmra.mrb[0].mxu0 %v4612
        %v5341 = vpop.f32.mrb[0].mxu0
        %v5342 = vadd.f32 %v5197, %v5341
        %v5343 = vpop.f32.mrb[0].mxu0
        %5344 = vmatprep.mubr.f32.mxu0 %v4630
        %5345 = vmatmul.mubr.f32.gmra.mrb[0].mxu0 %v4629
        %v5346 = vpop.f32.mrb[0].mxu0
        %v5347 = vadd.f32 %v5202, %v5346
        %v5348 = vpop.f32.mrb[0].mxu0
        %5349 = vdwg.mxu0
        %5350 = vmatprep.subr.mxu0 0.0
        %5351 = vmatpush1.msra.mxu0 %v4739
        %5352 = vmatprep.subr.mxu0 0.0
        %5353 = vmatpush1.msra.mxu0 %v4740
        %5354 = vmatprep.subr.mxu0 0.0
        %5355 = vmatpush1.msra.mxu0 %v4741
        %5356 = vmatprep.subr.mxu0 0.0
        %5357 = vmatpush1.msra.mxu0 %v4742
        %5358 = vmatprep.subr.mxu0 0.0
        %5359 = vmatpush1.msra.mxu0 %v4743
        %5360 = vmatprep.subr.mxu0 0.0
        %5361 = vmatpush1.msra.mxu0 %v4744
        %5362 = vmatprep.subr.mxu0 0.0
        %5363 = vmatpush1.msra.mxu0 %v4745
        %5364 = vmatprep.subr.mxu0 0.0
        %5365 = vmatpush1.msra.mxu0 %v4746
        %5366 = vmatprep.subr.mxu0 0.0
        %5367 = vmatpush1.msra.mxu0 %v4747
        %5368 = vmatprep.subr.mxu0 0.0
        %5369 = vmatpush1.msra.mxu0 %v4748
        %5370 = vmatprep.subr.mxu0 0.0
        %5371 = vmatpush1.msra.mxu0 %v4749
        %5372 = vmatprep.subr.mxu0 0.0
        %5373 = vmatpush1.msra.mxu0 %v4750
        %5374 = vmatprep.subr.mxu0 0.0
        %5375 = vmatpush1.msra.mxu0 %v4751
        %5376 = vmatprep.subr.mxu0 0.0
        %5377 = vmatpush1.msra.mxu0 %v4752
        %5378 = vmatprep.subr.mxu0 0.0
        %5379 = vmatpush1.msra.mxu0 %v4753
        %5380 = vmatprep.subr.mxu0 0.0
        %5381 = vmatpush1.msra.mxu0 %v4754
        %5382 = vmatprep.subr.mxu0 0.0
        %5383 = vmatpush1.msra.mxu0 %v4755
        %5384 = vmatprep.subr.mxu0 0.0
        %5385 = vmatpush1.msra.mxu0 %v4756
        %5386 = vmatprep.subr.mxu0 0.0
        %5387 = vmatpush1.msra.mxu0 %v4757
        %5388 = vmatprep.subr.mxu0 0.0
        %5389 = vmatpush1.msra.mxu0 %v4758
        %5390 = vmatprep.subr.mxu0 0.0
        %5391 = vmatpush1.msra.mxu0 %v4759
        %5392 = vmatprep.subr.mxu0 0.0
        %5393 = vmatpush1.msra.mxu0 %v4760
        %5394 = vmatprep.subr.mxu0 0.0
        %5395 = vmatpush1.msra.mxu0 %v4761
        %5396 = vmatprep.subr.mxu0 0.0
        %5397 = vmatpush1.msra.mxu0 %v4762
        %5398 = vmatprep.subr.mxu0 0.0
        %5399 = vmatpush1.msra.mxu0 %v4763
        %5400 = vmatprep.subr.mxu0 0.0
        %5401 = vmatpush1.msra.mxu0 %v4764
        %5402 = vmatprep.subr.mxu0 0.0
        %5403 = vmatpush1.msra.mxu0 %v4765
        %5404 = vmatprep.subr.mxu0 0.0
        %5405 = vmatpush1.msra.mxu0 %v4766
        %5406 = vmatprep.subr.mxu0 0.0
        %5407 = vmatpush1.msra.mxu0 %v4767
        %5408 = vmatprep.subr.mxu0 0.0
        %5409 = vmatpush1.msra.mxu0 %v4768
        %5410 = vmatprep.subr.mxu0 0.0
        %5411 = vmatpush1.msra.mxu0 %v4769
        %5412 = vmatprep.subr.mxu0 0.0
        %5413 = vmatpush1.msra.mxu0 %v4770
        %5414 = vmatprep.mubr.f32.mxu0 %v4377
        %5415 = vmatmul.mubr.f32.gmra.mrb[0].mxu0 %v4376
        %v5416 = vpop.f32.mrb[0].mxu0
        %v5417 = vadd.f32 %v5272, %v5416
        %v5418 = vpop.f32.mrb[0].mxu0
        %5419 = vmatprep.mubr.f32.mxu0 %v4394
        %5420 = vmatmul.mubr.f32.gmra.mrb[0].mxu0 %v4393
        %v5421 = vpop.f32.mrb[0].mxu0
        %v5422 = vadd.f32 %v5277, %v5421
        %v5423 = vpop.f32.mrb[0].mxu0
        %5424 = vmatprep.mubr.f32.mxu0 %v4411
        %5425 = vmatmul.mubr.f32.gmra.mrb[0].mxu0 %v4410
        %v5426 = vpop.f32.mrb[0].mxu0
        %v5427 = vadd.f32 %v5282, %v5426
        %v5428 = vpop.f32.mrb[0].mxu0
        %5429 = vmatprep.mubr.f32.mxu0 %v4428
        %5430 = vmatmul.mubr.f32.gmra.mrb[0].mxu0 %v4427
        %v5431 = vpop.f32.mrb[0].mxu0
        %v5432 = vadd.f32 %v5287, %v5431
        %v5433 = vpop.f32.mrb[0].mxu0
        %5434 = vmatprep.mubr.f32.mxu0 %v4445
        %5435 = vmatmul.mubr.f32.gmra.mrb[0].mxu0 %v4444
        %v5436 = vpop.f32.mrb[0].mxu0
        %v5437 = vadd.f32 %v5292, %v5436
        %v5438 = vpop.f32.mrb[0].mxu0
        %5439 = vmatprep.mubr.f32.mxu0 %v4462
        %5440 = vmatmul.mubr.f32.gmra.mrb[0].mxu0 %v4461
        %v5441 = vpop.f32.mrb[0].mxu0
        %v5442 = vadd.f32 %v5297, %v5441
        %v5443 = vpop.f32.mrb[0].mxu0
        %5444 = vmatprep.mubr.f32.mxu0 %v4479
        %5445 = vmatmul.mubr.f32.gmra.mrb[0].mxu0 %v4478
        %v5446 = vpop.f32.mrb[0].mxu0
        %v5447 = vadd.f32 %v5302, %v5446
        %v5448 = vpop.f32.mrb[0].mxu0
        %5449 = vmatprep.mubr.f32.mxu0 %v4496
        %5450 = vmatmul.mubr.f32.gmra.mrb[0].mxu0 %v4495
        %v5451 = vpop.f32.mrb[0].mxu0
        %v5452 = vadd.f32 %v5307, %v5451
        %v5453 = vpop.f32.mrb[0].mxu0
        %5454 = vmatprep.mubr.f32.mxu0 %v4513
        %5455 = vmatmul.mubr.f32.gmra.mrb[0].mxu0 %v4512
        %v5456 = vpop.f32.mrb[0].mxu0
        %v5457 = vadd.f32 %v5312, %v5456
        %v5458 = vpop.f32.mrb[0].mxu0
        %5459 = vmatprep.mubr.f32.mxu0 %v4530
        %5460 = vmatmul.mubr.f32.gmra.mrb[0].mxu0 %v4529
        %v5461 = vpop.f32.mrb[0].mxu0
        %v5462 = vadd.f32 %v5317, %v5461
        %v5463 = vpop.f32.mrb[0].mxu0
        %5464 = vmatprep.mubr.f32.mxu0 %v4547
        %5465 = vmatmul.mubr.f32.gmra.mrb[0].mxu0 %v4546
        %v5466 = vpop.f32.mrb[0].mxu0
        %v5467 = vadd.f32 %v5322, %v5466
        %v5468 = vpop.f32.mrb[0].mxu0
        %5469 = vmatprep.mubr.f32.mxu0 %v4564
        %5470 = vmatmul.mubr.f32.gmra.mrb[0].mxu0 %v4563
        %v5471 = vpop.f32.mrb[0].mxu0
        %v5472 = vadd.f32 %v5327, %v5471
        %v5473 = vpop.f32.mrb[0].mxu0
        %5474 = vmatprep.mubr.f32.mxu0 %v4581
        %5475 = vmatmul.mubr.f32.gmra.mrb[0].mxu0 %v4580
        %v5476 = vpop.f32.mrb[0].mxu0
        %v5477 = vadd.f32 %v5332, %v5476
        %v5478 = vpop.f32.mrb[0].mxu0
        %5479 = vmatprep.mubr.f32.mxu0 %v4598
        %5480 = vmatmul.mubr.f32.gmra.mrb[0].mxu0 %v4597
        %v5481 = vpop.f32.mrb[0].mxu0
        %v5482 = vadd.f32 %v5337, %v5481
        %v5483 = vpop.f32.mrb[0].mxu0
        %5484 = vmatprep.mubr.f32.mxu0 %v4615
        %5485 = vmatmul.mubr.f32.gmra.mrb[0].mxu0 %v4614
        %v5486 = vpop.f32.mrb[0].mxu0
        %v5487 = vadd.f32 %v5342, %v5486
        %v5488 = vpop.f32.mrb[0].mxu0
        %5489 = vmatprep.mubr.f32.mxu0 %v4632
        %5490 = vmatmul.mubr.f32.gmra.mrb[0].mxu0 %v4631
        %v5491 = vpop.f32.mrb[0].mxu0
        %v5492 = vadd.f32 %v5347, %v5491
        %v5493 = vpop.f32.mrb[0].mxu0
        %5494 = vdwg.mxu0
        %5495 = vmatprep.subr.mxu0 0.0
        %5496 = vmatpush1.msra.mxu0 %v4771
        %5497 = vmatprep.subr.mxu0 0.0
        %5498 = vmatpush1.msra.mxu0 %v4772
        %5499 = vmatprep.subr.mxu0 0.0
        %5500 = vmatpush1.msra.mxu0 %v4773
        %5501 = vmatprep.subr.mxu0 0.0
        %5502 = vmatpush1.msra.mxu0 %v4774
        %5503 = vmatprep.subr.mxu0 0.0
        %5504 = vmatpush1.msra.mxu0 %v4775
        %5505 = vmatprep.subr.mxu0 0.0
        %5506 = vmatpush1.msra.mxu0 %v4776
        %5507 = vmatprep.subr.mxu0 0.0
        %5508 = vmatpush1.msra.mxu0 %v4777
        %5509 = vmatprep.subr.mxu0 0.0
        %5510 = vmatpush1.msra.mxu0 %v4778
        %5511 = vmatprep.subr.mxu0 0.0
        %5512 = vmatpush1.msra.mxu0 %v4779
        %5513 = vmatprep.subr.mxu0 0.0
        %5514 = vmatpush1.msra.mxu0 %v4780
        %5515 = vmatprep.subr.mxu0 0.0
        %5516 = vmatpush1.msra.mxu0 %v4781
        %5517 = vmatprep.subr.mxu0 0.0
        %5518 = vmatpush1.msra.mxu0 %v4782
        %5519 = vmatprep.subr.mxu0 0.0
        %5520 = vmatpush1.msra.mxu0 %v4783
        %5521 = vmatprep.subr.mxu0 0.0
        %5522 = vmatpush1.msra.mxu0 %v4784
        %5523 = vmatprep.subr.mxu0 0.0
        %5524 = vmatpush1.msra.mxu0 %v4785
        %5525 = vmatprep.subr.mxu0 0.0
        %5526 = vmatpush1.msra.mxu0 %v4786
        %5527 = vmatprep.subr.mxu0 0.0
        %5528 = vmatpush1.msra.mxu0 %v4787
        %5529 = vmatprep.subr.mxu0 0.0
        %5530 = vmatpush1.msra.mxu0 %v4788
        %5531 = vmatprep.subr.mxu0 0.0
        %5532 = vmatpush1.msra.mxu0 %v4789
        %5533 = vmatprep.subr.mxu0 0.0
        %5534 = vmatpush1.msra.mxu0 %v4790
        %5535 = vmatprep.subr.mxu0 0.0
        %5536 = vmatpush1.msra.mxu0 %v4791
        %5537 = vmatprep.subr.mxu0 0.0
        %5538 = vmatpush1.msra.mxu0 %v4792
        %5539 = vmatprep.subr.mxu0 0.0
        %5540 = vmatpush1.msra.mxu0 %v4793
        %5541 = vmatprep.subr.mxu0 0.0
        %5542 = vmatpush1.msra.mxu0 %v4794
        %5543 = vmatprep.subr.mxu0 0.0
        %5544 = vmatpush1.msra.mxu0 %v4795
        %5545 = vmatprep.subr.mxu0 0.0
        %5546 = vmatpush1.msra.mxu0 %v4796
        %5547 = vmatprep.subr.mxu0 0.0
        %5548 = vmatpush1.msra.mxu0 %v4797
        %5549 = vmatprep.subr.mxu0 0.0
        %5550 = vmatpush1.msra.mxu0 %v4798
        %5551 = vmatprep.subr.mxu0 0.0
        %5552 = vmatpush1.msra.mxu0 %v4799
        %5553 = vmatprep.subr.mxu0 0.0
        %5554 = vmatpush1.msra.mxu0 %v4800
        %5555 = vmatprep.subr.mxu0 0.0
        %5556 = vmatpush1.msra.mxu0 %v4801
        %5557 = vmatprep.subr.mxu0 0.0
        %5558 = vmatpush1.msra.mxu0 %v4802
        %5559 = vmatprep.mubr.f32.mxu0 %v4379
        %5560 = vmatmul.mubr.f32.gmra.mrb[0].mxu0 %v4378
        %v5561 = vpop.f32.mrb[0].mxu0
        %v5562 = vadd.f32 %v5417, %v5561
        %v5563 = vpop.f32.mrb[0].mxu0
        %5564 = vmatprep.mubr.f32.mxu0 %v4396
        %5565 = vmatmul.mubr.f32.gmra.mrb[0].mxu0 %v4395
        %v5566 = vpop.f32.mrb[0].mxu0
        %v5567 = vadd.f32 %v5422, %v5566
        %v5568 = vpop.f32.mrb[0].mxu0
        %5569 = vmatprep.mubr.f32.mxu0 %v4413
        %5570 = vmatmul.mubr.f32.gmra.mrb[0].mxu0 %v4412
        %v5571 = vpop.f32.mrb[0].mxu0
        %v5572 = vadd.f32 %v5427, %v5571
        %v5573 = vpop.f32.mrb[0].mxu0
        %5574 = vmatprep.mubr.f32.mxu0 %v4430
        %5575 = vmatmul.mubr.f32.gmra.mrb[0].mxu0 %v4429
        %v5576 = vpop.f32.mrb[0].mxu0
        %v5577 = vadd.f32 %v5432, %v5576
        %v5578 = vpop.f32.mrb[0].mxu0
        %5579 = vmatprep.mubr.f32.mxu0 %v4447
        %5580 = vmatmul.mubr.f32.gmra.mrb[0].mxu0 %v4446
        %v5581 = vpop.f32.mrb[0].mxu0
        %v5582 = vadd.f32 %v5437, %v5581
        %v5583 = vpop.f32.mrb[0].mxu0
        %5584 = vmatprep.mubr.f32.mxu0 %v4464
        %5585 = vmatmul.mubr.f32.gmra.mrb[0].mxu0 %v4463
        %v5586 = vpop.f32.mrb[0].mxu0
        %v5587 = vadd.f32 %v5442, %v5586
        %v5588 = vpop.f32.mrb[0].mxu0
        %5589 = vmatprep.mubr.f32.mxu0 %v4481
        %5590 = vmatmul.mubr.f32.gmra.mrb[0].mxu0 %v4480
        %v5591 = vpop.f32.mrb[0].mxu0
        %v5592 = vadd.f32 %v5447, %v5591
        %v5593 = vpop.f32.mrb[0].mxu0
        %5594 = vmatprep.mubr.f32.mxu0 %v4498
        %5595 = vmatmul.mubr.f32.gmra.mrb[0].mxu0 %v4497
        %v5596 = vpop.f32.mrb[0].mxu0
        %v5597 = vadd.f32 %v5452, %v5596
        %v5598 = vpop.f32.mrb[0].mxu0
        %5599 = vmatprep.mubr.f32.mxu0 %v4515
        %5600 = vmatmul.mubr.f32.gmra.mrb[0].mxu0 %v4514
        %v5601 = vpop.f32.mrb[0].mxu0
        %v5602 = vadd.f32 %v5457, %v5601
        %v5603 = vpop.f32.mrb[0].mxu0
        %5604 = vmatprep.mubr.f32.mxu0 %v4532
        %5605 = vmatmul.mubr.f32.gmra.mrb[0].mxu0 %v4531
        %v5606 = vpop.f32.mrb[0].mxu0
        %v5607 = vadd.f32 %v5462, %v5606
        %v5608 = vpop.f32.mrb[0].mxu0
        %5609 = vmatprep.mubr.f32.mxu0 %v4549
        %5610 = vmatmul.mubr.f32.gmra.mrb[0].mxu0 %v4548
        %v5611 = vpop.f32.mrb[0].mxu0
        %v5612 = vadd.f32 %v5467, %v5611
        %v5613 = vpop.f32.mrb[0].mxu0
        %5614 = vmatprep.mubr.f32.mxu0 %v4566
        %5615 = vmatmul.mubr.f32.gmra.mrb[0].mxu0 %v4565
        %v5616 = vpop.f32.mrb[0].mxu0
        %v5617 = vadd.f32 %v5472, %v5616
        %v5618 = vpop.f32.mrb[0].mxu0
        %5619 = vmatprep.mubr.f32.mxu0 %v4583
        %5620 = vmatmul.mubr.f32.gmra.mrb[0].mxu0 %v4582
        %v5621 = vpop.f32.mrb[0].mxu0
        %v5622 = vadd.f32 %v5477, %v5621
        %v5623 = vpop.f32.mrb[0].mxu0
        %5624 = vmatprep.mubr.f32.mxu0 %v4600
        %5625 = vmatmul.mubr.f32.gmra.mrb[0].mxu0 %v4599
        %v5626 = vpop.f32.mrb[0].mxu0
        %v5627 = vadd.f32 %v5482, %v5626
        %v5628 = vpop.f32.mrb[0].mxu0
        %5629 = vmatprep.mubr.f32.mxu0 %v4617
        %5630 = vmatmul.mubr.f32.gmra.mrb[0].mxu0 %v4616
        %v5631 = vpop.f32.mrb[0].mxu0
        %v5632 = vadd.f32 %v5487, %v5631
        %v5633 = vpop.f32.mrb[0].mxu0
        %5634 = vmatprep.mubr.f32.mxu0 %v4634
        %5635 = vmatmul.mubr.f32.gmra.mrb[0].mxu0 %v4633
        %v5636 = vpop.f32.mrb[0].mxu0
        %v5637 = vadd.f32 %v5492, %v5636
        %v5638 = vpop.f32.mrb[0].mxu0
        %5639 = vdwg.mxu0
        %5640 = vmatprep.subr.mxu0 0.0
        %5641 = vmatpush1.msra.mxu0 %v4803
        %5642 = vmatprep.subr.mxu0 0.0
        %5643 = vmatpush1.msra.mxu0 %v4804
        %5644 = vmatprep.subr.mxu0 0.0
        %5645 = vmatpush1.msra.mxu0 %v4805
        %5646 = vmatprep.subr.mxu0 0.0
        %5647 = vmatpush1.msra.mxu0 %v4806
        %5648 = vmatprep.subr.mxu0 0.0
        %5649 = vmatpush1.msra.mxu0 %v4807
        %5650 = vmatprep.subr.mxu0 0.0
        %5651 = vmatpush1.msra.mxu0 %v4808
        %5652 = vmatprep.subr.mxu0 0.0
        %5653 = vmatpush1.msra.mxu0 %v4809
        %5654 = vmatprep.subr.mxu0 0.0
        %5655 = vmatpush1.msra.mxu0 %v4810
        %5656 = vmatprep.subr.mxu0 0.0
        %5657 = vmatpush1.msra.mxu0 %v4811
        %5658 = vmatprep.subr.mxu0 0.0
        %5659 = vmatpush1.msra.mxu0 %v4812
        %5660 = vmatprep.subr.mxu0 0.0
        %5661 = vmatpush1.msra.mxu0 %v4813
        %5662 = vmatprep.subr.mxu0 0.0
        %5663 = vmatpush1.msra.mxu0 %v4814
        %5664 = vmatprep.subr.mxu0 0.0
        %5665 = vmatpush1.msra.mxu0 %v4815
        %5666 = vmatprep.subr.mxu0 0.0
        %5667 = vmatpush1.msra.mxu0 %v4816
        %5668 = vmatprep.subr.mxu0 0.0
        %5669 = vmatpush1.msra.mxu0 %v4817
        %5670 = vmatprep.subr.mxu0 0.0
        %5671 = vmatpush1.msra.mxu0 %v4818
        %5672 = vmatprep.subr.mxu0 0.0
        %5673 = vmatpush1.msra.mxu0 %v4819
        %5674 = vmatprep.subr.mxu0 0.0
        %5675 = vmatpush1.msra.mxu0 %v4820
        %5676 = vmatprep.subr.mxu0 0.0
        %5677 = vmatpush1.msra.mxu0 %v4821
        %5678 = vmatprep.subr.mxu0 0.0
        %5679 = vmatpush1.msra.mxu0 %v4822
        %5680 = vmatprep.subr.mxu0 0.0
        %5681 = vmatpush1.msra.mxu0 %v4823
        %5682 = vmatprep.subr.mxu0 0.0
        %5683 = vmatpush1.msra.mxu0 %v4824
        %5684 = vmatprep.subr.mxu0 0.0
        %5685 = vmatpush1.msra.mxu0 %v4825
        %5686 = vmatprep.subr.mxu0 0.0
        %5687 = vmatpush1.msra.mxu0 %v4826
        %5688 = vmatprep.subr.mxu0 0.0
        %5689 = vmatpush1.msra.mxu0 %v4827
        %5690 = vmatprep.subr.mxu0 0.0
        %5691 = vmatpush1.msra.mxu0 %v4828
        %5692 = vmatprep.subr.mxu0 0.0
        %5693 = vmatpush1.msra.mxu0 %v4829
        %5694 = vmatprep.subr.mxu0 0.0
        %5695 = vmatpush1.msra.mxu0 %v4830
        %5696 = vmatprep.subr.mxu0 0.0
        %5697 = vmatpush1.msra.mxu0 %v4831
        %5698 = vmatprep.subr.mxu0 0.0
        %5699 = vmatpush1.msra.mxu0 %v4832
        %5700 = vmatprep.subr.mxu0 0.0
        %5701 = vmatpush1.msra.mxu0 %v4833
        %5702 = vmatprep.subr.mxu0 0.0
        %5703 = vmatpush1.msra.mxu0 %v4834
        %5704 = vmatprep.mubr.f32.mxu0 %v4381
        %5705 = vmatmul.mubr.f32.gmra.mrb[0].mxu0 %v4380
        %v5706 = vpop.f32.mrb[0].mxu0
        %v5707 = vadd.f32 %v5562, %v5706
        %v5708 = vpop.f32.mrb[0].mxu0
        %5709 = vmatprep.mubr.f32.mxu0 %v4398
        %5710 = vmatmul.mubr.f32.gmra.mrb[0].mxu0 %v4397
        %v5711 = vpop.f32.mrb[0].mxu0
        %v5712 = vadd.f32 %v5567, %v5711
        %v5713 = vpop.f32.mrb[0].mxu0
        %5714 = vmatprep.mubr.f32.mxu0 %v4415
        %5715 = vmatmul.mubr.f32.gmra.mrb[0].mxu0 %v4414
        %v5716 = vpop.f32.mrb[0].mxu0
        %v5717 = vadd.f32 %v5572, %v5716
        %v5718 = vpop.f32.mrb[0].mxu0
        %5719 = vmatprep.mubr.f32.mxu0 %v4432
        %5720 = vmatmul.mubr.f32.gmra.mrb[0].mxu0 %v4431
        %v5721 = vpop.f32.mrb[0].mxu0
        %v5722 = vadd.f32 %v5577, %v5721
        %v5723 = vpop.f32.mrb[0].mxu0
        %5724 = vmatprep.mubr.f32.mxu0 %v4449
        %5725 = vmatmul.mubr.f32.gmra.mrb[0].mxu0 %v4448
        %v5726 = vpop.f32.mrb[0].mxu0
        %v5727 = vadd.f32 %v5582, %v5726
        %v5728 = vpop.f32.mrb[0].mxu0
        %5729 = vmatprep.mubr.f32.mxu0 %v4466
        %5730 = vmatmul.mubr.f32.gmra.mrb[0].mxu0 %v4465
        %v5731 = vpop.f32.mrb[0].mxu0
        %v5732 = vadd.f32 %v5587, %v5731
        %v5733 = vpop.f32.mrb[0].mxu0
        %5734 = vmatprep.mubr.f32.mxu0 %v4483
        %5735 = vmatmul.mubr.f32.gmra.mrb[0].mxu0 %v4482
        %v5736 = vpop.f32.mrb[0].mxu0
        %v5737 = vadd.f32 %v5592, %v5736
        %v5738 = vpop.f32.mrb[0].mxu0
        %5739 = vmatprep.mubr.f32.mxu0 %v4500
        %5740 = vmatmul.mubr.f32.gmra.mrb[0].mxu0 %v4499
        %v5741 = vpop.f32.mrb[0].mxu0
        %v5742 = vadd.f32 %v5597, %v5741
        %v5743 = vpop.f32.mrb[0].mxu0
        %5744 = vmatprep.mubr.f32.mxu0 %v4517
        %5745 = vmatmul.mubr.f32.gmra.mrb[0].mxu0 %v4516
        %v5746 = vpop.f32.mrb[0].mxu0
        %v5747 = vadd.f32 %v5602, %v5746
        %v5748 = vpop.f32.mrb[0].mxu0
        %5749 = vmatprep.mubr.f32.mxu0 %v4534
        %5750 = vmatmul.mubr.f32.gmra.mrb[0].mxu0 %v4533
        %v5751 = vpop.f32.mrb[0].mxu0
        %v5752 = vadd.f32 %v5607, %v5751
        %v5753 = vpop.f32.mrb[0].mxu0
        %5754 = vmatprep.mubr.f32.mxu0 %v4551
        %5755 = vmatmul.mubr.f32.gmra.mrb[0].mxu0 %v4550
        %v5756 = vpop.f32.mrb[0].mxu0
        %v5757 = vadd.f32 %v5612, %v5756
        %v5758 = vpop.f32.mrb[0].mxu0
        %5759 = vmatprep.mubr.f32.mxu0 %v4568
        %5760 = vmatmul.mubr.f32.gmra.mrb[0].mxu0 %v4567
        %v5761 = vpop.f32.mrb[0].mxu0
        %v5762 = vadd.f32 %v5617, %v5761
        %v5763 = vpop.f32.mrb[0].mxu0
        %5764 = vmatprep.mubr.f32.mxu0 %v4585
        %5765 = vmatmul.mubr.f32.gmra.mrb[0].mxu0 %v4584
        %v5766 = vpop.f32.mrb[0].mxu0
        %v5767 = vadd.f32 %v5622, %v5766
        %v5768 = vpop.f32.mrb[0].mxu0
        %5769 = vmatprep.mubr.f32.mxu0 %v4602
        %5770 = vmatmul.mubr.f32.gmra.mrb[0].mxu0 %v4601
        %v5771 = vpop.f32.mrb[0].mxu0
        %v5772 = vadd.f32 %v5627, %v5771
        %v5773 = vpop.f32.mrb[0].mxu0
        %5774 = vmatprep.mubr.f32.mxu0 %v4619
        %5775 = vmatmul.mubr.f32.gmra.mrb[0].mxu0 %v4618
        %v5776 = vpop.f32.mrb[0].mxu0
        %v5777 = vadd.f32 %v5632, %v5776
        %v5778 = vpop.f32.mrb[0].mxu0
        %5779 = vmatprep.mubr.f32.mxu0 %v4636
        %5780 = vmatmul.mubr.f32.gmra.mrb[0].mxu0 %v4635
        %v5781 = vpop.f32.mrb[0].mxu0
        %v5782 = vadd.f32 %v5637, %v5781
        %v5783 = vpop.f32.mrb[0].mxu0
        %5784 = vdwg.mxu0
        %5785 = vmatprep.subr.mxu0 0.0
        %5786 = vmatpush1.msra.mxu0 %v4835
        %5787 = vmatprep.subr.mxu0 0.0
        %5788 = vmatpush1.msra.mxu0 %v4836
        %5789 = vmatprep.subr.mxu0 0.0
        %5790 = vmatpush1.msra.mxu0 %v4837
        %5791 = vmatprep.subr.mxu0 0.0
        %5792 = vmatpush1.msra.mxu0 %v4838
        %5793 = vmatprep.subr.mxu0 0.0
        %5794 = vmatpush1.msra.mxu0 %v4839
        %5795 = vmatprep.subr.mxu0 0.0
        %5796 = vmatpush1.msra.mxu0 %v4840
        %5797 = vmatprep.subr.mxu0 0.0
        %5798 = vmatpush1.msra.mxu0 %v4841
        %5799 = vmatprep.subr.mxu0 0.0
        %5800 = vmatpush1.msra.mxu0 %v4842
        %5801 = vmatprep.subr.mxu0 0.0
        %5802 = vmatpush1.msra.mxu0 %v4843
        %5803 = vmatprep.subr.mxu0 0.0
        %5804 = vmatpush1.msra.mxu0 %v4844
        %5805 = vmatprep.subr.mxu0 0.0
        %5806 = vmatpush1.msra.mxu0 %v4845
        %5807 = vmatprep.subr.mxu0 0.0
        %5808 = vmatpush1.msra.mxu0 %v4846
        %5809 = vmatprep.subr.mxu0 0.0
        %5810 = vmatpush1.msra.mxu0 %v4847
        %5811 = vmatprep.subr.mxu0 0.0
        %5812 = vmatpush1.msra.mxu0 %v4848
        %5813 = vmatprep.subr.mxu0 0.0
        %5814 = vmatpush1.msra.mxu0 %v4849
        %5815 = vmatprep.subr.mxu0 0.0
        %5816 = vmatpush1.msra.mxu0 %v4850
        %5817 = vmatprep.subr.mxu0 0.0
        %5818 = vmatpush1.msra.mxu0 %v4851
        %5819 = vmatprep.subr.mxu0 0.0
        %5820 = vmatpush1.msra.mxu0 %v4852
        %5821 = vmatprep.subr.mxu0 0.0
        %5822 = vmatpush1.msra.mxu0 %v4853
        %5823 = vmatprep.subr.mxu0 0.0
        %5824 = vmatpush1.msra.mxu0 %v4854
        %5825 = vmatprep.subr.mxu0 0.0
        %5826 = vmatpush1.msra.mxu0 %v4855
        %5827 = vmatprep.subr.mxu0 0.0
        %5828 = vmatpush1.msra.mxu0 %v4856
        %5829 = vmatprep.subr.mxu0 0.0
        %5830 = vmatpush1.msra.mxu0 %v4857
        %5831 = vmatprep.subr.mxu0 0.0
        %5832 = vmatpush1.msra.mxu0 %v4858
        %5833 = vmatprep.subr.mxu0 0.0
        %5834 = vmatpush1.msra.mxu0 %v4859
        %5835 = vmatprep.subr.mxu0 0.0
        %5836 = vmatpush1.msra.mxu0 %v4860
        %5837 = vmatprep.subr.mxu0 0.0
        %5838 = vmatpush1.msra.mxu0 %v4861
        %5839 = vmatprep.subr.mxu0 0.0
        %5840 = vmatpush1.msra.mxu0 %v4862
        %5841 = vmatprep.subr.mxu0 0.0
        %5842 = vmatpush1.msra.mxu0 %v4863
        %5843 = vmatprep.subr.mxu0 0.0
        %5844 = vmatpush1.msra.mxu0 %v4864
        %5845 = vmatprep.subr.mxu0 0.0
        %5846 = vmatpush1.msra.mxu0 %v4865
        %5847 = vmatprep.subr.mxu0 0.0
        %5848 = vmatpush1.msra.mxu0 %v4866
        %5849 = vmatprep.mubr.f32.mxu0 %v4383
        %5850 = vmatmul.mubr.f32.gmra.mrb[0].mxu0 %v4382
        %v5851 = vpop.f32.mrb[0].mxu0
        %v5852 = vadd.f32 %v5707, %v5851
        %v5853 = vpop.f32.mrb[0].mxu0
        %5854 = vmatprep.mubr.f32.mxu0 %v4400
        %5855 = vmatmul.mubr.f32.gmra.mrb[0].mxu0 %v4399
        %v5856 = vpop.f32.mrb[0].mxu0
        %v5857 = vadd.f32 %v5712, %v5856
        %v5858 = vpop.f32.mrb[0].mxu0
        %5859 = vmatprep.mubr.f32.mxu0 %v4417
        %5860 = vmatmul.mubr.f32.gmra.mrb[0].mxu0 %v4416
        %v5861 = vpop.f32.mrb[0].mxu0
        %v5862 = vadd.f32 %v5717, %v5861
        %v5863 = vpop.f32.mrb[0].mxu0
        %5864 = vmatprep.mubr.f32.mxu0 %v4434
        %5865 = vmatmul.mubr.f32.gmra.mrb[0].mxu0 %v4433
        %v5866 = vpop.f32.mrb[0].mxu0
        %v5867 = vadd.f32 %v5722, %v5866
        %v5868 = vpop.f32.mrb[0].mxu0
        %5869 = vmatprep.mubr.f32.mxu0 %v4451
        %5870 = vmatmul.mubr.f32.gmra.mrb[0].mxu0 %v4450
        %v5871 = vpop.f32.mrb[0].mxu0
        %v5872 = vadd.f32 %v5727, %v5871
        %v5873 = vpop.f32.mrb[0].mxu0
        %5874 = vmatprep.mubr.f32.mxu0 %v4468
        %5875 = vmatmul.mubr.f32.gmra.mrb[0].mxu0 %v4467
        %v5876 = vpop.f32.mrb[0].mxu0
        %v5877 = vadd.f32 %v5732, %v5876
        %v5878 = vpop.f32.mrb[0].mxu0
        %5879 = vmatprep.mubr.f32.mxu0 %v4485
        %5880 = vmatmul.mubr.f32.gmra.mrb[0].mxu0 %v4484
        %v5881 = vpop.f32.mrb[0].mxu0
        %v5882 = vadd.f32 %v5737, %v5881
        %v5883 = vpop.f32.mrb[0].mxu0
        %5884 = vmatprep.mubr.f32.mxu0 %v4502
        %5885 = vmatmul.mubr.f32.gmra.mrb[0].mxu0 %v4501
        %v5886 = vpop.f32.mrb[0].mxu0
        %v5887 = vadd.f32 %v5742, %v5886
        %v5888 = vpop.f32.mrb[0].mxu0
        %5889 = vmatprep.mubr.f32.mxu0 %v4519
        %5890 = vmatmul.mubr.f32.gmra.mrb[0].mxu0 %v4518
        %v5891 = vpop.f32.mrb[0].mxu0
        %v5892 = vadd.f32 %v5747, %v5891
        %v5893 = vpop.f32.mrb[0].mxu0
        %5894 = vmatprep.mubr.f32.mxu0 %v4536
        %5895 = vmatmul.mubr.f32.gmra.mrb[0].mxu0 %v4535
        %v5896 = vpop.f32.mrb[0].mxu0
        %v5897 = vadd.f32 %v5752, %v5896
        %v5898 = vpop.f32.mrb[0].mxu0
        %5899 = vmatprep.mubr.f32.mxu0 %v4553
        %5900 = vmatmul.mubr.f32.gmra.mrb[0].mxu0 %v4552
        %v5901 = vpop.f32.mrb[0].mxu0
        %v5902 = vadd.f32 %v5757, %v5901
        %v5903 = vpop.f32.mrb[0].mxu0
        %5904 = vmatprep.mubr.f32.mxu0 %v4570
        %5905 = vmatmul.mubr.f32.gmra.mrb[0].mxu0 %v4569
        %v5906 = vpop.f32.mrb[0].mxu0
        %v5907 = vadd.f32 %v5762, %v5906
        %v5908 = vpop.f32.mrb[0].mxu0
        %5909 = vmatprep.mubr.f32.mxu0 %v4587
        %5910 = vmatmul.mubr.f32.gmra.mrb[0].mxu0 %v4586
        %v5911 = vpop.f32.mrb[0].mxu0
        %v5912 = vadd.f32 %v5767, %v5911
        %v5913 = vpop.f32.mrb[0].mxu0
        %5914 = vmatprep.mubr.f32.mxu0 %v4604
        %5915 = vmatmul.mubr.f32.gmra.mrb[0].mxu0 %v4603
        %v5916 = vpop.f32.mrb[0].mxu0
        %v5917 = vadd.f32 %v5772, %v5916
        %v5918 = vpop.f32.mrb[0].mxu0
        %5919 = vmatprep.mubr.f32.mxu0 %v4621
        %5920 = vmatmul.mubr.f32.gmra.mrb[0].mxu0 %v4620
        %v5921 = vpop.f32.mrb[0].mxu0
        %v5922 = vadd.f32 %v5777, %v5921
        %v5923 = vpop.f32.mrb[0].mxu0
        %5924 = vmatprep.mubr.f32.mxu0 %v4638
        %5925 = vmatmul.mubr.f32.gmra.mrb[0].mxu0 %v4637
        %v5926 = vpop.f32.mrb[0].mxu0
        %v5927 = vadd.f32 %v5782, %v5926
        %v5928 = vpop.f32.mrb[0].mxu0
        %5929 = vdwg.mxu0
        %5930 = vmatprep.subr.mxu0 0.0
        %5931 = vmatpush1.msra.mxu0 %v4867
        %5932 = vmatprep.subr.mxu0 0.0
        %5933 = vmatpush1.msra.mxu0 %v4868
        %5934 = vmatprep.subr.mxu0 0.0
        %5935 = vmatpush1.msra.mxu0 %v4869
        %5936 = vmatprep.subr.mxu0 0.0
        %5937 = vmatpush1.msra.mxu0 %v4870
        %5938 = vmatprep.subr.mxu0 0.0
        %5939 = vmatpush1.msra.mxu0 %v4871
        %5940 = vmatprep.subr.mxu0 0.0
        %5941 = vmatpush1.msra.mxu0 %v4872
        %5942 = vmatprep.subr.mxu0 0.0
        %5943 = vmatpush1.msra.mxu0 %v4873
        %5944 = vmatprep.subr.mxu0 0.0
        %5945 = vmatpush1.msra.mxu0 %v4874
        %5946 = vmatprep.subr.mxu0 0.0
        %5947 = vmatpush1.msra.mxu0 %v4875
        %5948 = vmatprep.subr.mxu0 0.0
        %5949 = vmatpush1.msra.mxu0 %v4876
        %5950 = vmatprep.subr.mxu0 0.0
        %5951 = vmatpush1.msra.mxu0 %v4877
        %5952 = vmatprep.subr.mxu0 0.0
        %5953 = vmatpush1.msra.mxu0 %v4878
        %5954 = vmatprep.subr.mxu0 0.0
        %5955 = vmatpush1.msra.mxu0 %v4879
        %5956 = vmatprep.subr.mxu0 0.0
        %5957 = vmatpush1.msra.mxu0 %v4880
        %5958 = vmatprep.subr.mxu0 0.0
        %5959 = vmatpush1.msra.mxu0 %v4881
        %5960 = vmatprep.subr.mxu0 0.0
        %5961 = vmatpush1.msra.mxu0 %v4882
        %5962 = vmatprep.subr.mxu0 0.0
        %5963 = vmatpush1.msra.mxu0 %v4883
        %5964 = vmatprep.subr.mxu0 0.0
        %5965 = vmatpush1.msra.mxu0 %v4884
        %5966 = vmatprep.subr.mxu0 0.0
        %5967 = vmatpush1.msra.mxu0 %v4885
        %5968 = vmatprep.subr.mxu0 0.0
        %5969 = vmatpush1.msra.mxu0 %v4886
        %5970 = vmatprep.subr.mxu0 0.0
        %5971 = vmatpush1.msra.mxu0 %v4887
        %5972 = vmatprep.subr.mxu0 0.0
        %5973 = vmatpush1.msra.mxu0 %v4888
        %5974 = vmatprep.subr.mxu0 0.0
        %5975 = vmatpush1.msra.mxu0 %v4889
        %5976 = vmatprep.subr.mxu0 0.0
        %5977 = vmatpush1.msra.mxu0 %v4890
        %5978 = vmatprep.subr.mxu0 0.0
        %5979 = vmatpush1.msra.mxu0 %v4891
        %5980 = vmatprep.subr.mxu0 0.0
        %5981 = vmatpush1.msra.mxu0 %v4892
        %5982 = vmatprep.subr.mxu0 0.0
        %5983 = vmatpush1.msra.mxu0 %v4893
        %5984 = vmatprep.subr.mxu0 0.0
        %5985 = vmatpush1.msra.mxu0 %v4894
        %5986 = vmatprep.subr.mxu0 0.0
        %5987 = vmatpush1.msra.mxu0 %v4895
        %5988 = vmatprep.subr.mxu0 0.0
        %5989 = vmatpush1.msra.mxu0 %v4896
        %5990 = vmatprep.subr.mxu0 0.0
        %5991 = vmatpush1.msra.mxu0 %v4897
        %5992 = vmatprep.subr.mxu0 0.0
        %5993 = vmatpush1.msra.mxu0 %v4898
        %5994 = vmatprep.mubr.f32.mxu0 %v4385
        %5995 = vmatmul.mubr.f32.gmra.mrb[0].mxu0 %v4384
        %v5996 = vpop.f32.mrb[0].mxu0
        %v5997 = vadd.f32 %v5852, %v5996
        %v5998 = vpop.f32.mrb[0].mxu0
        %5999 = vmatprep.mubr.f32.mxu0 %v4402
        %6000 = vmatmul.mubr.f32.gmra.mrb[0].mxu0 %v4401
        %v6001 = vpop.f32.mrb[0].mxu0
        %v6002 = vadd.f32 %v5857, %v6001
        %v6003 = vpop.f32.mrb[0].mxu0
        %6004 = vmatprep.mubr.f32.mxu0 %v4419
        %6005 = vmatmul.mubr.f32.gmra.mrb[0].mxu0 %v4418
        %v6006 = vpop.f32.mrb[0].mxu0
        %v6007 = vadd.f32 %v5862, %v6006
        %v6008 = vpop.f32.mrb[0].mxu0
        %6009 = vmatprep.mubr.f32.mxu0 %v4436
        %6010 = vmatmul.mubr.f32.gmra.mrb[0].mxu0 %v4435
        %v6011 = vpop.f32.mrb[0].mxu0
        %v6012 = vadd.f32 %v5867, %v6011
        %v6013 = vpop.f32.mrb[0].mxu0
        %6014 = vmatprep.mubr.f32.mxu0 %v4453
        %6015 = vmatmul.mubr.f32.gmra.mrb[0].mxu0 %v4452
        %v6016 = vpop.f32.mrb[0].mxu0
        %v6017 = vadd.f32 %v5872, %v6016
        %v6018 = vpop.f32.mrb[0].mxu0
        %6019 = vmatprep.mubr.f32.mxu0 %v4470
        %6020 = vmatmul.mubr.f32.gmra.mrb[0].mxu0 %v4469
        %v6021 = vpop.f32.mrb[0].mxu0
        %v6022 = vadd.f32 %v5877, %v6021
        %v6023 = vpop.f32.mrb[0].mxu0
        %6024 = vmatprep.mubr.f32.mxu0 %v4487
        %6025 = vmatmul.mubr.f32.gmra.mrb[0].mxu0 %v4486
        %v6026 = vpop.f32.mrb[0].mxu0
        %v6027 = vadd.f32 %v5882, %v6026
        %v6028 = vpop.f32.mrb[0].mxu0
        %6029 = vmatprep.mubr.f32.mxu0 %v4504
        %6030 = vmatmul.mubr.f32.gmra.mrb[0].mxu0 %v4503
        %v6031 = vpop.f32.mrb[0].mxu0
        %v6032 = vadd.f32 %v5887, %v6031
        %v6033 = vpop.f32.mrb[0].mxu0
        %6034 = vmatprep.mubr.f32.mxu0 %v4521
        %6035 = vmatmul.mubr.f32.gmra.mrb[0].mxu0 %v4520
        %v6036 = vpop.f32.mrb[0].mxu0
        %v6037 = vadd.f32 %v5892, %v6036
        %v6038 = vpop.f32.mrb[0].mxu0
        %6039 = vmatprep.mubr.f32.mxu0 %v4538
        %6040 = vmatmul.mubr.f32.gmra.mrb[0].mxu0 %v4537
        %v6041 = vpop.f32.mrb[0].mxu0
        %v6042 = vadd.f32 %v5897, %v6041
        %v6043 = vpop.f32.mrb[0].mxu0
        %6044 = vmatprep.mubr.f32.mxu0 %v4555
        %6045 = vmatmul.mubr.f32.gmra.mrb[0].mxu0 %v4554
        %v6046 = vpop.f32.mrb[0].mxu0
        %v6047 = vadd.f32 %v5902, %v6046
        %v6048 = vpop.f32.mrb[0].mxu0
        %6049 = vmatprep.mubr.f32.mxu0 %v4572
        %6050 = vmatmul.mubr.f32.gmra.mrb[0].mxu0 %v4571
        %v6051 = vpop.f32.mrb[0].mxu0
        %v6052 = vadd.f32 %v5907, %v6051
        %v6053 = vpop.f32.mrb[0].mxu0
        %6054 = vmatprep.mubr.f32.mxu0 %v4589
        %6055 = vmatmul.mubr.f32.gmra.mrb[0].mxu0 %v4588
        %v6056 = vpop.f32.mrb[0].mxu0
        %v6057 = vadd.f32 %v5912, %v6056
        %v6058 = vpop.f32.mrb[0].mxu0
        %6059 = vmatprep.mubr.f32.mxu0 %v4606
        %6060 = vmatmul.mubr.f32.gmra.mrb[0].mxu0 %v4605
        %v6061 = vpop.f32.mrb[0].mxu0
        %v6062 = vadd.f32 %v5917, %v6061
        %v6063 = vpop.f32.mrb[0].mxu0
        %6064 = vmatprep.mubr.f32.mxu0 %v4623
        %6065 = vmatmul.mubr.f32.gmra.mrb[0].mxu0 %v4622
        %v6066 = vpop.f32.mrb[0].mxu0
        %v6067 = vadd.f32 %v5922, %v6066
        %v6068 = vpop.f32.mrb[0].mxu0
        %6069 = vmatprep.mubr.f32.mxu0 %v4640
        %6070 = vmatmul.mubr.f32.gmra.mrb[0].mxu0 %v4639
        %v6071 = vpop.f32.mrb[0].mxu0
        %v6072 = vadd.f32 %v5927, %v6071
        %v6073 = vpop.f32.mrb[0].mxu0
        %6074 = vdwg.mxu0
        %6075 = vmatprep.subr.mxu0 0.0
        %6076 = vmatpush1.msra.mxu0 %v4899
        %6077 = vmatprep.subr.mxu0 0.0
        %6078 = vmatpush1.msra.mxu0 %v4900
        %6079 = vmatprep.subr.mxu0 0.0
        %6080 = vmatpush1.msra.mxu0 %v4901
        %6081 = vmatprep.subr.mxu0 0.0
        %6082 = vmatpush1.msra.mxu0 %v4902
        %6083 = vmatprep.subr.mxu0 0.0
        %6084 = vmatpush1.msra.mxu0 %v4903
        %6085 = vmatprep.subr.mxu0 0.0
        %6086 = vmatpush1.msra.mxu0 %v4904
        %6087 = vmatprep.subr.mxu0 0.0
        %6088 = vmatpush1.msra.mxu0 %v4905
        %6089 = vmatprep.subr.mxu0 0.0
        %6090 = vmatpush1.msra.mxu0 %v4906
        %6091 = vmatprep.subr.mxu0 0.0
        %6092 = vmatpush1.msra.mxu0 %v4907
        %6093 = vmatprep.subr.mxu0 0.0
        %6094 = vmatpush1.msra.mxu0 %v4908
        %6095 = vmatprep.subr.mxu0 0.0
        %6096 = vmatpush1.msra.mxu0 %v4909
        %6097 = vmatprep.subr.mxu0 0.0
        %6098 = vmatpush1.msra.mxu0 %v4910
        %6099 = vmatprep.subr.mxu0 0.0
        %6100 = vmatpush1.msra.mxu0 %v4911
        %6101 = vmatprep.subr.mxu0 0.0
        %6102 = vmatpush1.msra.mxu0 %v4912
        %6103 = vmatprep.subr.mxu0 0.0
        %6104 = vmatpush1.msra.mxu0 %v4913
        %6105 = vmatprep.subr.mxu0 0.0
        %6106 = vmatpush1.msra.mxu0 %v4914
        %6107 = vmatprep.subr.mxu0 0.0
        %6108 = vmatpush1.msra.mxu0 0.0
        %6109 = vmatprep.subr.mxu0 0.0
        %6110 = vmatpush1.msra.mxu0 0.0
        %6111 = vmatprep.subr.mxu0 0.0
        %6112 = vmatpush1.msra.mxu0 0.0
        %6113 = vmatprep.subr.mxu0 0.0
        %6114 = vmatpush1.msra.mxu0 0.0
        %6115 = vmatprep.subr.mxu0 0.0
        %6116 = vmatpush1.msra.mxu0 0.0
        %6117 = vmatprep.subr.mxu0 0.0
        %6118 = vmatpush1.msra.mxu0 0.0
        %6119 = vmatprep.subr.mxu0 0.0
        %6120 = vmatpush1.msra.mxu0 0.0
        %6121 = vmatprep.subr.mxu0 0.0
        %6122 = vmatpush1.msra.mxu0 0.0
        %6123 = vmatprep.subr.mxu0 0.0
        %6124 = vmatpush1.msra.mxu0 0.0
        %6125 = vmatprep.subr.mxu0 0.0
        %6126 = vmatpush1.msra.mxu0 0.0
        %6127 = vmatprep.subr.mxu0 0.0
        %6128 = vmatpush1.msra.mxu0 0.0
        %6129 = vmatprep.subr.mxu0 0.0
        %6130 = vmatpush1.msra.mxu0 0.0
        %6131 = vmatprep.subr.mxu0 0.0
        %6132 = vmatpush1.msra.mxu0 0.0
        %6133 = vmatprep.subr.mxu0 0.0
        %6134 = vmatpush1.msra.mxu0 0.0
        %6135 = vmatprep.subr.mxu0 0.0
        %6136 = vmatpush1.msra.mxu0 0.0
        %6137 = vmatprep.subr.mxu0 0.0
        %6138 = vmatpush1.msra.mxu0 0.0
        %6139 = vmatprep.mubr.f32.mxu0 0.0
        %6140 = vmatmul.mubr.f32.gmra.mrb[0].mxu0 %v4386
        %v6141 = vpop.f32.mrb[0].mxu0
        %v6142 = vadd.f32 %v5997, %v6141
        %v6143 = vpop.f32.mrb[0].mxu0
        %6144 = vmatprep.mubr.f32.mxu0 0.0
        %6145 = vmatmul.mubr.f32.gmra.mrb[0].mxu0 %v4403
        %v6146 = vpop.f32.mrb[0].mxu0
        %v6147 = vadd.f32 %v6002, %v6146
        %v6148 = vpop.f32.mrb[0].mxu0
        %6149 = vmatprep.mubr.f32.mxu0 0.0
        %6150 = vmatmul.mubr.f32.gmra.mrb[0].mxu0 %v4420
        %v6151 = vpop.f32.mrb[0].mxu0
        %v6152 = vadd.f32 %v6007, %v6151
        %v6153 = vpop.f32.mrb[0].mxu0
        %6154 = vmatprep.mubr.f32.mxu0 0.0
        %6155 = vmatmul.mubr.f32.gmra.mrb[0].mxu0 %v4437
        %v6156 = vpop.f32.mrb[0].mxu0
        %v6157 = vadd.f32 %v6012, %v6156
        %v6158 = vpop.f32.mrb[0].mxu0
        %6159 = vmatprep.mubr.f32.mxu0 0.0
        %6160 = vmatmul.mubr.f32.gmra.mrb[0].mxu0 %v4454
        %v6161 = vpop.f32.mrb[0].mxu0
        %v6162 = vadd.f32 %v6017, %v6161
        %v6163 = vpop.f32.mrb[0].mxu0
        %6164 = vmatprep.mubr.f32.mxu0 0.0
        %6165 = vmatmul.mubr.f32.gmra.mrb[0].mxu0 %v4471
        %v6166 = vpop.f32.mrb[0].mxu0
        %v6167 = vadd.f32 %v6022, %v6166
        %v6168 = vpop.f32.mrb[0].mxu0
        %6169 = vmatprep.mubr.f32.mxu0 0.0
        %6170 = vmatmul.mubr.f32.gmra.mrb[0].mxu0 %v4488
        %v6171 = vpop.f32.mrb[0].mxu0
        %v6172 = vadd.f32 %v6027, %v6171
        %v6173 = vpop.f32.mrb[0].mxu0
        %6174 = vmatprep.mubr.f32.mxu0 0.0
        %6175 = vmatmul.mubr.f32.gmra.mrb[0].mxu0 %v4505
        %v6176 = vpop.f32.mrb[0].mxu0
        %v6177 = vadd.f32 %v6032, %v6176
        %v6178 = vpop.f32.mrb[0].mxu0
        %6179 = vmatprep.mubr.f32.mxu0 0.0
        %6180 = vmatmul.mubr.f32.gmra.mrb[0].mxu0 %v4522
        %v6181 = vpop.f32.mrb[0].mxu0
        %v6182 = vadd.f32 %v6037, %v6181
        %v6183 = vpop.f32.mrb[0].mxu0
        %6184 = vmatprep.mubr.f32.mxu0 0.0
        %6185 = vmatmul.mubr.f32.gmra.mrb[0].mxu0 %v4539
        %v6186 = vpop.f32.mrb[0].mxu0
        %v6187 = vadd.f32 %v6042, %v6186
        %v6188 = vpop.f32.mrb[0].mxu0
        %6189 = vmatprep.mubr.f32.mxu0 0.0
        %6190 = vmatmul.mubr.f32.gmra.mrb[0].mxu0 %v4556
        %v6191 = vpop.f32.mrb[0].mxu0
        %v6192 = vadd.f32 %v6047, %v6191
        %v6193 = vpop.f32.mrb[0].mxu0
        %6194 = vmatprep.mubr.f32.mxu0 0.0
        %6195 = vmatmul.mubr.f32.gmra.mrb[0].mxu0 %v4573
        %v6196 = vpop.f32.mrb[0].mxu0
        %v6197 = vadd.f32 %v6052, %v6196
        %v6198 = vpop.f32.mrb[0].mxu0
        %6199 = vmatprep.mubr.f32.mxu0 0.0
        %6200 = vmatmul.mubr.f32.gmra.mrb[0].mxu0 %v4590
        %v6201 = vpop.f32.mrb[0].mxu0
        %v6202 = vadd.f32 %v6057, %v6201
        %v6203 = vpop.f32.mrb[0].mxu0
        %6204 = vmatprep.mubr.f32.mxu0 0.0
        %6205 = vmatmul.mubr.f32.gmra.mrb[0].mxu0 %v4607
        %v6206 = vpop.f32.mrb[0].mxu0
        %v6207 = vadd.f32 %v6062, %v6206
        %v6208 = vpop.f32.mrb[0].mxu0
        %6209 = vmatprep.mubr.f32.mxu0 0.0
        %6210 = vmatmul.mubr.f32.gmra.mrb[0].mxu0 %v4624
        %v6211 = vpop.f32.mrb[0].mxu0
        %v6212 = vadd.f32 %v6067, %v6211
        %v6213 = vpop.f32.mrb[0].mxu0
        %6214 = vmatprep.mubr.f32.mxu0 0.0
        %6215 = vmatmul.mubr.f32.gmra.mrb[0].mxu0 %v4641
        %v6216 = vpop.f32.mrb[0].mxu0
        %v6217 = vadd.f32 %v6072, %v6216
        %v6218 = vpop.f32.mrb[0].mxu0
        %6219 = vdwg.mxu0
        %s6220 = scalar_lea.vmem [#allocation17], 1
        %v6221 = vld [vmem:[%s6220] sm:$0x1]
        %v6223 = vlaneseq
        %v6224 = vshrl.u32 %v6223, 7
        %v6225 = vsub.s32 0, %v6224
        %v6226 = vrot.slane %v6221, %v6225
        %v6228 = vmul.f32 %v6142, %v6226
        %v6229 = vmul.f32 %v6147, %v6226
        %v6230 = vmul.f32 %v6152, %v6226
        %v6231 = vmul.f32 %v6157, %v6226
        %v6232 = vmul.f32 %v6162, %v6226
        %v6233 = vmul.f32 %v6167, %v6226
        %v6234 = vmul.f32 %v6172, %v6226
        %v6235 = vmul.f32 %v6177, %v6226
        %v6236 = vmul.f32 %v6182, %v6226
        %v6237 = vmul.f32 %v6187, %v6226
        %v6238 = vmul.f32 %v6192, %v6226
        %v6239 = vmul.f32 %v6197, %v6226
        %v6240 = vmul.f32 %v6202, %v6226
        %v6241 = vmul.f32 %v6207, %v6226
        %v6242 = vmul.f32 %v6212, %v6226
        %v6243 = vmul.f32 %v6217, %v6226
        %s6244 = scalar_lea.vmem [#allocation19], 1
        %v6245 = vld [vmem:[%s6244] sm:$0x1]
        %v6247 = vlaneseq
        %v6248 = vshrl.u32 %v6247, 7
        %v6249 = vsub.s32 0, %v6248
        %v6250 = vrot.slane %v6245, %v6249
        %v6252 = vadd.f32 %v6228, %v6250
        %v6253 = vadd.f32 %v6229, %v6250
        %v6254 = vadd.f32 %v6230, %v6250
        %v6255 = vadd.f32 %v6231, %v6250
        %v6256 = vadd.f32 %v6232, %v6250
        %v6257 = vadd.f32 %v6233, %v6250
        %v6258 = vadd.f32 %v6234, %v6250
        %v6259 = vadd.f32 %v6235, %v6250
        %v6260 = vadd.f32 %v6236, %v6250
        %v6261 = vadd.f32 %v6237, %v6250
        %v6262 = vadd.f32 %v6238, %v6250
        %v6263 = vadd.f32 %v6239, %v6250
        %v6264 = vadd.f32 %v6240, %v6250
        %v6265 = vadd.f32 %v6241, %v6250
        %v6266 = vadd.f32 %v6242, %v6250
        %v6267 = vadd.f32 %v6243, %v6250
        %v6268 = vadd.f32 %v6252, %v3568
        %v6269 = vadd.f32 %v6253, %v3569
        %v6270 = vadd.f32 %v6254, %v3570
        %v6271 = vadd.f32 %v6255, %v3571
        %v6272 = vadd.f32 %v6256, %v3572
        %v6273 = vadd.f32 %v6257, %v3573
        %v6274 = vadd.f32 %v6258, %v3574
        %v6275 = vadd.f32 %v6259, %v3575
        %v6276 = vadd.f32 %v6260, %v3576
        %v6277 = vadd.f32 %v6261, %v3577
        %v6278 = vadd.f32 %v6262, %v3578
        %v6279 = vadd.f32 %v6263, %v3579
        %v6280 = vadd.f32 %v6264, %v3580
        %v6281 = vadd.f32 %v6265, %v3581
        %v6282 = vadd.f32 %v6266, %v3582
        %v6283 = vadd.f32 %v6267, %v3583
        %v6284 = vmax.f32 %v6268, 0.0
        %v6285 = vmax.f32 %v6269, 0.0
        %v6286 = vmax.f32 %v6270, 0.0
        %v6287 = vmax.f32 %v6271, 0.0
        %v6288 = vmax.f32 %v6272, 0.0
        %v6289 = vmax.f32 %v6273, 0.0
        %v6290 = vmax.f32 %v6274, 0.0
        %v6291 = vmax.f32 %v6275, 0.0
        %v6292 = vmax.f32 %v6276, 0.0
        %v6293 = vmax.f32 %v6277, 0.0
        %v6294 = vmax.f32 %v6278, 0.0
        %v6295 = vmax.f32 %v6279, 0.0
        %v6296 = vmax.f32 %v6280, 0.0
        %v6297 = vmax.f32 %v6281, 0.0
        %v6298 = vmax.f32 %v6282, 0.0
        %v6299 = vmax.f32 %v6283, 0.0
        %v6300 = vld [vmem:[#allocation20] sm:$0xff]
        %v6301 = vld [vmem:[#allocation20 + $0x8] sm:$0xff]
        %v6302 = vld [vmem:[#allocation20 + $0x10] sm:$0xff]
        %v6303 = vld [vmem:[#allocation20 + $0x18] sm:$0xff]
        %v6304 = vld [vmem:[#allocation20 + $0x20] sm:$0xff]
        %v6305 = vld [vmem:[#allocation20 + $0x28] sm:$0xff]
        %v6306 = vld [vmem:[#allocation20 + $0x30] sm:$0xff]
        %v6307 = vld [vmem:[#allocation20 + $0x38] sm:$0xff]
        %v6308 = vld [vmem:[#allocation20 + $0x40] sm:$0xff]
        %v6309 = vld [vmem:[#allocation20 + $0x48] sm:$0xff]
        %v6310 = vld [vmem:[#allocation20 + $0x50] sm:$0xff]
        %v6311 = vld [vmem:[#allocation20 + $0x58] sm:$0xff]
        %v6312 = vld [vmem:[#allocation20 + $0x60] sm:$0xff]
        %v6313 = vld [vmem:[#allocation20 + $0x68] sm:$0xff]
        %v6314 = vld [vmem:[#allocation20 + $0x70] sm:$0xff]
        %v6315 = vld [vmem:[#allocation20 + $0x78] sm:$0xff]
        %v6316 = vld [vmem:[#allocation22] sm:$0x1]
        %v6318 = vlaneseq
        %v6319 = vshrl.u32 %v6318, 7
        %v6320 = vsub.s32 0, %v6319
        %v6321 = vrot.slane %v6316, %v6320
        %6323 = vmatprep.subr.mxu0 0.0
        %6324 = vmatpush1.msra.mxu0 %v6300
        %6325 = vmatprep.subr.mxu0 0.0
        %6326 = vmatpush1.msra.mxu0 %v6301
        %6327 = vmatprep.subr.mxu0 0.0
        %6328 = vmatpush1.msra.mxu0 %v6302
        %6329 = vmatprep.subr.mxu0 0.0
        %6330 = vmatpush1.msra.mxu0 %v6303
        %6331 = vmatprep.subr.mxu0 0.0
        %6332 = vmatpush1.msra.mxu0 %v6304
        %6333 = vmatprep.subr.mxu0 0.0
        %6334 = vmatpush1.msra.mxu0 %v6305
        %6335 = vmatprep.subr.mxu0 0.0
        %6336 = vmatpush1.msra.mxu0 %v6306
        %6337 = vmatprep.subr.mxu0 0.0
        %6338 = vmatpush1.msra.mxu0 %v6307
        %6339 = vmatprep.subr.mxu0 0.0
        %6340 = vmatpush1.msra.mxu0 %v6308
        %6341 = vmatprep.subr.mxu0 0.0
        %6342 = vmatpush1.msra.mxu0 %v6309
        %6343 = vmatprep.subr.mxu0 0.0
        %6344 = vmatpush1.msra.mxu0 %v6310
        %6345 = vmatprep.subr.mxu0 0.0
        %6346 = vmatpush1.msra.mxu0 %v6311
        %6347 = vmatprep.subr.mxu0 0.0
        %6348 = vmatpush1.msra.mxu0 %v6312
        %6349 = vmatprep.subr.mxu0 0.0
        %6350 = vmatpush1.msra.mxu0 %v6313
        %6351 = vmatprep.subr.mxu0 0.0
        %6352 = vmatpush1.msra.mxu0 %v6314
        %6353 = vmatprep.subr.mxu0 0.0
        %6354 = vmatpush1.msra.mxu0 %v6315
        %6355 = vmatprep.subr.mxu0 0.0
        %6356 = vmatpush1.msra.mxu0 0.0
        %6357 = vmatprep.subr.mxu0 0.0
        %6358 = vmatpush1.msra.mxu0 0.0
        %6359 = vmatprep.subr.mxu0 0.0
        %6360 = vmatpush1.msra.mxu0 0.0
        %6361 = vmatprep.subr.mxu0 0.0
        %6362 = vmatpush1.msra.mxu0 0.0
        %6363 = vmatprep.subr.mxu0 0.0
        %6364 = vmatpush1.msra.mxu0 0.0
        %6365 = vmatprep.subr.mxu0 0.0
        %6366 = vmatpush1.msra.mxu0 0.0
        %6367 = vmatprep.subr.mxu0 0.0
        %6368 = vmatpush1.msra.mxu0 0.0
        %6369 = vmatprep.subr.mxu0 0.0
        %6370 = vmatpush1.msra.mxu0 0.0
        %6371 = vmatprep.subr.mxu0 0.0
        %6372 = vmatpush1.msra.mxu0 0.0
        %6373 = vmatprep.subr.mxu0 0.0
        %6374 = vmatpush1.msra.mxu0 0.0
        %6375 = vmatprep.subr.mxu0 0.0
        %6376 = vmatpush1.msra.mxu0 0.0
        %6377 = vmatprep.subr.mxu0 0.0
        %6378 = vmatpush1.msra.mxu0 0.0
        %6379 = vmatprep.subr.mxu0 0.0
        %6380 = vmatpush1.msra.mxu0 0.0
        %6381 = vmatprep.subr.mxu0 0.0
        %6382 = vmatpush1.msra.mxu0 0.0
        %6383 = vmatprep.subr.mxu0 0.0
        %6384 = vmatpush1.msra.mxu0 0.0
        %6385 = vmatprep.subr.mxu0 0.0
        %6386 = vmatpush1.msra.mxu0 0.0
        %6387 = vmatprep.mubr.f32.mxu0 0.0
        %6388 = vmatmul.mubr.f32.gmra.mrb[0].mxu0 %v6284
        %v6389 = vpop.f32.mrb[0].mxu0
        %v6390 = vadd.f32 %v6321, %v6389
        %v6391 = vpop.f32.mrb[0].mxu0
        %6392 = vmatprep.mubr.f32.mxu0 0.0
        %6393 = vmatmul.mubr.f32.gmra.mrb[0].mxu0 %v6285
        %v6394 = vpop.f32.mrb[0].mxu0
        %v6395 = vadd.f32 %v6321, %v6394
        %v6396 = vpop.f32.mrb[0].mxu0
        %6397 = vmatprep.mubr.f32.mxu0 0.0
        %6398 = vmatmul.mubr.f32.gmra.mrb[0].mxu0 %v6286
        %v6399 = vpop.f32.mrb[0].mxu0
        %v6400 = vadd.f32 %v6321, %v6399
        %v6401 = vpop.f32.mrb[0].mxu0
        %6402 = vmatprep.mubr.f32.mxu0 0.0
        %6403 = vmatmul.mubr.f32.gmra.mrb[0].mxu0 %v6287
        %v6404 = vpop.f32.mrb[0].mxu0
        %v6405 = vadd.f32 %v6321, %v6404
        %v6406 = vpop.f32.mrb[0].mxu0
        %6407 = vmatprep.mubr.f32.mxu0 0.0
        %6408 = vmatmul.mubr.f32.gmra.mrb[0].mxu0 %v6288
        %v6409 = vpop.f32.mrb[0].mxu0
        %v6410 = vadd.f32 %v6321, %v6409
        %v6411 = vpop.f32.mrb[0].mxu0
        %6412 = vmatprep.mubr.f32.mxu0 0.0
        %6413 = vmatmul.mubr.f32.gmra.mrb[0].mxu0 %v6289
        %v6414 = vpop.f32.mrb[0].mxu0
        %v6415 = vadd.f32 %v6321, %v6414
        %v6416 = vpop.f32.mrb[0].mxu0
        %6417 = vmatprep.mubr.f32.mxu0 0.0
        %6418 = vmatmul.mubr.f32.gmra.mrb[0].mxu0 %v6290
        %v6419 = vpop.f32.mrb[0].mxu0
        %v6420 = vadd.f32 %v6321, %v6419
        %v6421 = vpop.f32.mrb[0].mxu0
        %6422 = vmatprep.mubr.f32.mxu0 0.0
        %6423 = vmatmul.mubr.f32.gmra.mrb[0].mxu0 %v6291
        %v6424 = vpop.f32.mrb[0].mxu0
        %v6425 = vadd.f32 %v6321, %v6424
        %v6426 = vpop.f32.mrb[0].mxu0
        %6427 = vmatprep.mubr.f32.mxu0 0.0
        %6428 = vmatmul.mubr.f32.gmra.mrb[0].mxu0 %v6292
        %v6429 = vpop.f32.mrb[0].mxu0
        %v6430 = vadd.f32 %v6321, %v6429
        %v6431 = vpop.f32.mrb[0].mxu0
        %6432 = vmatprep.mubr.f32.mxu0 0.0
        %6433 = vmatmul.mubr.f32.gmra.mrb[0].mxu0 %v6293
        %v6434 = vpop.f32.mrb[0].mxu0
        %v6435 = vadd.f32 %v6321, %v6434
        %v6436 = vpop.f32.mrb[0].mxu0
        %6437 = vmatprep.mubr.f32.mxu0 0.0
        %6438 = vmatmul.mubr.f32.gmra.mrb[0].mxu0 %v6294
        %v6439 = vpop.f32.mrb[0].mxu0
        %v6440 = vadd.f32 %v6321, %v6439
        %v6441 = vpop.f32.mrb[0].mxu0
        %6442 = vmatprep.mubr.f32.mxu0 0.0
        %6443 = vmatmul.mubr.f32.gmra.mrb[0].mxu0 %v6295
        %v6444 = vpop.f32.mrb[0].mxu0
        %v6445 = vadd.f32 %v6321, %v6444
        %v6446 = vpop.f32.mrb[0].mxu0
        %6447 = vmatprep.mubr.f32.mxu0 0.0
        %6448 = vmatmul.mubr.f32.gmra.mrb[0].mxu0 %v6296
        %v6449 = vpop.f32.mrb[0].mxu0
        %v6450 = vadd.f32 %v6321, %v6449
        %v6451 = vpop.f32.mrb[0].mxu0
        %6452 = vmatprep.mubr.f32.mxu0 0.0
        %6453 = vmatmul.mubr.f32.gmra.mrb[0].mxu0 %v6297
        %v6454 = vpop.f32.mrb[0].mxu0
        %v6455 = vadd.f32 %v6321, %v6454
        %v6456 = vpop.f32.mrb[0].mxu0
        %6457 = vmatprep.mubr.f32.mxu0 0.0
        %6458 = vmatmul.mubr.f32.gmra.mrb[0].mxu0 %v6298
        %v6459 = vpop.f32.mrb[0].mxu0
        %v6460 = vadd.f32 %v6321, %v6459
        %v6461 = vpop.f32.mrb[0].mxu0
        %6462 = vmatprep.mubr.f32.mxu0 0.0
        %6463 = vmatmul.mubr.f32.gmra.mrb[0].mxu0 %v6299
        %v6464 = vpop.f32.mrb[0].mxu0
        %v6465 = vadd.f32 %v6321, %v6464
        %v6466 = vpop.f32.mrb[0].mxu0
        %6467 = vdwg.mxu0
        %v6468 = vmul.f32 %v6390, %v6390
        %v6469 = vmul.f32 %v6395, %v6395
        %v6470 = vmul.f32 %v6400, %v6400
        %v6471 = vmul.f32 %v6405, %v6405
        %v6472 = vmul.f32 %v6410, %v6410
        %v6473 = vmul.f32 %v6415, %v6415
        %v6474 = vmul.f32 %v6420, %v6420
        %v6475 = vmul.f32 %v6425, %v6425
        %v6476 = vmul.f32 %v6430, %v6430
        %v6477 = vmul.f32 %v6435, %v6435
        %v6478 = vmul.f32 %v6440, %v6440
        %v6479 = vmul.f32 %v6445, %v6445
        %v6480 = vmul.f32 %v6450, %v6450
        %v6481 = vmul.f32 %v6455, %v6455
        %v6482 = vmul.f32 %v6460, %v6460
        %v6483 = vmul.f32 %v6465, %v6465
        %6484 = vadd.xlane.f32.xlu0 %v6468
        %v6485 = vpop.xlane.xlu0 %6484
        %6486 = vadd.xlane.f32.xlu0 %v6469
        %v6487 = vpop.xlane.xlu0 %6486
        %6488 = vadd.xlane.f32.xlu0 %v6470
        %v6489 = vpop.xlane.xlu0 %6488
        %6490 = vadd.xlane.f32.xlu0 %v6471
        %v6491 = vpop.xlane.xlu0 %6490
        %6492 = vadd.xlane.f32.xlu0 %v6472
        %v6493 = vpop.xlane.xlu0 %6492
        %6494 = vadd.xlane.f32.xlu0 %v6473
        %v6495 = vpop.xlane.xlu0 %6494
        %6496 = vadd.xlane.f32.xlu0 %v6474
        %v6497 = vpop.xlane.xlu0 %6496
        %6498 = vadd.xlane.f32.xlu0 %v6475
        %v6499 = vpop.xlane.xlu0 %6498
        %6500 = vadd.xlane.f32.xlu0 %v6476
        %v6501 = vpop.xlane.xlu0 %6500
        %6502 = vadd.xlane.f32.xlu0 %v6477
        %v6503 = vpop.xlane.xlu0 %6502
        %6504 = vadd.xlane.f32.xlu0 %v6478
        %v6505 = vpop.xlane.xlu0 %6504
        %6506 = vadd.xlane.f32.xlu0 %v6479
        %v6507 = vpop.xlane.xlu0 %6506
        %6508 = vadd.xlane.f32.xlu0 %v6480
        %v6509 = vpop.xlane.xlu0 %6508
        %6510 = vadd.xlane.f32.xlu0 %v6481
        %v6511 = vpop.xlane.xlu0 %6510
        %6512 = vadd.xlane.f32.xlu0 %v6482
        %v6513 = vpop.xlane.xlu0 %6512
        %6514 = vadd.xlane.f32.xlu0 %v6483
        %v6515 = vpop.xlane.xlu0 %6514
        %6516 = vmatprep.subr.mxu0 0.0
        %6517 = vmatpush1.xpose.msra.mxu0 %v6390
        %6518 = vmatprep.subr.mxu0 0.0
        %6519 = vmatpush1.xpose.msra.mxu0 %v6395
        %6520 = vmatprep.subr.mxu0 0.0
        %6521 = vmatpush1.xpose.msra.mxu0 %v6400
        %6522 = vmatprep.subr.mxu0 0.0
        %6523 = vmatpush1.xpose.msra.mxu0 %v6405
        %6524 = vmatprep.subr.mxu0 0.0
        %6525 = vmatpush1.xpose.msra.mxu0 %v6410
        %6526 = vmatprep.subr.mxu0 0.0
        %6527 = vmatpush1.xpose.msra.mxu0 %v6415
        %6528 = vmatprep.subr.mxu0 0.0
        %6529 = vmatpush1.xpose.msra.mxu0 %v6420
        %6530 = vmatprep.subr.mxu0 0.0
        %6531 = vmatpush1.xpose.msra.mxu0 %v6425
        %6532 = vmatprep.subr.mxu0 0.0
        %6533 = vmatpush1.xpose.msra.mxu0 %v6430
        %6534 = vmatprep.subr.mxu0 0.0
        %6535 = vmatpush1.xpose.msra.mxu0 %v6435
        %6536 = vmatprep.subr.mxu0 0.0
        %6537 = vmatpush1.xpose.msra.mxu0 %v6440
        %6538 = vmatprep.subr.mxu0 0.0
        %6539 = vmatpush1.xpose.msra.mxu0 %v6445
        %6540 = vmatprep.subr.mxu0 0.0
        %6541 = vmatpush1.xpose.msra.mxu0 %v6450
        %6542 = vmatprep.subr.mxu0 0.0
        %6543 = vmatpush1.xpose.msra.mxu0 %v6455
        %6544 = vmatprep.subr.mxu0 0.0
        %6545 = vmatpush1.xpose.msra.mxu0 %v6460
        %6546 = vmatprep.subr.mxu0 0.0
        %6547 = vmatpush1.xpose.msra.mxu0 %v6465
        %6548 = vmatprep.subr.mxu0 0.0
        %6549 = vmatpush1.xpose.msra.mxu0 0.0
        %6550 = vmatprep.subr.mxu0 0.0
        %6551 = vmatpush1.xpose.msra.mxu0 0.0
        %6552 = vmatprep.subr.mxu0 0.0
        %6553 = vmatpush1.xpose.msra.mxu0 0.0
        %6554 = vmatprep.subr.mxu0 0.0
        %6555 = vmatpush1.xpose.msra.mxu0 0.0
        %6556 = vmatprep.subr.mxu0 0.0
        %6557 = vmatpush1.xpose.msra.mxu0 0.0
        %6558 = vmatprep.subr.mxu0 0.0
        %6559 = vmatpush1.xpose.msra.mxu0 0.0
        %6560 = vmatprep.subr.mxu0 0.0
        %6561 = vmatpush1.xpose.msra.mxu0 0.0
        %6562 = vmatprep.subr.mxu0 0.0
        %6563 = vmatpush1.xpose.msra.mxu0 0.0
        %6564 = vmatprep.subr.mxu0 0.0
        %6565 = vmatpush1.xpose.msra.mxu0 0.0
        %6566 = vmatprep.subr.mxu0 0.0
        %6567 = vmatpush1.xpose.msra.mxu0 0.0
        %6568 = vmatprep.subr.mxu0 0.0
        %6569 = vmatpush1.xpose.msra.mxu0 0.0
        %6570 = vmatprep.subr.mxu0 0.0
        %6571 = vmatpush1.xpose.msra.mxu0 0.0
        %6572 = vmatprep.subr.mxu0 0.0
        %6573 = vmatpush1.xpose.msra.mxu0 0.0
        %6574 = vmatprep.subr.mxu0 0.0
        %6575 = vmatpush1.xpose.msra.mxu0 0.0
        %6576 = vmatprep.subr.mxu0 0.0
        %6577 = vmatpush1.xpose.msra.mxu0 0.0
        %6578 = vmatprep.subr.mxu0 0.0
        %6579 = vmatpush1.xpose.msra.mxu0 0.0
        %6580 = vmatprep.mubr.f32.mxu0 0.0
        %6581 = vmatmul.mubr.f32.gmra.mrb[0].mxu0 %v6390
        %v6582 = vpop.f32.mrb[0].mxu0
        %v6583 = vadd.f32 0.0, %v6582
        %v6584 = vpop.f32.mrb[0].mxu0
        %6585 = vmatprep.mubr.f32.mxu0 0.0
        %6586 = vmatmul.mubr.f32.gmra.mrb[0].mxu0 %v6395
        %v6587 = vpop.f32.mrb[0].mxu0
        %v6588 = vadd.f32 0.0, %v6587
        %v6589 = vpop.f32.mrb[0].mxu0
        %6590 = vmatprep.mubr.f32.mxu0 0.0
        %6591 = vmatmul.mubr.f32.gmra.mrb[0].mxu0 %v6400
        %v6592 = vpop.f32.mrb[0].mxu0
        %v6593 = vadd.f32 0.0, %v6592
        %v6594 = vpop.f32.mrb[0].mxu0
        %6595 = vmatprep.mubr.f32.mxu0 0.0
        %6596 = vmatmul.mubr.f32.gmra.mrb[0].mxu0 %v6405
        %v6597 = vpop.f32.mrb[0].mxu0
        %v6598 = vadd.f32 0.0, %v6597
        %v6599 = vpop.f32.mrb[0].mxu0
        %6600 = vmatprep.mubr.f32.mxu0 0.0
        %6601 = vmatmul.mubr.f32.gmra.mrb[0].mxu0 %v6410
        %v6602 = vpop.f32.mrb[0].mxu0
        %v6603 = vadd.f32 0.0, %v6602
        %v6604 = vpop.f32.mrb[0].mxu0
        %6605 = vmatprep.mubr.f32.mxu0 0.0
        %6606 = vmatmul.mubr.f32.gmra.mrb[0].mxu0 %v6415
        %v6607 = vpop.f32.mrb[0].mxu0
        %v6608 = vadd.f32 0.0, %v6607
        %v6609 = vpop.f32.mrb[0].mxu0
        %6610 = vmatprep.mubr.f32.mxu0 0.0
        %6611 = vmatmul.mubr.f32.gmra.mrb[0].mxu0 %v6420
        %v6612 = vpop.f32.mrb[0].mxu0
        %v6613 = vadd.f32 0.0, %v6612
        %v6614 = vpop.f32.mrb[0].mxu0
        %6615 = vmatprep.mubr.f32.mxu0 0.0
        %6616 = vmatmul.mubr.f32.gmra.mrb[0].mxu0 %v6425
        %v6617 = vpop.f32.mrb[0].mxu0
        %v6618 = vadd.f32 0.0, %v6617
        %v6619 = vpop.f32.mrb[0].mxu0
        %6620 = vmatprep.mubr.f32.mxu0 0.0
        %6621 = vmatmul.mubr.f32.gmra.mrb[0].mxu0 %v6430
        %v6622 = vpop.f32.mrb[0].mxu0
        %v6623 = vadd.f32 0.0, %v6622
        %v6624 = vpop.f32.mrb[0].mxu0
        %6625 = vmatprep.mubr.f32.mxu0 0.0
        %6626 = vmatmul.mubr.f32.gmra.mrb[0].mxu0 %v6435
        %v6627 = vpop.f32.mrb[0].mxu0
        %v6628 = vadd.f32 0.0, %v6627
        %v6629 = vpop.f32.mrb[0].mxu0
        %6630 = vmatprep.mubr.f32.mxu0 0.0
        %6631 = vmatmul.mubr.f32.gmra.mrb[0].mxu0 %v6440
        %v6632 = vpop.f32.mrb[0].mxu0
        %v6633 = vadd.f32 0.0, %v6632
        %v6634 = vpop.f32.mrb[0].mxu0
        %6635 = vmatprep.mubr.f32.mxu0 0.0
        %6636 = vmatmul.mubr.f32.gmra.mrb[0].mxu0 %v6445
        %v6637 = vpop.f32.mrb[0].mxu0
        %v6638 = vadd.f32 0.0, %v6637
        %v6639 = vpop.f32.mrb[0].mxu0
        %6640 = vmatprep.mubr.f32.mxu0 0.0
        %6641 = vmatmul.mubr.f32.gmra.mrb[0].mxu0 %v6450
        %v6642 = vpop.f32.mrb[0].mxu0
        %v6643 = vadd.f32 0.0, %v6642
        %v6644 = vpop.f32.mrb[0].mxu0
        %6645 = vmatprep.mubr.f32.mxu0 0.0
        %6646 = vmatmul.mubr.f32.gmra.mrb[0].mxu0 %v6455
        %v6647 = vpop.f32.mrb[0].mxu0
        %v6648 = vadd.f32 0.0, %v6647
        %v6649 = vpop.f32.mrb[0].mxu0
        %6650 = vmatprep.mubr.f32.mxu0 0.0
        %6651 = vmatmul.mubr.f32.gmra.mrb[0].mxu0 %v6460
        %v6652 = vpop.f32.mrb[0].mxu0
        %v6653 = vadd.f32 0.0, %v6652
        %v6654 = vpop.f32.mrb[0].mxu0
        %6655 = vmatprep.mubr.f32.mxu0 0.0
        %6656 = vmatmul.mubr.f32.gmra.mrb[0].mxu0 %v6465
        %v6657 = vpop.f32.mrb[0].mxu0
        %v6658 = vadd.f32 0.0, %v6657
        %v6659 = vpop.f32.mrb[0].mxu0
        %6660 = vdwg.mxu0
        %6661 = vxpose.xlu0.b32.start [1/16] %v6485, 128
        %6662 = vxpose.xlu0.b32.cont [2/16] %v6487, 128
        %6663 = vxpose.xlu0.b32.cont [3/16] %v6489, 128
        %6664 = vxpose.xlu0.b32.cont [4/16] %v6491, 128
        %6665 = vxpose.xlu0.b32.cont [5/16] %v6493, 128
        %6666 = vxpose.xlu0.b32.cont [6/16] %v6495, 128
        %6667 = vxpose.xlu0.b32.cont [7/16] %v6497, 128
        %6668 = vxpose.xlu0.b32.cont [8/16] %v6499, 128
        %6669 = vxpose.xlu0.b32.cont [9/16] %v6501, 128
        %6670 = vxpose.xlu0.b32.cont [10/16] %v6503, 128
        %6671 = vxpose.xlu0.b32.cont [11/16] %v6505, 128
        %6672 = vxpose.xlu0.b32.cont [12/16] %v6507, 128
        %6673 = vxpose.xlu0.b32.cont [13/16] %v6509, 128
        %6674 = vxpose.xlu0.b32.cont [14/16] %v6511, 128
        %6675 = vxpose.xlu0.b32.cont [15/16] %v6513, 128
        %6676 = vxpose.xlu0.b32.end [16/16] %v6515, 128
        %v6677 = vpop.trf.xlu0
        %v6678 = vpop.trf.xlu0
        %v6679 = vpop.trf.xlu0
        %v6680 = vpop.trf.xlu0
        %v6681 = vpop.trf.xlu0
        %v6682 = vpop.trf.xlu0
        %v6683 = vpop.trf.xlu0
        %v6684 = vpop.trf.xlu0
        %v6685 = vpop.trf.xlu0
        %v6686 = vpop.trf.xlu0
        %v6687 = vpop.trf.xlu0
        %v6688 = vpop.trf.xlu0
        %v6689 = vpop.trf.xlu0
        %v6690 = vpop.trf.xlu0
        %v6691 = vpop.trf.xlu0
        %v6692 = vpop.trf.xlu0
        %v6693 = vlaneseq
        %v6694 = vshrl.u32 %v6693, 7
        %v6695 = vsub.s32 0, %v6694
        %v6696 = vrot.slane %v6677, %v6695
        %v6697 = vadd.f32 %v6485, %v6696
        %v6698 = vadd.f32 %v6487, %v6696
        %v6699 = vadd.f32 %v6489, %v6696
        %v6700 = vadd.f32 %v6491, %v6696
        %v6701 = vadd.f32 %v6493, %v6696
        %v6702 = vadd.f32 %v6495, %v6696
        %v6703 = vadd.f32 %v6497, %v6696
        %v6704 = vadd.f32 %v6499, %v6696
        %v6705 = vadd.f32 %v6501, %v6696
        %v6706 = vadd.f32 %v6503, %v6696
        %v6707 = vadd.f32 %v6505, %v6696
        %v6708 = vadd.f32 %v6507, %v6696
        %v6709 = vadd.f32 %v6509, %v6696
        %v6710 = vadd.f32 %v6511, %v6696
        %v6711 = vadd.f32 %v6513, %v6696
        %v6712 = vadd.f32 %v6515, %v6696
        %v6713 = vmul.f32 %v6583, 2.0
        %v6714 = vmul.f32 %v6588, 2.0
        %v6715 = vmul.f32 %v6593, 2.0
        %v6716 = vmul.f32 %v6598, 2.0
        %v6717 = vmul.f32 %v6603, 2.0
        %v6718 = vmul.f32 %v6608, 2.0
        %v6719 = vmul.f32 %v6613, 2.0
        %v6720 = vmul.f32 %v6618, 2.0
        %v6721 = vmul.f32 %v6623, 2.0
        %v6722 = vmul.f32 %v6628, 2.0
        %v6723 = vmul.f32 %v6633, 2.0
        %v6724 = vmul.f32 %v6638, 2.0
        %v6725 = vmul.f32 %v6643, 2.0
        %v6726 = vmul.f32 %v6648, 2.0
        %v6727 = vmul.f32 %v6653, 2.0
        %v6728 = vmul.f32 %v6658, 2.0
        %v6729 = vsub.f32 %v6697, %v6713
        %v6730 = vsub.f32 %v6698, %v6714
        %v6731 = vsub.f32 %v6699, %v6715
        %v6732 = vsub.f32 %v6700, %v6716
        %v6733 = vsub.f32 %v6701, %v6717
        %v6734 = vsub.f32 %v6702, %v6718
        %v6735 = vsub.f32 %v6703, %v6719
        %v6736 = vsub.f32 %v6704, %v6720
        %v6737 = vsub.f32 %v6705, %v6721
        %v6738 = vsub.f32 %v6706, %v6722
        %v6739 = vsub.f32 %v6707, %v6723
        %v6740 = vsub.f32 %v6708, %v6724
        %v6741 = vsub.f32 %v6709, %v6725
        %v6742 = vsub.f32 %v6710, %v6726
        %v6743 = vsub.f32 %v6711, %v6727
        %v6744 = vsub.f32 %v6712, %v6728
        %v6745 = vmax.f32 %v6729, 0.0
        %v6746 = vmax.f32 %v6730, 0.0
        %v6747 = vmax.f32 %v6731, 0.0
        %v6748 = vmax.f32 %v6732, 0.0
        %v6749 = vmax.f32 %v6733, 0.0
        %v6750 = vmax.f32 %v6734, 0.0
        %v6751 = vmax.f32 %v6735, 0.0
        %v6752 = vmax.f32 %v6736, 0.0
        %v6753 = vmax.f32 %v6737, 0.0
        %v6754 = vmax.f32 %v6738, 0.0
        %v6755 = vmax.f32 %v6739, 0.0
        %v6756 = vmax.f32 %v6740, 0.0
        %v6757 = vmax.f32 %v6741, 0.0
        %v6758 = vmax.f32 %v6742, 0.0
        %v6759 = vmax.f32 %v6743, 0.0
        %v6760 = vmax.f32 %v6744, 0.0
        %s6761 = sld [smem:[#allocation4]]
        %v6762 = vstv %s6761
        %v6763 = vmul.f32 %v6745, %v6762
        %v6764 = vmul.f32 %v6746, %v6762
        %v6765 = vmul.f32 %v6747, %v6762
        %v6766 = vmul.f32 %v6748, %v6762
        %v6767 = vmul.f32 %v6749, %v6762
        %v6768 = vmul.f32 %v6750, %v6762
        %v6769 = vmul.f32 %v6751, %v6762
        %v6770 = vmul.f32 %v6752, %v6762
        %v6771 = vmul.f32 %v6753, %v6762
        %v6772 = vmul.f32 %v6754, %v6762
        %v6773 = vmul.f32 %v6755, %v6762
        %v6774 = vmul.f32 %v6756, %v6762
        %v6775 = vmul.f32 %v6757, %v6762
        %v6776 = vmul.f32 %v6758, %v6762
        %v6777 = vmul.f32 %v6759, %v6762
        %v6778 = vmul.f32 %v6760, %v6762
        %v6779 = vmul.f32 %v6763, 1.442695
        %v6780 = vpow.pop %v6779
        %v6781 = vmul.f32 %v6764, 1.442695
        %v6782 = vpow.pop %v6781
        %v6783 = vmul.f32 %v6765, 1.442695
        %v6784 = vpow.pop %v6783
        %v6785 = vmul.f32 %v6766, 1.442695
        %v6786 = vpow.pop %v6785
        %v6787 = vmul.f32 %v6767, 1.442695
        %v6788 = vpow.pop %v6787
        %v6789 = vmul.f32 %v6768, 1.442695
        %v6790 = vpow.pop %v6789
        %v6791 = vmul.f32 %v6769, 1.442695
        %v6792 = vpow.pop %v6791
        %v6793 = vmul.f32 %v6770, 1.442695
        %v6794 = vpow.pop %v6793
        %v6795 = vmul.f32 %v6771, 1.442695
        %v6796 = vpow.pop %v6795
        %v6797 = vmul.f32 %v6772, 1.442695
        %v6798 = vpow.pop %v6797
        %v6799 = vmul.f32 %v6773, 1.442695
        %v6800 = vpow.pop %v6799
        %v6801 = vmul.f32 %v6774, 1.442695
        %v6802 = vpow.pop %v6801
        %v6803 = vmul.f32 %v6775, 1.442695
        %v6804 = vpow.pop %v6803
        %v6805 = vmul.f32 %v6776, 1.442695
        %v6806 = vpow.pop %v6805
        %v6807 = vmul.f32 %v6777, 1.442695
        %v6808 = vpow.pop %v6807
        %v6809 = vmul.f32 %v6778, 1.442695
        %v6810 = vpow.pop %v6809
        %v6811 = vld [vmem:[%s526] sm:$0xff]
        %v6812 = vld [vmem:[%s526 + $0x8] sm:$0xff]
        %v6813 = vld [vmem:[%s526 + $0x10] sm:$0xff]
        %v6814 = vld [vmem:[%s526 + $0x18] sm:$0xff]
        %v6815 = vld [vmem:[%s526 + $0x20] sm:$0xff]
        %v6816 = vld [vmem:[%s526 + $0x28] sm:$0xff]
        %v6817 = vld [vmem:[%s526 + $0x30] sm:$0xff]
        %v6818 = vld [vmem:[%s526 + $0x38] sm:$0xff]
        %v6819 = vld [vmem:[%s526 + $0x40] sm:$0xff]
        %v6820 = vld [vmem:[%s526 + $0x48] sm:$0xff]
        %v6821 = vld [vmem:[%s526 + $0x50] sm:$0xff]
        %v6822 = vld [vmem:[%s526 + $0x58] sm:$0xff]
        %v6823 = vld [vmem:[%s526 + $0x60] sm:$0xff]
        %v6824 = vld [vmem:[%s526 + $0x68] sm:$0xff]
        %v6825 = vld [vmem:[%s526 + $0x70] sm:$0xff]
        %v6826 = vld [vmem:[%s526 + $0x78] sm:$0xff]
        %v6827 = vmul.f32 %v6780, %v6811
        %v6828 = vmul.f32 %v6782, %v6812
        %v6829 = vmul.f32 %v6784, %v6813
        %v6830 = vmul.f32 %v6786, %v6814
        %v6831 = vmul.f32 %v6788, %v6815
        %v6832 = vmul.f32 %v6790, %v6816
        %v6833 = vmul.f32 %v6792, %v6817
        %v6834 = vmul.f32 %v6794, %v6818
        %v6835 = vmul.f32 %v6796, %v6819
        %v6836 = vmul.f32 %v6798, %v6820
        %v6837 = vmul.f32 %v6800, %v6821
        %v6838 = vmul.f32 %v6802, %v6822
        %v6839 = vmul.f32 %v6804, %v6823
        %v6840 = vmul.f32 %v6806, %v6824
        %v6841 = vmul.f32 %v6808, %v6825
        %v6842 = vmul.f32 %v6810, %v6826
        %6843 = vst [vmem:[%s613] sm:$0xff] %v6827
        %6844 = vst [vmem:[%s613 + $0x8] sm:$0xff] %v6828
        %6845 = vst [vmem:[%s613 + $0x10] sm:$0xff] %v6829
        %6846 = vst [vmem:[%s613 + $0x18] sm:$0xff] %v6830
        %6847 = vst [vmem:[%s613 + $0x20] sm:$0xff] %v6831
        %6848 = vst [vmem:[%s613 + $0x28] sm:$0xff] %v6832
        %6849 = vst [vmem:[%s613 + $0x30] sm:$0xff] %v6833
        %6850 = vst [vmem:[%s613 + $0x38] sm:$0xff] %v6834
        %6851 = vst [vmem:[%s613 + $0x40] sm:$0xff] %v6835
        %6852 = vst [vmem:[%s613 + $0x48] sm:$0xff] %v6836
        %6853 = vst [vmem:[%s613 + $0x50] sm:$0xff] %v6837
        %6854 = vst [vmem:[%s613 + $0x58] sm:$0xff] %v6838
        %6855 = vst [vmem:[%s613 + $0x60] sm:$0xff] %v6839
        %6856 = vst [vmem:[%s613 + $0x68] sm:$0xff] %v6840
        %6857 = vst [vmem:[%s613 + $0x70] sm:$0xff] %v6841
        %6858 = vst [vmem:[%s613 + $0x78] sm:$0xff] %v6842
        %s6859 = sand.u32 %s327, 1
        %s6860 = scalar_lea.sflag [#allocation7], %s6859
        %s6861 = sand.u32 %s327, 1
        %s6862 = smul.addr %s6861, 128
        %s6863 = scalar_lea.vmem [#allocation23], %s6862
        // Predicated region
        $region117: #{tpu_custom_call.1} parent=71 // pred_check
          %p6864 = pneg %p337
        $region118: #{tpu_custom_call.1} parent=71 // pred_check_branch
          %6866 = sbr.rel (%p6864) target = $region120
        $region119: #{tpu_custom_call.1} parent=71 // pred_region
          %s6868 = ssub.s32 2048, 2048
          %6869 = vsyncadd %s6860, %s6868
          %s6870 = smul.addr %s36, 16
          %s6871 = smul.addr %s6870, 128
          %s6872 = scalar_lea.hbm %s13, %s6871
          %s6873 = sshll.u32 %s6863, 4
          %s6874 = int_to_ptr.vmem [resolvable:$true] %s6873
          %6879 = dma.vmem_to_hbm [thread:$0]  %s6874, 2048, %s6872, %s6860, 128, 128, 8
        $region120: #{tpu_custom_call.1} parent=71 // pred_fallthru
          _
      $region72: #{tpu_custom_call.1} parent=5 // pred_fallthru
        _
      %p6880 = scmp.le.s32.totalorder 2, %s31
      // Predicated region
      $region121: #{tpu_custom_call.1} parent=5 // pred_check
        %p6881 = pneg %p6880
      $region122: #{tpu_custom_call.1} parent=5 // pred_check_branch
        %6883 = sbr.rel (%p6881) target = $region124
      $region123: #{tpu_custom_call.1} parent=5 // pred_region
        %s6884 = ssub.s32 %s31, 2
        // Predicated region
        $region125: #{tpu_custom_call.1} parent=123 // pred_check
          %p6885 = pneg %p343
        $region126: #{tpu_custom_call.1} parent=123 // pred_check_branch
          %6887 = sbr.rel (%p6885) target = $region128
        $region127: #{tpu_custom_call.1} parent=123 // pred_region
          %s6888 = sand.u32 %s328, 1
          %s6889 = scalar_lea.sflag [#allocation7], %s6888
          %s6890 = sand.u32 %s328, 1
          %s6891 = smul.addr %s6890, 128
          %s6892 = scalar_lea.vmem [#allocation23], %s6891
          %6893 = dma.done %s6889, 2048
        $region128: #{tpu_custom_call.1} parent=123 // pred_fallthru
          _
      $region124: #{tpu_custom_call.1} parent=5 // pred_fallthru
        _
    $region6: #{tpu_custom_call.1} parent=1 // loop_footer
      %s35 = sadd.s32 1, %s31
    $region7: #{tpu_custom_call.1} parent=1 // loop_footer_branch
      %30 = sbr.rel target = $region3
    $region8: #{tpu_custom_call.1} parent=1 // loop_exit
      _
    %6894 = vsyncpa [#allocation6], 1
    %s6895 = scalar_lea.sflag [#allocation6], 1
    %6896 = vsyncpa %s6895, 1
    %6897 = vsyncpa [#allocation9], 1
    %6898 = vsyncpa [#allocation12], 1
    %6899 = vsyncpa [#allocation15], 1
    %6900 = vsyncpa [#allocation18], 1
    %6901 = vsyncpa [#allocation21], 1
    %6902 = vsyncpa [#allocation7], 1
    %s6903 = scalar_lea.sflag [#allocation7], 1
    %6904 = vsyncpa %s6903, 1

</llo_original>
